<compile_context>
chip_gen: v7x
topology: tpu7x:2x2x1
jax: 0.10.0
libtpu: 0.0.40
codegen_flags: <defaults>
</compile_context>

<pallas_src>
import functools

import numpy as np
import jax
import jax.numpy as jnp
from jax import lax
from jax.experimental import pallas as pl
from jax.experimental.pallas import tpu as pltpu

_LN_EPS = 1e-5
_BN_EPS = 1e-5
_VMEM_LIMIT = 32 * 1024 * 1024   # explicit scoped-VMEM budget (safe on v5e/v6e/v7x)


# ----------------------------------------------------------------------------
# helpers
# ----------------------------------------------------------------------------
def _row_tile(m, cap):
    """VMEM-budgeted row tile: multiple of 8, >=2 grid steps when possible."""
    if m <= 8:
        return m
    half = -(-m // 2)              # ceil(m/2) -> at least 2 grid steps
    half = -(-half // 8) * 8       # round up to sublane multiple
    return min(cap, half)


def _silu(y):
    # y * sigmoid(y); the divide goes to the EUP via approx reciprocal.
    return y * pl.reciprocal(1.0 + jnp.exp(-y), approx=True)


def _relative_position_index(ws):
    coords = np.stack(np.meshgrid(np.arange(ws), np.arange(ws), indexing="ij"))
    coords_flatten = coords.reshape(2, -1)                              # (2, N)
    rel = coords_flatten[:, :, None] - coords_flatten[:, None, :]       # (2, N, N)
    rel = rel.transpose(1, 2, 0).astype(np.int64)                       # (N, N, 2)
    rel[:, :, 0] += ws - 1
    rel[:, :, 1] += ws - 1
    rel[:, :, 0] *= 2 * ws - 1
    return rel.sum(-1)                                                  # (N, N)


def _relative_position_bias(table, ws, num_heads):
    # table: ((2ws-1)^2, heads) -> (heads, N, N); done ONCE at init time.
    rpi = _relative_position_index(ws).reshape(-1)
    bias = jnp.take(table, jnp.asarray(rpi, jnp.int32), axis=0)
    bias = bias.reshape(ws * ws, ws * ws, num_heads)
    return jnp.transpose(bias, (2, 0, 1)).astype(jnp.float32)


def _create_attn_mask_np(H, W, ws, shift):
    # Same construction as SwinTransformerLayer.create_mask (static numpy).
    img_mask = np.zeros((1, H, W, 1), np.float32)
    h_slices = (slice(0, -ws), slice(-ws, -shift), slice(-shift, None))
    w_slices = (slice(0, -ws), slice(-ws, -shift), slice(-shift, None))
    cnt = 0
    for h in h_slices:
        for w in w_slices:
            img_mask[:, h, w, :] = cnt
            cnt += 1
    m = img_mask.reshape(1, H // ws, ws, W // ws, ws, 1)
    m = m.transpose(0, 1, 3, 2, 4, 5).reshape(-1, ws * ws)              # (nW, N)
    attn_mask = m[:, None, :] - m[:, :, None]                           # (nW, N, N)
    return np.where(attn_mask != 0, np.float32(-100.0), np.float32(0.0))


# ----------------------------------------------------------------------------
# kernel 1: fused cv1 + cv2  (1x1 Conv + folded BN + SiLU, two outputs)
# ----------------------------------------------------------------------------
def _dual_conv_kernel(x_ref, w1_ref, b1_ref, w2_ref, b2_ref, o1_ref, o2_ref):
    x = x_ref[...]                                               # bf16 (tm, c1)
    y1 = jnp.dot(x, w1_ref[...], preferred_element_type=jnp.float32) + b1_ref[...]
    y2 = jnp.dot(x, w2_ref[...], preferred_element_type=jnp.float32) + b2_ref[...]
    o1_ref[...] = _silu(y1)
    o2_ref[...] = _silu(y2)


def _dual_pointwise_conv(rows_bf16, p1, p2):
    M, K = rows_bf16.shape
    N1 = p1['w'].shape[1]
    N2 = p2['w'].shape[1]
    tm = _row_tile(M, 512)
    return pl.pallas_call(
        _dual_conv_kernel,
        out_shape=(jax.ShapeDtypeStruct((M, N1), jnp.float32),
                   jax.ShapeDtypeStruct((M, N2), jnp.float32)),
        grid=(pl.cdiv(M, tm),),
        in_specs=[pl.BlockSpec((tm, K), lambda i: (i, 0)),
                  pl.BlockSpec((K, N1), lambda i: (0, 0)),
                  pl.BlockSpec((1, N1), lambda i: (0, 0)),
                  pl.BlockSpec((K, N2), lambda i: (0, 0)),
                  pl.BlockSpec((1, N2), lambda i: (0, 0))],
        out_specs=(pl.BlockSpec((tm, N1), lambda i: (i, 0)),
                   pl.BlockSpec((tm, N2), lambda i: (i, 0))),
        compiler_params=pltpu.CompilerParams(
            dimension_semantics=("parallel",), vmem_limit_bytes=_VMEM_LIMIT),
    )(rows_bf16, p1['w'], p1['b'], p2['w'], p2['b'])


# ----------------------------------------------------------------------------
# kernel 2: cv3 without the HBM concat  (y1@w3a + y2@w3b + BN bias + SiLU)
# ----------------------------------------------------------------------------
def _cv3_kernel(y1_ref, y2_ref, wa_ref, wb_ref, b_ref, o_ref):
    acc = jnp.dot(y1_ref[...].astype(jnp.bfloat16), wa_ref[...],
                  preferred_element_type=jnp.float32)
    acc = acc + jnp.dot(y2_ref[...].astype(jnp.bfloat16), wb_ref[...],
                        preferred_element_type=jnp.float32)
    acc = acc + b_ref[...]
    o_ref[...] = _silu(acc)


def _cv3_conv(y1, y2, p3):
    M, c_ = y1.shape
    c2 = p3['wa'].shape[1]
    tm = _row_tile(M, 512)
    return pl.pallas_call(
        _cv3_kernel,
        out_shape=jax.ShapeDtypeStruct((M, c2), jnp.float32),
        grid=(pl.cdiv(M, tm),),
        in_specs=[pl.BlockSpec((tm, c_), lambda i: (i, 0)),
                  pl.BlockSpec((tm, c_), lambda i: (i, 0)),
                  pl.BlockSpec((c_, c2), lambda i: (0, 0)),
                  pl.BlockSpec((c_, c2), lambda i: (0, 0)),
                  pl.BlockSpec((1, c2), lambda i: (0, 0))],
        out_specs=pl.BlockSpec((tm, c2), lambda i: (i, 0)),
        compiler_params=pltpu.CompilerParams(
            dimension_semantics=("parallel",), vmem_limit_bytes=_VMEM_LIMIT),
    )(y1, y2, p3['wa'], p3['wb'], p3['b'])


# ----------------------------------------------------------------------------
# kernel 3: LayerNorm1 + windowed MHSA + proj + residual, one ROW of windows
#           per grid step; window partition/reverse folded into the kernel.
# ----------------------------------------------------------------------------
def _swin_attn_kernel(x_ref, wq_ref, wk_ref, wv_ref, bq_ref, bk_ref, bv_ref,
                      wp_ref, bp_ref, g1_ref, b1_ref, bias_ref, o_ref,
                      *, ws, num_heads, head_dim):
    x_row = x_ref[0]                                  # (ws, W, C) pre-norm shortcut
    w_full = x_row.shape[1]
    C = x_row.shape[2]
    nw = w_full // ws
    N = ws * ws

    # window partition inside VMEM (no HBM transpose round trip)
    xw = x_row.reshape(ws, nw, ws, C)
    xw = jnp.transpose(xw, (1, 0, 2, 3)).reshape(nw, N, C)
    xf = xw.reshape(nw * N, C)

    # LayerNorm (norm1), f32 elementwise
    mu = jnp.mean(xf, axis=-1, keepdims=True)
    xc = xf - mu
    var = jnp.mean(xc * xc, axis=-1, keepdims=True)
    xn = xc * lax.rsqrt(var + _LN_EPS) * g1_ref[...] + b1_ref[...]
    xn_b = xn.astype(jnp.bfloat16)

    # QKV projection over all windows of the row (bf16 MXU, f32 accumulate).
    # The q scale (head_dim ** -0.5) is folded into wq / bq at init time.
    q = jnp.dot(xn_b, wq_ref[...], preferred_element_type=jnp.float32) + bq_ref[...]
    k = jnp.dot(xn_b, wk_ref[...], preferred_element_type=jnp.float32) + bk_ref[...]
    v = jnp.dot(xn_b, wv_ref[...], preferred_element_type=jnp.float32) + bv_ref[...]
    q = q.reshape(nw, N, C)
    k = k.reshape(nw, N, C)
    v = v.reshape(nw, N, C)

    bias = bias_ref[...]                               # (1 or nw, heads, N, N) f32

    head_outs = []
    for h in range(num_heads):                         # heads = c_//32 (small, static)
        sl = slice(h * head_dim, (h + 1) * head_dim)
        qh = q[:, :, sl].astype(jnp.bfloat16)
        kh = k[:, :, sl].astype(jnp.bfloat16)
        vh = v[:, :, sl].astype(jnp.bfloat16)
        attn = jnp.einsum('bqd,bkd->bqk', qh, kh,
                          preferred_element_type=jnp.float32)    # (nw, N, N)
        attn = attn + bias[:, h]                       # rel-pos bias (+ shift mask)
        attn = attn - jnp.max(attn, axis=-1, keepdims=True)
        e = jnp.exp(attn)
        pmat = e * pl.reciprocal(jnp.sum(e, axis=-1, keepdims=True), approx=True)
        head_outs.append(jnp.einsum('bqk,bkd->bqd', pmat.astype(jnp.bfloat16), vh,
                                    preferred_element_type=jnp.float32))
    attn_out = head_outs[0] if num_heads == 1 else jnp.concatenate(head_outs, axis=-1)

    y = jnp.dot(attn_out.reshape(nw * N, C).astype(jnp.bfloat16), wp_ref[...],
                preferred_element_type=jnp.float32) + bp_ref[...]
    y = y.reshape(nw, N, C) + xw                       # residual on pre-norm (shifted) x

    # window reverse for this row of windows, then single full-tile store
    y = jnp.transpose(y.reshape(nw, ws, ws, C), (1, 0, 2, 3)).reshape(ws, w_full, C)
    o_ref[0] = y


def _window_attention_rows(x_img, p, bias_all, ws, num_heads, head_dim):
    B, H, W, C = x_img.shape
    nw = W // ws
    N = ws * ws
    if bias_all.shape[0] == 1:                         # shift == 0: no mask at all
        bias_spec = pl.BlockSpec((1, num_heads, N, N), lambda b, i: (0, 0, 0, 0))
    else:                                              # shifted: masks for row i
        bias_spec = pl.BlockSpec((nw, num_heads, N, N), lambda b, i: (i, 0, 0, 0))
    kernel = functools.partial(_swin_attn_kernel, ws=ws,
                               num_heads=num_heads, head_dim=head_dim)
    return pl.pallas_call(
        kernel,
        out_shape=jax.ShapeDtypeStruct((B, H, W, C), jnp.float32),
        grid=(B, H // ws),
        in_specs=[pl.BlockSpec((1, ws, W, C), lambda b, i: (b, i, 0, 0)),
                  pl.BlockSpec((C, C), lambda b, i: (0, 0)),   # wq (bf16, pre-scaled)
                  pl.BlockSpec((C, C), lambda b, i: (0, 0)),   # wk
                  pl.BlockSpec((C, C), lambda b, i: (0, 0)),   # wv
                  pl.BlockSpec((1, C), lambda b, i: (0, 0)),   # bq
                  pl.BlockSpec((1, C), lambda b, i: (0, 0)),   # bk
                  pl.BlockSpec((1, C), lambda b, i: (0, 0)),   # bv
                  pl.BlockSpec((C, C), lambda b, i: (0, 0)),   # wproj
                  pl.BlockSpec((1, C), lambda b, i: (0, 0)),   # bproj
                  pl.BlockSpec((1, C), lambda b, i: (0, 0)),   # ln1 gamma
                  pl.BlockSpec((1, C), lambda b, i: (0, 0)),   # ln1 beta
                  bias_spec],
        out_specs=pl.BlockSpec((1, ws, W, C), lambda b, i: (b, i, 0, 0)),
        compiler_params=pltpu.CompilerParams(
            dimension_semantics=("parallel", "parallel"),
            vmem_limit_bytes=_VMEM_LIMIT),
    )(x_img, p['wq'], p['wk'], p['wv'], p['bq'], p['bk'], p['bv'],
      p['wproj'], p['bproj'], p['ln1_g'], p['ln1_b'], bias_all)


# ----------------------------------------------------------------------------
# kernel 4: fused LayerNorm2 + MLP (fc1 + SiLU + fc2) + residual
# ----------------------------------------------------------------------------
def _mlp_kernel(x_ref, w1_ref, b1_ref, w2_ref, b2_ref, g_ref, be_ref, o_ref):
    x = x_ref[...]                                               # f32 (tm, C)
    mu = jnp.mean(x, axis=-1, keepdims=True)
    xc = x - mu
    var = jnp.mean(xc * xc, axis=-1, keepdims=True)
    xn = xc * lax.rsqrt(var + _LN_EPS) * g_ref[...] + be_ref[...]
    h = jnp.dot(xn.astype(jnp.bfloat16), w1_ref[...],
                preferred_element_type=jnp.float32) + b1_ref[...]
    h = _silu(h)
    y = jnp.dot(h.astype(jnp.bfloat16), w2_ref[...],
                preferred_element_type=jnp.float32) + b2_ref[...]
    o_ref[...] = x + y


def _mlp_block(rows, p):
    M, C = rows.shape
    hidden = p['fc1_w'].shape[1]
    tm = _row_tile(M, 256)          # capped for v7x 64 MiB VMEM (fc weights resident)
    return pl.pallas_call(
        _mlp_kernel,
        out_shape=jax.ShapeDtypeStruct((M, C), jnp.float32),
        grid=(pl.cdiv(M, tm),),
        in_specs=[pl.BlockSpec((tm, C), lambda i: (i, 0)),
                  pl.BlockSpec((C, hidden), lambda i: (0, 0)),
                  pl.BlockSpec((1, hidden), lambda i: (0, 0)),
                  pl.BlockSpec((hidden, C), lambda i: (0, 0)),
                  pl.BlockSpec((1, C), lambda i: (0, 0)),
                  pl.BlockSpec((1, C), lambda i: (0, 0)),
                  pl.BlockSpec((1, C), lambda i: (0, 0))],
        out_specs=pl.BlockSpec((tm, C), lambda i: (i, 0)),
        compiler_params=pltpu.CompilerParams(
            dimension_semantics=("parallel",), vmem_limit_bytes=_VMEM_LIMIT),
    )(rows, p['fc1_w'], p['fc1_b'], p['fc2_w'], p['fc2_b'], p['ln2_g'], p['ln2_b'])


# ----------------------------------------------------------------------------
# module forward
# ----------------------------------------------------------------------------
def _swin_layer(x, p, num_heads, ws, shift, bias_all):
    # x: (B, H, W, C) channels-last f32; returns same shape.
    B, H_, W_, C = x.shape
    pad_b = (ws - H_ % ws) % ws
    pad_r = (ws - W_ % ws) % ws
    if pad_b or pad_r:
        x = jnp.pad(x, ((0, 0), (0, pad_b), (0, pad_r), (0, 0)))
    B, H, W, C = x.shape
    head_dim = C // num_heads

    # cyclic shift left to XLA (cheap roll); attention kernel handles the rest
    x_sh = jnp.roll(x, shift=(-shift, -shift), axis=(1, 2)) if shift > 0 else x
    x_sh = _window_attention_rows(x_sh, p, bias_all, ws, num_heads, head_dim)
    x = jnp.roll(x_sh, shift=(shift, shift), axis=(1, 2)) if shift > 0 else x_sh

    rows = x.reshape(B * H * W, C)
    rows = _mlp_block(rows, p)                         # + LN2 + residual
    x = rows.reshape(B, H, W, C)
    if pad_b or pad_r:
        x = x[:, :H_, :W_, :]
    return x


def stcspa_forward(x, params, cfg):
    """x: (B, c1, H, W) float32 -> (B, c2, H, W) float32."""
    B, c1, H, W = x.shape
    # NCHW -> channels-last rows (layout transpose left to XLA glue)
    rows = jnp.transpose(x, (0, 2, 3, 1)).reshape(B * H * W, c1).astype(jnp.bfloat16)

    y1, y2 = _dual_pointwise_conv(rows, params['cv1'], params['cv2'])   # single read
    c_ = y1.shape[1]

    ws = cfg['window_size']
    heads = cfg['num_heads']
    nlayers = cfg['num_layers']
    Hp = H + (ws - H % ws) % ws
    Wp = W + (ws - W % ws) % ws
    any_shift = any(i % 2 == 1 for i in range(nlayers))
    mask = (jnp.asarray(_create_attn_mask_np(Hp, Wp, ws, ws // 2))
            if any_shift else None)                                     # (nW, N, N)

    # SwinTransformerBlock (c1 == c2 inside STCSPA -> no extra Conv)
    y1_img = y1.reshape(B, H, W, c_)
    for i in range(nlayers):
        shift = 0 if i % 2 == 0 else ws // 2
        p = params['layers'][i]
        rel = p['rel_bias']                                             # (heads, N, N)
        if shift > 0:
            bias_all = rel[None, :, :, :] + mask[:, None, :, :]         # (nW, h, N, N)
        else:
            bias_all = rel[None, :, :, :]                               # (1, h, N, N)
        y1_img = _swin_layer(y1_img, p, heads, ws, shift, bias_all)
    y1 = y1_img.reshape(B * H * W, c_)

    out = _cv3_conv(y1, y2, params['cv3'])                              # no HBM concat
    c2 = out.shape[1]
    return jnp.transpose(out.reshape(B, H, W, c2), (0, 3, 1, 2))


# ----------------------------------------------------------------------------
# parameter construction (BN folded into the 1x1 convs, eval semantics)
# ----------------------------------------------------------------------------
def _conv_bn_params(key, cin, cout):
    k1, k2, k3, k4, k5 = jax.random.split(key, 5)
    w = 0.1 * jax.random.normal(k1, (cout, cin), jnp.float32)
    gamma = 1.0 + 0.1 * jax.random.normal(k2, (cout,), jnp.float32)
    beta = 0.1 * jax.random.normal(k3, (cout,), jnp.float32)
    mean = 0.1 * jax.random.normal(k4, (cout,), jnp.float32)
    var = jax.random.uniform(k5, (cout,), jnp.float32, 0.5, 1.5)
    scale = gamma / jnp.sqrt(var + _BN_EPS)
    w_eff = (w * scale[:, None]).T                                      # (cin, cout)
    b_eff = (beta - mean * scale).reshape(1, cout)
    return w_eff, b_eff


def _swin_layer_params(key, dim, num_heads, ws, hidden):
    ks = jax.random.split(key, 8)

    def nrm(k, shape, std=0.1):
        return std * jax.random.normal(k, shape, jnp.float32)

    head_dim = dim // num_heads
    qscale = float(head_dim) ** -0.5
    wqkv = nrm(ks[0], (dim, 3 * dim))
    bqkv = nrm(ks[1], (3 * dim,), 0.02)
    rpb_table = nrm(ks[4], ((2 * ws - 1) ** 2, num_heads), 0.02)
    rel_bias = _relative_position_bias(rpb_table, ws, num_heads)        # hoisted to init

    return {
        'ln1_g': jnp.ones((1, dim), jnp.float32),
        'ln1_b': jnp.zeros((1, dim), jnp.float32),
        'wq': (wqkv[:, :dim] * qscale).astype(jnp.bfloat16),            # scale folded
        'wk': wqkv[:, dim:2 * dim].astype(jnp.bfloat16),
        'wv': wqkv[:, 2 * dim:].astype(jnp.bfloat16),
        'bq': (bqkv[:dim] * qscale).reshape(1, dim),
        'bk': bqkv[dim:2 * dim].reshape(1, dim),
        'bv': bqkv[2 * dim:].reshape(1, dim),
        'wproj': nrm(ks[2], (dim, dim)).astype(jnp.bfloat16),
        'bproj': nrm(ks[3], (1, dim), 0.02),
        'rel_bias': rel_bias,
        'ln2_g': jnp.ones((1, dim), jnp.float32),
        'ln2_b': jnp.zeros((1, dim), jnp.float32),
        'fc1_w': nrm(ks[5], (dim, hidden)).astype(jnp.bfloat16),
        'fc1_b': nrm(ks[6], (1, hidden), 0.02),
        'fc2_w': nrm(ks[7], (hidden, dim)).astype(jnp.bfloat16),
        'fc2_b': jnp.zeros((1, dim), jnp.float32),
    }


def init_stcspa_params(key, c1, c2, n=1, e=0.5, window_size=8, mlp_ratio=4.0):
    c_ = int(c2 * e)
    num_heads = max(c_ // 32, 1)
    hidden = int(c_ * mlp_ratio)
    k_cv1, k_cv2, k_cv3, k_layers = jax.random.split(key, 4)
    w1, b1 = _conv_bn_params(k_cv1, c1, c_)
    w2, b2 = _conv_bn_params(k_cv2, c1, c_)
    w3, b3 = _conv_bn_params(k_cv3, 2 * c_, c2)
    lkeys = jax.random.split(k_layers, n)
    params = {
        'cv1': {'w': w1.astype(jnp.bfloat16), 'b': b1},
        'cv2': {'w': w2.astype(jnp.bfloat16), 'b': b2},
        'cv3': {'wa': w3[:c_].astype(jnp.bfloat16),                     # y1 half
                'wb': w3[c_:].astype(jnp.bfloat16),                     # y2 half
                'b': b3},
        'layers': [_swin_layer_params(lkeys[i], c_, num_heads, window_size, hidden)
                   for i in range(n)],
    }
    cfg = {'num_heads': num_heads, 'window_size': window_size, 'num_layers': n}
    return params, cfg


# TODO(synk): BatchNorm uses eval-mode running statistics folded into the conv
# weights; training-mode batch stats, Dropout and DropPath RNG are not
# reproduced (all drop rates are 0.0 in this module -> identity).

if __name__ == "__main__":
    key = jax.random.PRNGKey(0)
    kx, kp = jax.random.split(key)

    # Small shapes consistent with STCSPA: c_ = c2*0.5 = 32 -> num_heads = 1,
    # window_size = 8, 16x16 spatial (2x2 windows per image), 2 Swin layers
    # (exercises both the no-shift and shifted-window paths).
    B, c1, c2, H, W = 2, 64, 64, 16, 16
    n_layers = 2

    x = jax.random.normal(kx, (B, c1, H, W), jnp.float32)
    params, cfg = init_stcspa_params(kp, c1, c2, n=n_layers)

    fwd = jax.jit(functools.partial(stcspa_forward, cfg=cfg))
    out = fwd(x, params)
    jax.block_until_ready(out)
    assert out.shape == (B, c2, H, W), out.shape
    assert bool(jnp.all(jnp.isfinite(out)))
    print("KERNEL_OK")
</pallas_src>

<mosaic_0001>
module attributes {stable_mosaic.version = 11 : i64} {
  func.func @_dual_conv_kernel(%arg0: i32, %arg1: memref<256x64xbf16, #tpu.memory_space<vmem>>, %arg2: memref<64x32xbf16, #tpu.memory_space<vmem>>, %arg3: memref<1x32xf32, #tpu.memory_space<vmem>>, %arg4: memref<64x32xbf16, #tpu.memory_space<vmem>>, %arg5: memref<1x32xf32, #tpu.memory_space<vmem>>, %arg6: memref<256x32xf32, #tpu.memory_space<vmem>>, %arg7: memref<256x32xf32, #tpu.memory_space<vmem>>) attributes {dimension_semantics = [#tpu.dimension_semantics<parallel>], iteration_bounds = array<i64: 2>, scalar_prefetch = 0 : i64, scratch_operands = 0 : i64, tpu.core_type = #tpu.core_type<tc>, window_params = [{transform_indices = @transform_0, window_bounds = array<i64: 256, 64>}, {pipeline_mode = #tpu.pipeline_mode<synchronous>, transform_indices = @transform_1, window_bounds = array<i64: 64, 32>}, {pipeline_mode = #tpu.pipeline_mode<synchronous>, transform_indices = @transform_2, window_bounds = array<i64: 1, 32>}, {pipeline_mode = #tpu.pipeline_mode<synchronous>, transform_indices = @transform_3, window_bounds = array<i64: 64, 32>}, {pipeline_mode = #tpu.pipeline_mode<synchronous>, transform_indices = @transform_4, window_bounds = array<i64: 1, 32>}, {transform_indices = @transform_5, window_bounds = array<i64: 256, 32>}, {transform_indices = @transform_6, window_bounds = array<i64: 256, 32>}]} {
    %c0 = arith.constant 0 : index
    %c0_0 = arith.constant 0 : index
    %0 = vector.load %arg1[%c0, %c0_0] : memref<256x64xbf16, #tpu.memory_space<vmem>>, vector<256x64xbf16>
    %c0_1 = arith.constant 0 : index
    %c0_2 = arith.constant 0 : index
    %1 = vector.load %arg2[%c0_1, %c0_2] : memref<64x32xbf16, #tpu.memory_space<vmem>>, vector<64x32xbf16>
    %cst = arith.constant dense<0.000000e+00> : vector<256x32xf32>
    %2 = tpu.matmul %0, %1, %cst {dimension_numbers = #tpu.dot_dimension_numbers<[1], [0], [0], [1], [0, 0, 1, 1], [], []>} : vector<256x64xbf16>, vector<64x32xbf16>, vector<256x32xf32> -> vector<256x32xf32>
    %c0_3 = arith.constant 0 : index
    %c0_4 = arith.constant 0 : index
    %3 = vector.load %arg3[%c0_3, %c0_4] : memref<1x32xf32, #tpu.memory_space<vmem>>, vector<1x32xf32>
    %4 = vector.broadcast %3 : vector<1x32xf32> to vector<256x32xf32>
    %5 = arith.addf %2, %4 : vector<256x32xf32>
    %c0_5 = arith.constant 0 : index
    %c0_6 = arith.constant 0 : index
    %6 = vector.load %arg4[%c0_5, %c0_6] : memref<64x32xbf16, #tpu.memory_space<vmem>>, vector<64x32xbf16>
    %cst_7 = arith.constant dense<0.000000e+00> : vector<256x32xf32>
    %7 = tpu.matmul %0, %6, %cst_7 {dimension_numbers = #tpu.dot_dimension_numbers<[1], [0], [0], [1], [0, 0, 1, 1], [], []>} : vector<256x64xbf16>, vector<64x32xbf16>, vector<256x32xf32> -> vector<256x32xf32>
    %c0_8 = arith.constant 0 : index
    %c0_9 = arith.constant 0 : index
    %8 = vector.load %arg5[%c0_8, %c0_9] : memref<1x32xf32, #tpu.memory_space<vmem>>, vector<1x32xf32>
    %9 = vector.broadcast %8 : vector<1x32xf32> to vector<256x32xf32>
    %10 = arith.addf %7, %9 : vector<256x32xf32>
    %cst_10 = arith.constant 0.000000e+00 : f32
    %11 = vector.broadcast %cst_10 : f32 to vector<256x32xf32>
    %12 = arith.subf %11, %5 : vector<256x32xf32>
    %13 = math.exp %12 : vector<256x32xf32>
    %cst_11 = arith.constant 1.000000e+00 : f32
    %14 = vector.broadcast %cst_11 : f32 to vector<256x32xf32>
    %15 = arith.addf %14, %13 : vector<256x32xf32>
    %16 = tpu.reciprocal %15 {approx = true} : vector<256x32xf32> -> vector<256x32xf32>
    %17 = arith.mulf %5, %16 : vector<256x32xf32>
    %c0_12 = arith.constant 0 : index
    %c0_13 = arith.constant 0 : index
    %18 = vector.load %arg6[%c0_12, %c0_13] : memref<256x32xf32, #tpu.memory_space<vmem>>, vector<256x32xf32>
    tpu.vector_store %arg6[%c0_12, %c0_13], %17 {strides = array<i32>} : memref<256x32xf32, #tpu.memory_space<vmem>>, vector<256x32xf32>,
    %cst_14 = arith.constant 0.000000e+00 : f32
    %19 = vector.broadcast %cst_14 : f32 to vector<256x32xf32>
    %20 = arith.subf %19, %10 : vector<256x32xf32>
    %21 = math.exp %20 : vector<256x32xf32>
    %cst_15 = arith.constant 1.000000e+00 : f32
    %22 = vector.broadcast %cst_15 : f32 to vector<256x32xf32>
    %23 = arith.addf %22, %21 : vector<256x32xf32>
    %24 = tpu.reciprocal %23 {approx = true} : vector<256x32xf32> -> vector<256x32xf32>
    %25 = arith.mulf %10, %24 : vector<256x32xf32>
    %c0_16 = arith.constant 0 : index
    %c0_17 = arith.constant 0 : index
    %26 = vector.load %arg7[%c0_16, %c0_17] : memref<256x32xf32, #tpu.memory_space<vmem>>, vector<256x32xf32>
    tpu.vector_store %arg7[%c0_16, %c0_17], %25 {strides = array<i32>} : memref<256x32xf32, #tpu.memory_space<vmem>>, vector<256x32xf32>,
    return
  }
  func.func @transform_0(%arg0: i32) -> (i32, i32) {
    %c0_i32 = arith.constant 0 : i32
    %c0_i32_0 = arith.constant 0 : i32
    return %arg0, %c0_i32 : i32, i32
  }
  func.func @transform_1(%arg0: i32) -> (i32, i32) {
    %c0_i32 = arith.constant 0 : i32
    %c0_i32_0 = arith.constant 0 : i32
    %c0_i32_1 = arith.constant 0 : i32
    return %c0_i32, %c0_i32_0 : i32, i32
  }
  func.func @transform_2(%arg0: i32) -> (i32, i32) {
    %c0_i32 = arith.constant 0 : i32
    %c0_i32_0 = arith.constant 0 : i32
    %c0_i32_1 = arith.constant 0 : i32
    return %c0_i32, %c0_i32_0 : i32, i32
  }
  func.func @transform_3(%arg0: i32) -> (i32, i32) {
    %c0_i32 = arith.constant 0 : i32
    %c0_i32_0 = arith.constant 0 : i32
    %c0_i32_1 = arith.constant 0 : i32
    return %c0_i32, %c0_i32_0 : i32, i32
  }
  func.func @transform_4(%arg0: i32) -> (i32, i32) {
    %c0_i32 = arith.constant 0 : i32
    %c0_i32_0 = arith.constant 0 : i32
    %c0_i32_1 = arith.constant 0 : i32
    return %c0_i32, %c0_i32_0 : i32, i32
  }
  func.func @transform_5(%arg0: i32) -> (i32, i32) {
    %c0_i32 = arith.constant 0 : i32
    %c0_i32_0 = arith.constant 0 : i32
    return %arg0, %c0_i32 : i32, i32
  }
  func.func @transform_6(%arg0: i32) -> (i32, i32) {
    %c0_i32 = arith.constant 0 : i32
    %c0_i32_0 = arith.constant 0 : i32
    return %arg0, %c0_i32 : i32, i32
  }
}

module attributes {stable_mosaic.version = 11 : i64} {
  func.func @_swin_attn_kernel(%arg0: i32, %arg1: i32, %arg2: memref<1x8x16x32xf32, #tpu.memory_space<vmem>>, %arg3: memref<32x32xbf16, #tpu.memory_space<vmem>>, %arg4: memref<32x32xbf16, #tpu.memory_space<vmem>>, %arg5: memref<32x32xbf16, #tpu.memory_space<vmem>>, %arg6: memref<1x32xf32, #tpu.memory_space<vmem>>, %arg7: memref<1x32xf32, #tpu.memory_space<vmem>>, %arg8: memref<1x32xf32, #tpu.memory_space<vmem>>, %arg9: memref<32x32xbf16, #tpu.memory_space<vmem>>, %arg10: memref<1x32xf32, #tpu.memory_space<vmem>>, %arg11: memref<1x32xf32, #tpu.memory_space<vmem>>, %arg12: memref<1x32xf32, #tpu.memory_space<vmem>>, %arg13: memref<1x1x64x64xf32, #tpu.memory_space<vmem>>, %arg14: memref<1x8x16x32xf32, #tpu.memory_space<vmem>>) attributes {dimension_semantics = [#tpu.dimension_semantics<parallel>, #tpu.dimension_semantics<parallel>], iteration_bounds = array<i64: 2, 2>, scalar_prefetch = 0 : i64, scratch_operands = 0 : i64, tpu.core_type = #tpu.core_type<tc>, window_params = [{transform_indices = @transform_0, window_bounds = array<i64: 1, 8, 16, 32>}, {pipeline_mode = #tpu.pipeline_mode<synchronous>, transform_indices = @transform_1, window_bounds = array<i64: 32, 32>}, {pipeline_mode = #tpu.pipeline_mode<synchronous>, transform_indices = @transform_2, window_bounds = array<i64: 32, 32>}, {pipeline_mode = #tpu.pipeline_mode<synchronous>, transform_indices = @transform_3, window_bounds = array<i64: 32, 32>}, {pipeline_mode = #tpu.pipeline_mode<synchronous>, transform_indices = @transform_4, window_bounds = array<i64: 1, 32>}, {pipeline_mode = #tpu.pipeline_mode<synchronous>, transform_indices = @transform_5, window_bounds = array<i64: 1, 32>}, {pipeline_mode = #tpu.pipeline_mode<synchronous>, transform_indices = @transform_6, window_bounds = array<i64: 1, 32>}, {pipeline_mode = #tpu.pipeline_mode<synchronous>, transform_indices = @transform_7, window_bounds = array<i64: 32, 32>}, {pipeline_mode = #tpu.pipeline_mode<synchronous>, transform_indices = @transform_8, window_bounds = array<i64: 1, 32>}, {pipeline_mode = #tpu.pipeline_mode<synchronous>, transform_indices = @transform_9, window_bounds = array<i64: 1, 32>}, {pipeline_mode = #tpu.pipeline_mode<synchronous>, transform_indices = @transform_10, window_bounds = array<i64: 1, 32>}, {pipeline_mode = #tpu.pipeline_mode<synchronous>, transform_indices = @transform_11, window_bounds = array<i64: 1, 1, 64, 64>}, {transform_indices = @transform_12, window_bounds = array<i64: 1, 8, 16, 32>}]} {
    %c0 = arith.constant 0 : index
    %c0_0 = arith.constant 0 : index
    %c0_1 = arith.constant 0 : index
    %c0_2 = arith.constant 0 : index
    %0 = vector.load %arg2[%c0, %c0_0, %c0_1, %c0_2] : memref<1x8x16x32xf32, #tpu.memory_space<vmem>>, vector<1x8x16x32xf32>
    %1 = vector.shape_cast %0 : vector<1x8x16x32xf32> to vector<8x16x32xf32>
    %2 = vector.shape_cast %1 : vector<8x16x32xf32> to vector<8x2x8x32xf32>
    %3 = tpu.transpose %2, [1, 0, 2, 3] : vector<8x2x8x32xf32> -> vector<2x8x8x32xf32>
    %4 = vector.shape_cast %3 : vector<2x8x8x32xf32> to vector<2x64x32xf32>
    %5 = vector.shape_cast %4 : vector<2x64x32xf32> to vector<128x32xf32>
    %cst = arith.constant dense<0.000000e+00> : vector<128xf32>
    %6 = vector.multi_reduction <add>, %5, %cst [1] : vector<128x32xf32> to vector<128xf32>
    %7 = vector.shape_cast %6 : vector<128xf32> to vector<128x1xf32>
    %cst_3 = arith.constant 3.200000e+01 : f32
    %8 = vector.broadcast %cst_3 : f32 to vector<128x1xf32>
    %9 = arith.divf %7, %8 : vector<128x1xf32>
    %10 = vector.broadcast %9 : vector<128x1xf32> to vector<128x32xf32>
    %11 = arith.subf %5, %10 : vector<128x32xf32>
    %12 = arith.mulf %11, %11 : vector<128x32xf32>
    %cst_4 = arith.constant dense<0.000000e+00> : vector<128xf32>
    %13 = vector.multi_reduction <add>, %12, %cst_4 [1] : vector<128x32xf32> to vector<128xf32>
    %14 = vector.shape_cast %13 : vector<128xf32> to vector<128x1xf32>
    %cst_5 = arith.constant 3.200000e+01 : f32
    %15 = vector.broadcast %cst_5 : f32 to vector<128x1xf32>
    %16 = arith.divf %14, %15 : vector<128x1xf32>
    %cst_6 = arith.constant 9.99999974E-6 : f32
    %17 = vector.broadcast %cst_6 : f32 to vector<128x1xf32>
    %18 = arith.addf %16, %17 : vector<128x1xf32>
    %19 = math.rsqrt %18 : vector<128x1xf32>
    %20 = vector.broadcast %19 : vector<128x1xf32> to vector<128x32xf32>
    %21 = arith.mulf %11, %20 : vector<128x32xf32>
    %c0_7 = arith.constant 0 : index
    %c0_8 = arith.constant 0 : index
    %22 = vector.load %arg11[%c0_7, %c0_8] : memref<1x32xf32, #tpu.memory_space<vmem>>, vector<1x32xf32>
    %23 = vector.broadcast %22 : vector<1x32xf32> to vector<128x32xf32>
    %24 = arith.mulf %21, %23 : vector<128x32xf32>
    %c0_9 = arith.constant 0 : index
    %c0_10 = arith.constant 0 : index
    %25 = vector.load %arg12[%c0_9, %c0_10] : memref<1x32xf32, #tpu.memory_space<vmem>>, vector<1x32xf32>
    %26 = vector.broadcast %25 : vector<1x32xf32> to vector<128x32xf32>
    %27 = arith.addf %24, %26 : vector<128x32xf32>
    %28 = arith.truncf %27 : vector<128x32xf32> to vector<128x32xbf16>
    %c0_11 = arith.constant 0 : index
    %c0_12 = arith.constant 0 : index
    %29 = vector.load %arg3[%c0_11, %c0_12] : memref<32x32xbf16, #tpu.memory_space<vmem>>, vector<32x32xbf16>
    %cst_13 = arith.constant dense<0.000000e+00> : vector<128x32xf32>
    %30 = tpu.matmul %28, %29, %cst_13 {dimension_numbers = #tpu.dot_dimension_numbers<[1], [0], [0], [1], [0, 0, 1, 1], [], []>} : vector<128x32xbf16>, vector<32x32xbf16>, vector<128x32xf32> -> vector<128x32xf32>
    %c0_14 = arith.constant 0 : index
    %c0_15 = arith.constant 0 : index
    %31 = vector.load %arg6[%c0_14, %c0_15] : memref<1x32xf32, #tpu.memory_space<vmem>>, vector<1x32xf32>
    %32 = vector.broadcast %31 : vector<1x32xf32> to vector<128x32xf32>
    %33 = arith.addf %30, %32 : vector<128x32xf32>
    %c0_16 = arith.constant 0 : index
    %c0_17 = arith.constant 0 : index
    %34 = vector.load %arg4[%c0_16, %c0_17] : memref<32x32xbf16, #tpu.memory_space<vmem>>, vector<32x32xbf16>
    %cst_18 = arith.constant dense<0.000000e+00> : vector<128x32xf32>
    %35 = tpu.matmul %28, %34, %cst_18 {dimension_numbers = #tpu.dot_dimension_numbers<[1], [0], [0], [1], [0, 0, 1, 1], [], []>} : vector<128x32xbf16>, vector<32x32xbf16>, vector<128x32xf32> -> vector<128x32xf32>
    %c0_19 = arith.constant 0 : index
    %c0_20 = arith.constant 0 : index
    %36 = vector.load %arg7[%c0_19, %c0_20] : memref<1x32xf32, #tpu.memory_space<vmem>>, vector<1x32xf32>
    %37 = vector.broadcast %36 : vector<1x32xf32> to vector<128x32xf32>
    %38 = arith.addf %35, %37 : vector<128x32xf32>
    %c0_21 = arith.constant 0 : index
    %c0_22 = arith.constant 0 : index
    %39 = vector.load %arg5[%c0_21, %c0_22] : memref<32x32xbf16, #tpu.memory_space<vmem>>, vector<32x32xbf16>
    %cst_23 = arith.constant dense<0.000000e+00> : vector<128x32xf32>
    %40 = tpu.matmul %28, %39, %cst_23 {dimension_numbers = #tpu.dot_dimension_numbers<[1], [0], [0], [1], [0, 0, 1, 1], [], []>} : vector<128x32xbf16>, vector<32x32xbf16>, vector<128x32xf32> -> vector<128x32xf32>
    %c0_24 = arith.constant 0 : index
    %c0_25 = arith.constant 0 : index
    %41 = vector.load %arg8[%c0_24, %c0_25] : memref<1x32xf32, #tpu.memory_space<vmem>>, vector<1x32xf32>
    %42 = vector.broadcast %41 : vector<1x32xf32> to vector<128x32xf32>
    %43 = arith.addf %40, %42 : vector<128x32xf32>
    %44 = vector.shape_cast %33 : vector<128x32xf32> to vector<2x64x32xf32>
    %45 = vector.shape_cast %38 : vector<128x32xf32> to vector<2x64x32xf32>
    %46 = vector.shape_cast %43 : vector<128x32xf32> to vector<2x64x32xf32>
    %c0_26 = arith.constant 0 : index
    %c0_27 = arith.constant 0 : index
    %c0_28 = arith.constant 0 : index
    %c0_29 = arith.constant 0 : index
    %47 = vector.load %arg13[%c0_26, %c0_27, %c0_28, %c0_29] : memref<1x1x64x64xf32, #tpu.memory_space<vmem>>, vector<1x1x64x64xf32>
    %48 = arith.truncf %44 : vector<2x64x32xf32> to vector<2x64x32xbf16>
    %49 = arith.truncf %45 : vector<2x64x32xf32> to vector<2x64x32xbf16>
    %50 = arith.truncf %46 : vector<2x64x32xf32> to vector<2x64x32xbf16>
    "tpu.trace_start"() <{level = 10 : i32, message = "bqd,bkd->bqk"}> : () -> ()
    %cst_30 = arith.constant dense<0.000000e+00> : vector<2x64x64xf32>
    %51 = tpu.matmul %48, %49, %cst_30 {dimension_numbers = #tpu.dot_dimension_numbers<[2], [2], [1], [1], [0, 0, 0, 1, 1, 1], [0], [0]>} : vector<2x64x32xbf16>, vector<2x64x32xbf16>, vector<2x64x64xf32> -> vector<2x64x64xf32>
    "tpu.trace_stop"() : () -> ()
    %52 = vector.shape_cast %47 : vector<1x1x64x64xf32> to vector<1x64x64xf32>
    %53 = vector.broadcast %52 : vector<1x64x64xf32> to vector<2x64x64xf32>
    %54 = arith.addf %51, %53 : vector<2x64x64xf32>
    %cst_31 = arith.constant dense<0xFF800000> : vector<2x64xf32>
    %55 = vector.multi_reduction <maximumf>, %54, %cst_31 [2] : vector<2x64x64xf32> to vector<2x64xf32>
    %56 = vector.shape_cast %55 : vector<2x64xf32> to vector<2x64x1xf32>
    %57 = vector.broadcast %56 : vector<2x64x1xf32> to vector<2x64x64xf32>
    %58 = arith.subf %54, %57 : vector<2x64x64xf32>
    %59 = math.exp %58 : vector<2x64x64xf32>
    %cst_32 = arith.constant dense<0.000000e+00> : vector<2x64xf32>
    %60 = vector.multi_reduction <add>, %59, %cst_32 [2] : vector<2x64x64xf32> to vector<2x64xf32>
    %61 = vector.shape_cast %60 : vector<2x64xf32> to vector<2x64x1xf32>
    %62 = tpu.reciprocal %61 {approx = true} : vector<2x64x1xf32> -> vector<2x64x1xf32>
    %63 = vector.broadcast %62 : vector<2x64x1xf32> to vector<2x64x64xf32>
    %64 = arith.mulf %59, %63 : vector<2x64x64xf32>
    %65 = arith.truncf %64 : vector<2x64x64xf32> to vector<2x64x64xbf16>
    "tpu.trace_start"() <{level = 10 : i32, message = "bqk,bkd->bqd"}> : () -> ()
    %cst_33 = arith.constant dense<0.000000e+00> : vector<2x64x32xf32>
    %66 = tpu.matmul %65, %50, %cst_33 {dimension_numbers = #tpu.dot_dimension_numbers<[2], [1], [1], [2], [0, 0, 0, 1, 1, 2], [0], [0]>} : vector<2x64x64xbf16>, vector<2x64x32xbf16>, vector<2x64x32xf32> -> vector<2x64x32xf32>
    "tpu.trace_stop"() : () -> ()
    %67 = vector.shape_cast %66 : vector<2x64x32xf32> to vector<128x32xf32>
    %68 = arith.truncf %67 : vector<128x32xf32> to vector<128x32xbf16>
    %c0_34 = arith.constant 0 : index
    %c0_35 = arith.constant 0 : index
    %69 = vector.load %arg9[%c0_34, %c0_35] : memref<32x32xbf16, #tpu.memory_space<vmem>>, vector<32x32xbf16>
    %cst_36 = arith.constant dense<0.000000e+00> : vector<128x32xf32>
    %70 = tpu.matmul %68, %69, %cst_36 {dimension_numbers = #tpu.dot_dimension_numbers<[1], [0], [0], [1], [0, 0, 1, 1], [], []>} : vector<128x32xbf16>, vector<32x32xbf16>, vector<128x32xf32> -> vector<128x32xf32>
    %c0_37 = arith.constant 0 : index
    %c0_38 = arith.constant 0 : index
    %71 = vector.load %arg10[%c0_37, %c0_38] : memref<1x32xf32, #tpu.memory_space<vmem>>, vector<1x32xf32>
    %72 = vector.broadcast %71 : vector<1x32xf32> to vector<128x32xf32>
    %73 = arith.addf %70, %72 : vector<128x32xf32>
    %74 = vector.shape_cast %73 : vector<128x32xf32> to vector<2x64x32xf32>
    %75 = arith.addf %74, %4 : vector<2x64x32xf32>
    %76 = vector.shape_cast %75 : vector<2x64x32xf32> to vector<2x8x8x32xf32>
    %77 = tpu.transpose %76, [1, 0, 2, 3] : vector<2x8x8x32xf32> -> vector<8x2x8x32xf32>
    %78 = vector.shape_cast %77 : vector<8x2x8x32xf32> to vector<8x16x32xf32>
    %c0_39 = arith.constant 0 : index
    %c0_40 = arith.constant 0 : index
    %c0_41 = arith.constant 0 : index
    %c0_42 = arith.constant 0 : index
    %79 = vector.load %arg14[%c0_39, %c0_40, %c0_41, %c0_42] : memref<1x8x16x32xf32, #tpu.memory_space<vmem>>, vector<1x8x16x32xf32>
    %80 = vector.shape_cast %79 : vector<1x8x16x32xf32> to vector<8x16x32xf32>
    %81 = vector.shape_cast %78 : vector<8x16x32xf32> to vector<1x8x16x32xf32>
    tpu.vector_store %arg14[%c0_39, %c0_40, %c0_41, %c0_42], %81 {strides = array<i32>} : memref<1x8x16x32xf32, #tpu.memory_space<vmem>>, vector<1x8x16x32xf32>,
    return
  }
  func.func @transform_0(%arg0: i32, %arg1: i32) -> (i32, i32, i32, i32) {
    %c0_i32 = arith.constant 0 : i32
    %c0_i32_0 = arith.constant 0 : i32
    %c0_i32_1 = arith.constant 0 : i32
    return %arg0, %arg1, %c0_i32, %c0_i32_0 : i32, i32, i32, i32
  }
  func.func @transform_1(%arg0: i32, %arg1: i32) -> (i32, i32) {
    %c0_i32 = arith.constant 0 : i32
    %c0_i32_0 = arith.constant 0 : i32
    %c0_i32_1 = arith.constant 0 : i32
    return %c0_i32, %c0_i32_0 : i32, i32
  }
  func.func @transform_2(%arg0: i32, %arg1: i32) -> (i32, i32) {
    %c0_i32 = arith.constant 0 : i32
    %c0_i32_0 = arith.constant 0 : i32
    %c0_i32_1 = arith.constant 0 : i32
    return %c0_i32, %c0_i32_0 : i32, i32
  }
  func.func @transform_3(%arg0: i32, %arg1: i32) -> (i32, i32) {
    %c0_i32 = arith.constant 0 : i32
    %c0_i32_0 = arith.constant 0 : i32
    %c0_i32_1 = arith.constant 0 : i32
    return %c0_i32, %c0_i32_0 : i32, i32
  }
  func.func @transform_4(%arg0: i32, %arg1: i32) -> (i32, i32) {
    %c0_i32 = arith.constant 0 : i32
    %c0_i32_0 = arith.constant 0 : i32
    %c0_i32_1 = arith.constant 0 : i32
    return %c0_i32, %c0_i32_0 : i32, i32
  }
  func.func @transform_5(%arg0: i32, %arg1: i32) -> (i32, i32) {
    %c0_i32 = arith.constant 0 : i32
    %c0_i32_0 = arith.constant 0 : i32
    %c0_i32_1 = arith.constant 0 : i32
    return %c0_i32, %c0_i32_0 : i32, i32
  }
  func.func @transform_6(%arg0: i32, %arg1: i32) -> (i32, i32) {
    %c0_i32 = arith.constant 0 : i32
    %c0_i32_0 = arith.constant 0 : i32
    %c0_i32_1 = arith.constant 0 : i32
    return %c0_i32, %c0_i32_0 : i32, i32
  }
  func.func @transform_7(%arg0: i32, %arg1: i32) -> (i32, i32) {
    %c0_i32 = arith.constant 0 : i32
    %c0_i32_0 = arith.constant 0 : i32
    %c0_i32_1 = arith.constant 0 : i32
    return %c0_i32, %c0_i32_0 : i32, i32
  }
  func.func @transform_8(%arg0: i32, %arg1: i32) -> (i32, i32) {
    %c0_i32 = arith.constant 0 : i32
    %c0_i32_0 = arith.constant 0 : i32
    %c0_i32_1 = arith.constant 0 : i32
    return %c0_i32, %c0_i32_0 : i32, i32
  }
  func.func @transform_9(%arg0: i32, %arg1: i32) -> (i32, i32) {
    %c0_i32 = arith.constant 0 : i32
    %c0_i32_0 = arith.constant 0 : i32
    %c0_i32_1 = arith.constant 0 : i32
    return %c0_i32, %c0_i32_0 : i32, i32
  }
  func.func @transform_10(%arg0: i32, %arg1: i32) -> (i32, i32) {
    %c0_i32 = arith.constant 0 : i32
    %c0_i32_0 = arith.constant 0 : i32
    %c0_i32_1 = arith.constant 0 : i32
    return %c0_i32, %c0_i32_0 : i32, i32
  }
  func.func @transform_11(%arg0: i32, %arg1: i32) -> (i32, i32, i32, i32) {
    %c0_i32 = arith.constant 0 : i32
    %c0_i32_0 = arith.constant 0 : i32
    %c0_i32_1 = arith.constant 0 : i32
    %c0_i32_2 = arith.constant 0 : i32
    %c0_i32_3 = arith.constant 0 : i32
    return %c0_i32, %c0_i32_0, %c0_i32_1, %c0_i32_2 : i32, i32, i32, i32
  }
  func.func @transform_12(%arg0: i32, %arg1: i32) -> (i32, i32, i32, i32) {
    %c0_i32 = arith.constant 0 : i32
    %c0_i32_0 = arith.constant 0 : i32
    %c0_i32_1 = arith.constant 0 : i32
    return %arg0, %arg1, %c0_i32, %c0_i32_0 : i32, i32, i32, i32
  }
}

module attributes {stable_mosaic.version = 11 : i64} {
  func.func @_mlp_kernel(%arg0: i32, %arg1: memref<256x32xf32, #tpu.memory_space<vmem>>, %arg2: memref<32x128xbf16, #tpu.memory_space<vmem>>, %arg3: memref<1x128xf32, #tpu.memory_space<vmem>>, %arg4: memref<128x32xbf16, #tpu.memory_space<vmem>>, %arg5: memref<1x32xf32, #tpu.memory_space<vmem>>, %arg6: memref<1x32xf32, #tpu.memory_space<vmem>>, %arg7: memref<1x32xf32, #tpu.memory_space<vmem>>, %arg8: memref<256x32xf32, #tpu.memory_space<vmem>>) attributes {dimension_semantics = [#tpu.dimension_semantics<parallel>], iteration_bounds = array<i64: 2>, scalar_prefetch = 0 : i64, scratch_operands = 0 : i64, tpu.core_type = #tpu.core_type<tc>, window_params = [{transform_indices = @transform_0, window_bounds = array<i64: 256, 32>}, {pipeline_mode = #tpu.pipeline_mode<synchronous>, transform_indices = @transform_1, window_bounds = array<i64: 32, 128>}, {pipeline_mode = #tpu.pipeline_mode<synchronous>, transform_indices = @transform_2, window_bounds = array<i64: 1, 128>}, {pipeline_mode = #tpu.pipeline_mode<synchronous>, transform_indices = @transform_3, window_bounds = array<i64: 128, 32>}, {pipeline_mode = #tpu.pipeline_mode<synchronous>, transform_indices = @transform_4, window_bounds = array<i64: 1, 32>}, {pipeline_mode = #tpu.pipeline_mode<synchronous>, transform_indices = @transform_5, window_bounds = array<i64: 1, 32>}, {pipeline_mode = #tpu.pipeline_mode<synchronous>, transform_indices = @transform_6, window_bounds = array<i64: 1, 32>}, {transform_indices = @transform_7, window_bounds = array<i64: 256, 32>}]} {
    %c0 = arith.constant 0 : index
    %c0_0 = arith.constant 0 : index
    %0 = vector.load %arg1[%c0, %c0_0] : memref<256x32xf32, #tpu.memory_space<vmem>>, vector<256x32xf32>
    %cst = arith.constant dense<0.000000e+00> : vector<256xf32>
    %1 = vector.multi_reduction <add>, %0, %cst [1] : vector<256x32xf32> to vector<256xf32>
    %2 = vector.shape_cast %1 : vector<256xf32> to vector<256x1xf32>
    %cst_1 = arith.constant 3.200000e+01 : f32
    %3 = vector.broadcast %cst_1 : f32 to vector<256x1xf32>
    %4 = arith.divf %2, %3 : vector<256x1xf32>
    %5 = vector.broadcast %4 : vector<256x1xf32> to vector<256x32xf32>
    %6 = arith.subf %0, %5 : vector<256x32xf32>
    %7 = arith.mulf %6, %6 : vector<256x32xf32>
    %cst_2 = arith.constant dense<0.000000e+00> : vector<256xf32>
    %8 = vector.multi_reduction <add>, %7, %cst_2 [1] : vector<256x32xf32> to vector<256xf32>
    %9 = vector.shape_cast %8 : vector<256xf32> to vector<256x1xf32>
    %cst_3 = arith.constant 3.200000e+01 : f32
    %10 = vector.broadcast %cst_3 : f32 to vector<256x1xf32>
    %11 = arith.divf %9, %10 : vector<256x1xf32>
    %cst_4 = arith.constant 9.99999974E-6 : f32
    %12 = vector.broadcast %cst_4 : f32 to vector<256x1xf32>
    %13 = arith.addf %11, %12 : vector<256x1xf32>
    %14 = math.rsqrt %13 : vector<256x1xf32>
    %15 = vector.broadcast %14 : vector<256x1xf32> to vector<256x32xf32>
    %16 = arith.mulf %6, %15 : vector<256x32xf32>
    %c0_5 = arith.constant 0 : index
    %c0_6 = arith.constant 0 : index
    %17 = vector.load %arg6[%c0_5, %c0_6] : memref<1x32xf32, #tpu.memory_space<vmem>>, vector<1x32xf32>
    %18 = vector.broadcast %17 : vector<1x32xf32> to vector<256x32xf32>
    %19 = arith.mulf %16, %18 : vector<256x32xf32>
    %c0_7 = arith.constant 0 : index
    %c0_8 = arith.constant 0 : index
    %20 = vector.load %arg7[%c0_7, %c0_8] : memref<1x32xf32, #tpu.memory_space<vmem>>, vector<1x32xf32>
    %21 = vector.broadcast %20 : vector<1x32xf32> to vector<256x32xf32>
    %22 = arith.addf %19, %21 : vector<256x32xf32>
    %23 = arith.truncf %22 : vector<256x32xf32> to vector<256x32xbf16>
    %c0_9 = arith.constant 0 : index
    %c0_10 = arith.constant 0 : index
    %24 = vector.load %arg2[%c0_9, %c0_10] : memref<32x128xbf16, #tpu.memory_space<vmem>>, vector<32x128xbf16>
    %cst_11 = arith.constant dense<0.000000e+00> : vector<256x128xf32>
    %25 = tpu.matmul %23, %24, %cst_11 {dimension_numbers = #tpu.dot_dimension_numbers<[1], [0], [0], [1], [0, 0, 1, 1], [], []>} : vector<256x32xbf16>, vector<32x128xbf16>, vector<256x128xf32> -> vector<256x128xf32>
    %c0_12 = arith.constant 0 : index
    %c0_13 = arith.constant 0 : index
    %26 = vector.load %arg3[%c0_12, %c0_13] : memref<1x128xf32, #tpu.memory_space<vmem>>, vector<1x128xf32>
    %27 = vector.broadcast %26 : vector<1x128xf32> to vector<256x128xf32>
    %28 = arith.addf %25, %27 : vector<256x128xf32>
    %cst_14 = arith.constant 0.000000e+00 : f32
    %29 = vector.broadcast %cst_14 : f32 to vector<256x128xf32>
    %30 = arith.subf %29, %28 : vector<256x128xf32>
    %31 = math.exp %30 : vector<256x128xf32>
    %cst_15 = arith.constant 1.000000e+00 : f32
    %32 = vector.broadcast %cst_15 : f32 to vector<256x128xf32>
    %33 = arith.addf %32, %31 : vector<256x128xf32>
    %34 = tpu.reciprocal %33 {approx = true} : vector<256x128xf32> -> vector<256x128xf32>
    %35 = arith.mulf %28, %34 : vector<256x128xf32>
    %36 = arith.truncf %35 : vector<256x128xf32> to vector<256x128xbf16>
    %c0_16 = arith.constant 0 : index
    %c0_17 = arith.constant 0 : index
    %37 = vector.load %arg4[%c0_16, %c0_17] : memref<128x32xbf16, #tpu.memory_space<vmem>>, vector<128x32xbf16>
    %cst_18 = arith.constant dense<0.000000e+00> : vector<256x32xf32>
    %38 = tpu.matmul %36, %37, %cst_18 {dimension_numbers = #tpu.dot_dimension_numbers<[1], [0], [0], [1], [0, 0, 1, 1], [], []>} : vector<256x128xbf16>, vector<128x32xbf16>, vector<256x32xf32> -> vector<256x32xf32>
    %c0_19 = arith.constant 0 : index
    %c0_20 = arith.constant 0 : index
    %39 = vector.load %arg5[%c0_19, %c0_20] : memref<1x32xf32, #tpu.memory_space<vmem>>, vector<1x32xf32>
    %40 = vector.broadcast %39 : vector<1x32xf32> to vector<256x32xf32>
    %41 = arith.addf %38, %40 : vector<256x32xf32>
    %42 = arith.addf %0, %41 : vector<256x32xf32>
    %c0_21 = arith.constant 0 : index
    %c0_22 = arith.constant 0 : index
    %43 = vector.load %arg8[%c0_21, %c0_22] : memref<256x32xf32, #tpu.memory_space<vmem>>, vector<256x32xf32>
    tpu.vector_store %arg8[%c0_21, %c0_22], %42 {strides = array<i32>} : memref<256x32xf32, #tpu.memory_space<vmem>>, vector<256x32xf32>,
    return
  }
  func.func @transform_0(%arg0: i32) -> (i32, i32) {
    %c0_i32 = arith.constant 0 : i32
    %c0_i32_0 = arith.constant 0 : i32
    return %arg0, %c0_i32 : i32, i32
  }
  func.func @transform_1(%arg0: i32) -> (i32, i32) {
    %c0_i32 = arith.constant 0 : i32
    %c0_i32_0 = arith.constant 0 : i32
    %c0_i32_1 = arith.constant 0 : i32
    return %c0_i32, %c0_i32_0 : i32, i32
  }
  func.func @transform_2(%arg0: i32) -> (i32, i32) {
    %c0_i32 = arith.constant 0 : i32
    %c0_i32_0 = arith.constant 0 : i32
    %c0_i32_1 = arith.constant 0 : i32
    return %c0_i32, %c0_i32_0 : i32, i32
  }
  func.func @transform_3(%arg0: i32) -> (i32, i32) {
    %c0_i32 = arith.constant 0 : i32
    %c0_i32_0 = arith.constant 0 : i32
    %c0_i32_1 = arith.constant 0 : i32
    return %c0_i32, %c0_i32_0 : i32, i32
  }
  func.func @transform_4(%arg0: i32) -> (i32, i32) {
    %c0_i32 = arith.constant 0 : i32
    %c0_i32_0 = arith.constant 0 : i32
    %c0_i32_1 = arith.constant 0 : i32
    return %c0_i32, %c0_i32_0 : i32, i32
  }
  func.func @transform_5(%arg0: i32) -> (i32, i32) {
    %c0_i32 = arith.constant 0 : i32
    %c0_i32_0 = arith.constant 0 : i32
    %c0_i32_1 = arith.constant 0 : i32
    return %c0_i32, %c0_i32_0 : i32, i32
  }
  func.func @transform_6(%arg0: i32) -> (i32, i32) {
    %c0_i32 = arith.constant 0 : i32
    %c0_i32_0 = arith.constant 0 : i32
    %c0_i32_1 = arith.constant 0 : i32
    return %c0_i32, %c0_i32_0 : i32, i32
  }
  func.func @transform_7(%arg0: i32) -> (i32, i32) {
    %c0_i32 = arith.constant 0 : i32
    %c0_i32_0 = arith.constant 0 : i32
    return %arg0, %c0_i32 : i32, i32
  }
}

module attributes {stable_mosaic.version = 11 : i64} {
  func.func @_swin_attn_kernel(%arg0: i32, %arg1: i32, %arg2: memref<1x8x16x32xf32, #tpu.memory_space<vmem>>, %arg3: memref<32x32xbf16, #tpu.memory_space<vmem>>, %arg4: memref<32x32xbf16, #tpu.memory_space<vmem>>, %arg5: memref<32x32xbf16, #tpu.memory_space<vmem>>, %arg6: memref<1x32xf32, #tpu.memory_space<vmem>>, %arg7: memref<1x32xf32, #tpu.memory_space<vmem>>, %arg8: memref<1x32xf32, #tpu.memory_space<vmem>>, %arg9: memref<32x32xbf16, #tpu.memory_space<vmem>>, %arg10: memref<1x32xf32, #tpu.memory_space<vmem>>, %arg11: memref<1x32xf32, #tpu.memory_space<vmem>>, %arg12: memref<1x32xf32, #tpu.memory_space<vmem>>, %arg13: memref<2x1x64x64xf32, #tpu.memory_space<vmem>>, %arg14: memref<1x8x16x32xf32, #tpu.memory_space<vmem>>) attributes {dimension_semantics = [#tpu.dimension_semantics<parallel>, #tpu.dimension_semantics<parallel>], iteration_bounds = array<i64: 2, 2>, scalar_prefetch = 0 : i64, scratch_operands = 0 : i64, tpu.core_type = #tpu.core_type<tc>, window_params = [{transform_indices = @transform_0, window_bounds = array<i64: 1, 8, 16, 32>}, {pipeline_mode = #tpu.pipeline_mode<synchronous>, transform_indices = @transform_1, window_bounds = array<i64: 32, 32>}, {pipeline_mode = #tpu.pipeline_mode<synchronous>, transform_indices = @transform_2, window_bounds = array<i64: 32, 32>}, {pipeline_mode = #tpu.pipeline_mode<synchronous>, transform_indices = @transform_3, window_bounds = array<i64: 32, 32>}, {pipeline_mode = #tpu.pipeline_mode<synchronous>, transform_indices = @transform_4, window_bounds = array<i64: 1, 32>}, {pipeline_mode = #tpu.pipeline_mode<synchronous>, transform_indices = @transform_5, window_bounds = array<i64: 1, 32>}, {pipeline_mode = #tpu.pipeline_mode<synchronous>, transform_indices = @transform_6, window_bounds = array<i64: 1, 32>}, {pipeline_mode = #tpu.pipeline_mode<synchronous>, transform_indices = @transform_7, window_bounds = array<i64: 32, 32>}, {pipeline_mode = #tpu.pipeline_mode<synchronous>, transform_indices = @transform_8, window_bounds = array<i64: 1, 32>}, {pipeline_mode = #tpu.pipeline_mode<synchronous>, transform_indices = @transform_9, window_bounds = array<i64: 1, 32>}, {pipeline_mode = #tpu.pipeline_mode<synchronous>, transform_indices = @transform_10, window_bounds = array<i64: 1, 32>}, {transform_indices = @transform_11, window_bounds = array<i64: 2, 1, 64, 64>}, {transform_indices = @transform_12, window_bounds = array<i64: 1, 8, 16, 32>}]} {
    %c0 = arith.constant 0 : index
    %c0_0 = arith.constant 0 : index
    %c0_1 = arith.constant 0 : index
    %c0_2 = arith.constant 0 : index
    %0 = vector.load %arg2[%c0, %c0_0, %c0_1, %c0_2] : memref<1x8x16x32xf32, #tpu.memory_space<vmem>>, vector<1x8x16x32xf32>
    %1 = vector.shape_cast %0 : vector<1x8x16x32xf32> to vector<8x16x32xf32>
    %2 = vector.shape_cast %1 : vector<8x16x32xf32> to vector<8x2x8x32xf32>
    %3 = tpu.transpose %2, [1, 0, 2, 3] : vector<8x2x8x32xf32> -> vector<2x8x8x32xf32>
    %4 = vector.shape_cast %3 : vector<2x8x8x32xf32> to vector<2x64x32xf32>
    %5 = vector.shape_cast %4 : vector<2x64x32xf32> to vector<128x32xf32>
    %cst = arith.constant dense<0.000000e+00> : vector<128xf32>
    %6 = vector.multi_reduction <add>, %5, %cst [1] : vector<128x32xf32> to vector<128xf32>
    %7 = vector.shape_cast %6 : vector<128xf32> to vector<128x1xf32>
    %cst_3 = arith.constant 3.200000e+01 : f32
    %8 = vector.broadcast %cst_3 : f32 to vector<128x1xf32>
    %9 = arith.divf %7, %8 : vector<128x1xf32>
    %10 = vector.broadcast %9 : vector<128x1xf32> to vector<128x32xf32>
    %11 = arith.subf %5, %10 : vector<128x32xf32>
    %12 = arith.mulf %11, %11 : vector<128x32xf32>
    %cst_4 = arith.constant dense<0.000000e+00> : vector<128xf32>
    %13 = vector.multi_reduction <add>, %12, %cst_4 [1] : vector<128x32xf32> to vector<128xf32>
    %14 = vector.shape_cast %13 : vector<128xf32> to vector<128x1xf32>
    %cst_5 = arith.constant 3.200000e+01 : f32
    %15 = vector.broadcast %cst_5 : f32 to vector<128x1xf32>
    %16 = arith.divf %14, %15 : vector<128x1xf32>
    %cst_6 = arith.constant 9.99999974E-6 : f32
    %17 = vector.broadcast %cst_6 : f32 to vector<128x1xf32>
    %18 = arith.addf %16, %17 : vector<128x1xf32>
    %19 = math.rsqrt %18 : vector<128x1xf32>
    %20 = vector.broadcast %19 : vector<128x1xf32> to vector<128x32xf32>
    %21 = arith.mulf %11, %20 : vector<128x32xf32>
    %c0_7 = arith.constant 0 : index
    %c0_8 = arith.constant 0 : index
    %22 = vector.load %arg11[%c0_7, %c0_8] : memref<1x32xf32, #tpu.memory_space<vmem>>, vector<1x32xf32>
    %23 = vector.broadcast %22 : vector<1x32xf32> to vector<128x32xf32>
    %24 = arith.mulf %21, %23 : vector<128x32xf32>
    %c0_9 = arith.constant 0 : index
    %c0_10 = arith.constant 0 : index
    %25 = vector.load %arg12[%c0_9, %c0_10] : memref<1x32xf32, #tpu.memory_space<vmem>>, vector<1x32xf32>
    %26 = vector.broadcast %25 : vector<1x32xf32> to vector<128x32xf32>
    %27 = arith.addf %24, %26 : vector<128x32xf32>
    %28 = arith.truncf %27 : vector<128x32xf32> to vector<128x32xbf16>
    %c0_11 = arith.constant 0 : index
    %c0_12 = arith.constant 0 : index
    %29 = vector.load %arg3[%c0_11, %c0_12] : memref<32x32xbf16, #tpu.memory_space<vmem>>, vector<32x32xbf16>
    %cst_13 = arith.constant dense<0.000000e+00> : vector<128x32xf32>
    %30 = tpu.matmul %28, %29, %cst_13 {dimension_numbers = #tpu.dot_dimension_numbers<[1], [0], [0], [1], [0, 0, 1, 1], [], []>} : vector<128x32xbf16>, vector<32x32xbf16>, vector<128x32xf32> -> vector<128x32xf32>
    %c0_14 = arith.constant 0 : index
    %c0_15 = arith.constant 0 : index
    %31 = vector.load %arg6[%c0_14, %c0_15] : memref<1x32xf32, #tpu.memory_space<vmem>>, vector<1x32xf32>
    %32 = vector.broadcast %31 : vector<1x32xf32> to vector<128x32xf32>
    %33 = arith.addf %30, %32 : vector<128x32xf32>
    %c0_16 = arith.constant 0 : index
    %c0_17 = arith.constant 0 : index
    %34 = vector.load %arg4[%c0_16, %c0_17] : memref<32x32xbf16, #tpu.memory_space<vmem>>, vector<32x32xbf16>
    %cst_18 = arith.constant dense<0.000000e+00> : vector<128x32xf32>
    %35 = tpu.matmul %28, %34, %cst_18 {dimension_numbers = #tpu.dot_dimension_numbers<[1], [0], [0], [1], [0, 0, 1, 1], [], []>} : vector<128x32xbf16>, vector<32x32xbf16>, vector<128x32xf32> -> vector<128x32xf32>
    %c0_19 = arith.constant 0 : index
    %c0_20 = arith.constant 0 : index
    %36 = vector.load %arg7[%c0_19, %c0_20] : memref<1x32xf32, #tpu.memory_space<vmem>>, vector<1x32xf32>
    %37 = vector.broadcast %36 : vector<1x32xf32> to vector<128x32xf32>
    %38 = arith.addf %35, %37 : vector<128x32xf32>
    %c0_21 = arith.constant 0 : index
    %c0_22 = arith.constant 0 : index
    %39 = vector.load %arg5[%c0_21, %c0_22] : memref<32x32xbf16, #tpu.memory_space<vmem>>, vector<32x32xbf16>
    %cst_23 = arith.constant dense<0.000000e+00> : vector<128x32xf32>
    %40 = tpu.matmul %28, %39, %cst_23 {dimension_numbers = #tpu.dot_dimension_numbers<[1], [0], [0], [1], [0, 0, 1, 1], [], []>} : vector<128x32xbf16>, vector<32x32xbf16>, vector<128x32xf32> -> vector<128x32xf32>
    %c0_24 = arith.constant 0 : index
    %c0_25 = arith.constant 0 : index
    %41 = vector.load %arg8[%c0_24, %c0_25] : memref<1x32xf32, #tpu.memory_space<vmem>>, vector<1x32xf32>
    %42 = vector.broadcast %41 : vector<1x32xf32> to vector<128x32xf32>
    %43 = arith.addf %40, %42 : vector<128x32xf32>
    %44 = vector.shape_cast %33 : vector<128x32xf32> to vector<2x64x32xf32>
    %45 = vector.shape_cast %38 : vector<128x32xf32> to vector<2x64x32xf32>
    %46 = vector.shape_cast %43 : vector<128x32xf32> to vector<2x64x32xf32>
    %c0_26 = arith.constant 0 : index
    %c0_27 = arith.constant 0 : index
    %c0_28 = arith.constant 0 : index
    %c0_29 = arith.constant 0 : index
    %47 = vector.load %arg13[%c0_26, %c0_27, %c0_28, %c0_29] : memref<2x1x64x64xf32, #tpu.memory_space<vmem>>, vector<2x1x64x64xf32>
    %48 = arith.truncf %44 : vector<2x64x32xf32> to vector<2x64x32xbf16>
    %49 = arith.truncf %45 : vector<2x64x32xf32> to vector<2x64x32xbf16>
    %50 = arith.truncf %46 : vector<2x64x32xf32> to vector<2x64x32xbf16>
    "tpu.trace_start"() <{level = 10 : i32, message = "bqd,bkd->bqk"}> : () -> ()
    %cst_30 = arith.constant dense<0.000000e+00> : vector<2x64x64xf32>
    %51 = tpu.matmul %48, %49, %cst_30 {dimension_numbers = #tpu.dot_dimension_numbers<[2], [2], [1], [1], [0, 0, 0, 1, 1, 1], [0], [0]>} : vector<2x64x32xbf16>, vector<2x64x32xbf16>, vector<2x64x64xf32> -> vector<2x64x64xf32>
    "tpu.trace_stop"() : () -> ()
    %52 = vector.shape_cast %47 : vector<2x1x64x64xf32> to vector<2x64x64xf32>
    %53 = arith.addf %51, %52 : vector<2x64x64xf32>
    %cst_31 = arith.constant dense<0xFF800000> : vector<2x64xf32>
    %54 = vector.multi_reduction <maximumf>, %53, %cst_31 [2] : vector<2x64x64xf32> to vector<2x64xf32>
    %55 = vector.shape_cast %54 : vector<2x64xf32> to vector<2x64x1xf32>
    %56 = vector.broadcast %55 : vector<2x64x1xf32> to vector<2x64x64xf32>
    %57 = arith.subf %53, %56 : vector<2x64x64xf32>
    %58 = math.exp %57 : vector<2x64x64xf32>
    %cst_32 = arith.constant dense<0.000000e+00> : vector<2x64xf32>
    %59 = vector.multi_reduction <add>, %58, %cst_32 [2] : vector<2x64x64xf32> to vector<2x64xf32>
    %60 = vector.shape_cast %59 : vector<2x64xf32> to vector<2x64x1xf32>
    %61 = tpu.reciprocal %60 {approx = true} : vector<2x64x1xf32> -> vector<2x64x1xf32>
    %62 = vector.broadcast %61 : vector<2x64x1xf32> to vector<2x64x64xf32>
    %63 = arith.mulf %58, %62 : vector<2x64x64xf32>
    %64 = arith.truncf %63 : vector<2x64x64xf32> to vector<2x64x64xbf16>
    "tpu.trace_start"() <{level = 10 : i32, message = "bqk,bkd->bqd"}> : () -> ()
    %cst_33 = arith.constant dense<0.000000e+00> : vector<2x64x32xf32>
    %65 = tpu.matmul %64, %50, %cst_33 {dimension_numbers = #tpu.dot_dimension_numbers<[2], [1], [1], [2], [0, 0, 0, 1, 1, 2], [0], [0]>} : vector<2x64x64xbf16>, vector<2x64x32xbf16>, vector<2x64x32xf32> -> vector<2x64x32xf32>
    "tpu.trace_stop"() : () -> ()
    %66 = vector.shape_cast %65 : vector<2x64x32xf32> to vector<128x32xf32>
    %67 = arith.truncf %66 : vector<128x32xf32> to vector<128x32xbf16>
    %c0_34 = arith.constant 0 : index
    %c0_35 = arith.constant 0 : index
    %68 = vector.load %arg9[%c0_34, %c0_35] : memref<32x32xbf16, #tpu.memory_space<vmem>>, vector<32x32xbf16>
    %cst_36 = arith.constant dense<0.000000e+00> : vector<128x32xf32>
    %69 = tpu.matmul %67, %68, %cst_36 {dimension_numbers = #tpu.dot_dimension_numbers<[1], [0], [0], [1], [0, 0, 1, 1], [], []>} : vector<128x32xbf16>, vector<32x32xbf16>, vector<128x32xf32> -> vector<128x32xf32>
    %c0_37 = arith.constant 0 : index
    %c0_38 = arith.constant 0 : index
    %70 = vector.load %arg10[%c0_37, %c0_38] : memref<1x32xf32, #tpu.memory_space<vmem>>, vector<1x32xf32>
    %71 = vector.broadcast %70 : vector<1x32xf32> to vector<128x32xf32>
    %72 = arith.addf %69, %71 : vector<128x32xf32>
    %73 = vector.shape_cast %72 : vector<128x32xf32> to vector<2x64x32xf32>
    %74 = arith.addf %73, %4 : vector<2x64x32xf32>
    %75 = vector.shape_cast %74 : vector<2x64x32xf32> to vector<2x8x8x32xf32>
    %76 = tpu.transpose %75, [1, 0, 2, 3] : vector<2x8x8x32xf32> -> vector<8x2x8x32xf32>
    %77 = vector.shape_cast %76 : vector<8x2x8x32xf32> to vector<8x16x32xf32>
    %c0_39 = arith.constant 0 : index
    %c0_40 = arith.constant 0 : index
    %c0_41 = arith.constant 0 : index
    %c0_42 = arith.constant 0 : index
    %78 = vector.load %arg14[%c0_39, %c0_40, %c0_41, %c0_42] : memref<1x8x16x32xf32, #tpu.memory_space<vmem>>, vector<1x8x16x32xf32>
    %79 = vector.shape_cast %78 : vector<1x8x16x32xf32> to vector<8x16x32xf32>
    %80 = vector.shape_cast %77 : vector<8x16x32xf32> to vector<1x8x16x32xf32>
    tpu.vector_store %arg14[%c0_39, %c0_40, %c0_41, %c0_42], %80 {strides = array<i32>} : memref<1x8x16x32xf32, #tpu.memory_space<vmem>>, vector<1x8x16x32xf32>,
    return
  }
  func.func @transform_0(%arg0: i32, %arg1: i32) -> (i32, i32, i32, i32) {
    %c0_i32 = arith.constant 0 : i32
    %c0_i32_0 = arith.constant 0 : i32
    %c0_i32_1 = arith.constant 0 : i32
    return %arg0, %arg1, %c0_i32, %c0_i32_0 : i32, i32, i32, i32
  }
  func.func @transform_1(%arg0: i32, %arg1: i32) -> (i32, i32) {
    %c0_i32 = arith.constant 0 : i32
    %c0_i32_0 = arith.constant 0 : i32
    %c0_i32_1 = arith.constant 0 : i32
    return %c0_i32, %c0_i32_0 : i32, i32
  }
  func.func @transform_2(%arg0: i32, %arg1: i32) -> (i32, i32) {
    %c0_i32 = arith.constant 0 : i32
    %c0_i32_0 = arith.constant 0 : i32
    %c0_i32_1 = arith.constant 0 : i32
    return %c0_i32, %c0_i32_0 : i32, i32
  }
  func.func @transform_3(%arg0: i32, %arg1: i32) -> (i32, i32) {
    %c0_i32 = arith.constant 0 : i32
    %c0_i32_0 = arith.constant 0 : i32
    %c0_i32_1 = arith.constant 0 : i32
    return %c0_i32, %c0_i32_0 : i32, i32
  }
  func.func @transform_4(%arg0: i32, %arg1: i32) -> (i32, i32) {
    %c0_i32 = arith.constant 0 : i32
    %c0_i32_0 = arith.constant 0 : i32
    %c0_i32_1 = arith.constant 0 : i32
    return %c0_i32, %c0_i32_0 : i32, i32
  }
  func.func @transform_5(%arg0: i32, %arg1: i32) -> (i32, i32) {
    %c0_i32 = arith.constant 0 : i32
    %c0_i32_0 = arith.constant 0 : i32
    %c0_i32_1 = arith.constant 0 : i32
    return %c0_i32, %c0_i32_0 : i32, i32
  }
  func.func @transform_6(%arg0: i32, %arg1: i32) -> (i32, i32) {
    %c0_i32 = arith.constant 0 : i32
    %c0_i32_0 = arith.constant 0 : i32
    %c0_i32_1 = arith.constant 0 : i32
    return %c0_i32, %c0_i32_0 : i32, i32
  }
  func.func @transform_7(%arg0: i32, %arg1: i32) -> (i32, i32) {
    %c0_i32 = arith.constant 0 : i32
    %c0_i32_0 = arith.constant 0 : i32
    %c0_i32_1 = arith.constant 0 : i32
    return %c0_i32, %c0_i32_0 : i32, i32
  }
  func.func @transform_8(%arg0: i32, %arg1: i32) -> (i32, i32) {
    %c0_i32 = arith.constant 0 : i32
    %c0_i32_0 = arith.constant 0 : i32
    %c0_i32_1 = arith.constant 0 : i32
    return %c0_i32, %c0_i32_0 : i32, i32
  }
  func.func @transform_9(%arg0: i32, %arg1: i32) -> (i32, i32) {
    %c0_i32 = arith.constant 0 : i32
    %c0_i32_0 = arith.constant 0 : i32
    %c0_i32_1 = arith.constant 0 : i32
    return %c0_i32, %c0_i32_0 : i32, i32
  }
  func.func @transform_10(%arg0: i32, %arg1: i32) -> (i32, i32) {
    %c0_i32 = arith.constant 0 : i32
    %c0_i32_0 = arith.constant 0 : i32
    %c0_i32_1 = arith.constant 0 : i32
    return %c0_i32, %c0_i32_0 : i32, i32
  }
  func.func @transform_11(%arg0: i32, %arg1: i32) -> (i32, i32, i32, i32) {
    %c0_i32 = arith.constant 0 : i32
    %c0_i32_0 = arith.constant 0 : i32
    %c0_i32_1 = arith.constant 0 : i32
    %c0_i32_2 = arith.constant 0 : i32
    return %arg1, %c0_i32, %c0_i32_0, %c0_i32_1 : i32, i32, i32, i32
  }
  func.func @transform_12(%arg0: i32, %arg1: i32) -> (i32, i32, i32, i32) {
    %c0_i32 = arith.constant 0 : i32
    %c0_i32_0 = arith.constant 0 : i32
    %c0_i32_1 = arith.constant 0 : i32
    return %arg0, %arg1, %c0_i32, %c0_i32_0 : i32, i32, i32, i32
  }
}

module attributes {stable_mosaic.version = 11 : i64} {
  func.func @_cv3_kernel(%arg0: i32, %arg1: memref<256x32xf32, #tpu.memory_space<vmem>>, %arg2: memref<256x32xf32, #tpu.memory_space<vmem>>, %arg3: memref<32x64xbf16, #tpu.memory_space<vmem>>, %arg4: memref<32x64xbf16, #tpu.memory_space<vmem>>, %arg5: memref<1x64xf32, #tpu.memory_space<vmem>>, %arg6: memref<256x64xf32, #tpu.memory_space<vmem>>) attributes {dimension_semantics = [#tpu.dimension_semantics<parallel>], iteration_bounds = array<i64: 2>, scalar_prefetch = 0 : i64, scratch_operands = 0 : i64, tpu.core_type = #tpu.core_type<tc>, window_params = [{transform_indices = @transform_0, window_bounds = array<i64: 256, 32>}, {transform_indices = @transform_1, window_bounds = array<i64: 256, 32>}, {pipeline_mode = #tpu.pipeline_mode<synchronous>, transform_indices = @transform_2, window_bounds = array<i64: 32, 64>}, {pipeline_mode = #tpu.pipeline_mode<synchronous>, transform_indices = @transform_3, window_bounds = array<i64: 32, 64>}, {pipeline_mode = #tpu.pipeline_mode<synchronous>, transform_indices = @transform_4, window_bounds = array<i64: 1, 64>}, {transform_indices = @transform_5, window_bounds = array<i64: 256, 64>}]} {
    %c0 = arith.constant 0 : index
    %c0_0 = arith.constant 0 : index
    %0 = vector.load %arg1[%c0, %c0_0] : memref<256x32xf32, #tpu.memory_space<vmem>>, vector<256x32xf32>
    %1 = arith.truncf %0 : vector<256x32xf32> to vector<256x32xbf16>
    %c0_1 = arith.constant 0 : index
    %c0_2 = arith.constant 0 : index
    %2 = vector.load %arg3[%c0_1, %c0_2] : memref<32x64xbf16, #tpu.memory_space<vmem>>, vector<32x64xbf16>
    %cst = arith.constant dense<0.000000e+00> : vector<256x64xf32>
    %3 = tpu.matmul %1, %2, %cst {dimension_numbers = #tpu.dot_dimension_numbers<[1], [0], [0], [1], [0, 0, 1, 1], [], []>} : vector<256x32xbf16>, vector<32x64xbf16>, vector<256x64xf32> -> vector<256x64xf32>
    %c0_3 = arith.constant 0 : index
    %c0_4 = arith.constant 0 : index
    %4 = vector.load %arg2[%c0_3, %c0_4] : memref<256x32xf32, #tpu.memory_space<vmem>>, vector<256x32xf32>
    %5 = arith.truncf %4 : vector<256x32xf32> to vector<256x32xbf16>
    %c0_5 = arith.constant 0 : index
    %c0_6 = arith.constant 0 : index
    %6 = vector.load %arg4[%c0_5, %c0_6] : memref<32x64xbf16, #tpu.memory_space<vmem>>, vector<32x64xbf16>
    %cst_7 = arith.constant dense<0.000000e+00> : vector<256x64xf32>
    %7 = tpu.matmul %5, %6, %cst_7 {dimension_numbers = #tpu.dot_dimension_numbers<[1], [0], [0], [1], [0, 0, 1, 1], [], []>} : vector<256x32xbf16>, vector<32x64xbf16>, vector<256x64xf32> -> vector<256x64xf32>
    %8 = arith.addf %3, %7 : vector<256x64xf32>
    %c0_8 = arith.constant 0 : index
    %c0_9 = arith.constant 0 : index
    %9 = vector.load %arg5[%c0_8, %c0_9] : memref<1x64xf32, #tpu.memory_space<vmem>>, vector<1x64xf32>
    %10 = vector.broadcast %9 : vector<1x64xf32> to vector<256x64xf32>
    %11 = arith.addf %8, %10 : vector<256x64xf32>
    %cst_10 = arith.constant 0.000000e+00 : f32
    %12 = vector.broadcast %cst_10 : f32 to vector<256x64xf32>
    %13 = arith.subf %12, %11 : vector<256x64xf32>
    %14 = math.exp %13 : vector<256x64xf32>
    %cst_11 = arith.constant 1.000000e+00 : f32
    %15 = vector.broadcast %cst_11 : f32 to vector<256x64xf32>
    %16 = arith.addf %15, %14 : vector<256x64xf32>
    %17 = tpu.reciprocal %16 {approx = true} : vector<256x64xf32> -> vector<256x64xf32>
    %18 = arith.mulf %11, %17 : vector<256x64xf32>
    %c0_12 = arith.constant 0 : index
    %c0_13 = arith.constant 0 : index
    %19 = vector.load %arg6[%c0_12, %c0_13] : memref<256x64xf32, #tpu.memory_space<vmem>>, vector<256x64xf32>
    tpu.vector_store %arg6[%c0_12, %c0_13], %18 {strides = array<i32>} : memref<256x64xf32, #tpu.memory_space<vmem>>, vector<256x64xf32>,
    return
  }
  func.func @transform_0(%arg0: i32) -> (i32, i32) {
    %c0_i32 = arith.constant 0 : i32
    %c0_i32_0 = arith.constant 0 : i32
    return %arg0, %c0_i32 : i32, i32
  }
  func.func @transform_1(%arg0: i32) -> (i32, i32) {
    %c0_i32 = arith.constant 0 : i32
    %c0_i32_0 = arith.constant 0 : i32
    return %arg0, %c0_i32 : i32, i32
  }
  func.func @transform_2(%arg0: i32) -> (i32, i32) {
    %c0_i32 = arith.constant 0 : i32
    %c0_i32_0 = arith.constant 0 : i32
    %c0_i32_1 = arith.constant 0 : i32
    return %c0_i32, %c0_i32_0 : i32, i32
  }
  func.func @transform_3(%arg0: i32) -> (i32, i32) {
    %c0_i32 = arith.constant 0 : i32
    %c0_i32_0 = arith.constant 0 : i32
    %c0_i32_1 = arith.constant 0 : i32
    return %c0_i32, %c0_i32_0 : i32, i32
  }
  func.func @transform_4(%arg0: i32) -> (i32, i32) {
    %c0_i32 = arith.constant 0 : i32
    %c0_i32_0 = arith.constant 0 : i32
    %c0_i32_1 = arith.constant 0 : i32
    return %c0_i32, %c0_i32_0 : i32, i32
  }
  func.func @transform_5(%arg0: i32) -> (i32, i32) {
    %c0_i32 = arith.constant 0 : i32
    %c0_i32_0 = arith.constant 0 : i32
    return %arg0, %c0_i32 : i32, i32
  }
}

</mosaic_0001>

<llo_original>
// kernel: stcspa_forward.6
$region0: #{stcspa_forward.6}
  #allocation0 [shape = 'u32[]', space=smem, size = 0x4, offset = 0x4, fixed_abs, tag = 'smem constant byte address 0x4 - core index']
  #allocation1 [shape = 'u32[144,128]{1,0:T(1,128)}', space=vmem, size = 0x12000, scoped, tag = 'internal scratch']
  %s0 = inlined_call_operand.vmem [shape: bf16[512,64], index: 0, kind: input, shape index: {}]
  %s1 = inlined_call_operand.vmem [shape: bf16[64,32], index: 1, kind: input, shape index: {}]
  %s2 = inlined_call_operand.vmem [shape: f32[1,32], index: 2, kind: input, shape index: {}]
  %s3 = inlined_call_operand.vmem [shape: bf16[64,32], index: 3, kind: input, shape index: {}]
  %s4 = inlined_call_operand.vmem [shape: f32[1,32], index: 4, kind: input, shape index: {}]
  %s5 = inlined_call_operand.vmem [shape: f32[512,32], index: 5, kind: output, shape index: {0}]
  %s6 = inlined_call_operand.vmem [shape: f32[512,32], index: 6, kind: output, shape index: {1}]
  %7 = xla_tuple %s5, %s6
  %s8 = sld [smem:[#allocation0]]
  $region61: #{stcspa_forward.6} parent=0
    _
  %s10 = ssub.s32 1, %s8
  %s11 = scalar_select 0, %s10, %s8
  loop: start=0, step=1, limit=4
  $region2: #{stcspa_forward.6} parent=0 // loop_pre_header
    _
  $region3: #{stcspa_forward.6} parent=0 // loop_header
    %s13 = sphi 0, %s17
    %p14 = scmp.ge.s32.totalorder %s13, 4
    %s23 = sphi 0, %s25
    %s26 = sphi 0, %s23
    %s27 = sphi 0, %s26
    %s43 = sphi 0, %s27
    %s47 = sphi 0, %s47
    %s49 = sphi 0, %s47
    %s50 = sphi 0, %s49
    %s64 = sphi 0, %s50
    %s68 = sphi 0, %s68
    %s70 = sphi 0, %s68
    %s71 = sphi 0, %s70
    %s85 = sphi 0, %s71
    %s89 = sphi 0, %s89
    %s91 = sphi 0, %s89
    %s92 = sphi 0, %s91
    %s106 = sphi 0, %s92
    %s110 = sphi 0, %s110
    %s112 = sphi 0, %s110
    %s113 = sphi 0, %s112
    %s127 = sphi 0, %s113
    %s133 = sphi 0, %s135
    %s136 = sphi 0, %s133
    %s137 = sphi 0, %s136
    %s153 = sphi 0, %s137
    %s159 = sphi 0, %s161
    %s162 = sphi 0, %s159
    %s163 = sphi 0, %s162
    %s179 = sphi 0, %s163
  $region4: #{stcspa_forward.6} parent=0 // loop_header_branch
    %16 = sbr.rel (%p14) target = $region8
  $region5: #{stcspa_forward.6} parent=0 // loop_body
    %s18 = ssub.s32 %s13, 1
    %s19 = ssub.s32 %s13, 2
    %s20 = sadd.s32 %s13, 1
    %s21 = ssub.s32 %s13, %s20
    %p22 = scmp.eq.s32.totalorder %s21, 0
    %s24 = sadd.s32 %s23, 1
    %s25 = scalar_select %p22, %s23, %s24
    %p28 = pneg %p22
    %p29 = scmp.eq.s32.totalorder %s13, 1
    %p30 = por %p28, %p29
    %p31 = scmp.ne.s32.totalorder %s23, %s26
    %p32 = scmp.eq.s32.totalorder %s13, 0
    %p33 = por %p31, %p32
    %p34 = scmp.ne.s32.totalorder %s23, %s26
    %p35 = scmp.eq.s32.totalorder %s18, 1
    %p36 = por %p34, %p35
    %p37 = scmp.ne.s32.totalorder %s26, %s27
    %p38 = scmp.eq.s32.totalorder %s18, 0
    %p39 = por %p37, %p38
    %p40 = scmp.ne.s32.totalorder %s26, %s27
    %p41 = scmp.eq.s32.totalorder %s19, 1
    %p42 = por %p40, %p41
    %p44 = scmp.ne.s32.totalorder %s27, %s43
    %p45 = scmp.eq.s32.totalorder %s19, 0
    %p46 = por %p44, %p45
    %s48 = sadd.s32 %s47, 1
    %p51 = scmp.eq.s32.totalorder %s13, 1
    %p52 = scmp.ne.s32.totalorder %s47, %s49
    %p53 = scmp.eq.s32.totalorder %s13, 0
    %p54 = por %p52, %p53
    %p55 = scmp.ne.s32.totalorder %s47, %s49
    %p56 = scmp.eq.s32.totalorder %s18, 1
    %p57 = por %p55, %p56
    %p58 = scmp.ne.s32.totalorder %s49, %s50
    %p59 = scmp.eq.s32.totalorder %s18, 0
    %p60 = por %p58, %p59
    %p61 = scmp.ne.s32.totalorder %s49, %s50
    %p62 = scmp.eq.s32.totalorder %s19, 1
    %p63 = por %p61, %p62
    %p65 = scmp.ne.s32.totalorder %s50, %s64
    %p66 = scmp.eq.s32.totalorder %s19, 0
    %p67 = por %p65, %p66
    %s69 = sadd.s32 %s68, 1
    %p72 = scmp.eq.s32.totalorder %s13, 1
    %p73 = scmp.ne.s32.totalorder %s68, %s70
    %p74 = scmp.eq.s32.totalorder %s13, 0
    %p75 = por %p73, %p74
    %p76 = scmp.ne.s32.totalorder %s68, %s70
    %p77 = scmp.eq.s32.totalorder %s18, 1
    %p78 = por %p76, %p77
    %p79 = scmp.ne.s32.totalorder %s70, %s71
    %p80 = scmp.eq.s32.totalorder %s18, 0
    %p81 = por %p79, %p80
    %p82 = scmp.ne.s32.totalorder %s70, %s71
    %p83 = scmp.eq.s32.totalorder %s19, 1
    %p84 = por %p82, %p83
    %p86 = scmp.ne.s32.totalorder %s71, %s85
    %p87 = scmp.eq.s32.totalorder %s19, 0
    %p88 = por %p86, %p87
    %s90 = sadd.s32 %s89, 1
    %p93 = scmp.eq.s32.totalorder %s13, 1
    %p94 = scmp.ne.s32.totalorder %s89, %s91
    %p95 = scmp.eq.s32.totalorder %s13, 0
    %p96 = por %p94, %p95
    %p97 = scmp.ne.s32.totalorder %s89, %s91
    %p98 = scmp.eq.s32.totalorder %s18, 1
    %p99 = por %p97, %p98
    %p100 = scmp.ne.s32.totalorder %s91, %s92
    %p101 = scmp.eq.s32.totalorder %s18, 0
    %p102 = por %p100, %p101
    %p103 = scmp.ne.s32.totalorder %s91, %s92
    %p104 = scmp.eq.s32.totalorder %s19, 1
    %p105 = por %p103, %p104
    %p107 = scmp.ne.s32.totalorder %s92, %s106
    %p108 = scmp.eq.s32.totalorder %s19, 0
    %p109 = por %p107, %p108
    %s111 = sadd.s32 %s110, 1
    %p114 = scmp.eq.s32.totalorder %s13, 1
    %p115 = scmp.ne.s32.totalorder %s110, %s112
    %p116 = scmp.eq.s32.totalorder %s13, 0
    %p117 = por %p115, %p116
    %p118 = scmp.ne.s32.totalorder %s110, %s112
    %p119 = scmp.eq.s32.totalorder %s18, 1
    %p120 = por %p118, %p119
    %p121 = scmp.ne.s32.totalorder %s112, %s113
    %p122 = scmp.eq.s32.totalorder %s18, 0
    %p123 = por %p121, %p122
    %p124 = scmp.ne.s32.totalorder %s112, %s113
    %p125 = scmp.eq.s32.totalorder %s19, 1
    %p126 = por %p124, %p125
    %p128 = scmp.ne.s32.totalorder %s113, %s127
    %p129 = scmp.eq.s32.totalorder %s19, 0
    %p130 = por %p128, %p129
    %s131 = ssub.s32 %s13, %s20
    %p132 = scmp.eq.s32.totalorder %s131, 0
    %s134 = sadd.s32 %s133, 1
    %s135 = scalar_select %p132, %s133, %s134
    %p138 = pneg %p132
    %p139 = scmp.eq.s32.totalorder %s13, 1
    %p140 = por %p138, %p139
    %p141 = scmp.ne.s32.totalorder %s133, %s136
    %p142 = scmp.eq.s32.totalorder %s13, 0
    %p143 = por %p141, %p142
    %p144 = scmp.ne.s32.totalorder %s133, %s136
    %p145 = scmp.eq.s32.totalorder %s18, 1
    %p146 = por %p144, %p145
    %p147 = scmp.ne.s32.totalorder %s136, %s137
    %p148 = scmp.eq.s32.totalorder %s18, 0
    %p149 = por %p147, %p148
    %p150 = scmp.ne.s32.totalorder %s136, %s137
    %p151 = scmp.eq.s32.totalorder %s19, 1
    %p152 = por %p150, %p151
    %p154 = scmp.ne.s32.totalorder %s137, %s153
    %p155 = scmp.eq.s32.totalorder %s19, 0
    %p156 = por %p154, %p155
    %s157 = ssub.s32 %s13, %s20
    %p158 = scmp.eq.s32.totalorder %s157, 0
    %s160 = sadd.s32 %s159, 1
    %s161 = scalar_select %p158, %s159, %s160
    %p164 = pneg %p158
    %p165 = scmp.eq.s32.totalorder %s13, 1
    %p166 = por %p164, %p165
    %p167 = scmp.ne.s32.totalorder %s159, %s162
    %p168 = scmp.eq.s32.totalorder %s13, 0
    %p169 = por %p167, %p168
    %p170 = scmp.ne.s32.totalorder %s159, %s162
    %p171 = scmp.eq.s32.totalorder %s18, 1
    %p172 = por %p170, %p171
    %p173 = scmp.ne.s32.totalorder %s162, %s163
    %p174 = scmp.eq.s32.totalorder %s18, 0
    %p175 = por %p173, %p174
    %p176 = scmp.ne.s32.totalorder %s162, %s163
    %p177 = scmp.eq.s32.totalorder %s19, 1
    %p178 = por %p176, %p177
    %p180 = scmp.ne.s32.totalorder %s163, %s179
    %p181 = scmp.eq.s32.totalorder %s19, 0
    %p182 = por %p180, %p181
    %p183 = scmp.le.s32.totalorder 1, %s13
    %p184 = scmp.lt.s32.totalorder %s13, 3
    %p185 = pnand %p183, %p184
    %p186 = pneg %p185
    // Predicated region
    $region9: #{stcspa_forward.6} parent=5 // pred_check
      _
    $region10: #{stcspa_forward.6} parent=5 // pred_check_branch
      %188 = sbr.rel (%p185) target = $region12
    $region11: #{stcspa_forward.6} parent=5 // pred_region
      %s189 = ssub.s32 %s13, 1
      // Predicated region
      $region13: #{stcspa_forward.6} parent=11 // pred_check
        %p190 = pneg %p60
      $region14: #{stcspa_forward.6} parent=11 // pred_check_branch
        %192 = sbr.rel (%p190) target = $region16
      $region15: #{stcspa_forward.6} parent=11 // pred_region
        _
      $region16: #{stcspa_forward.6} parent=11 // pred_fallthru
        _
      // Predicated region
      $region17: #{stcspa_forward.6} parent=11 // pred_check
        %p193 = pneg %p81
      $region18: #{stcspa_forward.6} parent=11 // pred_check_branch
        %195 = sbr.rel (%p193) target = $region20
      $region19: #{stcspa_forward.6} parent=11 // pred_region
        _
      $region20: #{stcspa_forward.6} parent=11 // pred_fallthru
        _
      // Predicated region
      $region21: #{stcspa_forward.6} parent=11 // pred_check
        %p196 = pneg %p102
      $region22: #{stcspa_forward.6} parent=11 // pred_check_branch
        %198 = sbr.rel (%p196) target = $region24
      $region23: #{stcspa_forward.6} parent=11 // pred_region
        _
      $region24: #{stcspa_forward.6} parent=11 // pred_fallthru
        _
      // Predicated region
      $region25: #{stcspa_forward.6} parent=11 // pred_check
        %p199 = pneg %p123
      $region26: #{stcspa_forward.6} parent=11 // pred_check_branch
        %201 = sbr.rel (%p199) target = $region28
      $region27: #{stcspa_forward.6} parent=11 // pred_region
        _
      $region28: #{stcspa_forward.6} parent=11 // pred_fallthru
        _
    $region12: #{stcspa_forward.6} parent=5 // pred_fallthru
      _
    %p202 = scmp.lt.s32.totalorder %s13, 2
    // Predicated region
    $region29: #{stcspa_forward.6} parent=5 // pred_check
      %p203 = pneg %p202
    $region30: #{stcspa_forward.6} parent=5 // pred_check_branch
      %205 = sbr.rel (%p203) target = $region32
    $region31: #{stcspa_forward.6} parent=5 // pred_region
      // Predicated region
      $region33: #{stcspa_forward.6} parent=31 // pred_check
        %p206 = pneg %p33
      $region34: #{stcspa_forward.6} parent=31 // pred_check_branch
        %208 = sbr.rel (%p206) target = $region36
      $region35: #{stcspa_forward.6} parent=31 // pred_region
        %s209 = smul.u32 32, %s13
        %p210 = scmp.lt.s32.totalorder %s209, 63
        %s211 = scalar_select %p210, %s209, 63
        %s212 = smul.addr %s211, 4
        %s213 = scalar_lea.vmem %s0, %s212
        %s214 = smul.u32 32, %s13
      $region36: #{stcspa_forward.6} parent=31 // pred_fallthru
        _
    $region32: #{stcspa_forward.6} parent=5 // pred_fallthru
      _
    %p215 = scmp.le.s32.totalorder 1, %s13
    %p216 = scmp.lt.s32.totalorder %s13, 3
    %p217 = pnand %p215, %p216
    %p218 = pneg %p217
    // Predicated region
    $region37: #{stcspa_forward.6} parent=5 // pred_check
      _
    $region38: #{stcspa_forward.6} parent=5 // pred_check_branch
      %220 = sbr.rel (%p217) target = $region40
    $region39: #{stcspa_forward.6} parent=5 // pred_region
      %s221 = ssub.s32 %s13, 1
      %s222 = smul.u32 32, %s18
      %p223 = scmp.lt.s32.totalorder %s222, 63
      %s224 = scalar_select %p223, %s222, 63
      %s225 = smul.addr %s224, 4
      %s226 = scalar_lea.vmem %s0, %s225
      %p227 = pneg %p39
      %p228 = pneg %p36
      %p229 = pneg %p60
      %p230 = pneg %p57
      %p231 = pneg %p81
      %p232 = pneg %p78
      %p233 = pneg %p102
      %p234 = pneg %p99
      %p235 = pneg %p123
      %p236 = pneg %p120
      %p237 = pneg %p149
      %p238 = pneg %p146
      %s239 = smul.u32 32, %s18
      %p240 = scmp.lt.s32.totalorder %s239, 63
      %s241 = scalar_select %p240, %s239, 63
      %s242 = smul.addr %s241, 8
      %s243 = scalar_lea.vmem %s5, %s242
      %p244 = pneg %p175
      %p245 = pneg %p172
      %s246 = smul.u32 32, %s18
      %p247 = scmp.lt.s32.totalorder %s246, 63
      %s248 = scalar_select %p247, %s246, 63
      %s249 = smul.addr %s248, 8
      %s250 = scalar_lea.vmem %s6, %s249
      %s251 = smul.u32 32, %s18
      %p252 = scmp.lt.s32.totalorder %s251, 63
      %s253 = scalar_select %p252, %s251, 63
      %s254 = smul.addr %s253, 4
      %s255 = scalar_lea.vmem %s0, %s254
      %s256 = smul.u32 32, %s18
      %s257 = smul.u32 32, %s18
      %p258 = scmp.lt.s32.totalorder %s257, 63
      %s259 = scalar_select %p258, %s257, 63
      %s260 = smul.addr %s259, 8
      %s261 = scalar_lea.vmem %s5, %s260
      %s262 = smul.u32 32, %s18
      %s263 = smul.u32 32, %s18
      %p264 = scmp.lt.s32.totalorder %s263, 63
      %s265 = scalar_select %p264, %s263, 63
      %s266 = smul.addr %s265, 8
      %s267 = scalar_lea.vmem %s6, %s266
      %s268 = smul.u32 32, %s18
      %v270 = vld [vmem:[%s255] sm:$0xf]
      %v271 = vld [vmem:[%s255 + $0x4] sm:$0xf]
      %v272 = vld [vmem:[%s255 + $0x8] sm:$0xf]
      %v273 = vld [vmem:[%s255 + $0xc] sm:$0xf]
      %v274 = vld [vmem:[%s255 + $0x10] sm:$0xf]
      %v275 = vld [vmem:[%s255 + $0x14] sm:$0xf]
      %v276 = vld [vmem:[%s255 + $0x18] sm:$0xf]
      %v277 = vld [vmem:[%s255 + $0x1c] sm:$0xf]
      %v278 = vld [vmem:[%s255 + $0x20] sm:$0xf]
      %v279 = vld [vmem:[%s255 + $0x24] sm:$0xf]
      %v280 = vld [vmem:[%s255 + $0x28] sm:$0xf]
      %v281 = vld [vmem:[%s255 + $0x2c] sm:$0xf]
      %v282 = vld [vmem:[%s255 + $0x30] sm:$0xf]
      %v283 = vld [vmem:[%s255 + $0x34] sm:$0xf]
      %v284 = vld [vmem:[%s255 + $0x38] sm:$0xf]
      %v285 = vld [vmem:[%s255 + $0x3c] sm:$0xf]
      %v286 = vld [vmem:[%s255 + $0x40] sm:$0xf]
      %v287 = vld [vmem:[%s255 + $0x44] sm:$0xf]
      %v288 = vld [vmem:[%s255 + $0x48] sm:$0xf]
      %v289 = vld [vmem:[%s255 + $0x4c] sm:$0xf]
      %v290 = vld [vmem:[%s255 + $0x50] sm:$0xf]
      %v291 = vld [vmem:[%s255 + $0x54] sm:$0xf]
      %v292 = vld [vmem:[%s255 + $0x58] sm:$0xf]
      %v293 = vld [vmem:[%s255 + $0x5c] sm:$0xf]
      %v294 = vld [vmem:[%s255 + $0x60] sm:$0xf]
      %v295 = vld [vmem:[%s255 + $0x64] sm:$0xf]
      %v296 = vld [vmem:[%s255 + $0x68] sm:$0xf]
      %v297 = vld [vmem:[%s255 + $0x6c] sm:$0xf]
      %v298 = vld [vmem:[%s255 + $0x70] sm:$0xf]
      %v299 = vld [vmem:[%s255 + $0x74] sm:$0xf]
      %v300 = vld [vmem:[%s255 + $0x78] sm:$0xf]
      %v301 = vld [vmem:[%s255 + $0x7c] sm:$0xf]
      %v302 = vld [vmem:[%s1] sm:$0xf]
      %v303 = vld [vmem:[%s1 + $0x4] sm:$0xf]
      %v304 = vld [vmem:[%s1 + $0x8] sm:$0xf]
      %v305 = vld [vmem:[%s1 + $0xc] sm:$0xf]
      %v306 = vld [vmem:[%s1 + $0x10] sm:$0xf]
      %v307 = vld [vmem:[%s1 + $0x14] sm:$0xf]
      %v308 = vld [vmem:[%s1 + $0x18] sm:$0xf]
      %v309 = vld [vmem:[%s1 + $0x1c] sm:$0xf]
      %v310 = vld [vmem:[%s2] sm:$0x1]
      %v312 = vlaneseq
      %v313 = vshrl.u32 %v312, 7
      %v314 = vsub.s32 0, %v313
      %v315 = vrot.slane %v310, %v314
      %v349 = vunpack.c.l.b16 %v270
      %v350 = vunpack.c.l.b16 %v271
      %v351 = vunpack.c.l.b16 %v272
      %v352 = vunpack.c.l.b16 %v273
      %v353 = vunpack.c.l.b16 %v274
      %v354 = vunpack.c.l.b16 %v275
      %v355 = vunpack.c.l.b16 %v276
      %v356 = vunpack.c.l.b16 %v277
      %v357 = vunpack.c.l.b16 %v278
      %v358 = vunpack.c.l.b16 %v279
      %v359 = vunpack.c.l.b16 %v280
      %v360 = vunpack.c.l.b16 %v281
      %v361 = vunpack.c.l.b16 %v282
      %v362 = vunpack.c.l.b16 %v283
      %v363 = vunpack.c.l.b16 %v284
      %v364 = vunpack.c.l.b16 %v285
      %v365 = vunpack.c.l.b16 %v286
      %v366 = vunpack.c.l.b16 %v287
      %v367 = vunpack.c.l.b16 %v288
      %v368 = vunpack.c.l.b16 %v289
      %v369 = vunpack.c.l.b16 %v290
      %v370 = vunpack.c.l.b16 %v291
      %v371 = vunpack.c.l.b16 %v292
      %v372 = vunpack.c.l.b16 %v293
      %v373 = vunpack.c.l.b16 %v294
      %v374 = vunpack.c.l.b16 %v295
      %v375 = vunpack.c.l.b16 %v296
      %v376 = vunpack.c.l.b16 %v297
      %v377 = vunpack.c.l.b16 %v298
      %v378 = vunpack.c.l.b16 %v299
      %v379 = vunpack.c.l.b16 %v300
      %v380 = vunpack.c.l.b16 %v301
      %v381 = vpack.c.b16 %v350, %v349
      %v382 = vpack.c.b16 %v352, %v351
      %v383 = vpack.c.b16 %v354, %v353
      %v384 = vpack.c.b16 %v356, %v355
      %v385 = vpack.c.b16 %v358, %v357
      %v386 = vpack.c.b16 %v360, %v359
      %v387 = vpack.c.b16 %v362, %v361
      %v388 = vpack.c.b16 %v364, %v363
      %v389 = vpack.c.b16 %v366, %v365
      %v390 = vpack.c.b16 %v368, %v367
      %v391 = vpack.c.b16 %v370, %v369
      %v392 = vpack.c.b16 %v372, %v371
      %v393 = vpack.c.b16 %v374, %v373
      %v394 = vpack.c.b16 %v376, %v375
      %v395 = vpack.c.b16 %v378, %v377
      %v396 = vpack.c.b16 %v380, %v379
      %v405 = vunpack.c.l.b16 %v302
      %v406 = vunpack.c.l.b16 %v303
      %v407 = vunpack.c.l.b16 %v304
      %v408 = vunpack.c.l.b16 %v305
      %v409 = vunpack.c.l.b16 %v306
      %v410 = vunpack.c.l.b16 %v307
      %v411 = vunpack.c.l.b16 %v308
      %v412 = vunpack.c.l.b16 %v309
      %v413 = vpack.c.b16 %v406, %v405
      %v414 = vpack.c.b16 %v408, %v407
      %v415 = vpack.c.b16 %v410, %v409
      %v416 = vpack.c.b16 %v412, %v411
      %vm421 = vcmask 523264
      %v423 = vsel %vm421, %v381, 0
      %v426 = vsel %vm421, %v382, 0
      %v429 = vsel %vm421, %v383, 0
      %v432 = vsel %vm421, %v384, 0
      %v435 = vsel %vm421, %v385, 0
      %v438 = vsel %vm421, %v386, 0
      %v441 = vsel %vm421, %v387, 0
      %v444 = vsel %vm421, %v388, 0
      %v447 = vsel %vm421, %v389, 0
      %v450 = vsel %vm421, %v390, 0
      %v453 = vsel %vm421, %v391, 0
      %v456 = vsel %vm421, %v392, 0
      %v459 = vsel %vm421, %v393, 0
      %v462 = vsel %vm421, %v394, 0
      %v465 = vsel %vm421, %v395, 0
      %v468 = vsel %vm421, %v396, 0
      %470 = vmatprep.subr.bf16.mxu0 0
      %471 = vmatpush1.bf16.msra.mxu0 %v413
      %472 = vmatprep.subr.bf16.mxu0 0
      %473 = vmatpush1.bf16.msra.mxu0 %v414
      %474 = vmatprep.subr.bf16.mxu0 0
      %475 = vmatpush1.bf16.msra.mxu0 %v415
      %476 = vmatprep.subr.bf16.mxu0 0
      %477 = vmatpush1.bf16.msra.mxu0 %v416
      %478 = vmatprep.subr.bf16.mxu0 0
      %479 = vmatpush1.bf16.msra.mxu0 0
      %480 = vmatprep.subr.bf16.mxu0 0
      %481 = vmatpush1.bf16.msra.mxu0 0
      %482 = vmatprep.subr.bf16.mxu0 0
      %483 = vmatpush1.bf16.msra.mxu0 0
      %484 = vmatprep.subr.bf16.mxu0 0
      %485 = vmatpush1.bf16.msra.mxu0 0
      %486 = vmatprep.subr.bf16.mxu0 0
      %487 = vmatpush1.bf16.msra.mxu0 0
      %488 = vmatprep.subr.bf16.mxu0 0
      %489 = vmatpush1.bf16.msra.mxu0 0
      %490 = vmatprep.subr.bf16.mxu0 0
      %491 = vmatpush1.bf16.msra.mxu0 0
      %492 = vmatprep.subr.bf16.mxu0 0
      %493 = vmatpush1.bf16.msra.mxu0 0
      %494 = vmatprep.subr.bf16.mxu0 0
      %495 = vmatpush1.bf16.msra.mxu0 0
      %496 = vmatprep.subr.bf16.mxu0 0
      %497 = vmatpush1.bf16.msra.mxu0 0
      %498 = vmatprep.subr.bf16.mxu0 0
      %499 = vmatpush1.bf16.msra.mxu0 0
      %500 = vmatprep.subr.bf16.mxu0 0
      %501 = vmatpush1.bf16.msra.mxu0 0
      %502 = vmatprep.mubr.bf16.mxu0 0
      %503 = vmatmul.mubr.bf16.gmra.mrb[0].mxu0 %v423
      %v504 = vpop.f32.mrb[0].mxu0
      %v505 = vadd.f32 %v315, %v504
      %v506 = vpop.f32.mrb[0].mxu0
      %v507 = vpop.f32.mrb[0].mxu0
      %v508 = vadd.f32 %v315, %v507
      %v509 = vpop.f32.mrb[0].mxu0
      %510 = vmatprep.mubr.bf16.mxu0 0
      %511 = vmatmul.mubr.bf16.gmra.mrb[0].mxu0 %v426
      %v512 = vpop.f32.mrb[0].mxu0
      %v513 = vadd.f32 %v315, %v512
      %v514 = vpop.f32.mrb[0].mxu0
      %v515 = vpop.f32.mrb[0].mxu0
      %v516 = vadd.f32 %v315, %v515
      %v517 = vpop.f32.mrb[0].mxu0
      %518 = vmatprep.mubr.bf16.mxu0 0
      %519 = vmatmul.mubr.bf16.gmra.mrb[0].mxu0 %v429
      %v520 = vpop.f32.mrb[0].mxu0
      %v521 = vadd.f32 %v315, %v520
      %v522 = vpop.f32.mrb[0].mxu0
      %v523 = vpop.f32.mrb[0].mxu0
      %v524 = vadd.f32 %v315, %v523
      %v525 = vpop.f32.mrb[0].mxu0
      %526 = vmatprep.mubr.bf16.mxu0 0
      %527 = vmatmul.mubr.bf16.gmra.mrb[0].mxu0 %v432
      %v528 = vpop.f32.mrb[0].mxu0
      %v529 = vadd.f32 %v315, %v528
      %v530 = vpop.f32.mrb[0].mxu0
      %v531 = vpop.f32.mrb[0].mxu0
      %v532 = vadd.f32 %v315, %v531
      %v533 = vpop.f32.mrb[0].mxu0
      %534 = vmatprep.mubr.bf16.mxu0 0
      %535 = vmatmul.mubr.bf16.gmra.mrb[0].mxu0 %v435
      %v536 = vpop.f32.mrb[0].mxu0
      %v537 = vadd.f32 %v315, %v536
      %v538 = vpop.f32.mrb[0].mxu0
      %v539 = vpop.f32.mrb[0].mxu0
      %v540 = vadd.f32 %v315, %v539
      %v541 = vpop.f32.mrb[0].mxu0
      %542 = vmatprep.mubr.bf16.mxu0 0
      %543 = vmatmul.mubr.bf16.gmra.mrb[0].mxu0 %v438
      %v544 = vpop.f32.mrb[0].mxu0
      %v545 = vadd.f32 %v315, %v544
      %v546 = vpop.f32.mrb[0].mxu0
      %v547 = vpop.f32.mrb[0].mxu0
      %v548 = vadd.f32 %v315, %v547
      %v549 = vpop.f32.mrb[0].mxu0
      %550 = vmatprep.mubr.bf16.mxu0 0
      %551 = vmatmul.mubr.bf16.gmra.mrb[0].mxu0 %v441
      %v552 = vpop.f32.mrb[0].mxu0
      %v553 = vadd.f32 %v315, %v552
      %v554 = vpop.f32.mrb[0].mxu0
      %v555 = vpop.f32.mrb[0].mxu0
      %v556 = vadd.f32 %v315, %v555
      %v557 = vpop.f32.mrb[0].mxu0
      %558 = vmatprep.mubr.bf16.mxu0 0
      %559 = vmatmul.mubr.bf16.gmra.mrb[0].mxu0 %v444
      %v560 = vpop.f32.mrb[0].mxu0
      %v561 = vadd.f32 %v315, %v560
      %v562 = vpop.f32.mrb[0].mxu0
      %v563 = vpop.f32.mrb[0].mxu0
      %v564 = vadd.f32 %v315, %v563
      %v565 = vpop.f32.mrb[0].mxu0
      %566 = vmatprep.mubr.bf16.mxu0 0
      %567 = vmatmul.mubr.bf16.gmra.mrb[0].mxu0 %v447
      %v568 = vpop.f32.mrb[0].mxu0
      %v569 = vadd.f32 %v315, %v568
      %v570 = vpop.f32.mrb[0].mxu0
      %v571 = vpop.f32.mrb[0].mxu0
      %v572 = vadd.f32 %v315, %v571
      %v573 = vpop.f32.mrb[0].mxu0
      %574 = vmatprep.mubr.bf16.mxu0 0
      %575 = vmatmul.mubr.bf16.gmra.mrb[0].mxu0 %v450
      %v576 = vpop.f32.mrb[0].mxu0
      %v577 = vadd.f32 %v315, %v576
      %v578 = vpop.f32.mrb[0].mxu0
      %v579 = vpop.f32.mrb[0].mxu0
      %v580 = vadd.f32 %v315, %v579
      %v581 = vpop.f32.mrb[0].mxu0
      %582 = vmatprep.mubr.bf16.mxu0 0
      %583 = vmatmul.mubr.bf16.gmra.mrb[0].mxu0 %v453
      %v584 = vpop.f32.mrb[0].mxu0
      %v585 = vadd.f32 %v315, %v584
      %v586 = vpop.f32.mrb[0].mxu0
      %v587 = vpop.f32.mrb[0].mxu0
      %v588 = vadd.f32 %v315, %v587
      %v589 = vpop.f32.mrb[0].mxu0
      %590 = vmatprep.mubr.bf16.mxu0 0
      %591 = vmatmul.mubr.bf16.gmra.mrb[0].mxu0 %v456
      %v592 = vpop.f32.mrb[0].mxu0
      %v593 = vadd.f32 %v315, %v592
      %v594 = vpop.f32.mrb[0].mxu0
      %v595 = vpop.f32.mrb[0].mxu0
      %v596 = vadd.f32 %v315, %v595
      %v597 = vpop.f32.mrb[0].mxu0
      %598 = vmatprep.mubr.bf16.mxu0 0
      %599 = vmatmul.mubr.bf16.gmra.mrb[0].mxu0 %v459
      %v600 = vpop.f32.mrb[0].mxu0
      %v601 = vadd.f32 %v315, %v600
      %v602 = vpop.f32.mrb[0].mxu0
      %v603 = vpop.f32.mrb[0].mxu0
      %v604 = vadd.f32 %v315, %v603
      %v605 = vpop.f32.mrb[0].mxu0
      %606 = vmatprep.mubr.bf16.mxu0 0
      %607 = vmatmul.mubr.bf16.gmra.mrb[0].mxu0 %v462
      %v608 = vpop.f32.mrb[0].mxu0
      %v609 = vadd.f32 %v315, %v608
      %v610 = vpop.f32.mrb[0].mxu0
      %v611 = vpop.f32.mrb[0].mxu0
      %v612 = vadd.f32 %v315, %v611
      %v613 = vpop.f32.mrb[0].mxu0
      %614 = vmatprep.mubr.bf16.mxu0 0
      %615 = vmatmul.mubr.bf16.gmra.mrb[0].mxu0 %v465
      %v616 = vpop.f32.mrb[0].mxu0
      %v617 = vadd.f32 %v315, %v616
      %v618 = vpop.f32.mrb[0].mxu0
      %v619 = vpop.f32.mrb[0].mxu0
      %v620 = vadd.f32 %v315, %v619
      %v621 = vpop.f32.mrb[0].mxu0
      %622 = vmatprep.mubr.bf16.mxu0 0
      %623 = vmatmul.mubr.bf16.gmra.mrb[0].mxu0 %v468
      %v624 = vpop.f32.mrb[0].mxu0
      %v625 = vadd.f32 %v315, %v624
      %v626 = vpop.f32.mrb[0].mxu0
      %v627 = vpop.f32.mrb[0].mxu0
      %v628 = vadd.f32 %v315, %v627
      %v629 = vpop.f32.mrb[0].mxu0
      %630 = vdwg.mxu0
      %v631 = vld [vmem:[%s3] sm:$0xf]
      %v632 = vld [vmem:[%s3 + $0x4] sm:$0xf]
      %v633 = vld [vmem:[%s3 + $0x8] sm:$0xf]
      %v634 = vld [vmem:[%s3 + $0xc] sm:$0xf]
      %v635 = vld [vmem:[%s3 + $0x10] sm:$0xf]
      %v636 = vld [vmem:[%s3 + $0x14] sm:$0xf]
      %v637 = vld [vmem:[%s3 + $0x18] sm:$0xf]
      %v638 = vld [vmem:[%s3 + $0x1c] sm:$0xf]
      %v639 = vld [vmem:[%s4] sm:$0x1]
      %v641 = vlaneseq
      %v642 = vshrl.u32 %v641, 7
      %v643 = vsub.s32 0, %v642
      %v644 = vrot.slane %v639, %v643
      %v654 = vunpack.c.l.b16 %v631
      %v655 = vunpack.c.l.b16 %v632
      %v656 = vunpack.c.l.b16 %v633
      %v657 = vunpack.c.l.b16 %v634
      %v658 = vunpack.c.l.b16 %v635
      %v659 = vunpack.c.l.b16 %v636
      %v660 = vunpack.c.l.b16 %v637
      %v661 = vunpack.c.l.b16 %v638
      %v662 = vpack.c.b16 %v655, %v654
      %v663 = vpack.c.b16 %v657, %v656
      %v664 = vpack.c.b16 %v659, %v658
      %v665 = vpack.c.b16 %v661, %v660
      %670 = vmatprep.subr.bf16.mxu0 0
      %671 = vmatpush1.bf16.msra.mxu0 %v662
      %672 = vmatprep.subr.bf16.mxu0 0
      %673 = vmatpush1.bf16.msra.mxu0 %v663
      %674 = vmatprep.subr.bf16.mxu0 0
      %675 = vmatpush1.bf16.msra.mxu0 %v664
      %676 = vmatprep.subr.bf16.mxu0 0
      %677 = vmatpush1.bf16.msra.mxu0 %v665
      %678 = vmatprep.subr.bf16.mxu0 0
      %679 = vmatpush1.bf16.msra.mxu0 0
      %680 = vmatprep.subr.bf16.mxu0 0
      %681 = vmatpush1.bf16.msra.mxu0 0
      %682 = vmatprep.subr.bf16.mxu0 0
      %683 = vmatpush1.bf16.msra.mxu0 0
      %684 = vmatprep.subr.bf16.mxu0 0
      %685 = vmatpush1.bf16.msra.mxu0 0
      %686 = vmatprep.subr.bf16.mxu0 0
      %687 = vmatpush1.bf16.msra.mxu0 0
      %688 = vmatprep.subr.bf16.mxu0 0
      %689 = vmatpush1.bf16.msra.mxu0 0
      %690 = vmatprep.subr.bf16.mxu0 0
      %691 = vmatpush1.bf16.msra.mxu0 0
      %692 = vmatprep.subr.bf16.mxu0 0
      %693 = vmatpush1.bf16.msra.mxu0 0
      %694 = vmatprep.subr.bf16.mxu0 0
      %695 = vmatpush1.bf16.msra.mxu0 0
      %696 = vmatprep.subr.bf16.mxu0 0
      %697 = vmatpush1.bf16.msra.mxu0 0
      %698 = vmatprep.subr.bf16.mxu0 0
      %699 = vmatpush1.bf16.msra.mxu0 0
      %700 = vmatprep.subr.bf16.mxu0 0
      %701 = vmatpush1.bf16.msra.mxu0 0
      %702 = vmatprep.mubr.bf16.mxu0 0
      %703 = vmatmul.mubr.bf16.gmra.mrb[0].mxu0 %v423
      %v704 = vpop.f32.mrb[0].mxu0
      %v705 = vadd.f32 %v644, %v704
      %v706 = vpop.f32.mrb[0].mxu0
      %v707 = vpop.f32.mrb[0].mxu0
      %v708 = vadd.f32 %v644, %v707
      %v709 = vpop.f32.mrb[0].mxu0
      %710 = vmatprep.mubr.bf16.mxu0 0
      %711 = vmatmul.mubr.bf16.gmra.mrb[0].mxu0 %v426
      %v712 = vpop.f32.mrb[0].mxu0
      %v713 = vadd.f32 %v644, %v712
      %v714 = vpop.f32.mrb[0].mxu0
      %v715 = vpop.f32.mrb[0].mxu0
      %v716 = vadd.f32 %v644, %v715
      %v717 = vpop.f32.mrb[0].mxu0
      %718 = vmatprep.mubr.bf16.mxu0 0
      %719 = vmatmul.mubr.bf16.gmra.mrb[0].mxu0 %v429
      %v720 = vpop.f32.mrb[0].mxu0
      %v721 = vadd.f32 %v644, %v720
      %v722 = vpop.f32.mrb[0].mxu0
      %v723 = vpop.f32.mrb[0].mxu0
      %v724 = vadd.f32 %v644, %v723
      %v725 = vpop.f32.mrb[0].mxu0
      %726 = vmatprep.mubr.bf16.mxu0 0
      %727 = vmatmul.mubr.bf16.gmra.mrb[0].mxu0 %v432
      %v728 = vpop.f32.mrb[0].mxu0
      %v729 = vadd.f32 %v644, %v728
      %v730 = vpop.f32.mrb[0].mxu0
      %v731 = vpop.f32.mrb[0].mxu0
      %v732 = vadd.f32 %v644, %v731
      %v733 = vpop.f32.mrb[0].mxu0
      %734 = vmatprep.mubr.bf16.mxu0 0
      %735 = vmatmul.mubr.bf16.gmra.mrb[0].mxu0 %v435
      %v736 = vpop.f32.mrb[0].mxu0
      %v737 = vadd.f32 %v644, %v736
      %v738 = vpop.f32.mrb[0].mxu0
      %v739 = vpop.f32.mrb[0].mxu0
      %v740 = vadd.f32 %v644, %v739
      %v741 = vpop.f32.mrb[0].mxu0
      %742 = vmatprep.mubr.bf16.mxu0 0
      %743 = vmatmul.mubr.bf16.gmra.mrb[0].mxu0 %v438
      %v744 = vpop.f32.mrb[0].mxu0
      %v745 = vadd.f32 %v644, %v744
      %v746 = vpop.f32.mrb[0].mxu0
      %v747 = vpop.f32.mrb[0].mxu0
      %v748 = vadd.f32 %v644, %v747
      %v749 = vpop.f32.mrb[0].mxu0
      %750 = vmatprep.mubr.bf16.mxu0 0
      %751 = vmatmul.mubr.bf16.gmra.mrb[0].mxu0 %v441
      %v752 = vpop.f32.mrb[0].mxu0
      %v753 = vadd.f32 %v644, %v752
      %v754 = vpop.f32.mrb[0].mxu0
      %v755 = vpop.f32.mrb[0].mxu0
      %v756 = vadd.f32 %v644, %v755
      %v757 = vpop.f32.mrb[0].mxu0
      %758 = vmatprep.mubr.bf16.mxu0 0
      %759 = vmatmul.mubr.bf16.gmra.mrb[0].mxu0 %v444
      %v760 = vpop.f32.mrb[0].mxu0
      %v761 = vadd.f32 %v644, %v760
      %v762 = vpop.f32.mrb[0].mxu0
      %v763 = vpop.f32.mrb[0].mxu0
      %v764 = vadd.f32 %v644, %v763
      %v765 = vpop.f32.mrb[0].mxu0
      %766 = vmatprep.mubr.bf16.mxu0 0
      %767 = vmatmul.mubr.bf16.gmra.mrb[0].mxu0 %v447
      %v768 = vpop.f32.mrb[0].mxu0
      %v769 = vadd.f32 %v644, %v768
      %v770 = vpop.f32.mrb[0].mxu0
      %v771 = vpop.f32.mrb[0].mxu0
      %v772 = vadd.f32 %v644, %v771
      %v773 = vpop.f32.mrb[0].mxu0
      %774 = vmatprep.mubr.bf16.mxu0 0
      %775 = vmatmul.mubr.bf16.gmra.mrb[0].mxu0 %v450
      %v776 = vpop.f32.mrb[0].mxu0
      %v777 = vadd.f32 %v644, %v776
      %v778 = vpop.f32.mrb[0].mxu0
      %v779 = vpop.f32.mrb[0].mxu0
      %v780 = vadd.f32 %v644, %v779
      %v781 = vpop.f32.mrb[0].mxu0
      %782 = vmatprep.mubr.bf16.mxu0 0
      %783 = vmatmul.mubr.bf16.gmra.mrb[0].mxu0 %v453
      %v784 = vpop.f32.mrb[0].mxu0
      %v785 = vadd.f32 %v644, %v784
      %v786 = vpop.f32.mrb[0].mxu0
      %v787 = vpop.f32.mrb[0].mxu0
      %v788 = vadd.f32 %v644, %v787
      %v789 = vpop.f32.mrb[0].mxu0
      %790 = vmatprep.mubr.bf16.mxu0 0
      %791 = vmatmul.mubr.bf16.gmra.mrb[0].mxu0 %v456
      %v792 = vpop.f32.mrb[0].mxu0
      %v793 = vadd.f32 %v644, %v792
      %v794 = vpop.f32.mrb[0].mxu0
      %v795 = vpop.f32.mrb[0].mxu0
      %v796 = vadd.f32 %v644, %v795
      %v797 = vpop.f32.mrb[0].mxu0
      %798 = vmatprep.mubr.bf16.mxu0 0
      %799 = vmatmul.mubr.bf16.gmra.mrb[0].mxu0 %v459
      %v800 = vpop.f32.mrb[0].mxu0
      %v801 = vadd.f32 %v644, %v800
      %v802 = vpop.f32.mrb[0].mxu0
      %v803 = vpop.f32.mrb[0].mxu0
      %v804 = vadd.f32 %v644, %v803
      %v805 = vpop.f32.mrb[0].mxu0
      %806 = vmatprep.mubr.bf16.mxu0 0
      %807 = vmatmul.mubr.bf16.gmra.mrb[0].mxu0 %v462
      %v808 = vpop.f32.mrb[0].mxu0
      %v809 = vadd.f32 %v644, %v808
      %v810 = vpop.f32.mrb[0].mxu0
      %v811 = vpop.f32.mrb[0].mxu0
      %v812 = vadd.f32 %v644, %v811
      %v813 = vpop.f32.mrb[0].mxu0
      %814 = vmatprep.mubr.bf16.mxu0 0
      %815 = vmatmul.mubr.bf16.gmra.mrb[0].mxu0 %v465
      %v816 = vpop.f32.mrb[0].mxu0
      %v817 = vadd.f32 %v644, %v816
      %v818 = vpop.f32.mrb[0].mxu0
      %v819 = vpop.f32.mrb[0].mxu0
      %v820 = vadd.f32 %v644, %v819
      %v821 = vpop.f32.mrb[0].mxu0
      %822 = vmatprep.mubr.bf16.mxu0 0
      %823 = vmatmul.mubr.bf16.gmra.mrb[0].mxu0 %v468
      %v824 = vpop.f32.mrb[0].mxu0
      %v825 = vadd.f32 %v644, %v824
      %v826 = vpop.f32.mrb[0].mxu0
      %v827 = vpop.f32.mrb[0].mxu0
      %v828 = vadd.f32 %v644, %v827
      %v829 = vpop.f32.mrb[0].mxu0
      %830 = vdwg.mxu0
      %v831 = vsub.f32 0.0, %v505
      %v832 = vsub.f32 0.0, %v508
      %v833 = vsub.f32 0.0, %v513
      %v834 = vsub.f32 0.0, %v516
      %v835 = vsub.f32 0.0, %v521
      %v836 = vsub.f32 0.0, %v524
      %v837 = vsub.f32 0.0, %v529
      %v838 = vsub.f32 0.0, %v532
      %v839 = vsub.f32 0.0, %v537
      %v840 = vsub.f32 0.0, %v540
      %v841 = vsub.f32 0.0, %v545
      %v842 = vsub.f32 0.0, %v548
      %v843 = vsub.f32 0.0, %v553
      %v844 = vsub.f32 0.0, %v556
      %v845 = vsub.f32 0.0, %v561
      %v846 = vsub.f32 0.0, %v564
      %v847 = vsub.f32 0.0, %v569
      %v848 = vsub.f32 0.0, %v572
      %v849 = vsub.f32 0.0, %v577
      %v850 = vsub.f32 0.0, %v580
      %v851 = vsub.f32 0.0, %v585
      %v852 = vsub.f32 0.0, %v588
      %v853 = vsub.f32 0.0, %v593
      %v854 = vsub.f32 0.0, %v596
      %v855 = vsub.f32 0.0, %v601
      %v856 = vsub.f32 0.0, %v604
      %v857 = vsub.f32 0.0, %v609
      %v858 = vsub.f32 0.0, %v612
      %v859 = vsub.f32 0.0, %v617
      %v860 = vsub.f32 0.0, %v620
      %v861 = vsub.f32 0.0, %v625
      %v862 = vsub.f32 0.0, %v628
      %v863 = vmul.f32 %v831, 1.442695
      %v864 = vpow.pop %v863
      %v865 = vmul.f32 %v832, 1.442695
      %v866 = vpow.pop %v865
      %v867 = vmul.f32 %v833, 1.442695
      %v868 = vpow.pop %v867
      %v869 = vmul.f32 %v834, 1.442695
      %v870 = vpow.pop %v869
      %v871 = vmul.f32 %v835, 1.442695
      %v872 = vpow.pop %v871
      %v873 = vmul.f32 %v836, 1.442695
      %v874 = vpow.pop %v873
      %v875 = vmul.f32 %v837, 1.442695
      %v876 = vpow.pop %v875
      %v877 = vmul.f32 %v838, 1.442695
      %v878 = vpow.pop %v877
      %v879 = vmul.f32 %v839, 1.442695
      %v880 = vpow.pop %v879
      %v881 = vmul.f32 %v840, 1.442695
      %v882 = vpow.pop %v881
      %v883 = vmul.f32 %v841, 1.442695
      %v884 = vpow.pop %v883
      %v885 = vmul.f32 %v842, 1.442695
      %v886 = vpow.pop %v885
      %v887 = vmul.f32 %v843, 1.442695
      %v888 = vpow.pop %v887
      %v889 = vmul.f32 %v844, 1.442695
      %v890 = vpow.pop %v889
      %v891 = vmul.f32 %v845, 1.442695
      %v892 = vpow.pop %v891
      %v893 = vmul.f32 %v846, 1.442695
      %v894 = vpow.pop %v893
      %v895 = vmul.f32 %v847, 1.442695
      %v896 = vpow.pop %v895
      %v897 = vmul.f32 %v848, 1.442695
      %v898 = vpow.pop %v897
      %v899 = vmul.f32 %v849, 1.442695
      %v900 = vpow.pop %v899
      %v901 = vmul.f32 %v850, 1.442695
      %v902 = vpow.pop %v901
      %v903 = vmul.f32 %v851, 1.442695
      %v904 = vpow.pop %v903
      %v905 = vmul.f32 %v852, 1.442695
      %v906 = vpow.pop %v905
      %v907 = vmul.f32 %v853, 1.442695
      %v908 = vpow.pop %v907
      %v909 = vmul.f32 %v854, 1.442695
      %v910 = vpow.pop %v909
      %v911 = vmul.f32 %v855, 1.442695
      %v912 = vpow.pop %v911
      %v913 = vmul.f32 %v856, 1.442695
      %v914 = vpow.pop %v913
      %v915 = vmul.f32 %v857, 1.442695
      %v916 = vpow.pop %v915
      %v917 = vmul.f32 %v858, 1.442695
      %v918 = vpow.pop %v917
      %v919 = vmul.f32 %v859, 1.442695
      %v920 = vpow.pop %v919
      %v921 = vmul.f32 %v860, 1.442695
      %v922 = vpow.pop %v921
      %v923 = vmul.f32 %v861, 1.442695
      %v924 = vpow.pop %v923
      %v925 = vmul.f32 %v862, 1.442695
      %v926 = vpow.pop %v925
      %v927 = vadd.f32 %v864, 1.0
      %v928 = vadd.f32 %v866, 1.0
      %v929 = vadd.f32 %v868, 1.0
      %v930 = vadd.f32 %v870, 1.0
      %v931 = vadd.f32 %v872, 1.0
      %v932 = vadd.f32 %v874, 1.0
      %v933 = vadd.f32 %v876, 1.0
      %v934 = vadd.f32 %v878, 1.0
      %v935 = vadd.f32 %v880, 1.0
      %v936 = vadd.f32 %v882, 1.0
      %v937 = vadd.f32 %v884, 1.0
      %v938 = vadd.f32 %v886, 1.0
      %v939 = vadd.f32 %v888, 1.0
      %v940 = vadd.f32 %v890, 1.0
      %v941 = vadd.f32 %v892, 1.0
      %v942 = vadd.f32 %v894, 1.0
      %v943 = vadd.f32 %v896, 1.0
      %v944 = vadd.f32 %v898, 1.0
      %v945 = vadd.f32 %v900, 1.0
      %v946 = vadd.f32 %v902, 1.0
      %v947 = vadd.f32 %v904, 1.0
      %v948 = vadd.f32 %v906, 1.0
      %v949 = vadd.f32 %v908, 1.0
      %v950 = vadd.f32 %v910, 1.0
      %v951 = vadd.f32 %v912, 1.0
      %v952 = vadd.f32 %v914, 1.0
      %v953 = vadd.f32 %v916, 1.0
      %v954 = vadd.f32 %v918, 1.0
      %v955 = vadd.f32 %v920, 1.0
      %v956 = vadd.f32 %v922, 1.0
      %v957 = vadd.f32 %v924, 1.0
      %v958 = vadd.f32 %v926, 1.0
      %v959 = vrcp.pop %v927
      %v960 = vrcp.pop %v928
      %v961 = vrcp.pop %v929
      %v962 = vrcp.pop %v930
      %v963 = vrcp.pop %v931
      %v964 = vrcp.pop %v932
      %v965 = vrcp.pop %v933
      %v966 = vrcp.pop %v934
      %v967 = vrcp.pop %v935
      %v968 = vrcp.pop %v936
      %v969 = vrcp.pop %v937
      %v970 = vrcp.pop %v938
      %v971 = vrcp.pop %v939
      %v972 = vrcp.pop %v940
      %v973 = vrcp.pop %v941
      %v974 = vrcp.pop %v942
      %v975 = vrcp.pop %v943
      %v976 = vrcp.pop %v944
      %v977 = vrcp.pop %v945
      %v978 = vrcp.pop %v946
      %v979 = vrcp.pop %v947
      %v980 = vrcp.pop %v948
      %v981 = vrcp.pop %v949
      %v982 = vrcp.pop %v950
      %v983 = vrcp.pop %v951
      %v984 = vrcp.pop %v952
      %v985 = vrcp.pop %v953
      %v986 = vrcp.pop %v954
      %v987 = vrcp.pop %v955
      %v988 = vrcp.pop %v956
      %v989 = vrcp.pop %v957
      %v990 = vrcp.pop %v958
      %v991 = vmul.f32 %v505, %v959
      %v992 = vmul.f32 %v508, %v960
      %v993 = vmul.f32 %v513, %v961
      %v994 = vmul.f32 %v516, %v962
      %v995 = vmul.f32 %v521, %v963
      %v996 = vmul.f32 %v524, %v964
      %v997 = vmul.f32 %v529, %v965
      %v998 = vmul.f32 %v532, %v966
      %v999 = vmul.f32 %v537, %v967
      %v1000 = vmul.f32 %v540, %v968
      %v1001 = vmul.f32 %v545, %v969
      %v1002 = vmul.f32 %v548, %v970
      %v1003 = vmul.f32 %v553, %v971
      %v1004 = vmul.f32 %v556, %v972
      %v1005 = vmul.f32 %v561, %v973
      %v1006 = vmul.f32 %v564, %v974
      %v1007 = vmul.f32 %v569, %v975
      %v1008 = vmul.f32 %v572, %v976
      %v1009 = vmul.f32 %v577, %v977
      %v1010 = vmul.f32 %v580, %v978
      %v1011 = vmul.f32 %v585, %v979
      %v1012 = vmul.f32 %v588, %v980
      %v1013 = vmul.f32 %v593, %v981
      %v1014 = vmul.f32 %v596, %v982
      %v1015 = vmul.f32 %v601, %v983
      %v1016 = vmul.f32 %v604, %v984
      %v1017 = vmul.f32 %v609, %v985
      %v1018 = vmul.f32 %v612, %v986
      %v1019 = vmul.f32 %v617, %v987
      %v1020 = vmul.f32 %v620, %v988
      %v1021 = vmul.f32 %v625, %v989
      %v1022 = vmul.f32 %v628, %v990
      %vm1023 = vcmask 261120
      %1024 = vst.msk [vmem:[%s261] sm:$0xff] %vm1023, %v991
      %1025 = vst.msk [vmem:[%s261 + $0x8] sm:$0xff] %vm1023, %v992
      %1026 = vst.msk [vmem:[%s261 + $0x10] sm:$0xff] %vm1023, %v993
      %1027 = vst.msk [vmem:[%s261 + $0x18] sm:$0xff] %vm1023, %v994
      %1028 = vst.msk [vmem:[%s261 + $0x20] sm:$0xff] %vm1023, %v995
      %1029 = vst.msk [vmem:[%s261 + $0x28] sm:$0xff] %vm1023, %v996
      %1030 = vst.msk [vmem:[%s261 + $0x30] sm:$0xff] %vm1023, %v997
      %1031 = vst.msk [vmem:[%s261 + $0x38] sm:$0xff] %vm1023, %v998
      %1032 = vst.msk [vmem:[%s261 + $0x40] sm:$0xff] %vm1023, %v999
      %1033 = vst.msk [vmem:[%s261 + $0x48] sm:$0xff] %vm1023, %v1000
      %1034 = vst.msk [vmem:[%s261 + $0x50] sm:$0xff] %vm1023, %v1001
      %1035 = vst.msk [vmem:[%s261 + $0x58] sm:$0xff] %vm1023, %v1002
      %1036 = vst.msk [vmem:[%s261 + $0x60] sm:$0xff] %vm1023, %v1003
      %1037 = vst.msk [vmem:[%s261 + $0x68] sm:$0xff] %vm1023, %v1004
      %1038 = vst.msk [vmem:[%s261 + $0x70] sm:$0xff] %vm1023, %v1005
      %1039 = vst.msk [vmem:[%s261 + $0x78] sm:$0xff] %vm1023, %v1006
      %1040 = vst.msk [vmem:[%s261 + $0x80] sm:$0xff] %vm1023, %v1007
      %1041 = vst.msk [vmem:[%s261 + $0x88] sm:$0xff] %vm1023, %v1008
      %1042 = vst.msk [vmem:[%s261 + $0x90] sm:$0xff] %vm1023, %v1009
      %1043 = vst.msk [vmem:[%s261 + $0x98] sm:$0xff] %vm1023, %v1010
      %1044 = vst.msk [vmem:[%s261 + $0xa0] sm:$0xff] %vm1023, %v1011
      %1045 = vst.msk [vmem:[%s261 + $0xa8] sm:$0xff] %vm1023, %v1012
      %1046 = vst.msk [vmem:[%s261 + $0xb0] sm:$0xff] %vm1023, %v1013
      %1047 = vst.msk [vmem:[%s261 + $0xb8] sm:$0xff] %vm1023, %v1014
      %1048 = vst.msk [vmem:[%s261 + $0xc0] sm:$0xff] %vm1023, %v1015
      %1049 = vst.msk [vmem:[%s261 + $0xc8] sm:$0xff] %vm1023, %v1016
      %1050 = vst.msk [vmem:[%s261 + $0xd0] sm:$0xff] %vm1023, %v1017
      %1051 = vst.msk [vmem:[%s261 + $0xd8] sm:$0xff] %vm1023, %v1018
      %1052 = vst.msk [vmem:[%s261 + $0xe0] sm:$0xff] %vm1023, %v1019
      %1053 = vst.msk [vmem:[%s261 + $0xe8] sm:$0xff] %vm1023, %v1020
      %1054 = vst.msk [vmem:[%s261 + $0xf0] sm:$0xff] %vm1023, %v1021
      %1055 = vst.msk [vmem:[%s261 + $0xf8] sm:$0xff] %vm1023, %v1022
      %v1056 = vsub.f32 0.0, %v705
      %v1057 = vsub.f32 0.0, %v708
      %v1058 = vsub.f32 0.0, %v713
      %v1059 = vsub.f32 0.0, %v716
      %v1060 = vsub.f32 0.0, %v721
      %v1061 = vsub.f32 0.0, %v724
      %v1062 = vsub.f32 0.0, %v729
      %v1063 = vsub.f32 0.0, %v732
      %v1064 = vsub.f32 0.0, %v737
      %v1065 = vsub.f32 0.0, %v740
      %v1066 = vsub.f32 0.0, %v745
      %v1067 = vsub.f32 0.0, %v748
      %v1068 = vsub.f32 0.0, %v753
      %v1069 = vsub.f32 0.0, %v756
      %v1070 = vsub.f32 0.0, %v761
      %v1071 = vsub.f32 0.0, %v764
      %v1072 = vsub.f32 0.0, %v769
      %v1073 = vsub.f32 0.0, %v772
      %v1074 = vsub.f32 0.0, %v777
      %v1075 = vsub.f32 0.0, %v780
      %v1076 = vsub.f32 0.0, %v785
      %v1077 = vsub.f32 0.0, %v788
      %v1078 = vsub.f32 0.0, %v793
      %v1079 = vsub.f32 0.0, %v796
      %v1080 = vsub.f32 0.0, %v801
      %v1081 = vsub.f32 0.0, %v804
      %v1082 = vsub.f32 0.0, %v809
      %v1083 = vsub.f32 0.0, %v812
      %v1084 = vsub.f32 0.0, %v817
      %v1085 = vsub.f32 0.0, %v820
      %v1086 = vsub.f32 0.0, %v825
      %v1087 = vsub.f32 0.0, %v828
      %v1088 = vmul.f32 %v1056, 1.442695
      %v1089 = vpow.pop %v1088
      %v1090 = vmul.f32 %v1057, 1.442695
      %v1091 = vpow.pop %v1090
      %v1092 = vmul.f32 %v1058, 1.442695
      %v1093 = vpow.pop %v1092
      %v1094 = vmul.f32 %v1059, 1.442695
      %v1095 = vpow.pop %v1094
      %v1096 = vmul.f32 %v1060, 1.442695
      %v1097 = vpow.pop %v1096
      %v1098 = vmul.f32 %v1061, 1.442695
      %v1099 = vpow.pop %v1098
      %v1100 = vmul.f32 %v1062, 1.442695
      %v1101 = vpow.pop %v1100
      %v1102 = vmul.f32 %v1063, 1.442695
      %v1103 = vpow.pop %v1102
      %v1104 = vmul.f32 %v1064, 1.442695
      %v1105 = vpow.pop %v1104
      %v1106 = vmul.f32 %v1065, 1.442695
      %v1107 = vpow.pop %v1106
      %v1108 = vmul.f32 %v1066, 1.442695
      %v1109 = vpow.pop %v1108
      %v1110 = vmul.f32 %v1067, 1.442695
      %v1111 = vpow.pop %v1110
      %v1112 = vmul.f32 %v1068, 1.442695
      %v1113 = vpow.pop %v1112
      %v1114 = vmul.f32 %v1069, 1.442695
      %v1115 = vpow.pop %v1114
      %v1116 = vmul.f32 %v1070, 1.442695
      %v1117 = vpow.pop %v1116
      %v1118 = vmul.f32 %v1071, 1.442695
      %v1119 = vpow.pop %v1118
      %v1120 = vmul.f32 %v1072, 1.442695
      %v1121 = vpow.pop %v1120
      %v1122 = vmul.f32 %v1073, 1.442695
      %v1123 = vpow.pop %v1122
      %v1124 = vmul.f32 %v1074, 1.442695
      %v1125 = vpow.pop %v1124
      %v1126 = vmul.f32 %v1075, 1.442695
      %v1127 = vpow.pop %v1126
      %v1128 = vmul.f32 %v1076, 1.442695
      %v1129 = vpow.pop %v1128
      %v1130 = vmul.f32 %v1077, 1.442695
      %v1131 = vpow.pop %v1130
      %v1132 = vmul.f32 %v1078, 1.442695
      %v1133 = vpow.pop %v1132
      %v1134 = vmul.f32 %v1079, 1.442695
      %v1135 = vpow.pop %v1134
      %v1136 = vmul.f32 %v1080, 1.442695
      %v1137 = vpow.pop %v1136
      %v1138 = vmul.f32 %v1081, 1.442695
      %v1139 = vpow.pop %v1138
      %v1140 = vmul.f32 %v1082, 1.442695
      %v1141 = vpow.pop %v1140
      %v1142 = vmul.f32 %v1083, 1.442695
      %v1143 = vpow.pop %v1142
      %v1144 = vmul.f32 %v1084, 1.442695
      %v1145 = vpow.pop %v1144
      %v1146 = vmul.f32 %v1085, 1.442695
      %v1147 = vpow.pop %v1146
      %v1148 = vmul.f32 %v1086, 1.442695
      %v1149 = vpow.pop %v1148
      %v1150 = vmul.f32 %v1087, 1.442695
      %v1151 = vpow.pop %v1150
      %v1152 = vadd.f32 %v1089, 1.0
      %v1153 = vadd.f32 %v1091, 1.0
      %v1154 = vadd.f32 %v1093, 1.0
      %v1155 = vadd.f32 %v1095, 1.0
      %v1156 = vadd.f32 %v1097, 1.0
      %v1157 = vadd.f32 %v1099, 1.0
      %v1158 = vadd.f32 %v1101, 1.0
      %v1159 = vadd.f32 %v1103, 1.0
      %v1160 = vadd.f32 %v1105, 1.0
      %v1161 = vadd.f32 %v1107, 1.0
      %v1162 = vadd.f32 %v1109, 1.0
      %v1163 = vadd.f32 %v1111, 1.0
      %v1164 = vadd.f32 %v1113, 1.0
      %v1165 = vadd.f32 %v1115, 1.0
      %v1166 = vadd.f32 %v1117, 1.0
      %v1167 = vadd.f32 %v1119, 1.0
      %v1168 = vadd.f32 %v1121, 1.0
      %v1169 = vadd.f32 %v1123, 1.0
      %v1170 = vadd.f32 %v1125, 1.0
      %v1171 = vadd.f32 %v1127, 1.0
      %v1172 = vadd.f32 %v1129, 1.0
      %v1173 = vadd.f32 %v1131, 1.0
      %v1174 = vadd.f32 %v1133, 1.0
      %v1175 = vadd.f32 %v1135, 1.0
      %v1176 = vadd.f32 %v1137, 1.0
      %v1177 = vadd.f32 %v1139, 1.0
      %v1178 = vadd.f32 %v1141, 1.0
      %v1179 = vadd.f32 %v1143, 1.0
      %v1180 = vadd.f32 %v1145, 1.0
      %v1181 = vadd.f32 %v1147, 1.0
      %v1182 = vadd.f32 %v1149, 1.0
      %v1183 = vadd.f32 %v1151, 1.0
      %v1184 = vrcp.pop %v1152
      %v1185 = vrcp.pop %v1153
      %v1186 = vrcp.pop %v1154
      %v1187 = vrcp.pop %v1155
      %v1188 = vrcp.pop %v1156
      %v1189 = vrcp.pop %v1157
      %v1190 = vrcp.pop %v1158
      %v1191 = vrcp.pop %v1159
      %v1192 = vrcp.pop %v1160
      %v1193 = vrcp.pop %v1161
      %v1194 = vrcp.pop %v1162
      %v1195 = vrcp.pop %v1163
      %v1196 = vrcp.pop %v1164
      %v1197 = vrcp.pop %v1165
      %v1198 = vrcp.pop %v1166
      %v1199 = vrcp.pop %v1167
      %v1200 = vrcp.pop %v1168
      %v1201 = vrcp.pop %v1169
      %v1202 = vrcp.pop %v1170
      %v1203 = vrcp.pop %v1171
      %v1204 = vrcp.pop %v1172
      %v1205 = vrcp.pop %v1173
      %v1206 = vrcp.pop %v1174
      %v1207 = vrcp.pop %v1175
      %v1208 = vrcp.pop %v1176
      %v1209 = vrcp.pop %v1177
      %v1210 = vrcp.pop %v1178
      %v1211 = vrcp.pop %v1179
      %v1212 = vrcp.pop %v1180
      %v1213 = vrcp.pop %v1181
      %v1214 = vrcp.pop %v1182
      %v1215 = vrcp.pop %v1183
      %v1216 = vmul.f32 %v705, %v1184
      %v1217 = vmul.f32 %v708, %v1185
      %v1218 = vmul.f32 %v713, %v1186
      %v1219 = vmul.f32 %v716, %v1187
      %v1220 = vmul.f32 %v721, %v1188
      %v1221 = vmul.f32 %v724, %v1189
      %v1222 = vmul.f32 %v729, %v1190
      %v1223 = vmul.f32 %v732, %v1191
      %v1224 = vmul.f32 %v737, %v1192
      %v1225 = vmul.f32 %v740, %v1193
      %v1226 = vmul.f32 %v745, %v1194
      %v1227 = vmul.f32 %v748, %v1195
      %v1228 = vmul.f32 %v753, %v1196
      %v1229 = vmul.f32 %v756, %v1197
      %v1230 = vmul.f32 %v761, %v1198
      %v1231 = vmul.f32 %v764, %v1199
      %v1232 = vmul.f32 %v769, %v1200
      %v1233 = vmul.f32 %v772, %v1201
      %v1234 = vmul.f32 %v777, %v1202
      %v1235 = vmul.f32 %v780, %v1203
      %v1236 = vmul.f32 %v785, %v1204
      %v1237 = vmul.f32 %v788, %v1205
      %v1238 = vmul.f32 %v793, %v1206
      %v1239 = vmul.f32 %v796, %v1207
      %v1240 = vmul.f32 %v801, %v1208
      %v1241 = vmul.f32 %v804, %v1209
      %v1242 = vmul.f32 %v809, %v1210
      %v1243 = vmul.f32 %v812, %v1211
      %v1244 = vmul.f32 %v817, %v1212
      %v1245 = vmul.f32 %v820, %v1213
      %v1246 = vmul.f32 %v825, %v1214
      %v1247 = vmul.f32 %v828, %v1215
      %1248 = vst.msk [vmem:[%s267] sm:$0xff] %vm1023, %v1216
      %1249 = vst.msk [vmem:[%s267 + $0x8] sm:$0xff] %vm1023, %v1217
      %1250 = vst.msk [vmem:[%s267 + $0x10] sm:$0xff] %vm1023, %v1218
      %1251 = vst.msk [vmem:[%s267 + $0x18] sm:$0xff] %vm1023, %v1219
      %1252 = vst.msk [vmem:[%s267 + $0x20] sm:$0xff] %vm1023, %v1220
      %1253 = vst.msk [vmem:[%s267 + $0x28] sm:$0xff] %vm1023, %v1221
      %1254 = vst.msk [vmem:[%s267 + $0x30] sm:$0xff] %vm1023, %v1222
      %1255 = vst.msk [vmem:[%s267 + $0x38] sm:$0xff] %vm1023, %v1223
      %1256 = vst.msk [vmem:[%s267 + $0x40] sm:$0xff] %vm1023, %v1224
      %1257 = vst.msk [vmem:[%s267 + $0x48] sm:$0xff] %vm1023, %v1225
      %1258 = vst.msk [vmem:[%s267 + $0x50] sm:$0xff] %vm1023, %v1226
      %1259 = vst.msk [vmem:[%s267 + $0x58] sm:$0xff] %vm1023, %v1227
      %1260 = vst.msk [vmem:[%s267 + $0x60] sm:$0xff] %vm1023, %v1228
      %1261 = vst.msk [vmem:[%s267 + $0x68] sm:$0xff] %vm1023, %v1229
      %1262 = vst.msk [vmem:[%s267 + $0x70] sm:$0xff] %vm1023, %v1230
      %1263 = vst.msk [vmem:[%s267 + $0x78] sm:$0xff] %vm1023, %v1231
      %1264 = vst.msk [vmem:[%s267 + $0x80] sm:$0xff] %vm1023, %v1232
      %1265 = vst.msk [vmem:[%s267 + $0x88] sm:$0xff] %vm1023, %v1233
      %1266 = vst.msk [vmem:[%s267 + $0x90] sm:$0xff] %vm1023, %v1234
      %1267 = vst.msk [vmem:[%s267 + $0x98] sm:$0xff] %vm1023, %v1235
      %1268 = vst.msk [vmem:[%s267 + $0xa0] sm:$0xff] %vm1023, %v1236
      %1269 = vst.msk [vmem:[%s267 + $0xa8] sm:$0xff] %vm1023, %v1237
      %1270 = vst.msk [vmem:[%s267 + $0xb0] sm:$0xff] %vm1023, %v1238
      %1271 = vst.msk [vmem:[%s267 + $0xb8] sm:$0xff] %vm1023, %v1239
      %1272 = vst.msk [vmem:[%s267 + $0xc0] sm:$0xff] %vm1023, %v1240
      %1273 = vst.msk [vmem:[%s267 + $0xc8] sm:$0xff] %vm1023, %v1241
      %1274 = vst.msk [vmem:[%s267 + $0xd0] sm:$0xff] %vm1023, %v1242
      %1275 = vst.msk [vmem:[%s267 + $0xd8] sm:$0xff] %vm1023, %v1243
      %1276 = vst.msk [vmem:[%s267 + $0xe0] sm:$0xff] %vm1023, %v1244
      %1277 = vst.msk [vmem:[%s267 + $0xe8] sm:$0xff] %vm1023, %v1245
      %1278 = vst.msk [vmem:[%s267 + $0xf0] sm:$0xff] %vm1023, %v1246
      %1279 = vst.msk [vmem:[%s267 + $0xf8] sm:$0xff] %vm1023, %v1247
      %s1280 = smul.u32 32, %s18
      %p1281 = scmp.lt.s32.totalorder %s1280, 63
      %s1282 = scalar_select %p1281, %s1280, 63
      %s1283 = smul.addr %s1282, 8
      %s1284 = scalar_lea.vmem %s5, %s1283
      %s1285 = smul.u32 32, %s18
      %p1286 = scmp.lt.s32.totalorder %s1285, 63
      %s1287 = scalar_select %p1286, %s1285, 63
      %s1288 = smul.addr %s1287, 8
      %s1289 = scalar_lea.vmem %s6, %s1288
      // Predicated region
      $region41: #{stcspa_forward.6} parent=39 // pred_check
        %p1290 = pneg %p146
      $region42: #{stcspa_forward.6} parent=39 // pred_check_branch
        %1292 = sbr.rel (%p1290) target = $region44
      $region43: #{stcspa_forward.6} parent=39 // pred_region
        %s1293 = smul.u32 32, %s18
      $region44: #{stcspa_forward.6} parent=39 // pred_fallthru
        _
      // Predicated region
      $region45: #{stcspa_forward.6} parent=39 // pred_check
        %p1294 = pneg %p172
      $region46: #{stcspa_forward.6} parent=39 // pred_check_branch
        %1296 = sbr.rel (%p1294) target = $region48
      $region47: #{stcspa_forward.6} parent=39 // pred_region
        %s1297 = smul.u32 32, %s18
      $region48: #{stcspa_forward.6} parent=39 // pred_fallthru
        _
    $region40: #{stcspa_forward.6} parent=5 // pred_fallthru
      _
    %p1298 = scmp.le.s32.totalorder 2, %s13
    // Predicated region
    $region49: #{stcspa_forward.6} parent=5 // pred_check
      %p1299 = pneg %p1298
    $region50: #{stcspa_forward.6} parent=5 // pred_check_branch
      %1301 = sbr.rel (%p1299) target = $region52
    $region51: #{stcspa_forward.6} parent=5 // pred_region
      %s1302 = ssub.s32 %s13, 2
      // Predicated region
      $region53: #{stcspa_forward.6} parent=51 // pred_check
        %p1303 = pneg %p152
      $region54: #{stcspa_forward.6} parent=51 // pred_check_branch
        %1305 = sbr.rel (%p1303) target = $region56
      $region55: #{stcspa_forward.6} parent=51 // pred_region
        %s1306 = smul.u32 32, %s19
        %p1307 = scmp.lt.s32.totalorder %s1306, 63
        %s1308 = scalar_select %p1307, %s1306, 63
        %s1309 = smul.addr %s1308, 8
        %s1310 = scalar_lea.vmem %s5, %s1309
      $region56: #{stcspa_forward.6} parent=51 // pred_fallthru
        _
      // Predicated region
      $region57: #{stcspa_forward.6} parent=51 // pred_check
        %p1311 = pneg %p178
      $region58: #{stcspa_forward.6} parent=51 // pred_check_branch
        %1313 = sbr.rel (%p1311) target = $region60
      $region59: #{stcspa_forward.6} parent=51 // pred_region
        %s1314 = smul.u32 32, %s19
        %p1315 = scmp.lt.s32.totalorder %s1314, 63
        %s1316 = scalar_select %p1315, %s1314, 63
        %s1317 = smul.addr %s1316, 8
        %s1318 = scalar_lea.vmem %s6, %s1317
      $region60: #{stcspa_forward.6} parent=51 // pred_fallthru
        _
    $region52: #{stcspa_forward.6} parent=5 // pred_fallthru
      _
  $region6: #{stcspa_forward.6} parent=0 // loop_footer
    %s17 = sadd.s32 1, %s13
  $region7: #{stcspa_forward.6} parent=0 // loop_footer_branch
    %12 = sbr.rel target = $region3
  $region8: #{stcspa_forward.6} parent=0 // loop_exit
    _

// kernel: stcspa_forward.7
$region0: #{stcspa_forward.7}
  #allocation0 [shape = 'u32[]', space=smem, size = 0x4, offset = 0x4, fixed_abs, tag = 'smem constant byte address 0x4 - core index']
  #allocation1 [shape = 'u32[144,128]{1,0:T(1,128)}', space=vmem, size = 0x12000, scoped, tag = 'internal scratch']
  %s0 = inlined_call_operand.vmem [shape: f32[2,16,16,32], index: 0, kind: input, shape index: {}]
  %s1 = inlined_call_operand.vmem [shape: bf16[32,32], index: 1, kind: input, shape index: {}]
  %s2 = inlined_call_operand.vmem [shape: bf16[32,32], index: 2, kind: input, shape index: {}]
  %s3 = inlined_call_operand.vmem [shape: bf16[32,32], index: 3, kind: input, shape index: {}]
  %s4 = inlined_call_operand.vmem [shape: f32[1,32], index: 4, kind: input, shape index: {}]
  %s5 = inlined_call_operand.vmem [shape: f32[1,32], index: 5, kind: input, shape index: {}]
  %s6 = inlined_call_operand.vmem [shape: f32[1,32], index: 6, kind: input, shape index: {}]
  %s7 = inlined_call_operand.vmem [shape: bf16[32,32], index: 7, kind: input, shape index: {}]
  %s8 = inlined_call_operand.vmem [shape: f32[1,32], index: 8, kind: input, shape index: {}]
  %s9 = inlined_call_operand.vmem [shape: f32[1,32], index: 9, kind: input, shape index: {}]
  %s10 = inlined_call_operand.vmem [shape: f32[1,32], index: 10, kind: input, shape index: {}]
  %s11 = inlined_call_operand.vmem [shape: f32[1,1,64,64], index: 11, kind: input, shape index: {}]
  %s12 = inlined_call_operand.vmem [shape: f32[2,16,16,32], index: 12, kind: output, shape index: {}]
  %s13 = sld [smem:[#allocation0]]
  $region81: #{stcspa_forward.7} parent=0
    _
  %s15 = ssub.s32 1, %s13
  %s16 = scalar_select 0, %s15, %s13
  loop: start=0, step=1, limit=6
  $region2: #{stcspa_forward.7} parent=0 // loop_pre_header
    _
  $region3: #{stcspa_forward.7} parent=0 // loop_header
    %s18 = sphi 0, %s22
    %p19 = scmp.ge.s32.totalorder %s18, 6
    %s25 = sphi 0, %s37
    %s26 = sphi 0, %s33
    %s27 = sphi 0, %s25
    %s28 = sphi 0, %s26
    %s29 = sphi 0, %s27
    %s30 = sphi 0, %s28
    %s42 = sphi 0, %s44
    %s45 = sphi 0, %s42
    %s46 = sphi 0, %s45
    %s62 = sphi 0, %s46
    %s66 = sphi 0, %s66
    %s68 = sphi 0, %s66
    %s69 = sphi 0, %s68
    %s83 = sphi 0, %s69
    %s87 = sphi 0, %s87
    %s89 = sphi 0, %s87
    %s90 = sphi 0, %s89
    %s104 = sphi 0, %s90
    %s108 = sphi 0, %s108
    %s110 = sphi 0, %s108
    %s111 = sphi 0, %s110
    %s125 = sphi 0, %s111
    %s129 = sphi 0, %s129
    %s131 = sphi 0, %s129
    %s132 = sphi 0, %s131
    %s146 = sphi 0, %s132
    %s150 = sphi 0, %s150
    %s152 = sphi 0, %s150
    %s153 = sphi 0, %s152
    %s167 = sphi 0, %s153
    %s171 = sphi 0, %s171
    %s173 = sphi 0, %s171
    %s174 = sphi 0, %s173
    %s188 = sphi 0, %s174
    %s192 = sphi 0, %s192
    %s194 = sphi 0, %s192
    %s195 = sphi 0, %s194
    %s209 = sphi 0, %s195
    %s213 = sphi 0, %s213
    %s215 = sphi 0, %s213
    %s216 = sphi 0, %s215
    %s230 = sphi 0, %s216
    %s234 = sphi 0, %s234
    %s236 = sphi 0, %s234
    %s237 = sphi 0, %s236
    %s251 = sphi 0, %s237
    %s255 = sphi 0, %s255
    %s257 = sphi 0, %s255
    %s258 = sphi 0, %s257
    %s272 = sphi 0, %s258
    %s276 = sphi 0, %s276
    %s278 = sphi 0, %s276
    %s279 = sphi 0, %s278
    %s293 = sphi 0, %s279
    %s301 = sphi 0, %s303
    %s304 = sphi 0, %s301
    %s305 = sphi 0, %s304
    %s321 = sphi 0, %s305
  $region4: #{stcspa_forward.7} parent=0 // loop_header_branch
    %21 = sbr.rel (%p19) target = $region8
  $region5: #{stcspa_forward.7} parent=0 // loop_body
    %s23 = ssub.s32 %s18, 1
    %s24 = ssub.s32 %s18, 2
    %s31 = sadd.s32 1, %s26
    %p32 = scmp.ge.s32.totalorder %s31, 2
    %s33 = scalar_select %p32, 0, %s31
    %s34 = sadd.s32 1, %s25
    %s35 = scalar_select %p32, %s34, %s25
    %p36 = scmp.ge.s32.totalorder %s35, 2
    %s37 = scalar_select %p36, 0, %s35
    %s38 = ssub.s32 %s25, %s37
    %s39 = ssub.s32 %s26, %s33
    %s40 = sor.u32 %s38, %s39
    %p41 = scmp.eq.s32.totalorder %s40, 0
    %s43 = sadd.s32 %s42, 1
    %s44 = scalar_select %p41, %s42, %s43
    %p47 = pneg %p41
    %p48 = scmp.eq.s32.totalorder %s18, 3
    %p49 = por %p47, %p48
    %p50 = scmp.ne.s32.totalorder %s42, %s45
    %p51 = scmp.eq.s32.totalorder %s18, 0
    %p52 = por %p50, %p51
    %p53 = scmp.ne.s32.totalorder %s42, %s45
    %p54 = scmp.eq.s32.totalorder %s23, 3
    %p55 = por %p53, %p54
    %p56 = scmp.ne.s32.totalorder %s45, %s46
    %p57 = scmp.eq.s32.totalorder %s23, 0
    %p58 = por %p56, %p57
    %p59 = scmp.ne.s32.totalorder %s45, %s46
    %p60 = scmp.eq.s32.totalorder %s24, 3
    %p61 = por %p59, %p60
    %p63 = scmp.ne.s32.totalorder %s46, %s62
    %p64 = scmp.eq.s32.totalorder %s24, 0
    %p65 = por %p63, %p64
    %s67 = sadd.s32 %s66, 1
    %p70 = scmp.eq.s32.totalorder %s18, 3
    %p71 = scmp.ne.s32.totalorder %s66, %s68
    %p72 = scmp.eq.s32.totalorder %s18, 0
    %p73 = por %p71, %p72
    %p74 = scmp.ne.s32.totalorder %s66, %s68
    %p75 = scmp.eq.s32.totalorder %s23, 3
    %p76 = por %p74, %p75
    %p77 = scmp.ne.s32.totalorder %s68, %s69
    %p78 = scmp.eq.s32.totalorder %s23, 0
    %p79 = por %p77, %p78
    %p80 = scmp.ne.s32.totalorder %s68, %s69
    %p81 = scmp.eq.s32.totalorder %s24, 3
    %p82 = por %p80, %p81
    %p84 = scmp.ne.s32.totalorder %s69, %s83
    %p85 = scmp.eq.s32.totalorder %s24, 0
    %p86 = por %p84, %p85
    %s88 = sadd.s32 %s87, 1
    %p91 = scmp.eq.s32.totalorder %s18, 3
    %p92 = scmp.ne.s32.totalorder %s87, %s89
    %p93 = scmp.eq.s32.totalorder %s18, 0
    %p94 = por %p92, %p93
    %p95 = scmp.ne.s32.totalorder %s87, %s89
    %p96 = scmp.eq.s32.totalorder %s23, 3
    %p97 = por %p95, %p96
    %p98 = scmp.ne.s32.totalorder %s89, %s90
    %p99 = scmp.eq.s32.totalorder %s23, 0
    %p100 = por %p98, %p99
    %p101 = scmp.ne.s32.totalorder %s89, %s90
    %p102 = scmp.eq.s32.totalorder %s24, 3
    %p103 = por %p101, %p102
    %p105 = scmp.ne.s32.totalorder %s90, %s104
    %p106 = scmp.eq.s32.totalorder %s24, 0
    %p107 = por %p105, %p106
    %s109 = sadd.s32 %s108, 1
    %p112 = scmp.eq.s32.totalorder %s18, 3
    %p113 = scmp.ne.s32.totalorder %s108, %s110
    %p114 = scmp.eq.s32.totalorder %s18, 0
    %p115 = por %p113, %p114
    %p116 = scmp.ne.s32.totalorder %s108, %s110
    %p117 = scmp.eq.s32.totalorder %s23, 3
    %p118 = por %p116, %p117
    %p119 = scmp.ne.s32.totalorder %s110, %s111
    %p120 = scmp.eq.s32.totalorder %s23, 0
    %p121 = por %p119, %p120
    %p122 = scmp.ne.s32.totalorder %s110, %s111
    %p123 = scmp.eq.s32.totalorder %s24, 3
    %p124 = por %p122, %p123
    %p126 = scmp.ne.s32.totalorder %s111, %s125
    %p127 = scmp.eq.s32.totalorder %s24, 0
    %p128 = por %p126, %p127
    %s130 = sadd.s32 %s129, 1
    %p133 = scmp.eq.s32.totalorder %s18, 3
    %p134 = scmp.ne.s32.totalorder %s129, %s131
    %p135 = scmp.eq.s32.totalorder %s18, 0
    %p136 = por %p134, %p135
    %p137 = scmp.ne.s32.totalorder %s129, %s131
    %p138 = scmp.eq.s32.totalorder %s23, 3
    %p139 = por %p137, %p138
    %p140 = scmp.ne.s32.totalorder %s131, %s132
    %p141 = scmp.eq.s32.totalorder %s23, 0
    %p142 = por %p140, %p141
    %p143 = scmp.ne.s32.totalorder %s131, %s132
    %p144 = scmp.eq.s32.totalorder %s24, 3
    %p145 = por %p143, %p144
    %p147 = scmp.ne.s32.totalorder %s132, %s146
    %p148 = scmp.eq.s32.totalorder %s24, 0
    %p149 = por %p147, %p148
    %s151 = sadd.s32 %s150, 1
    %p154 = scmp.eq.s32.totalorder %s18, 3
    %p155 = scmp.ne.s32.totalorder %s150, %s152
    %p156 = scmp.eq.s32.totalorder %s18, 0
    %p157 = por %p155, %p156
    %p158 = scmp.ne.s32.totalorder %s150, %s152
    %p159 = scmp.eq.s32.totalorder %s23, 3
    %p160 = por %p158, %p159
    %p161 = scmp.ne.s32.totalorder %s152, %s153
    %p162 = scmp.eq.s32.totalorder %s23, 0
    %p163 = por %p161, %p162
    %p164 = scmp.ne.s32.totalorder %s152, %s153
    %p165 = scmp.eq.s32.totalorder %s24, 3
    %p166 = por %p164, %p165
    %p168 = scmp.ne.s32.totalorder %s153, %s167
    %p169 = scmp.eq.s32.totalorder %s24, 0
    %p170 = por %p168, %p169
    %s172 = sadd.s32 %s171, 1
    %p175 = scmp.eq.s32.totalorder %s18, 3
    %p176 = scmp.ne.s32.totalorder %s171, %s173
    %p177 = scmp.eq.s32.totalorder %s18, 0
    %p178 = por %p176, %p177
    %p179 = scmp.ne.s32.totalorder %s171, %s173
    %p180 = scmp.eq.s32.totalorder %s23, 3
    %p181 = por %p179, %p180
    %p182 = scmp.ne.s32.totalorder %s173, %s174
    %p183 = scmp.eq.s32.totalorder %s23, 0
    %p184 = por %p182, %p183
    %p185 = scmp.ne.s32.totalorder %s173, %s174
    %p186 = scmp.eq.s32.totalorder %s24, 3
    %p187 = por %p185, %p186
    %p189 = scmp.ne.s32.totalorder %s174, %s188
    %p190 = scmp.eq.s32.totalorder %s24, 0
    %p191 = por %p189, %p190
    %s193 = sadd.s32 %s192, 1
    %p196 = scmp.eq.s32.totalorder %s18, 3
    %p197 = scmp.ne.s32.totalorder %s192, %s194
    %p198 = scmp.eq.s32.totalorder %s18, 0
    %p199 = por %p197, %p198
    %p200 = scmp.ne.s32.totalorder %s192, %s194
    %p201 = scmp.eq.s32.totalorder %s23, 3
    %p202 = por %p200, %p201
    %p203 = scmp.ne.s32.totalorder %s194, %s195
    %p204 = scmp.eq.s32.totalorder %s23, 0
    %p205 = por %p203, %p204
    %p206 = scmp.ne.s32.totalorder %s194, %s195
    %p207 = scmp.eq.s32.totalorder %s24, 3
    %p208 = por %p206, %p207
    %p210 = scmp.ne.s32.totalorder %s195, %s209
    %p211 = scmp.eq.s32.totalorder %s24, 0
    %p212 = por %p210, %p211
    %s214 = sadd.s32 %s213, 1
    %p217 = scmp.eq.s32.totalorder %s18, 3
    %p218 = scmp.ne.s32.totalorder %s213, %s215
    %p219 = scmp.eq.s32.totalorder %s18, 0
    %p220 = por %p218, %p219
    %p221 = scmp.ne.s32.totalorder %s213, %s215
    %p222 = scmp.eq.s32.totalorder %s23, 3
    %p223 = por %p221, %p222
    %p224 = scmp.ne.s32.totalorder %s215, %s216
    %p225 = scmp.eq.s32.totalorder %s23, 0
    %p226 = por %p224, %p225
    %p227 = scmp.ne.s32.totalorder %s215, %s216
    %p228 = scmp.eq.s32.totalorder %s24, 3
    %p229 = por %p227, %p228
    %p231 = scmp.ne.s32.totalorder %s216, %s230
    %p232 = scmp.eq.s32.totalorder %s24, 0
    %p233 = por %p231, %p232
    %s235 = sadd.s32 %s234, 1
    %p238 = scmp.eq.s32.totalorder %s18, 3
    %p239 = scmp.ne.s32.totalorder %s234, %s236
    %p240 = scmp.eq.s32.totalorder %s18, 0
    %p241 = por %p239, %p240
    %p242 = scmp.ne.s32.totalorder %s234, %s236
    %p243 = scmp.eq.s32.totalorder %s23, 3
    %p244 = por %p242, %p243
    %p245 = scmp.ne.s32.totalorder %s236, %s237
    %p246 = scmp.eq.s32.totalorder %s23, 0
    %p247 = por %p245, %p246
    %p248 = scmp.ne.s32.totalorder %s236, %s237
    %p249 = scmp.eq.s32.totalorder %s24, 3
    %p250 = por %p248, %p249
    %p252 = scmp.ne.s32.totalorder %s237, %s251
    %p253 = scmp.eq.s32.totalorder %s24, 0
    %p254 = por %p252, %p253
    %s256 = sadd.s32 %s255, 1
    %p259 = scmp.eq.s32.totalorder %s18, 3
    %p260 = scmp.ne.s32.totalorder %s255, %s257
    %p261 = scmp.eq.s32.totalorder %s18, 0
    %p262 = por %p260, %p261
    %p263 = scmp.ne.s32.totalorder %s255, %s257
    %p264 = scmp.eq.s32.totalorder %s23, 3
    %p265 = por %p263, %p264
    %p266 = scmp.ne.s32.totalorder %s257, %s258
    %p267 = scmp.eq.s32.totalorder %s23, 0
    %p268 = por %p266, %p267
    %p269 = scmp.ne.s32.totalorder %s257, %s258
    %p270 = scmp.eq.s32.totalorder %s24, 3
    %p271 = por %p269, %p270
    %p273 = scmp.ne.s32.totalorder %s258, %s272
    %p274 = scmp.eq.s32.totalorder %s24, 0
    %p275 = por %p273, %p274
    %s277 = sadd.s32 %s276, 1
    %p280 = scmp.eq.s32.totalorder %s18, 3
    %p281 = scmp.ne.s32.totalorder %s276, %s278
    %p282 = scmp.eq.s32.totalorder %s18, 0
    %p283 = por %p281, %p282
    %p284 = scmp.ne.s32.totalorder %s276, %s278
    %p285 = scmp.eq.s32.totalorder %s23, 3
    %p286 = por %p284, %p285
    %p287 = scmp.ne.s32.totalorder %s278, %s279
    %p288 = scmp.eq.s32.totalorder %s23, 0
    %p289 = por %p287, %p288
    %p290 = scmp.ne.s32.totalorder %s278, %s279
    %p291 = scmp.eq.s32.totalorder %s24, 3
    %p292 = por %p290, %p291
    %p294 = scmp.ne.s32.totalorder %s279, %s293
    %p295 = scmp.eq.s32.totalorder %s24, 0
    %p296 = por %p294, %p295
    %s297 = ssub.s32 %s25, %s37
    %s298 = ssub.s32 %s26, %s33
    %s299 = sor.u32 %s297, %s298
    %p300 = scmp.eq.s32.totalorder %s299, 0
    %s302 = sadd.s32 %s301, 1
    %s303 = scalar_select %p300, %s301, %s302
    %p306 = pneg %p300
    %p307 = scmp.eq.s32.totalorder %s18, 3
    %p308 = por %p306, %p307
    %p309 = scmp.ne.s32.totalorder %s301, %s304
    %p310 = scmp.eq.s32.totalorder %s18, 0
    %p311 = por %p309, %p310
    %p312 = scmp.ne.s32.totalorder %s301, %s304
    %p313 = scmp.eq.s32.totalorder %s23, 3
    %p314 = por %p312, %p313
    %p315 = scmp.ne.s32.totalorder %s304, %s305
    %p316 = scmp.eq.s32.totalorder %s23, 0
    %p317 = por %p315, %p316
    %p318 = scmp.ne.s32.totalorder %s304, %s305
    %p319 = scmp.eq.s32.totalorder %s24, 3
    %p320 = por %p318, %p319
    %p322 = scmp.ne.s32.totalorder %s305, %s321
    %p323 = scmp.eq.s32.totalorder %s24, 0
    %p324 = por %p322, %p323
    %p325 = scmp.le.s32.totalorder 1, %s18
    %p326 = scmp.lt.s32.totalorder %s18, 5
    %p327 = pnand %p325, %p326
    %p328 = pneg %p327
    // Predicated region
    $region9: #{stcspa_forward.7} parent=5 // pred_check
      _
    $region10: #{stcspa_forward.7} parent=5 // pred_check_branch
      %330 = sbr.rel (%p327) target = $region12
    $region11: #{stcspa_forward.7} parent=5 // pred_region
      %s331 = ssub.s32 %s18, 1
      // Predicated region
      $region13: #{stcspa_forward.7} parent=11 // pred_check
        %p332 = pneg %p79
      $region14: #{stcspa_forward.7} parent=11 // pred_check_branch
        %334 = sbr.rel (%p332) target = $region16
      $region15: #{stcspa_forward.7} parent=11 // pred_region
        _
      $region16: #{stcspa_forward.7} parent=11 // pred_fallthru
        _
      // Predicated region
      $region17: #{stcspa_forward.7} parent=11 // pred_check
        %p335 = pneg %p100
      $region18: #{stcspa_forward.7} parent=11 // pred_check_branch
        %337 = sbr.rel (%p335) target = $region20
      $region19: #{stcspa_forward.7} parent=11 // pred_region
        _
      $region20: #{stcspa_forward.7} parent=11 // pred_fallthru
        _
      // Predicated region
      $region21: #{stcspa_forward.7} parent=11 // pred_check
        %p338 = pneg %p121
      $region22: #{stcspa_forward.7} parent=11 // pred_check_branch
        %340 = sbr.rel (%p338) target = $region24
      $region23: #{stcspa_forward.7} parent=11 // pred_region
        _
      $region24: #{stcspa_forward.7} parent=11 // pred_fallthru
        _
      // Predicated region
      $region25: #{stcspa_forward.7} parent=11 // pred_check
        %p341 = pneg %p142
      $region26: #{stcspa_forward.7} parent=11 // pred_check_branch
        %343 = sbr.rel (%p341) target = $region28
      $region27: #{stcspa_forward.7} parent=11 // pred_region
        _
      $region28: #{stcspa_forward.7} parent=11 // pred_fallthru
        _
      // Predicated region
      $region29: #{stcspa_forward.7} parent=11 // pred_check
        %p344 = pneg %p163
      $region30: #{stcspa_forward.7} parent=11 // pred_check_branch
        %346 = sbr.rel (%p344) target = $region32
      $region31: #{stcspa_forward.7} parent=11 // pred_region
        _
      $region32: #{stcspa_forward.7} parent=11 // pred_fallthru
        _
      // Predicated region
      $region33: #{stcspa_forward.7} parent=11 // pred_check
        %p347 = pneg %p184
      $region34: #{stcspa_forward.7} parent=11 // pred_check_branch
        %349 = sbr.rel (%p347) target = $region36
      $region35: #{stcspa_forward.7} parent=11 // pred_region
        _
      $region36: #{stcspa_forward.7} parent=11 // pred_fallthru
        _
      // Predicated region
      $region37: #{stcspa_forward.7} parent=11 // pred_check
        %p350 = pneg %p205
      $region38: #{stcspa_forward.7} parent=11 // pred_check_branch
        %352 = sbr.rel (%p350) target = $region40
      $region39: #{stcspa_forward.7} parent=11 // pred_region
        _
      $region40: #{stcspa_forward.7} parent=11 // pred_fallthru
        _
      // Predicated region
      $region41: #{stcspa_forward.7} parent=11 // pred_check
        %p353 = pneg %p226
      $region42: #{stcspa_forward.7} parent=11 // pred_check_branch
        %355 = sbr.rel (%p353) target = $region44
      $region43: #{stcspa_forward.7} parent=11 // pred_region
        _
      $region44: #{stcspa_forward.7} parent=11 // pred_fallthru
        _
      // Predicated region
      $region45: #{stcspa_forward.7} parent=11 // pred_check
        %p356 = pneg %p247
      $region46: #{stcspa_forward.7} parent=11 // pred_check_branch
        %358 = sbr.rel (%p356) target = $region48
      $region47: #{stcspa_forward.7} parent=11 // pred_region
        _
      $region48: #{stcspa_forward.7} parent=11 // pred_fallthru
        _
      // Predicated region
      $region49: #{stcspa_forward.7} parent=11 // pred_check
        %p359 = pneg %p268
      $region50: #{stcspa_forward.7} parent=11 // pred_check_branch
        %361 = sbr.rel (%p359) target = $region52
      $region51: #{stcspa_forward.7} parent=11 // pred_region
        _
      $region52: #{stcspa_forward.7} parent=11 // pred_fallthru
        _
      // Predicated region
      $region53: #{stcspa_forward.7} parent=11 // pred_check
        %p362 = pneg %p289
      $region54: #{stcspa_forward.7} parent=11 // pred_check_branch
        %364 = sbr.rel (%p362) target = $region56
      $region55: #{stcspa_forward.7} parent=11 // pred_region
        _
      $region56: #{stcspa_forward.7} parent=11 // pred_fallthru
        _
    $region12: #{stcspa_forward.7} parent=5 // pred_fallthru
      _
    %p365 = scmp.lt.s32.totalorder %s18, 4
    // Predicated region
    $region57: #{stcspa_forward.7} parent=5 // pred_check
      %p366 = pneg %p365
    $region58: #{stcspa_forward.7} parent=5 // pred_check_branch
      %368 = sbr.rel (%p366) target = $region60
    $region59: #{stcspa_forward.7} parent=5 // pred_region
      // Predicated region
      $region61: #{stcspa_forward.7} parent=59 // pred_check
        %p369 = pneg %p52
      $region62: #{stcspa_forward.7} parent=59 // pred_check_branch
        %371 = sbr.rel (%p369) target = $region64
      $region63: #{stcspa_forward.7} parent=59 // pred_region
        %s372 = smul.u32 8, %s26
        %p373 = scmp.lt.s32.totalorder %s25, 1
        %s374 = scalar_select %p373, %s25, 1
        %p375 = scmp.lt.s32.totalorder %s372, 15
        %s376 = scalar_select %p375, %s372, 15
        %s377 = smul.addr %s376, 2
        %s378 = smul.addr %s374, 32
        %s379 = sadd.s32 %s377, %s378
        %s380 = smul.addr %s379, 8
        %s381 = scalar_lea.vmem %s0, %s380
        %s382 = smul.u32 8, %s26
      $region64: #{stcspa_forward.7} parent=59 // pred_fallthru
        _
    $region60: #{stcspa_forward.7} parent=5 // pred_fallthru
      _
    %p383 = scmp.le.s32.totalorder 1, %s18
    %p384 = scmp.lt.s32.totalorder %s18, 5
    %p385 = pnand %p383, %p384
    %p386 = pneg %p385
    // Predicated region
    $region65: #{stcspa_forward.7} parent=5 // pred_check
      _
    $region66: #{stcspa_forward.7} parent=5 // pred_check_branch
      %388 = sbr.rel (%p385) target = $region68
    $region67: #{stcspa_forward.7} parent=5 // pred_region
      %s389 = ssub.s32 %s18, 1
      %s390 = smul.u32 8, %s28
      %p391 = scmp.lt.s32.totalorder %s27, 1
      %s392 = scalar_select %p391, %s27, 1
      %p393 = scmp.lt.s32.totalorder %s390, 15
      %s394 = scalar_select %p393, %s390, 15
      %s395 = smul.addr %s394, 2
      %s396 = smul.addr %s392, 32
      %s397 = sadd.s32 %s395, %s396
      %s398 = smul.addr %s397, 8
      %s399 = scalar_lea.vmem %s0, %s398
      %p400 = pneg %p58
      %p401 = pneg %p55
      %p402 = pneg %p79
      %p403 = pneg %p76
      %p404 = pneg %p100
      %p405 = pneg %p97
      %p406 = pneg %p121
      %p407 = pneg %p118
      %p408 = pneg %p142
      %p409 = pneg %p139
      %p410 = pneg %p163
      %p411 = pneg %p160
      %p412 = pneg %p184
      %p413 = pneg %p181
      %p414 = pneg %p205
      %p415 = pneg %p202
      %p416 = pneg %p226
      %p417 = pneg %p223
      %p418 = pneg %p247
      %p419 = pneg %p244
      %p420 = pneg %p268
      %p421 = pneg %p265
      %p422 = pneg %p289
      %p423 = pneg %p286
      %p424 = pneg %p317
      %p425 = pneg %p314
      %s426 = smul.u32 8, %s28
      %p427 = scmp.lt.s32.totalorder %s27, 1
      %s428 = scalar_select %p427, %s27, 1
      %p429 = scmp.lt.s32.totalorder %s426, 15
      %s430 = scalar_select %p429, %s426, 15
      %s431 = smul.addr %s430, 2
      %s432 = smul.addr %s428, 32
      %s433 = sadd.s32 %s431, %s432
      %s434 = smul.addr %s433, 8
      %s435 = scalar_lea.vmem %s12, %s434
      %s436 = smul.u32 8, %s28
      %p437 = scmp.lt.s32.totalorder %s27, 1
      %s438 = scalar_select %p437, %s27, 1
      %p439 = scmp.lt.s32.totalorder %s436, 15
      %s440 = scalar_select %p439, %s436, 15
      %s441 = smul.addr %s440, 2
      %s442 = smul.addr %s438, 32
      %s443 = sadd.s32 %s441, %s442
      %s444 = smul.addr %s443, 8
      %s445 = scalar_lea.vmem %s0, %s444
      %s446 = smul.u32 8, %s28
      %s447 = smul.u32 8, %s28
      %p448 = scmp.lt.s32.totalorder %s27, 1
      %s449 = scalar_select %p448, %s27, 1
      %p450 = scmp.lt.s32.totalorder %s447, 15
      %s451 = scalar_select %p450, %s447, 15
      %s452 = smul.addr %s451, 2
      %s453 = smul.addr %s449, 32
      %s454 = sadd.s32 %s452, %s453
      %s455 = smul.addr %s454, 8
      %s456 = scalar_lea.vmem %s12, %s455
      %s457 = smul.u32 8, %s28
      %v459 = vld [vmem:[%s445] sm:$0xff]
      %v460 = vld [vmem:[%s445 + $0x8] sm:$0xff]
      %v461 = vld [vmem:[%s445 + $0x10] sm:$0xff]
      %v462 = vld [vmem:[%s445 + $0x18] sm:$0xff]
      %v463 = vld [vmem:[%s445 + $0x20] sm:$0xff]
      %v464 = vld [vmem:[%s445 + $0x28] sm:$0xff]
      %v465 = vld [vmem:[%s445 + $0x30] sm:$0xff]
      %v466 = vld [vmem:[%s445 + $0x38] sm:$0xff]
      %v467 = vld [vmem:[%s445 + $0x40] sm:$0xff]
      %v468 = vld [vmem:[%s445 + $0x48] sm:$0xff]
      %v469 = vld [vmem:[%s445 + $0x50] sm:$0xff]
      %v470 = vld [vmem:[%s445 + $0x58] sm:$0xff]
      %v471 = vld [vmem:[%s445 + $0x60] sm:$0xff]
      %v472 = vld [vmem:[%s445 + $0x68] sm:$0xff]
      %v473 = vld [vmem:[%s445 + $0x70] sm:$0xff]
      %v474 = vld [vmem:[%s445 + $0x78] sm:$0xff]
      %vm475 = vcmask 261120
      %v476 = vsel %vm475, %v459, 0.0
      %477 = vadd.xlane.f32.xlu0 %v476
      %v478 = vpop.xlane.xlu0 %477
      %v479 = vsel %vm475, %v461, 0.0
      %480 = vadd.xlane.f32.xlu0 %v479
      %v481 = vpop.xlane.xlu0 %480
      %v482 = vsel %vm475, %v463, 0.0
      %483 = vadd.xlane.f32.xlu0 %v482
      %v484 = vpop.xlane.xlu0 %483
      %v485 = vsel %vm475, %v465, 0.0
      %486 = vadd.xlane.f32.xlu0 %v485
      %v487 = vpop.xlane.xlu0 %486
      %v488 = vsel %vm475, %v467, 0.0
      %489 = vadd.xlane.f32.xlu0 %v488
      %v490 = vpop.xlane.xlu0 %489
      %v491 = vsel %vm475, %v469, 0.0
      %492 = vadd.xlane.f32.xlu0 %v491
      %v493 = vpop.xlane.xlu0 %492
      %v494 = vsel %vm475, %v471, 0.0
      %495 = vadd.xlane.f32.xlu0 %v494
      %v496 = vpop.xlane.xlu0 %495
      %v497 = vsel %vm475, %v473, 0.0
      %498 = vadd.xlane.f32.xlu0 %v497
      %v499 = vpop.xlane.xlu0 %498
      %v500 = vsel %vm475, %v460, 0.0
      %501 = vadd.xlane.f32.xlu0 %v500
      %v502 = vpop.xlane.xlu0 %501
      %v503 = vsel %vm475, %v462, 0.0
      %504 = vadd.xlane.f32.xlu0 %v503
      %v505 = vpop.xlane.xlu0 %504
      %v506 = vsel %vm475, %v464, 0.0
      %507 = vadd.xlane.f32.xlu0 %v506
      %v508 = vpop.xlane.xlu0 %507
      %v509 = vsel %vm475, %v466, 0.0
      %510 = vadd.xlane.f32.xlu0 %v509
      %v511 = vpop.xlane.xlu0 %510
      %v512 = vsel %vm475, %v468, 0.0
      %513 = vadd.xlane.f32.xlu0 %v512
      %v514 = vpop.xlane.xlu0 %513
      %v515 = vsel %vm475, %v470, 0.0
      %516 = vadd.xlane.f32.xlu0 %v515
      %v517 = vpop.xlane.xlu0 %516
      %v518 = vsel %vm475, %v472, 0.0
      %519 = vadd.xlane.f32.xlu0 %v518
      %v520 = vpop.xlane.xlu0 %519
      %v521 = vsel %vm475, %v474, 0.0
      %522 = vadd.xlane.f32.xlu0 %v521
      %v523 = vpop.xlane.xlu0 %522
      %v524 = vrcp.pop 32.0
      %v525 = vmul.f32 %v478, %v524
      %v526 = vmul.f32 %v481, %v524
      %v527 = vmul.f32 %v484, %v524
      %v528 = vmul.f32 %v487, %v524
      %v529 = vmul.f32 %v490, %v524
      %v530 = vmul.f32 %v493, %v524
      %v531 = vmul.f32 %v496, %v524
      %v532 = vmul.f32 %v499, %v524
      %v533 = vmul.f32 %v502, %v524
      %v534 = vmul.f32 %v505, %v524
      %v535 = vmul.f32 %v508, %v524
      %v536 = vmul.f32 %v511, %v524
      %v537 = vmul.f32 %v514, %v524
      %v538 = vmul.f32 %v517, %v524
      %v539 = vmul.f32 %v520, %v524
      %v540 = vmul.f32 %v523, %v524
      %v541 = vsub.f32 %v459, %v525
      %v542 = vsub.f32 %v461, %v526
      %v543 = vsub.f32 %v463, %v527
      %v544 = vsub.f32 %v465, %v528
      %v545 = vsub.f32 %v467, %v529
      %v546 = vsub.f32 %v469, %v530
      %v547 = vsub.f32 %v471, %v531
      %v548 = vsub.f32 %v473, %v532
      %v549 = vsub.f32 %v460, %v533
      %v550 = vsub.f32 %v462, %v534
      %v551 = vsub.f32 %v464, %v535
      %v552 = vsub.f32 %v466, %v536
      %v553 = vsub.f32 %v468, %v537
      %v554 = vsub.f32 %v470, %v538
      %v555 = vsub.f32 %v472, %v539
      %v556 = vsub.f32 %v474, %v540
      %v557 = vmul.f32 %v541, %v541
      %v558 = vmul.f32 %v542, %v542
      %v559 = vmul.f32 %v543, %v543
      %v560 = vmul.f32 %v544, %v544
      %v561 = vmul.f32 %v545, %v545
      %v562 = vmul.f32 %v546, %v546
      %v563 = vmul.f32 %v547, %v547
      %v564 = vmul.f32 %v548, %v548
      %v565 = vmul.f32 %v549, %v549
      %v566 = vmul.f32 %v550, %v550
      %v567 = vmul.f32 %v551, %v551
      %v568 = vmul.f32 %v552, %v552
      %v569 = vmul.f32 %v553, %v553
      %v570 = vmul.f32 %v554, %v554
      %v571 = vmul.f32 %v555, %v555
      %v572 = vmul.f32 %v556, %v556
      %v573 = vsel %vm475, %v557, 0.0
      %574 = vadd.xlane.f32.xlu0 %v573
      %v575 = vpop.xlane.xlu0 %574
      %v576 = vsel %vm475, %v558, 0.0
      %577 = vadd.xlane.f32.xlu0 %v576
      %v578 = vpop.xlane.xlu0 %577
      %v579 = vsel %vm475, %v559, 0.0
      %580 = vadd.xlane.f32.xlu0 %v579
      %v581 = vpop.xlane.xlu0 %580
      %v582 = vsel %vm475, %v560, 0.0
      %583 = vadd.xlane.f32.xlu0 %v582
      %v584 = vpop.xlane.xlu0 %583
      %v585 = vsel %vm475, %v561, 0.0
      %586 = vadd.xlane.f32.xlu0 %v585
      %v587 = vpop.xlane.xlu0 %586
      %v588 = vsel %vm475, %v562, 0.0
      %589 = vadd.xlane.f32.xlu0 %v588
      %v590 = vpop.xlane.xlu0 %589
      %v591 = vsel %vm475, %v563, 0.0
      %592 = vadd.xlane.f32.xlu0 %v591
      %v593 = vpop.xlane.xlu0 %592
      %v594 = vsel %vm475, %v564, 0.0
      %595 = vadd.xlane.f32.xlu0 %v594
      %v596 = vpop.xlane.xlu0 %595
      %v597 = vsel %vm475, %v565, 0.0
      %598 = vadd.xlane.f32.xlu0 %v597
      %v599 = vpop.xlane.xlu0 %598
      %v600 = vsel %vm475, %v566, 0.0
      %601 = vadd.xlane.f32.xlu0 %v600
      %v602 = vpop.xlane.xlu0 %601
      %v603 = vsel %vm475, %v567, 0.0
      %604 = vadd.xlane.f32.xlu0 %v603
      %v605 = vpop.xlane.xlu0 %604
      %v606 = vsel %vm475, %v568, 0.0
      %607 = vadd.xlane.f32.xlu0 %v606
      %v608 = vpop.xlane.xlu0 %607
      %v609 = vsel %vm475, %v569, 0.0
      %610 = vadd.xlane.f32.xlu0 %v609
      %v611 = vpop.xlane.xlu0 %610
      %v612 = vsel %vm475, %v570, 0.0
      %613 = vadd.xlane.f32.xlu0 %v612
      %v614 = vpop.xlane.xlu0 %613
      %v615 = vsel %vm475, %v571, 0.0
      %616 = vadd.xlane.f32.xlu0 %v615
      %v617 = vpop.xlane.xlu0 %616
      %v618 = vsel %vm475, %v572, 0.0
      %619 = vadd.xlane.f32.xlu0 %v618
      %v620 = vpop.xlane.xlu0 %619
      %v621 = vmul.f32 %v575, %v524
      %v622 = vmul.f32 %v578, %v524
      %v623 = vmul.f32 %v581, %v524
      %v624 = vmul.f32 %v584, %v524
      %v625 = vmul.f32 %v587, %v524
      %v626 = vmul.f32 %v590, %v524
      %v627 = vmul.f32 %v593, %v524
      %v628 = vmul.f32 %v596, %v524
      %v629 = vmul.f32 %v599, %v524
      %v630 = vmul.f32 %v602, %v524
      %v631 = vmul.f32 %v605, %v524
      %v632 = vmul.f32 %v608, %v524
      %v633 = vmul.f32 %v611, %v524
      %v634 = vmul.f32 %v614, %v524
      %v635 = vmul.f32 %v617, %v524
      %v636 = vmul.f32 %v620, %v524
      %v637 = vadd.f32 %v621, 1e-05
      %v638 = vadd.f32 %v622, 1e-05
      %v639 = vadd.f32 %v623, 1e-05
      %v640 = vadd.f32 %v624, 1e-05
      %v641 = vadd.f32 %v625, 1e-05
      %v642 = vadd.f32 %v626, 1e-05
      %v643 = vadd.f32 %v627, 1e-05
      %v644 = vadd.f32 %v628, 1e-05
      %v645 = vadd.f32 %v629, 1e-05
      %v646 = vadd.f32 %v630, 1e-05
      %v647 = vadd.f32 %v631, 1e-05
      %v648 = vadd.f32 %v632, 1e-05
      %v649 = vadd.f32 %v633, 1e-05
      %v650 = vadd.f32 %v634, 1e-05
      %v651 = vadd.f32 %v635, 1e-05
      %v652 = vadd.f32 %v636, 1e-05
      %v653 = vrsqrt.pop %v637
      %v654 = vrsqrt.pop %v638
      %v655 = vrsqrt.pop %v639
      %v656 = vrsqrt.pop %v640
      %v657 = vrsqrt.pop %v641
      %v658 = vrsqrt.pop %v642
      %v659 = vrsqrt.pop %v643
      %v660 = vrsqrt.pop %v644
      %v661 = vrsqrt.pop %v645
      %v662 = vrsqrt.pop %v646
      %v663 = vrsqrt.pop %v647
      %v664 = vrsqrt.pop %v648
      %v665 = vrsqrt.pop %v649
      %v666 = vrsqrt.pop %v650
      %v667 = vrsqrt.pop %v651
      %v668 = vrsqrt.pop %v652
      %v669 = vmul.f32 %v541, %v653
      %v670 = vmul.f32 %v542, %v654
      %v671 = vmul.f32 %v543, %v655
      %v672 = vmul.f32 %v544, %v656
      %v673 = vmul.f32 %v545, %v657
      %v674 = vmul.f32 %v546, %v658
      %v675 = vmul.f32 %v547, %v659
      %v676 = vmul.f32 %v548, %v660
      %v677 = vmul.f32 %v549, %v661
      %v678 = vmul.f32 %v550, %v662
      %v679 = vmul.f32 %v551, %v663
      %v680 = vmul.f32 %v552, %v664
      %v681 = vmul.f32 %v553, %v665
      %v682 = vmul.f32 %v554, %v666
      %v683 = vmul.f32 %v555, %v667
      %v684 = vmul.f32 %v556, %v668
      %v685 = vld [vmem:[%s9] sm:$0x1]
      %v687 = vlaneseq
      %v688 = vshrl.u32 %v687, 7
      %v689 = vsub.s32 0, %v688
      %v690 = vrot.slane %v685, %v689
      %v692 = vmul.f32 %v669, %v690
      %v693 = vmul.f32 %v670, %v690
      %v694 = vmul.f32 %v671, %v690
      %v695 = vmul.f32 %v672, %v690
      %v696 = vmul.f32 %v673, %v690
      %v697 = vmul.f32 %v674, %v690
      %v698 = vmul.f32 %v675, %v690
      %v699 = vmul.f32 %v676, %v690
      %v700 = vmul.f32 %v677, %v690
      %v701 = vmul.f32 %v678, %v690
      %v702 = vmul.f32 %v679, %v690
      %v703 = vmul.f32 %v680, %v690
      %v704 = vmul.f32 %v681, %v690
      %v705 = vmul.f32 %v682, %v690
      %v706 = vmul.f32 %v683, %v690
      %v707 = vmul.f32 %v684, %v690
      %v708 = vld [vmem:[%s10] sm:$0x1]
      %v710 = vlaneseq
      %v711 = vshrl.u32 %v710, 7
      %v712 = vsub.s32 0, %v711
      %v713 = vrot.slane %v708, %v712
      %v715 = vadd.f32 %v692, %v713
      %v716 = vadd.f32 %v693, %v713
      %v717 = vadd.f32 %v694, %v713
      %v718 = vadd.f32 %v695, %v713
      %v719 = vadd.f32 %v696, %v713
      %v720 = vadd.f32 %v697, %v713
      %v721 = vadd.f32 %v698, %v713
      %v722 = vadd.f32 %v699, %v713
      %v723 = vadd.f32 %v700, %v713
      %v724 = vadd.f32 %v701, %v713
      %v725 = vadd.f32 %v702, %v713
      %v726 = vadd.f32 %v703, %v713
      %v727 = vadd.f32 %v704, %v713
      %v728 = vadd.f32 %v705, %v713
      %v729 = vadd.f32 %v706, %v713
      %v730 = vadd.f32 %v707, %v713
      %v731 = vpack.c.bf16 %v716, %v715
      %v732 = vpack.c.bf16 %v718, %v717
      %v733 = vpack.c.bf16 %v720, %v719
      %v734 = vpack.c.bf16 %v722, %v721
      %v735 = vpack.c.bf16 %v724, %v723
      %v736 = vpack.c.bf16 %v726, %v725
      %v737 = vpack.c.bf16 %v728, %v727
      %v738 = vpack.c.bf16 %v730, %v729
      %v739 = vld [vmem:[%s1] sm:$0xf]
      %v740 = vld [vmem:[%s1 + $0x4] sm:$0xf]
      %v741 = vld [vmem:[%s1 + $0x8] sm:$0xf]
      %v742 = vld [vmem:[%s1 + $0xc] sm:$0xf]
      %v743 = vld [vmem:[%s4] sm:$0x1]
      %v745 = vlaneseq
      %v746 = vshrl.u32 %v745, 7
      %v747 = vsub.s32 0, %v746
      %v748 = vrot.slane %v743, %v747
      %v754 = vunpack.c.l.b16 %v739
      %v755 = vunpack.c.l.b16 %v740
      %v756 = vunpack.c.l.b16 %v741
      %v757 = vunpack.c.l.b16 %v742
      %v758 = vpack.c.b16 %v755, %v754
      %v759 = vpack.c.b16 %v757, %v756
      %v763 = vsel %vm475, %v731, 0
      %v766 = vsel %vm475, %v732, 0
      %v769 = vsel %vm475, %v733, 0
      %v772 = vsel %vm475, %v734, 0
      %v775 = vsel %vm475, %v735, 0
      %v778 = vsel %vm475, %v736, 0
      %v781 = vsel %vm475, %v737, 0
      %v784 = vsel %vm475, %v738, 0
      %786 = vmatprep.subr.bf16.mxu0 0
      %787 = vmatpush1.bf16.msra.mxu0 %v758
      %788 = vmatprep.subr.bf16.mxu0 0
      %789 = vmatpush1.bf16.msra.mxu0 %v759
      %790 = vmatprep.subr.bf16.mxu0 0
      %791 = vmatpush1.bf16.msra.mxu0 0
      %792 = vmatprep.subr.bf16.mxu0 0
      %793 = vmatpush1.bf16.msra.mxu0 0
      %794 = vmatprep.subr.bf16.mxu0 0
      %795 = vmatpush1.bf16.msra.mxu0 0
      %796 = vmatprep.subr.bf16.mxu0 0
      %797 = vmatpush1.bf16.msra.mxu0 0
      %798 = vmatprep.subr.bf16.mxu0 0
      %799 = vmatpush1.bf16.msra.mxu0 0
      %800 = vmatprep.subr.bf16.mxu0 0
      %801 = vmatpush1.bf16.msra.mxu0 0
      %802 = vmatprep.subr.bf16.mxu0 0
      %803 = vmatpush1.bf16.msra.mxu0 0
      %804 = vmatprep.subr.bf16.mxu0 0
      %805 = vmatpush1.bf16.msra.mxu0 0
      %806 = vmatprep.subr.bf16.mxu0 0
      %807 = vmatpush1.bf16.msra.mxu0 0
      %808 = vmatprep.subr.bf16.mxu0 0
      %809 = vmatpush1.bf16.msra.mxu0 0
      %810 = vmatprep.subr.bf16.mxu0 0
      %811 = vmatpush1.bf16.msra.mxu0 0
      %812 = vmatprep.subr.bf16.mxu0 0
      %813 = vmatpush1.bf16.msra.mxu0 0
      %814 = vmatprep.subr.bf16.mxu0 0
      %815 = vmatpush1.bf16.msra.mxu0 0
      %816 = vmatprep.subr.bf16.mxu0 0
      %817 = vmatpush1.bf16.msra.mxu0 0
      %818 = vmatprep.mubr.bf16.mxu0 0
      %819 = vmatmul.mubr.bf16.gmra.mrb[0].mxu0 %v763
      %v820 = vpop.f32.mrb[0].mxu0
      %v821 = vadd.f32 %v748, %v820
      %v822 = vpop.f32.mrb[0].mxu0
      %v823 = vpop.f32.mrb[0].mxu0
      %v824 = vadd.f32 %v748, %v823
      %v825 = vpop.f32.mrb[0].mxu0
      %826 = vmatprep.mubr.bf16.mxu0 0
      %827 = vmatmul.mubr.bf16.gmra.mrb[0].mxu0 %v766
      %v828 = vpop.f32.mrb[0].mxu0
      %v829 = vadd.f32 %v748, %v828
      %v830 = vpop.f32.mrb[0].mxu0
      %v831 = vpop.f32.mrb[0].mxu0
      %v832 = vadd.f32 %v748, %v831
      %v833 = vpop.f32.mrb[0].mxu0
      %834 = vmatprep.mubr.bf16.mxu0 0
      %835 = vmatmul.mubr.bf16.gmra.mrb[0].mxu0 %v769
      %v836 = vpop.f32.mrb[0].mxu0
      %v837 = vadd.f32 %v748, %v836
      %v838 = vpop.f32.mrb[0].mxu0
      %v839 = vpop.f32.mrb[0].mxu0
      %v840 = vadd.f32 %v748, %v839
      %v841 = vpop.f32.mrb[0].mxu0
      %842 = vmatprep.mubr.bf16.mxu0 0
      %843 = vmatmul.mubr.bf16.gmra.mrb[0].mxu0 %v772
      %v844 = vpop.f32.mrb[0].mxu0
      %v845 = vadd.f32 %v748, %v844
      %v846 = vpop.f32.mrb[0].mxu0
      %v847 = vpop.f32.mrb[0].mxu0
      %v848 = vadd.f32 %v748, %v847
      %v849 = vpop.f32.mrb[0].mxu0
      %850 = vmatprep.mubr.bf16.mxu0 0
      %851 = vmatmul.mubr.bf16.gmra.mrb[0].mxu0 %v775
      %v852 = vpop.f32.mrb[0].mxu0
      %v853 = vadd.f32 %v748, %v852
      %v854 = vpop.f32.mrb[0].mxu0
      %v855 = vpop.f32.mrb[0].mxu0
      %v856 = vadd.f32 %v748, %v855
      %v857 = vpop.f32.mrb[0].mxu0
      %858 = vmatprep.mubr.bf16.mxu0 0
      %859 = vmatmul.mubr.bf16.gmra.mrb[0].mxu0 %v778
      %v860 = vpop.f32.mrb[0].mxu0
      %v861 = vadd.f32 %v748, %v860
      %v862 = vpop.f32.mrb[0].mxu0
      %v863 = vpop.f32.mrb[0].mxu0
      %v864 = vadd.f32 %v748, %v863
      %v865 = vpop.f32.mrb[0].mxu0
      %866 = vmatprep.mubr.bf16.mxu0 0
      %867 = vmatmul.mubr.bf16.gmra.mrb[0].mxu0 %v781
      %v868 = vpop.f32.mrb[0].mxu0
      %v869 = vadd.f32 %v748, %v868
      %v870 = vpop.f32.mrb[0].mxu0
      %v871 = vpop.f32.mrb[0].mxu0
      %v872 = vadd.f32 %v748, %v871
      %v873 = vpop.f32.mrb[0].mxu0
      %874 = vmatprep.mubr.bf16.mxu0 0
      %875 = vmatmul.mubr.bf16.gmra.mrb[0].mxu0 %v784
      %v876 = vpop.f32.mrb[0].mxu0
      %v877 = vadd.f32 %v748, %v876
      %v878 = vpop.f32.mrb[0].mxu0
      %v879 = vpop.f32.mrb[0].mxu0
      %v880 = vadd.f32 %v748, %v879
      %v881 = vpop.f32.mrb[0].mxu0
      %882 = vdwg.mxu0
      %v883 = vld [vmem:[%s2] sm:$0xf]
      %v884 = vld [vmem:[%s2 + $0x4] sm:$0xf]
      %v885 = vld [vmem:[%s2 + $0x8] sm:$0xf]
      %v886 = vld [vmem:[%s2 + $0xc] sm:$0xf]
      %v887 = vld [vmem:[%s5] sm:$0x1]
      %v889 = vlaneseq
      %v890 = vshrl.u32 %v889, 7
      %v891 = vsub.s32 0, %v890
      %v892 = vrot.slane %v887, %v891
      %v898 = vunpack.c.l.b16 %v883
      %v899 = vunpack.c.l.b16 %v884
      %v900 = vunpack.c.l.b16 %v885
      %v901 = vunpack.c.l.b16 %v886
      %v902 = vpack.c.b16 %v899, %v898
      %v903 = vpack.c.b16 %v901, %v900
      %906 = vmatprep.subr.bf16.mxu0 0
      %907 = vmatpush1.bf16.msra.mxu0 %v902
      %908 = vmatprep.subr.bf16.mxu0 0
      %909 = vmatpush1.bf16.msra.mxu0 %v903
      %910 = vmatprep.subr.bf16.mxu0 0
      %911 = vmatpush1.bf16.msra.mxu0 0
      %912 = vmatprep.subr.bf16.mxu0 0
      %913 = vmatpush1.bf16.msra.mxu0 0
      %914 = vmatprep.subr.bf16.mxu0 0
      %915 = vmatpush1.bf16.msra.mxu0 0
      %916 = vmatprep.subr.bf16.mxu0 0
      %917 = vmatpush1.bf16.msra.mxu0 0
      %918 = vmatprep.subr.bf16.mxu0 0
      %919 = vmatpush1.bf16.msra.mxu0 0
      %920 = vmatprep.subr.bf16.mxu0 0
      %921 = vmatpush1.bf16.msra.mxu0 0
      %922 = vmatprep.subr.bf16.mxu0 0
      %923 = vmatpush1.bf16.msra.mxu0 0
      %924 = vmatprep.subr.bf16.mxu0 0
      %925 = vmatpush1.bf16.msra.mxu0 0
      %926 = vmatprep.subr.bf16.mxu0 0
      %927 = vmatpush1.bf16.msra.mxu0 0
      %928 = vmatprep.subr.bf16.mxu0 0
      %929 = vmatpush1.bf16.msra.mxu0 0
      %930 = vmatprep.subr.bf16.mxu0 0
      %931 = vmatpush1.bf16.msra.mxu0 0
      %932 = vmatprep.subr.bf16.mxu0 0
      %933 = vmatpush1.bf16.msra.mxu0 0
      %934 = vmatprep.subr.bf16.mxu0 0
      %935 = vmatpush1.bf16.msra.mxu0 0
      %936 = vmatprep.subr.bf16.mxu0 0
      %937 = vmatpush1.bf16.msra.mxu0 0
      %938 = vmatprep.mubr.bf16.mxu0 0
      %939 = vmatmul.mubr.bf16.gmra.mrb[0].mxu0 %v763
      %v940 = vpop.f32.mrb[0].mxu0
      %v941 = vadd.f32 %v892, %v940
      %v942 = vpop.f32.mrb[0].mxu0
      %v943 = vpop.f32.mrb[0].mxu0
      %v944 = vadd.f32 %v892, %v943
      %v945 = vpop.f32.mrb[0].mxu0
      %946 = vmatprep.mubr.bf16.mxu0 0
      %947 = vmatmul.mubr.bf16.gmra.mrb[0].mxu0 %v766
      %v948 = vpop.f32.mrb[0].mxu0
      %v949 = vadd.f32 %v892, %v948
      %v950 = vpop.f32.mrb[0].mxu0
      %v951 = vpop.f32.mrb[0].mxu0
      %v952 = vadd.f32 %v892, %v951
      %v953 = vpop.f32.mrb[0].mxu0
      %954 = vmatprep.mubr.bf16.mxu0 0
      %955 = vmatmul.mubr.bf16.gmra.mrb[0].mxu0 %v769
      %v956 = vpop.f32.mrb[0].mxu0
      %v957 = vadd.f32 %v892, %v956
      %v958 = vpop.f32.mrb[0].mxu0
      %v959 = vpop.f32.mrb[0].mxu0
      %v960 = vadd.f32 %v892, %v959
      %v961 = vpop.f32.mrb[0].mxu0
      %962 = vmatprep.mubr.bf16.mxu0 0
      %963 = vmatmul.mubr.bf16.gmra.mrb[0].mxu0 %v772
      %v964 = vpop.f32.mrb[0].mxu0
      %v965 = vadd.f32 %v892, %v964
      %v966 = vpop.f32.mrb[0].mxu0
      %v967 = vpop.f32.mrb[0].mxu0
      %v968 = vadd.f32 %v892, %v967
      %v969 = vpop.f32.mrb[0].mxu0
      %970 = vmatprep.mubr.bf16.mxu0 0
      %971 = vmatmul.mubr.bf16.gmra.mrb[0].mxu0 %v775
      %v972 = vpop.f32.mrb[0].mxu0
      %v973 = vadd.f32 %v892, %v972
      %v974 = vpop.f32.mrb[0].mxu0
      %v975 = vpop.f32.mrb[0].mxu0
      %v976 = vadd.f32 %v892, %v975
      %v977 = vpop.f32.mrb[0].mxu0
      %978 = vmatprep.mubr.bf16.mxu0 0
      %979 = vmatmul.mubr.bf16.gmra.mrb[0].mxu0 %v778
      %v980 = vpop.f32.mrb[0].mxu0
      %v981 = vadd.f32 %v892, %v980
      %v982 = vpop.f32.mrb[0].mxu0
      %v983 = vpop.f32.mrb[0].mxu0
      %v984 = vadd.f32 %v892, %v983
      %v985 = vpop.f32.mrb[0].mxu0
      %986 = vmatprep.mubr.bf16.mxu0 0
      %987 = vmatmul.mubr.bf16.gmra.mrb[0].mxu0 %v781
      %v988 = vpop.f32.mrb[0].mxu0
      %v989 = vadd.f32 %v892, %v988
      %v990 = vpop.f32.mrb[0].mxu0
      %v991 = vpop.f32.mrb[0].mxu0
      %v992 = vadd.f32 %v892, %v991
      %v993 = vpop.f32.mrb[0].mxu0
      %994 = vmatprep.mubr.bf16.mxu0 0
      %995 = vmatmul.mubr.bf16.gmra.mrb[0].mxu0 %v784
      %v996 = vpop.f32.mrb[0].mxu0
      %v997 = vadd.f32 %v892, %v996
      %v998 = vpop.f32.mrb[0].mxu0
      %v999 = vpop.f32.mrb[0].mxu0
      %v1000 = vadd.f32 %v892, %v999
      %v1001 = vpop.f32.mrb[0].mxu0
      %1002 = vdwg.mxu0
      %v1003 = vld [vmem:[%s3] sm:$0xf]
      %v1004 = vld [vmem:[%s3 + $0x4] sm:$0xf]
      %v1005 = vld [vmem:[%s3 + $0x8] sm:$0xf]
      %v1006 = vld [vmem:[%s3 + $0xc] sm:$0xf]
      %v1007 = vld [vmem:[%s6] sm:$0x1]
      %v1009 = vlaneseq
      %v1010 = vshrl.u32 %v1009, 7
      %v1011 = vsub.s32 0, %v1010
      %v1012 = vrot.slane %v1007, %v1011
      %v1018 = vunpack.c.l.b16 %v1003
      %v1019 = vunpack.c.l.b16 %v1004
      %v1020 = vunpack.c.l.b16 %v1005
      %v1021 = vunpack.c.l.b16 %v1006
      %v1022 = vpack.c.b16 %v1019, %v1018
      %v1023 = vpack.c.b16 %v1021, %v1020
      %1026 = vmatprep.subr.bf16.mxu0 0
      %1027 = vmatpush1.bf16.msra.mxu0 %v1022
      %1028 = vmatprep.subr.bf16.mxu0 0
      %1029 = vmatpush1.bf16.msra.mxu0 %v1023
      %1030 = vmatprep.subr.bf16.mxu0 0
      %1031 = vmatpush1.bf16.msra.mxu0 0
      %1032 = vmatprep.subr.bf16.mxu0 0
      %1033 = vmatpush1.bf16.msra.mxu0 0
      %1034 = vmatprep.subr.bf16.mxu0 0
      %1035 = vmatpush1.bf16.msra.mxu0 0
      %1036 = vmatprep.subr.bf16.mxu0 0
      %1037 = vmatpush1.bf16.msra.mxu0 0
      %1038 = vmatprep.subr.bf16.mxu0 0
      %1039 = vmatpush1.bf16.msra.mxu0 0
      %1040 = vmatprep.subr.bf16.mxu0 0
      %1041 = vmatpush1.bf16.msra.mxu0 0
      %1042 = vmatprep.subr.bf16.mxu0 0
      %1043 = vmatpush1.bf16.msra.mxu0 0
      %1044 = vmatprep.subr.bf16.mxu0 0
      %1045 = vmatpush1.bf16.msra.mxu0 0
      %1046 = vmatprep.subr.bf16.mxu0 0
      %1047 = vmatpush1.bf16.msra.mxu0 0
      %1048 = vmatprep.subr.bf16.mxu0 0
      %1049 = vmatpush1.bf16.msra.mxu0 0
      %1050 = vmatprep.subr.bf16.mxu0 0
      %1051 = vmatpush1.bf16.msra.mxu0 0
      %1052 = vmatprep.subr.bf16.mxu0 0
      %1053 = vmatpush1.bf16.msra.mxu0 0
      %1054 = vmatprep.subr.bf16.mxu0 0
      %1055 = vmatpush1.bf16.msra.mxu0 0
      %1056 = vmatprep.subr.bf16.mxu0 0
      %1057 = vmatpush1.bf16.msra.mxu0 0
      %1058 = vmatprep.mubr.bf16.mxu0 0
      %1059 = vmatmul.mubr.bf16.gmra.mrb[0].mxu0 %v763
      %v1060 = vpop.f32.mrb[0].mxu0
      %v1061 = vadd.f32 %v1012, %v1060
      %v1062 = vpop.f32.mrb[0].mxu0
      %v1063 = vpop.f32.mrb[0].mxu0
      %v1064 = vadd.f32 %v1012, %v1063
      %v1065 = vpop.f32.mrb[0].mxu0
      %1066 = vmatprep.mubr.bf16.mxu0 0
      %1067 = vmatmul.mubr.bf16.gmra.mrb[0].mxu0 %v766
      %v1068 = vpop.f32.mrb[0].mxu0
      %v1069 = vadd.f32 %v1012, %v1068
      %v1070 = vpop.f32.mrb[0].mxu0
      %v1071 = vpop.f32.mrb[0].mxu0
      %v1072 = vadd.f32 %v1012, %v1071
      %v1073 = vpop.f32.mrb[0].mxu0
      %1074 = vmatprep.mubr.bf16.mxu0 0
      %1075 = vmatmul.mubr.bf16.gmra.mrb[0].mxu0 %v769
      %v1076 = vpop.f32.mrb[0].mxu0
      %v1077 = vadd.f32 %v1012, %v1076
      %v1078 = vpop.f32.mrb[0].mxu0
      %v1079 = vpop.f32.mrb[0].mxu0
      %v1080 = vadd.f32 %v1012, %v1079
      %v1081 = vpop.f32.mrb[0].mxu0
      %1082 = vmatprep.mubr.bf16.mxu0 0
      %1083 = vmatmul.mubr.bf16.gmra.mrb[0].mxu0 %v772
      %v1084 = vpop.f32.mrb[0].mxu0
      %v1085 = vadd.f32 %v1012, %v1084
      %v1086 = vpop.f32.mrb[0].mxu0
      %v1087 = vpop.f32.mrb[0].mxu0
      %v1088 = vadd.f32 %v1012, %v1087
      %v1089 = vpop.f32.mrb[0].mxu0
      %1090 = vmatprep.mubr.bf16.mxu0 0
      %1091 = vmatmul.mubr.bf16.gmra.mrb[0].mxu0 %v775
      %v1092 = vpop.f32.mrb[0].mxu0
      %v1093 = vadd.f32 %v1012, %v1092
      %v1094 = vpop.f32.mrb[0].mxu0
      %v1095 = vpop.f32.mrb[0].mxu0
      %v1096 = vadd.f32 %v1012, %v1095
      %v1097 = vpop.f32.mrb[0].mxu0
      %1098 = vmatprep.mubr.bf16.mxu0 0
      %1099 = vmatmul.mubr.bf16.gmra.mrb[0].mxu0 %v778
      %v1100 = vpop.f32.mrb[0].mxu0
      %v1101 = vadd.f32 %v1012, %v1100
      %v1102 = vpop.f32.mrb[0].mxu0
      %v1103 = vpop.f32.mrb[0].mxu0
      %v1104 = vadd.f32 %v1012, %v1103
      %v1105 = vpop.f32.mrb[0].mxu0
      %1106 = vmatprep.mubr.bf16.mxu0 0
      %1107 = vmatmul.mubr.bf16.gmra.mrb[0].mxu0 %v781
      %v1108 = vpop.f32.mrb[0].mxu0
      %v1109 = vadd.f32 %v1012, %v1108
      %v1110 = vpop.f32.mrb[0].mxu0
      %v1111 = vpop.f32.mrb[0].mxu0
      %v1112 = vadd.f32 %v1012, %v1111
      %v1113 = vpop.f32.mrb[0].mxu0
      %1114 = vmatprep.mubr.bf16.mxu0 0
      %1115 = vmatmul.mubr.bf16.gmra.mrb[0].mxu0 %v784
      %v1116 = vpop.f32.mrb[0].mxu0
      %v1117 = vadd.f32 %v1012, %v1116
      %v1118 = vpop.f32.mrb[0].mxu0
      %v1119 = vpop.f32.mrb[0].mxu0
      %v1120 = vadd.f32 %v1012, %v1119
      %v1121 = vpop.f32.mrb[0].mxu0
      %1122 = vdwg.mxu0
      %v1123 = vld [vmem:[%s11] sm:$0xff]
      %v1124 = vld [vmem:[%s11 + $0x8] sm:$0xff]
      %v1125 = vld [vmem:[%s11 + $0x10] sm:$0xff]
      %v1126 = vld [vmem:[%s11 + $0x18] sm:$0xff]
      %v1127 = vld [vmem:[%s11 + $0x20] sm:$0xff]
      %v1128 = vld [vmem:[%s11 + $0x28] sm:$0xff]
      %v1129 = vld [vmem:[%s11 + $0x30] sm:$0xff]
      %v1130 = vld [vmem:[%s11 + $0x38] sm:$0xff]
      %v1131 = vpack.c.bf16 %v824, %v821
      %v1132 = vpack.c.bf16 %v832, %v829
      %v1133 = vpack.c.bf16 %v840, %v837
      %v1134 = vpack.c.bf16 %v848, %v845
      %v1135 = vpack.c.bf16 %v856, %v853
      %v1136 = vpack.c.bf16 %v864, %v861
      %v1137 = vpack.c.bf16 %v872, %v869
      %v1138 = vpack.c.bf16 %v880, %v877
      %v1139 = vpack.c.bf16 %v944, %v941
      %v1140 = vpack.c.bf16 %v952, %v949
      %v1141 = vpack.c.bf16 %v960, %v957
      %v1142 = vpack.c.bf16 %v968, %v965
      %v1143 = vpack.c.bf16 %v976, %v973
      %v1144 = vpack.c.bf16 %v984, %v981
      %v1145 = vpack.c.bf16 %v992, %v989
      %v1146 = vpack.c.bf16 %v1000, %v997
      %v1147 = vpack.c.bf16 %v1064, %v1061
      %v1148 = vpack.c.bf16 %v1072, %v1069
      %v1149 = vpack.c.bf16 %v1080, %v1077
      %v1150 = vpack.c.bf16 %v1088, %v1085
      %v1151 = vpack.c.bf16 %v1096, %v1093
      %v1152 = vpack.c.bf16 %v1104, %v1101
      %v1153 = vpack.c.bf16 %v1112, %v1109
      %v1154 = vpack.c.bf16 %v1120, %v1117
      %v1156 = vsel %vm475, %v1131, 0
      %v1159 = vsel %vm475, %v1132, 0
      %v1162 = vsel %vm475, %v1133, 0
      %v1165 = vsel %vm475, %v1134, 0
      %v1168 = vsel %vm475, %v1139, 0
      %v1171 = vsel %vm475, %v1140, 0
      %v1174 = vsel %vm475, %v1141, 0
      %v1177 = vsel %vm475, %v1142, 0
      %1179 = vmatprep.subr.bf16.mxu0 0
      %1180 = vmatpush1.bf16.xpose.msra.mxu0 %v1168
      %1181 = vmatprep.subr.bf16.mxu0 0
      %1182 = vmatpush1.bf16.xpose.msra.mxu0 %v1171
      %1183 = vmatprep.subr.bf16.mxu0 0
      %1184 = vmatpush1.bf16.xpose.msra.mxu0 %v1174
      %1185 = vmatprep.subr.bf16.mxu0 0
      %1186 = vmatpush1.bf16.xpose.msra.mxu0 %v1177
      %1187 = vmatprep.subr.bf16.mxu0 0
      %1188 = vmatpush1.bf16.xpose.msra.mxu0 0
      %1189 = vmatprep.subr.bf16.mxu0 0
      %1190 = vmatpush1.bf16.xpose.msra.mxu0 0
      %1191 = vmatprep.subr.bf16.mxu0 0
      %1192 = vmatpush1.bf16.xpose.msra.mxu0 0
      %1193 = vmatprep.subr.bf16.mxu0 0
      %1194 = vmatpush1.bf16.xpose.msra.mxu0 0
      %1195 = vmatprep.subr.bf16.mxu0 0
      %1196 = vmatpush1.bf16.xpose.msra.mxu0 0
      %1197 = vmatprep.subr.bf16.mxu0 0
      %1198 = vmatpush1.bf16.xpose.msra.mxu0 0
      %1199 = vmatprep.subr.bf16.mxu0 0
      %1200 = vmatpush1.bf16.xpose.msra.mxu0 0
      %1201 = vmatprep.subr.bf16.mxu0 0
      %1202 = vmatpush1.bf16.xpose.msra.mxu0 0
      %1203 = vmatprep.subr.bf16.mxu0 0
      %1204 = vmatpush1.bf16.xpose.msra.mxu0 0
      %1205 = vmatprep.subr.bf16.mxu0 0
      %1206 = vmatpush1.bf16.xpose.msra.mxu0 0
      %1207 = vmatprep.subr.bf16.mxu0 0
      %1208 = vmatpush1.bf16.xpose.msra.mxu0 0
      %1209 = vmatprep.subr.bf16.mxu0 0
      %1210 = vmatpush1.bf16.xpose.msra.mxu0 0
      %1211 = vmatprep.mubr.bf16.mxu0 0
      %1212 = vmatmul.mubr.bf16.gmra.mrb[0].mxu0 %v1156
      %v1213 = vpop.f32.mrb[0].mxu0
      %v1214 = vadd.f32 %v1123, %v1213
      %v1215 = vpop.f32.mrb[0].mxu0
      %v1216 = vpop.f32.mrb[0].mxu0
      %v1217 = vadd.f32 %v1124, %v1216
      %v1218 = vpop.f32.mrb[0].mxu0
      %1219 = vmatprep.mubr.bf16.mxu0 0
      %1220 = vmatmul.mubr.bf16.gmra.mrb[0].mxu0 %v1159
      %v1221 = vpop.f32.mrb[0].mxu0
      %v1222 = vadd.f32 %v1125, %v1221
      %v1223 = vpop.f32.mrb[0].mxu0
      %v1224 = vpop.f32.mrb[0].mxu0
      %v1225 = vadd.f32 %v1126, %v1224
      %v1226 = vpop.f32.mrb[0].mxu0
      %1227 = vmatprep.mubr.bf16.mxu0 0
      %1228 = vmatmul.mubr.bf16.gmra.mrb[0].mxu0 %v1162
      %v1229 = vpop.f32.mrb[0].mxu0
      %v1230 = vadd.f32 %v1127, %v1229
      %v1231 = vpop.f32.mrb[0].mxu0
      %v1232 = vpop.f32.mrb[0].mxu0
      %v1233 = vadd.f32 %v1128, %v1232
      %v1234 = vpop.f32.mrb[0].mxu0
      %1235 = vmatprep.mubr.bf16.mxu0 0
      %1236 = vmatmul.mubr.bf16.gmra.mrb[0].mxu0 %v1165
      %v1237 = vpop.f32.mrb[0].mxu0
      %v1238 = vadd.f32 %v1129, %v1237
      %v1239 = vpop.f32.mrb[0].mxu0
      %v1240 = vpop.f32.mrb[0].mxu0
      %v1241 = vadd.f32 %v1130, %v1240
      %v1242 = vpop.f32.mrb[0].mxu0
      %1243 = vdwg.mxu0
      %v1245 = vsel %vm475, %v1135, 0
      %v1248 = vsel %vm475, %v1136, 0
      %v1251 = vsel %vm475, %v1137, 0
      %v1254 = vsel %vm475, %v1138, 0
      %v1257 = vsel %vm475, %v1143, 0
      %v1260 = vsel %vm475, %v1144, 0
      %v1263 = vsel %vm475, %v1145, 0
      %v1266 = vsel %vm475, %v1146, 0
      %1268 = vmatprep.subr.bf16.mxu0 0
      %1269 = vmatpush1.bf16.xpose.msra.mxu0 %v1257
      %1270 = vmatprep.subr.bf16.mxu0 0
      %1271 = vmatpush1.bf16.xpose.msra.mxu0 %v1260
      %1272 = vmatprep.subr.bf16.mxu0 0
      %1273 = vmatpush1.bf16.xpose.msra.mxu0 %v1263
      %1274 = vmatprep.subr.bf16.mxu0 0
      %1275 = vmatpush1.bf16.xpose.msra.mxu0 %v1266
      %1276 = vmatprep.subr.bf16.mxu0 0
      %1277 = vmatpush1.bf16.xpose.msra.mxu0 0
      %1278 = vmatprep.subr.bf16.mxu0 0
      %1279 = vmatpush1.bf16.xpose.msra.mxu0 0
      %1280 = vmatprep.subr.bf16.mxu0 0
      %1281 = vmatpush1.bf16.xpose.msra.mxu0 0
      %1282 = vmatprep.subr.bf16.mxu0 0
      %1283 = vmatpush1.bf16.xpose.msra.mxu0 0
      %1284 = vmatprep.subr.bf16.mxu0 0
      %1285 = vmatpush1.bf16.xpose.msra.mxu0 0
      %1286 = vmatprep.subr.bf16.mxu0 0
      %1287 = vmatpush1.bf16.xpose.msra.mxu0 0
      %1288 = vmatprep.subr.bf16.mxu0 0
      %1289 = vmatpush1.bf16.xpose.msra.mxu0 0
      %1290 = vmatprep.subr.bf16.mxu0 0
      %1291 = vmatpush1.bf16.xpose.msra.mxu0 0
      %1292 = vmatprep.subr.bf16.mxu0 0
      %1293 = vmatpush1.bf16.xpose.msra.mxu0 0
      %1294 = vmatprep.subr.bf16.mxu0 0
      %1295 = vmatpush1.bf16.xpose.msra.mxu0 0
      %1296 = vmatprep.subr.bf16.mxu0 0
      %1297 = vmatpush1.bf16.xpose.msra.mxu0 0
      %1298 = vmatprep.subr.bf16.mxu0 0
      %1299 = vmatpush1.bf16.xpose.msra.mxu0 0
      %1300 = vmatprep.mubr.bf16.mxu0 0
      %1301 = vmatmul.mubr.bf16.gmra.mrb[0].mxu0 %v1245
      %v1302 = vpop.f32.mrb[0].mxu0
      %v1303 = vadd.f32 %v1123, %v1302
      %v1304 = vpop.f32.mrb[0].mxu0
      %v1305 = vpop.f32.mrb[0].mxu0
      %v1306 = vadd.f32 %v1124, %v1305
      %v1307 = vpop.f32.mrb[0].mxu0
      %1308 = vmatprep.mubr.bf16.mxu0 0
      %1309 = vmatmul.mubr.bf16.gmra.mrb[0].mxu0 %v1248
      %v1310 = vpop.f32.mrb[0].mxu0
      %v1311 = vadd.f32 %v1125, %v1310
      %v1312 = vpop.f32.mrb[0].mxu0
      %v1313 = vpop.f32.mrb[0].mxu0
      %v1314 = vadd.f32 %v1126, %v1313
      %v1315 = vpop.f32.mrb[0].mxu0
      %1316 = vmatprep.mubr.bf16.mxu0 0
      %1317 = vmatmul.mubr.bf16.gmra.mrb[0].mxu0 %v1251
      %v1318 = vpop.f32.mrb[0].mxu0
      %v1319 = vadd.f32 %v1127, %v1318
      %v1320 = vpop.f32.mrb[0].mxu0
      %v1321 = vpop.f32.mrb[0].mxu0
      %v1322 = vadd.f32 %v1128, %v1321
      %v1323 = vpop.f32.mrb[0].mxu0
      %1324 = vmatprep.mubr.bf16.mxu0 0
      %1325 = vmatmul.mubr.bf16.gmra.mrb[0].mxu0 %v1254
      %v1326 = vpop.f32.mrb[0].mxu0
      %v1327 = vadd.f32 %v1129, %v1326
      %v1328 = vpop.f32.mrb[0].mxu0
      %v1329 = vpop.f32.mrb[0].mxu0
      %v1330 = vadd.f32 %v1130, %v1329
      %v1331 = vpop.f32.mrb[0].mxu0
      %1332 = vdwg.mxu0
      %vm1333 = vcmask 523264
      %v1334 = vsel %vm1333, %v1214, -inf
      %1335 = vmax.xlane.f32.xlu0 %v1334
      %v1336 = vpop.xlane.xlu0 %1335
      %v1337 = vsel %vm1333, %v1217, -inf
      %1338 = vmax.xlane.f32.xlu0 %v1337
      %v1339 = vpop.xlane.xlu0 %1338
      %v1340 = vsel %vm1333, %v1222, -inf
      %1341 = vmax.xlane.f32.xlu0 %v1340
      %v1342 = vpop.xlane.xlu0 %1341
      %v1343 = vsel %vm1333, %v1225, -inf
      %1344 = vmax.xlane.f32.xlu0 %v1343
      %v1345 = vpop.xlane.xlu0 %1344
      %v1346 = vsel %vm1333, %v1230, -inf
      %1347 = vmax.xlane.f32.xlu0 %v1346
      %v1348 = vpop.xlane.xlu0 %1347
      %v1349 = vsel %vm1333, %v1233, -inf
      %1350 = vmax.xlane.f32.xlu0 %v1349
      %v1351 = vpop.xlane.xlu0 %1350
      %v1352 = vsel %vm1333, %v1238, -inf
      %1353 = vmax.xlane.f32.xlu0 %v1352
      %v1354 = vpop.xlane.xlu0 %1353
      %v1355 = vsel %vm1333, %v1241, -inf
      %1356 = vmax.xlane.f32.xlu0 %v1355
      %v1357 = vpop.xlane.xlu0 %1356
      %v1358 = vsel %vm1333, %v1303, -inf
      %1359 = vmax.xlane.f32.xlu0 %v1358
      %v1360 = vpop.xlane.xlu0 %1359
      %v1361 = vsel %vm1333, %v1306, -inf
      %1362 = vmax.xlane.f32.xlu0 %v1361
      %v1363 = vpop.xlane.xlu0 %1362
      %v1364 = vsel %vm1333, %v1311, -inf
      %1365 = vmax.xlane.f32.xlu0 %v1364
      %v1366 = vpop.xlane.xlu0 %1365
      %v1367 = vsel %vm1333, %v1314, -inf
      %1368 = vmax.xlane.f32.xlu0 %v1367
      %v1369 = vpop.xlane.xlu0 %1368
      %v1370 = vsel %vm1333, %v1319, -inf
      %1371 = vmax.xlane.f32.xlu0 %v1370
      %v1372 = vpop.xlane.xlu0 %1371
      %v1373 = vsel %vm1333, %v1322, -inf
      %1374 = vmax.xlane.f32.xlu0 %v1373
      %v1375 = vpop.xlane.xlu0 %1374
      %v1376 = vsel %vm1333, %v1327, -inf
      %1377 = vmax.xlane.f32.xlu0 %v1376
      %v1378 = vpop.xlane.xlu0 %1377
      %v1379 = vsel %vm1333, %v1330, -inf
      %1380 = vmax.xlane.f32.xlu0 %v1379
      %v1381 = vpop.xlane.xlu0 %1380
      %v1382 = vsub.f32 %v1214, %v1336
      %v1383 = vsub.f32 %v1217, %v1339
      %v1384 = vsub.f32 %v1222, %v1342
      %v1385 = vsub.f32 %v1225, %v1345
      %v1386 = vsub.f32 %v1230, %v1348
      %v1387 = vsub.f32 %v1233, %v1351
      %v1388 = vsub.f32 %v1238, %v1354
      %v1389 = vsub.f32 %v1241, %v1357
      %v1390 = vsub.f32 %v1303, %v1360
      %v1391 = vsub.f32 %v1306, %v1363
      %v1392 = vsub.f32 %v1311, %v1366
      %v1393 = vsub.f32 %v1314, %v1369
      %v1394 = vsub.f32 %v1319, %v1372
      %v1395 = vsub.f32 %v1322, %v1375
      %v1396 = vsub.f32 %v1327, %v1378
      %v1397 = vsub.f32 %v1330, %v1381
      %v1398 = vmul.f32 %v1382, 1.442695
      %v1399 = vpow.pop %v1398
      %v1400 = vmul.f32 %v1383, 1.442695
      %v1401 = vpow.pop %v1400
      %v1402 = vmul.f32 %v1384, 1.442695
      %v1403 = vpow.pop %v1402
      %v1404 = vmul.f32 %v1385, 1.442695
      %v1405 = vpow.pop %v1404
      %v1406 = vmul.f32 %v1386, 1.442695
      %v1407 = vpow.pop %v1406
      %v1408 = vmul.f32 %v1387, 1.442695
      %v1409 = vpow.pop %v1408
      %v1410 = vmul.f32 %v1388, 1.442695
      %v1411 = vpow.pop %v1410
      %v1412 = vmul.f32 %v1389, 1.442695
      %v1413 = vpow.pop %v1412
      %v1414 = vmul.f32 %v1390, 1.442695
      %v1415 = vpow.pop %v1414
      %v1416 = vmul.f32 %v1391, 1.442695
      %v1417 = vpow.pop %v1416
      %v1418 = vmul.f32 %v1392, 1.442695
      %v1419 = vpow.pop %v1418
      %v1420 = vmul.f32 %v1393, 1.442695
      %v1421 = vpow.pop %v1420
      %v1422 = vmul.f32 %v1394, 1.442695
      %v1423 = vpow.pop %v1422
      %v1424 = vmul.f32 %v1395, 1.442695
      %v1425 = vpow.pop %v1424
      %v1426 = vmul.f32 %v1396, 1.442695
      %v1427 = vpow.pop %v1426
      %v1428 = vmul.f32 %v1397, 1.442695
      %v1429 = vpow.pop %v1428
      %v1430 = vsel %vm1333, %v1399, 0.0
      %1431 = vadd.xlane.f32.xlu0 %v1430
      %v1432 = vpop.xlane.xlu0 %1431
      %v1433 = vsel %vm1333, %v1401, 0.0
      %1434 = vadd.xlane.f32.xlu0 %v1433
      %v1435 = vpop.xlane.xlu0 %1434
      %v1436 = vsel %vm1333, %v1403, 0.0
      %1437 = vadd.xlane.f32.xlu0 %v1436
      %v1438 = vpop.xlane.xlu0 %1437
      %v1439 = vsel %vm1333, %v1405, 0.0
      %1440 = vadd.xlane.f32.xlu0 %v1439
      %v1441 = vpop.xlane.xlu0 %1440
      %v1442 = vsel %vm1333, %v1407, 0.0
      %1443 = vadd.xlane.f32.xlu0 %v1442
      %v1444 = vpop.xlane.xlu0 %1443
      %v1445 = vsel %vm1333, %v1409, 0.0
      %1446 = vadd.xlane.f32.xlu0 %v1445
      %v1447 = vpop.xlane.xlu0 %1446
      %v1448 = vsel %vm1333, %v1411, 0.0
      %1449 = vadd.xlane.f32.xlu0 %v1448
      %v1450 = vpop.xlane.xlu0 %1449
      %v1451 = vsel %vm1333, %v1413, 0.0
      %1452 = vadd.xlane.f32.xlu0 %v1451
      %v1453 = vpop.xlane.xlu0 %1452
      %v1454 = vsel %vm1333, %v1415, 0.0
      %1455 = vadd.xlane.f32.xlu0 %v1454
      %v1456 = vpop.xlane.xlu0 %1455
      %v1457 = vsel %vm1333, %v1417, 0.0
      %1458 = vadd.xlane.f32.xlu0 %v1457
      %v1459 = vpop.xlane.xlu0 %1458
      %v1460 = vsel %vm1333, %v1419, 0.0
      %1461 = vadd.xlane.f32.xlu0 %v1460
      %v1462 = vpop.xlane.xlu0 %1461
      %v1463 = vsel %vm1333, %v1421, 0.0
      %1464 = vadd.xlane.f32.xlu0 %v1463
      %v1465 = vpop.xlane.xlu0 %1464
      %v1466 = vsel %vm1333, %v1423, 0.0
      %1467 = vadd.xlane.f32.xlu0 %v1466
      %v1468 = vpop.xlane.xlu0 %1467
      %v1469 = vsel %vm1333, %v1425, 0.0
      %1470 = vadd.xlane.f32.xlu0 %v1469
      %v1471 = vpop.xlane.xlu0 %1470
      %v1472 = vsel %vm1333, %v1427, 0.0
      %1473 = vadd.xlane.f32.xlu0 %v1472
      %v1474 = vpop.xlane.xlu0 %1473
      %v1475 = vsel %vm1333, %v1429, 0.0
      %1476 = vadd.xlane.f32.xlu0 %v1475
      %v1477 = vpop.xlane.xlu0 %1476
      %v1478 = vrcp.pop %v1432
      %v1479 = vrcp.pop %v1435
      %v1480 = vrcp.pop %v1438
      %v1481 = vrcp.pop %v1441
      %v1482 = vrcp.pop %v1444
      %v1483 = vrcp.pop %v1447
      %v1484 = vrcp.pop %v1450
      %v1485 = vrcp.pop %v1453
      %v1486 = vrcp.pop %v1456
      %v1487 = vrcp.pop %v1459
      %v1488 = vrcp.pop %v1462
      %v1489 = vrcp.pop %v1465
      %v1490 = vrcp.pop %v1468
      %v1491 = vrcp.pop %v1471
      %v1492 = vrcp.pop %v1474
      %v1493 = vrcp.pop %v1477
      %v1494 = vmul.f32 %v1399, %v1478
      %v1495 = vmul.f32 %v1401, %v1479
      %v1496 = vmul.f32 %v1403, %v1480
      %v1497 = vmul.f32 %v1405, %v1481
      %v1498 = vmul.f32 %v1407, %v1482
      %v1499 = vmul.f32 %v1409, %v1483
      %v1500 = vmul.f32 %v1411, %v1484
      %v1501 = vmul.f32 %v1413, %v1485
      %v1502 = vmul.f32 %v1415, %v1486
      %v1503 = vmul.f32 %v1417, %v1487
      %v1504 = vmul.f32 %v1419, %v1488
      %v1505 = vmul.f32 %v1421, %v1489
      %v1506 = vmul.f32 %v1423, %v1490
      %v1507 = vmul.f32 %v1425, %v1491
      %v1508 = vmul.f32 %v1427, %v1492
      %v1509 = vmul.f32 %v1429, %v1493
      %v1510 = vpack.c.bf16 %v1495, %v1494
      %v1511 = vpack.c.bf16 %v1497, %v1496
      %v1512 = vpack.c.bf16 %v1499, %v1498
      %v1513 = vpack.c.bf16 %v1501, %v1500
      %v1514 = vpack.c.bf16 %v1503, %v1502
      %v1515 = vpack.c.bf16 %v1505, %v1504
      %v1516 = vpack.c.bf16 %v1507, %v1506
      %v1517 = vpack.c.bf16 %v1509, %v1508
      %v1519 = vsel %vm1333, %v1510, 0
      %v1522 = vsel %vm1333, %v1511, 0
      %v1525 = vsel %vm1333, %v1512, 0
      %v1528 = vsel %vm1333, %v1513, 0
      %1530 = vmatprep.subr.bf16.mxu0 0
      %1531 = vmatpush1.bf16.msra.mxu0 %v1147
      %1532 = vmatprep.subr.bf16.mxu0 0
      %1533 = vmatpush1.bf16.msra.mxu0 %v1148
      %1534 = vmatprep.subr.bf16.mxu0 0
      %1535 = vmatpush1.bf16.msra.mxu0 %v1149
      %1536 = vmatprep.subr.bf16.mxu0 0
      %1537 = vmatpush1.bf16.msra.mxu0 %v1150
      %1538 = vmatprep.subr.bf16.mxu0 0
      %1539 = vmatpush1.bf16.msra.mxu0 0
      %1540 = vmatprep.subr.bf16.mxu0 0
      %1541 = vmatpush1.bf16.msra.mxu0 0
      %1542 = vmatprep.subr.bf16.mxu0 0
      %1543 = vmatpush1.bf16.msra.mxu0 0
      %1544 = vmatprep.subr.bf16.mxu0 0
      %1545 = vmatpush1.bf16.msra.mxu0 0
      %1546 = vmatprep.subr.bf16.mxu0 0
      %1547 = vmatpush1.bf16.msra.mxu0 0
      %1548 = vmatprep.subr.bf16.mxu0 0
      %1549 = vmatpush1.bf16.msra.mxu0 0
      %1550 = vmatprep.subr.bf16.mxu0 0
      %1551 = vmatpush1.bf16.msra.mxu0 0
      %1552 = vmatprep.subr.bf16.mxu0 0
      %1553 = vmatpush1.bf16.msra.mxu0 0
      %1554 = vmatprep.subr.bf16.mxu0 0
      %1555 = vmatpush1.bf16.msra.mxu0 0
      %1556 = vmatprep.subr.bf16.mxu0 0
      %1557 = vmatpush1.bf16.msra.mxu0 0
      %1558 = vmatprep.subr.bf16.mxu0 0
      %1559 = vmatpush1.bf16.msra.mxu0 0
      %1560 = vmatprep.subr.bf16.mxu0 0
      %1561 = vmatpush1.bf16.msra.mxu0 0
      %1562 = vmatprep.mubr.bf16.mxu0 0
      %1563 = vmatmul.mubr.bf16.gmra.mrb[0].mxu0 %v1519
      %v1564 = vpop.f32.mrb[0].mxu0
      %v1565 = vadd.f32 0.0, %v1564
      %v1566 = vpop.f32.mrb[0].mxu0
      %v1567 = vpop.f32.mrb[0].mxu0
      %v1568 = vadd.f32 0.0, %v1567
      %v1569 = vpop.f32.mrb[0].mxu0
      %1570 = vmatprep.mubr.bf16.mxu0 0
      %1571 = vmatmul.mubr.bf16.gmra.mrb[0].mxu0 %v1522
      %v1572 = vpop.f32.mrb[0].mxu0
      %v1573 = vadd.f32 0.0, %v1572
      %v1574 = vpop.f32.mrb[0].mxu0
      %v1575 = vpop.f32.mrb[0].mxu0
      %v1576 = vadd.f32 0.0, %v1575
      %v1577 = vpop.f32.mrb[0].mxu0
      %1578 = vmatprep.mubr.bf16.mxu0 0
      %1579 = vmatmul.mubr.bf16.gmra.mrb[0].mxu0 %v1525
      %v1580 = vpop.f32.mrb[0].mxu0
      %v1581 = vadd.f32 0.0, %v1580
      %v1582 = vpop.f32.mrb[0].mxu0
      %v1583 = vpop.f32.mrb[0].mxu0
      %v1584 = vadd.f32 0.0, %v1583
      %v1585 = vpop.f32.mrb[0].mxu0
      %1586 = vmatprep.mubr.bf16.mxu0 0
      %1587 = vmatmul.mubr.bf16.gmra.mrb[0].mxu0 %v1528
      %v1588 = vpop.f32.mrb[0].mxu0
      %v1589 = vadd.f32 0.0, %v1588
      %v1590 = vpop.f32.mrb[0].mxu0
      %v1591 = vpop.f32.mrb[0].mxu0
      %v1592 = vadd.f32 0.0, %v1591
      %v1593 = vpop.f32.mrb[0].mxu0
      %1594 = vdwg.mxu0
      %v1596 = vsel %vm1333, %v1514, 0
      %v1599 = vsel %vm1333, %v1515, 0
      %v1602 = vsel %vm1333, %v1516, 0
      %v1605 = vsel %vm1333, %v1517, 0
      %1607 = vmatprep.subr.bf16.mxu0 0
      %1608 = vmatpush1.bf16.msra.mxu0 %v1151
      %1609 = vmatprep.subr.bf16.mxu0 0
      %1610 = vmatpush1.bf16.msra.mxu0 %v1152
      %1611 = vmatprep.subr.bf16.mxu0 0
      %1612 = vmatpush1.bf16.msra.mxu0 %v1153
      %1613 = vmatprep.subr.bf16.mxu0 0
      %1614 = vmatpush1.bf16.msra.mxu0 %v1154
      %1615 = vmatprep.subr.bf16.mxu0 0
      %1616 = vmatpush1.bf16.msra.mxu0 0
      %1617 = vmatprep.subr.bf16.mxu0 0
      %1618 = vmatpush1.bf16.msra.mxu0 0
      %1619 = vmatprep.subr.bf16.mxu0 0
      %1620 = vmatpush1.bf16.msra.mxu0 0
      %1621 = vmatprep.subr.bf16.mxu0 0
      %1622 = vmatpush1.bf16.msra.mxu0 0
      %1623 = vmatprep.subr.bf16.mxu0 0
      %1624 = vmatpush1.bf16.msra.mxu0 0
      %1625 = vmatprep.subr.bf16.mxu0 0
      %1626 = vmatpush1.bf16.msra.mxu0 0
      %1627 = vmatprep.subr.bf16.mxu0 0
      %1628 = vmatpush1.bf16.msra.mxu0 0
      %1629 = vmatprep.subr.bf16.mxu0 0
      %1630 = vmatpush1.bf16.msra.mxu0 0
      %1631 = vmatprep.subr.bf16.mxu0 0
      %1632 = vmatpush1.bf16.msra.mxu0 0
      %1633 = vmatprep.subr.bf16.mxu0 0
      %1634 = vmatpush1.bf16.msra.mxu0 0
      %1635 = vmatprep.subr.bf16.mxu0 0
      %1636 = vmatpush1.bf16.msra.mxu0 0
      %1637 = vmatprep.subr.bf16.mxu0 0
      %1638 = vmatpush1.bf16.msra.mxu0 0
      %1639 = vmatprep.mubr.bf16.mxu0 0
      %1640 = vmatmul.mubr.bf16.gmra.mrb[0].mxu0 %v1596
      %v1641 = vpop.f32.mrb[0].mxu0
      %v1642 = vadd.f32 0.0, %v1641
      %v1643 = vpop.f32.mrb[0].mxu0
      %v1644 = vpop.f32.mrb[0].mxu0
      %v1645 = vadd.f32 0.0, %v1644
      %v1646 = vpop.f32.mrb[0].mxu0
      %1647 = vmatprep.mubr.bf16.mxu0 0
      %1648 = vmatmul.mubr.bf16.gmra.mrb[0].mxu0 %v1599
      %v1649 = vpop.f32.mrb[0].mxu0
      %v1650 = vadd.f32 0.0, %v1649
      %v1651 = vpop.f32.mrb[0].mxu0
      %v1652 = vpop.f32.mrb[0].mxu0
      %v1653 = vadd.f32 0.0, %v1652
      %v1654 = vpop.f32.mrb[0].mxu0
      %1655 = vmatprep.mubr.bf16.mxu0 0
      %1656 = vmatmul.mubr.bf16.gmra.mrb[0].mxu0 %v1602
      %v1657 = vpop.f32.mrb[0].mxu0
      %v1658 = vadd.f32 0.0, %v1657
      %v1659 = vpop.f32.mrb[0].mxu0
      %v1660 = vpop.f32.mrb[0].mxu0
      %v1661 = vadd.f32 0.0, %v1660
      %v1662 = vpop.f32.mrb[0].mxu0
      %1663 = vmatprep.mubr.bf16.mxu0 0
      %1664 = vmatmul.mubr.bf16.gmra.mrb[0].mxu0 %v1605
      %v1665 = vpop.f32.mrb[0].mxu0
      %v1666 = vadd.f32 0.0, %v1665
      %v1667 = vpop.f32.mrb[0].mxu0
      %v1668 = vpop.f32.mrb[0].mxu0
      %v1669 = vadd.f32 0.0, %v1668
      %v1670 = vpop.f32.mrb[0].mxu0
      %1671 = vdwg.mxu0
      %v1672 = vpack.c.bf16 %v1568, %v1565
      %v1673 = vpack.c.bf16 %v1576, %v1573
      %v1674 = vpack.c.bf16 %v1584, %v1581
      %v1675 = vpack.c.bf16 %v1592, %v1589
      %v1676 = vpack.c.bf16 %v1645, %v1642
      %v1677 = vpack.c.bf16 %v1653, %v1650
      %v1678 = vpack.c.bf16 %v1661, %v1658
      %v1679 = vpack.c.bf16 %v1669, %v1666
      %v1680 = vld [vmem:[%s7] sm:$0xf]
      %v1681 = vld [vmem:[%s7 + $0x4] sm:$0xf]
      %v1682 = vld [vmem:[%s7 + $0x8] sm:$0xf]
      %v1683 = vld [vmem:[%s7 + $0xc] sm:$0xf]
      %v1684 = vld [vmem:[%s8] sm:$0x1]
      %v1686 = vlaneseq
      %v1687 = vshrl.u32 %v1686, 7
      %v1688 = vsub.s32 0, %v1687
      %v1689 = vrot.slane %v1684, %v1688
      %v1695 = vunpack.c.l.b16 %v1680
      %v1696 = vunpack.c.l.b16 %v1681
      %v1697 = vunpack.c.l.b16 %v1682
      %v1698 = vunpack.c.l.b16 %v1683
      %v1699 = vpack.c.b16 %v1696, %v1695
      %v1700 = vpack.c.b16 %v1698, %v1697
      %v1704 = vsel %vm475, %v1672, 0
      %v1707 = vsel %vm475, %v1673, 0
      %v1710 = vsel %vm475, %v1674, 0
      %v1713 = vsel %vm475, %v1675, 0
      %v1716 = vsel %vm475, %v1676, 0
      %v1719 = vsel %vm475, %v1677, 0
      %v1722 = vsel %vm475, %v1678, 0
      %v1725 = vsel %vm475, %v1679, 0
      %1727 = vmatprep.subr.bf16.mxu0 0
      %1728 = vmatpush1.bf16.msra.mxu0 %v1699
      %1729 = vmatprep.subr.bf16.mxu0 0
      %1730 = vmatpush1.bf16.msra.mxu0 %v1700
      %1731 = vmatprep.subr.bf16.mxu0 0
      %1732 = vmatpush1.bf16.msra.mxu0 0
      %1733 = vmatprep.subr.bf16.mxu0 0
      %1734 = vmatpush1.bf16.msra.mxu0 0
      %1735 = vmatprep.subr.bf16.mxu0 0
      %1736 = vmatpush1.bf16.msra.mxu0 0
      %1737 = vmatprep.subr.bf16.mxu0 0
      %1738 = vmatpush1.bf16.msra.mxu0 0
      %1739 = vmatprep.subr.bf16.mxu0 0
      %1740 = vmatpush1.bf16.msra.mxu0 0
      %1741 = vmatprep.subr.bf16.mxu0 0
      %1742 = vmatpush1.bf16.msra.mxu0 0
      %1743 = vmatprep.subr.bf16.mxu0 0
      %1744 = vmatpush1.bf16.msra.mxu0 0
      %1745 = vmatprep.subr.bf16.mxu0 0
      %1746 = vmatpush1.bf16.msra.mxu0 0
      %1747 = vmatprep.subr.bf16.mxu0 0
      %1748 = vmatpush1.bf16.msra.mxu0 0
      %1749 = vmatprep.subr.bf16.mxu0 0
      %1750 = vmatpush1.bf16.msra.mxu0 0
      %1751 = vmatprep.subr.bf16.mxu0 0
      %1752 = vmatpush1.bf16.msra.mxu0 0
      %1753 = vmatprep.subr.bf16.mxu0 0
      %1754 = vmatpush1.bf16.msra.mxu0 0
      %1755 = vmatprep.subr.bf16.mxu0 0
      %1756 = vmatpush1.bf16.msra.mxu0 0
      %1757 = vmatprep.subr.bf16.mxu0 0
      %1758 = vmatpush1.bf16.msra.mxu0 0
      %1759 = vmatprep.mubr.bf16.mxu0 0
      %1760 = vmatmul.mubr.bf16.gmra.mrb[0].mxu0 %v1704
      %v1761 = vpop.f32.mrb[0].mxu0
      %v1762 = vadd.f32 %v1689, %v1761
      %v1763 = vpop.f32.mrb[0].mxu0
      %v1764 = vpop.f32.mrb[0].mxu0
      %v1765 = vadd.f32 %v1689, %v1764
      %v1766 = vpop.f32.mrb[0].mxu0
      %1767 = vmatprep.mubr.bf16.mxu0 0
      %1768 = vmatmul.mubr.bf16.gmra.mrb[0].mxu0 %v1707
      %v1769 = vpop.f32.mrb[0].mxu0
      %v1770 = vadd.f32 %v1689, %v1769
      %v1771 = vpop.f32.mrb[0].mxu0
      %v1772 = vpop.f32.mrb[0].mxu0
      %v1773 = vadd.f32 %v1689, %v1772
      %v1774 = vpop.f32.mrb[0].mxu0
      %1775 = vmatprep.mubr.bf16.mxu0 0
      %1776 = vmatmul.mubr.bf16.gmra.mrb[0].mxu0 %v1710
      %v1777 = vpop.f32.mrb[0].mxu0
      %v1778 = vadd.f32 %v1689, %v1777
      %v1779 = vpop.f32.mrb[0].mxu0
      %v1780 = vpop.f32.mrb[0].mxu0
      %v1781 = vadd.f32 %v1689, %v1780
      %v1782 = vpop.f32.mrb[0].mxu0
      %1783 = vmatprep.mubr.bf16.mxu0 0
      %1784 = vmatmul.mubr.bf16.gmra.mrb[0].mxu0 %v1713
      %v1785 = vpop.f32.mrb[0].mxu0
      %v1786 = vadd.f32 %v1689, %v1785
      %v1787 = vpop.f32.mrb[0].mxu0
      %v1788 = vpop.f32.mrb[0].mxu0
      %v1789 = vadd.f32 %v1689, %v1788
      %v1790 = vpop.f32.mrb[0].mxu0
      %1791 = vmatprep.mubr.bf16.mxu0 0
      %1792 = vmatmul.mubr.bf16.gmra.mrb[0].mxu0 %v1716
      %v1793 = vpop.f32.mrb[0].mxu0
      %v1794 = vadd.f32 %v1689, %v1793
      %v1795 = vpop.f32.mrb[0].mxu0
      %v1796 = vpop.f32.mrb[0].mxu0
      %v1797 = vadd.f32 %v1689, %v1796
      %v1798 = vpop.f32.mrb[0].mxu0
      %1799 = vmatprep.mubr.bf16.mxu0 0
      %1800 = vmatmul.mubr.bf16.gmra.mrb[0].mxu0 %v1719
      %v1801 = vpop.f32.mrb[0].mxu0
      %v1802 = vadd.f32 %v1689, %v1801
      %v1803 = vpop.f32.mrb[0].mxu0
      %v1804 = vpop.f32.mrb[0].mxu0
      %v1805 = vadd.f32 %v1689, %v1804
      %v1806 = vpop.f32.mrb[0].mxu0
      %1807 = vmatprep.mubr.bf16.mxu0 0
      %1808 = vmatmul.mubr.bf16.gmra.mrb[0].mxu0 %v1722
      %v1809 = vpop.f32.mrb[0].mxu0
      %v1810 = vadd.f32 %v1689, %v1809
      %v1811 = vpop.f32.mrb[0].mxu0
      %v1812 = vpop.f32.mrb[0].mxu0
      %v1813 = vadd.f32 %v1689, %v1812
      %v1814 = vpop.f32.mrb[0].mxu0
      %1815 = vmatprep.mubr.bf16.mxu0 0
      %1816 = vmatmul.mubr.bf16.gmra.mrb[0].mxu0 %v1725
      %v1817 = vpop.f32.mrb[0].mxu0
      %v1818 = vadd.f32 %v1689, %v1817
      %v1819 = vpop.f32.mrb[0].mxu0
      %v1820 = vpop.f32.mrb[0].mxu0
      %v1821 = vadd.f32 %v1689, %v1820
      %v1822 = vpop.f32.mrb[0].mxu0
      %1823 = vdwg.mxu0
      %v1824 = vadd.f32 %v1762, %v459
      %v1825 = vadd.f32 %v1765, %v461
      %v1826 = vadd.f32 %v1770, %v463
      %v1827 = vadd.f32 %v1773, %v465
      %v1828 = vadd.f32 %v1778, %v467
      %v1829 = vadd.f32 %v1781, %v469
      %v1830 = vadd.f32 %v1786, %v471
      %v1831 = vadd.f32 %v1789, %v473
      %v1832 = vadd.f32 %v1794, %v460
      %v1833 = vadd.f32 %v1797, %v462
      %v1834 = vadd.f32 %v1802, %v464
      %v1835 = vadd.f32 %v1805, %v466
      %v1836 = vadd.f32 %v1810, %v468
      %v1837 = vadd.f32 %v1813, %v470
      %v1838 = vadd.f32 %v1818, %v472
      %v1839 = vadd.f32 %v1821, %v474
      %1840 = vst.msk [vmem:[%s456] sm:$0xff] %vm475, %v1824
      %1841 = vst.msk [vmem:[%s456 + $0x8] sm:$0xff] %vm475, %v1832
      %1842 = vst.msk [vmem:[%s456 + $0x10] sm:$0xff] %vm475, %v1825
      %1843 = vst.msk [vmem:[%s456 + $0x18] sm:$0xff] %vm475, %v1833
      %1844 = vst.msk [vmem:[%s456 + $0x20] sm:$0xff] %vm475, %v1826
      %1845 = vst.msk [vmem:[%s456 + $0x28] sm:$0xff] %vm475, %v1834
      %1846 = vst.msk [vmem:[%s456 + $0x30] sm:$0xff] %vm475, %v1827
      %1847 = vst.msk [vmem:[%s456 + $0x38] sm:$0xff] %vm475, %v1835
      %1848 = vst.msk [vmem:[%s456 + $0x40] sm:$0xff] %vm475, %v1828
      %1849 = vst.msk [vmem:[%s456 + $0x48] sm:$0xff] %vm475, %v1836
      %1850 = vst.msk [vmem:[%s456 + $0x50] sm:$0xff] %vm475, %v1829
      %1851 = vst.msk [vmem:[%s456 + $0x58] sm:$0xff] %vm475, %v1837
      %1852 = vst.msk [vmem:[%s456 + $0x60] sm:$0xff] %vm475, %v1830
      %1853 = vst.msk [vmem:[%s456 + $0x68] sm:$0xff] %vm475, %v1838
      %1854 = vst.msk [vmem:[%s456 + $0x70] sm:$0xff] %vm475, %v1831
      %1855 = vst.msk [vmem:[%s456 + $0x78] sm:$0xff] %vm475, %v1839
      %s1856 = smul.u32 8, %s28
      %p1857 = scmp.lt.s32.totalorder %s27, 1
      %s1858 = scalar_select %p1857, %s27, 1
      %p1859 = scmp.lt.s32.totalorder %s1856, 15
      %s1860 = scalar_select %p1859, %s1856, 15
      %s1861 = smul.addr %s1860, 2
      %s1862 = smul.addr %s1858, 32
      %s1863 = sadd.s32 %s1861, %s1862
      %s1864 = smul.addr %s1863, 8
      %s1865 = scalar_lea.vmem %s12, %s1864
      // Predicated region
      $region69: #{stcspa_forward.7} parent=67 // pred_check
        %p1866 = pneg %p314
      $region70: #{stcspa_forward.7} parent=67 // pred_check_branch
        %1868 = sbr.rel (%p1866) target = $region72
      $region71: #{stcspa_forward.7} parent=67 // pred_region
        %s1869 = smul.u32 8, %s28
      $region72: #{stcspa_forward.7} parent=67 // pred_fallthru
        _
    $region68: #{stcspa_forward.7} parent=5 // pred_fallthru
      _
    %p1870 = scmp.le.s32.totalorder 2, %s18
    // Predicated region
    $region73: #{stcspa_forward.7} parent=5 // pred_check
      %p1871 = pneg %p1870
    $region74: #{stcspa_forward.7} parent=5 // pred_check_branch
      %1873 = sbr.rel (%p1871) target = $region76
    $region75: #{stcspa_forward.7} parent=5 // pred_region
      %s1874 = ssub.s32 %s18, 2
      // Predicated region
      $region77: #{stcspa_forward.7} parent=75 // pred_check
        %p1875 = pneg %p320
      $region78: #{stcspa_forward.7} parent=75 // pred_check_branch
        %1877 = sbr.rel (%p1875) target = $region80
      $region79: #{stcspa_forward.7} parent=75 // pred_region
        %s1878 = smul.u32 8, %s30
        %p1879 = scmp.lt.s32.totalorder %s29, 1
        %s1880 = scalar_select %p1879, %s29, 1
        %p1881 = scmp.lt.s32.totalorder %s1878, 15
        %s1882 = scalar_select %p1881, %s1878, 15
        %s1883 = smul.addr %s1882, 2
        %s1884 = smul.addr %s1880, 32
        %s1885 = sadd.s32 %s1883, %s1884
        %s1886 = smul.addr %s1885, 8
        %s1887 = scalar_lea.vmem %s12, %s1886
      $region80: #{stcspa_forward.7} parent=75 // pred_fallthru
        _
    $region76: #{stcspa_forward.7} parent=5 // pred_fallthru
      _
  $region6: #{stcspa_forward.7} parent=0 // loop_footer
    %s22 = sadd.s32 1, %s18
  $region7: #{stcspa_forward.7} parent=0 // loop_footer_branch
    %17 = sbr.rel target = $region3
  $region8: #{stcspa_forward.7} parent=0 // loop_exit
    _

// kernel: stcspa_forward.8
$region0: #{stcspa_forward.8}
  #allocation0 [shape = 'u32[]', space=smem, size = 0x4, offset = 0x4, fixed_abs, tag = 'smem constant byte address 0x4 - core index']
  #allocation1 [shape = 'u32[144,128]{1,0:T(1,128)}', space=vmem, size = 0x12000, scoped, tag = 'internal scratch']
  %s0 = inlined_call_operand.vmem [shape: f32[512,32], index: 0, kind: input, shape index: {}]
  %s1 = inlined_call_operand.vmem [shape: bf16[32,128], index: 1, kind: input, shape index: {}]
  %s2 = inlined_call_operand.vmem [shape: f32[1,128], index: 2, kind: input, shape index: {}]
  %s3 = inlined_call_operand.vmem [shape: bf16[128,32], index: 3, kind: input, shape index: {}]
  %s4 = inlined_call_operand.vmem [shape: f32[1,32], index: 4, kind: input, shape index: {}]
  %s5 = inlined_call_operand.vmem [shape: f32[1,32], index: 5, kind: input, shape index: {}]
  %s6 = inlined_call_operand.vmem [shape: f32[1,32], index: 6, kind: input, shape index: {}]
  %s7 = inlined_call_operand.vmem [shape: f32[512,32], index: 7, kind: output, shape index: {}]
  %s8 = sld [smem:[#allocation0]]
  $region61: #{stcspa_forward.8} parent=0
    _
  %s10 = ssub.s32 1, %s8
  %s11 = scalar_select 0, %s10, %s8
  loop: start=0, step=1, limit=4
  $region2: #{stcspa_forward.8} parent=0 // loop_pre_header
    _
  $region3: #{stcspa_forward.8} parent=0 // loop_header
    %s13 = sphi 0, %s17
    %p14 = scmp.ge.s32.totalorder %s13, 4
    %s23 = sphi 0, %s25
    %s26 = sphi 0, %s23
    %s27 = sphi 0, %s26
    %s43 = sphi 0, %s27
    %s47 = sphi 0, %s47
    %s49 = sphi 0, %s47
    %s50 = sphi 0, %s49
    %s64 = sphi 0, %s50
    %s68 = sphi 0, %s68
    %s70 = sphi 0, %s68
    %s71 = sphi 0, %s70
    %s85 = sphi 0, %s71
    %s89 = sphi 0, %s89
    %s91 = sphi 0, %s89
    %s92 = sphi 0, %s91
    %s106 = sphi 0, %s92
    %s110 = sphi 0, %s110
    %s112 = sphi 0, %s110
    %s113 = sphi 0, %s112
    %s127 = sphi 0, %s113
    %s131 = sphi 0, %s131
    %s133 = sphi 0, %s131
    %s134 = sphi 0, %s133
    %s148 = sphi 0, %s134
    %s152 = sphi 0, %s152
    %s154 = sphi 0, %s152
    %s155 = sphi 0, %s154
    %s169 = sphi 0, %s155
    %s175 = sphi 0, %s177
    %s178 = sphi 0, %s175
    %s179 = sphi 0, %s178
    %s195 = sphi 0, %s179
  $region4: #{stcspa_forward.8} parent=0 // loop_header_branch
    %16 = sbr.rel (%p14) target = $region8
  $region5: #{stcspa_forward.8} parent=0 // loop_body
    %s18 = ssub.s32 %s13, 1
    %s19 = ssub.s32 %s13, 2
    %s20 = sadd.s32 %s13, 1
    %s21 = ssub.s32 %s13, %s20
    %p22 = scmp.eq.s32.totalorder %s21, 0
    %s24 = sadd.s32 %s23, 1
    %s25 = scalar_select %p22, %s23, %s24
    %p28 = pneg %p22
    %p29 = scmp.eq.s32.totalorder %s13, 1
    %p30 = por %p28, %p29
    %p31 = scmp.ne.s32.totalorder %s23, %s26
    %p32 = scmp.eq.s32.totalorder %s13, 0
    %p33 = por %p31, %p32
    %p34 = scmp.ne.s32.totalorder %s23, %s26
    %p35 = scmp.eq.s32.totalorder %s18, 1
    %p36 = por %p34, %p35
    %p37 = scmp.ne.s32.totalorder %s26, %s27
    %p38 = scmp.eq.s32.totalorder %s18, 0
    %p39 = por %p37, %p38
    %p40 = scmp.ne.s32.totalorder %s26, %s27
    %p41 = scmp.eq.s32.totalorder %s19, 1
    %p42 = por %p40, %p41
    %p44 = scmp.ne.s32.totalorder %s27, %s43
    %p45 = scmp.eq.s32.totalorder %s19, 0
    %p46 = por %p44, %p45
    %s48 = sadd.s32 %s47, 1
    %p51 = scmp.eq.s32.totalorder %s13, 1
    %p52 = scmp.ne.s32.totalorder %s47, %s49
    %p53 = scmp.eq.s32.totalorder %s13, 0
    %p54 = por %p52, %p53
    %p55 = scmp.ne.s32.totalorder %s47, %s49
    %p56 = scmp.eq.s32.totalorder %s18, 1
    %p57 = por %p55, %p56
    %p58 = scmp.ne.s32.totalorder %s49, %s50
    %p59 = scmp.eq.s32.totalorder %s18, 0
    %p60 = por %p58, %p59
    %p61 = scmp.ne.s32.totalorder %s49, %s50
    %p62 = scmp.eq.s32.totalorder %s19, 1
    %p63 = por %p61, %p62
    %p65 = scmp.ne.s32.totalorder %s50, %s64
    %p66 = scmp.eq.s32.totalorder %s19, 0
    %p67 = por %p65, %p66
    %s69 = sadd.s32 %s68, 1
    %p72 = scmp.eq.s32.totalorder %s13, 1
    %p73 = scmp.ne.s32.totalorder %s68, %s70
    %p74 = scmp.eq.s32.totalorder %s13, 0
    %p75 = por %p73, %p74
    %p76 = scmp.ne.s32.totalorder %s68, %s70
    %p77 = scmp.eq.s32.totalorder %s18, 1
    %p78 = por %p76, %p77
    %p79 = scmp.ne.s32.totalorder %s70, %s71
    %p80 = scmp.eq.s32.totalorder %s18, 0
    %p81 = por %p79, %p80
    %p82 = scmp.ne.s32.totalorder %s70, %s71
    %p83 = scmp.eq.s32.totalorder %s19, 1
    %p84 = por %p82, %p83
    %p86 = scmp.ne.s32.totalorder %s71, %s85
    %p87 = scmp.eq.s32.totalorder %s19, 0
    %p88 = por %p86, %p87
    %s90 = sadd.s32 %s89, 1
    %p93 = scmp.eq.s32.totalorder %s13, 1
    %p94 = scmp.ne.s32.totalorder %s89, %s91
    %p95 = scmp.eq.s32.totalorder %s13, 0
    %p96 = por %p94, %p95
    %p97 = scmp.ne.s32.totalorder %s89, %s91
    %p98 = scmp.eq.s32.totalorder %s18, 1
    %p99 = por %p97, %p98
    %p100 = scmp.ne.s32.totalorder %s91, %s92
    %p101 = scmp.eq.s32.totalorder %s18, 0
    %p102 = por %p100, %p101
    %p103 = scmp.ne.s32.totalorder %s91, %s92
    %p104 = scmp.eq.s32.totalorder %s19, 1
    %p105 = por %p103, %p104
    %p107 = scmp.ne.s32.totalorder %s92, %s106
    %p108 = scmp.eq.s32.totalorder %s19, 0
    %p109 = por %p107, %p108
    %s111 = sadd.s32 %s110, 1
    %p114 = scmp.eq.s32.totalorder %s13, 1
    %p115 = scmp.ne.s32.totalorder %s110, %s112
    %p116 = scmp.eq.s32.totalorder %s13, 0
    %p117 = por %p115, %p116
    %p118 = scmp.ne.s32.totalorder %s110, %s112
    %p119 = scmp.eq.s32.totalorder %s18, 1
    %p120 = por %p118, %p119
    %p121 = scmp.ne.s32.totalorder %s112, %s113
    %p122 = scmp.eq.s32.totalorder %s18, 0
    %p123 = por %p121, %p122
    %p124 = scmp.ne.s32.totalorder %s112, %s113
    %p125 = scmp.eq.s32.totalorder %s19, 1
    %p126 = por %p124, %p125
    %p128 = scmp.ne.s32.totalorder %s113, %s127
    %p129 = scmp.eq.s32.totalorder %s19, 0
    %p130 = por %p128, %p129
    %s132 = sadd.s32 %s131, 1
    %p135 = scmp.eq.s32.totalorder %s13, 1
    %p136 = scmp.ne.s32.totalorder %s131, %s133
    %p137 = scmp.eq.s32.totalorder %s13, 0
    %p138 = por %p136, %p137
    %p139 = scmp.ne.s32.totalorder %s131, %s133
    %p140 = scmp.eq.s32.totalorder %s18, 1
    %p141 = por %p139, %p140
    %p142 = scmp.ne.s32.totalorder %s133, %s134
    %p143 = scmp.eq.s32.totalorder %s18, 0
    %p144 = por %p142, %p143
    %p145 = scmp.ne.s32.totalorder %s133, %s134
    %p146 = scmp.eq.s32.totalorder %s19, 1
    %p147 = por %p145, %p146
    %p149 = scmp.ne.s32.totalorder %s134, %s148
    %p150 = scmp.eq.s32.totalorder %s19, 0
    %p151 = por %p149, %p150
    %s153 = sadd.s32 %s152, 1
    %p156 = scmp.eq.s32.totalorder %s13, 1
    %p157 = scmp.ne.s32.totalorder %s152, %s154
    %p158 = scmp.eq.s32.totalorder %s13, 0
    %p159 = por %p157, %p158
    %p160 = scmp.ne.s32.totalorder %s152, %s154
    %p161 = scmp.eq.s32.totalorder %s18, 1
    %p162 = por %p160, %p161
    %p163 = scmp.ne.s32.totalorder %s154, %s155
    %p164 = scmp.eq.s32.totalorder %s18, 0
    %p165 = por %p163, %p164
    %p166 = scmp.ne.s32.totalorder %s154, %s155
    %p167 = scmp.eq.s32.totalorder %s19, 1
    %p168 = por %p166, %p167
    %p170 = scmp.ne.s32.totalorder %s155, %s169
    %p171 = scmp.eq.s32.totalorder %s19, 0
    %p172 = por %p170, %p171
    %s173 = ssub.s32 %s13, %s20
    %p174 = scmp.eq.s32.totalorder %s173, 0
    %s176 = sadd.s32 %s175, 1
    %s177 = scalar_select %p174, %s175, %s176
    %p180 = pneg %p174
    %p181 = scmp.eq.s32.totalorder %s13, 1
    %p182 = por %p180, %p181
    %p183 = scmp.ne.s32.totalorder %s175, %s178
    %p184 = scmp.eq.s32.totalorder %s13, 0
    %p185 = por %p183, %p184
    %p186 = scmp.ne.s32.totalorder %s175, %s178
    %p187 = scmp.eq.s32.totalorder %s18, 1
    %p188 = por %p186, %p187
    %p189 = scmp.ne.s32.totalorder %s178, %s179
    %p190 = scmp.eq.s32.totalorder %s18, 0
    %p191 = por %p189, %p190
    %p192 = scmp.ne.s32.totalorder %s178, %s179
    %p193 = scmp.eq.s32.totalorder %s19, 1
    %p194 = por %p192, %p193
    %p196 = scmp.ne.s32.totalorder %s179, %s195
    %p197 = scmp.eq.s32.totalorder %s19, 0
    %p198 = por %p196, %p197
    %p199 = scmp.le.s32.totalorder 1, %s13
    %p200 = scmp.lt.s32.totalorder %s13, 3
    %p201 = pnand %p199, %p200
    %p202 = pneg %p201
    // Predicated region
    $region9: #{stcspa_forward.8} parent=5 // pred_check
      _
    $region10: #{stcspa_forward.8} parent=5 // pred_check_branch
      %204 = sbr.rel (%p201) target = $region12
    $region11: #{stcspa_forward.8} parent=5 // pred_region
      %s205 = ssub.s32 %s13, 1
      // Predicated region
      $region13: #{stcspa_forward.8} parent=11 // pred_check
        %p206 = pneg %p60
      $region14: #{stcspa_forward.8} parent=11 // pred_check_branch
        %208 = sbr.rel (%p206) target = $region16
      $region15: #{stcspa_forward.8} parent=11 // pred_region
        _
      $region16: #{stcspa_forward.8} parent=11 // pred_fallthru
        _
      // Predicated region
      $region17: #{stcspa_forward.8} parent=11 // pred_check
        %p209 = pneg %p81
      $region18: #{stcspa_forward.8} parent=11 // pred_check_branch
        %211 = sbr.rel (%p209) target = $region20
      $region19: #{stcspa_forward.8} parent=11 // pred_region
        _
      $region20: #{stcspa_forward.8} parent=11 // pred_fallthru
        _
      // Predicated region
      $region21: #{stcspa_forward.8} parent=11 // pred_check
        %p212 = pneg %p102
      $region22: #{stcspa_forward.8} parent=11 // pred_check_branch
        %214 = sbr.rel (%p212) target = $region24
      $region23: #{stcspa_forward.8} parent=11 // pred_region
        _
      $region24: #{stcspa_forward.8} parent=11 // pred_fallthru
        _
      // Predicated region
      $region25: #{stcspa_forward.8} parent=11 // pred_check
        %p215 = pneg %p123
      $region26: #{stcspa_forward.8} parent=11 // pred_check_branch
        %217 = sbr.rel (%p215) target = $region28
      $region27: #{stcspa_forward.8} parent=11 // pred_region
        _
      $region28: #{stcspa_forward.8} parent=11 // pred_fallthru
        _
      // Predicated region
      $region29: #{stcspa_forward.8} parent=11 // pred_check
        %p218 = pneg %p144
      $region30: #{stcspa_forward.8} parent=11 // pred_check_branch
        %220 = sbr.rel (%p218) target = $region32
      $region31: #{stcspa_forward.8} parent=11 // pred_region
        _
      $region32: #{stcspa_forward.8} parent=11 // pred_fallthru
        _
      // Predicated region
      $region33: #{stcspa_forward.8} parent=11 // pred_check
        %p221 = pneg %p165
      $region34: #{stcspa_forward.8} parent=11 // pred_check_branch
        %223 = sbr.rel (%p221) target = $region36
      $region35: #{stcspa_forward.8} parent=11 // pred_region
        _
      $region36: #{stcspa_forward.8} parent=11 // pred_fallthru
        _
    $region12: #{stcspa_forward.8} parent=5 // pred_fallthru
      _
    %p224 = scmp.lt.s32.totalorder %s13, 2
    // Predicated region
    $region37: #{stcspa_forward.8} parent=5 // pred_check
      %p225 = pneg %p224
    $region38: #{stcspa_forward.8} parent=5 // pred_check_branch
      %227 = sbr.rel (%p225) target = $region40
    $region39: #{stcspa_forward.8} parent=5 // pred_region
      // Predicated region
      $region41: #{stcspa_forward.8} parent=39 // pred_check
        %p228 = pneg %p33
      $region42: #{stcspa_forward.8} parent=39 // pred_check_branch
        %230 = sbr.rel (%p228) target = $region44
      $region43: #{stcspa_forward.8} parent=39 // pred_region
        %s231 = smul.u32 32, %s13
        %p232 = scmp.lt.s32.totalorder %s231, 63
        %s233 = scalar_select %p232, %s231, 63
        %s234 = smul.addr %s233, 8
        %s235 = scalar_lea.vmem %s0, %s234
        %s236 = smul.u32 32, %s13
      $region44: #{stcspa_forward.8} parent=39 // pred_fallthru
        _
    $region40: #{stcspa_forward.8} parent=5 // pred_fallthru
      _
    %p237 = scmp.le.s32.totalorder 1, %s13
    %p238 = scmp.lt.s32.totalorder %s13, 3
    %p239 = pnand %p237, %p238
    %p240 = pneg %p239
    // Predicated region
    $region45: #{stcspa_forward.8} parent=5 // pred_check
      _
    $region46: #{stcspa_forward.8} parent=5 // pred_check_branch
      %242 = sbr.rel (%p239) target = $region48
    $region47: #{stcspa_forward.8} parent=5 // pred_region
      %s243 = ssub.s32 %s13, 1
      %s244 = smul.u32 32, %s18
      %p245 = scmp.lt.s32.totalorder %s244, 63
      %s246 = scalar_select %p245, %s244, 63
      %s247 = smul.addr %s246, 8
      %s248 = scalar_lea.vmem %s0, %s247
      %p249 = pneg %p39
      %p250 = pneg %p36
      %p251 = pneg %p60
      %p252 = pneg %p57
      %p253 = pneg %p81
      %p254 = pneg %p78
      %p255 = pneg %p102
      %p256 = pneg %p99
      %p257 = pneg %p123
      %p258 = pneg %p120
      %p259 = pneg %p144
      %p260 = pneg %p141
      %p261 = pneg %p165
      %p262 = pneg %p162
      %p263 = pneg %p191
      %p264 = pneg %p188
      %s265 = smul.u32 32, %s18
      %p266 = scmp.lt.s32.totalorder %s265, 63
      %s267 = scalar_select %p266, %s265, 63
      %s268 = smul.addr %s267, 8
      %s269 = scalar_lea.vmem %s7, %s268
      %s270 = smul.u32 32, %s18
      %p271 = scmp.lt.s32.totalorder %s270, 63
      %s272 = scalar_select %p271, %s270, 63
      %s273 = smul.addr %s272, 8
      %s274 = scalar_lea.vmem %s0, %s273
      %s275 = smul.u32 32, %s18
      %s276 = smul.u32 32, %s18
      %p277 = scmp.lt.s32.totalorder %s276, 63
      %s278 = scalar_select %p277, %s276, 63
      %s279 = smul.addr %s278, 8
      %s280 = scalar_lea.vmem %s7, %s279
      %s281 = smul.u32 32, %s18
      %v283 = vld [vmem:[%s274] sm:$0xff]
      %v284 = vld [vmem:[%s274 + $0x8] sm:$0xff]
      %v285 = vld [vmem:[%s274 + $0x10] sm:$0xff]
      %v286 = vld [vmem:[%s274 + $0x18] sm:$0xff]
      %v287 = vld [vmem:[%s274 + $0x20] sm:$0xff]
      %v288 = vld [vmem:[%s274 + $0x28] sm:$0xff]
      %v289 = vld [vmem:[%s274 + $0x30] sm:$0xff]
      %v290 = vld [vmem:[%s274 + $0x38] sm:$0xff]
      %v291 = vld [vmem:[%s274 + $0x40] sm:$0xff]
      %v292 = vld [vmem:[%s274 + $0x48] sm:$0xff]
      %v293 = vld [vmem:[%s274 + $0x50] sm:$0xff]
      %v294 = vld [vmem:[%s274 + $0x58] sm:$0xff]
      %v295 = vld [vmem:[%s274 + $0x60] sm:$0xff]
      %v296 = vld [vmem:[%s274 + $0x68] sm:$0xff]
      %v297 = vld [vmem:[%s274 + $0x70] sm:$0xff]
      %v298 = vld [vmem:[%s274 + $0x78] sm:$0xff]
      %v299 = vld [vmem:[%s274 + $0x80] sm:$0xff]
      %v300 = vld [vmem:[%s274 + $0x88] sm:$0xff]
      %v301 = vld [vmem:[%s274 + $0x90] sm:$0xff]
      %v302 = vld [vmem:[%s274 + $0x98] sm:$0xff]
      %v303 = vld [vmem:[%s274 + $0xa0] sm:$0xff]
      %v304 = vld [vmem:[%s274 + $0xa8] sm:$0xff]
      %v305 = vld [vmem:[%s274 + $0xb0] sm:$0xff]
      %v306 = vld [vmem:[%s274 + $0xb8] sm:$0xff]
      %v307 = vld [vmem:[%s274 + $0xc0] sm:$0xff]
      %v308 = vld [vmem:[%s274 + $0xc8] sm:$0xff]
      %v309 = vld [vmem:[%s274 + $0xd0] sm:$0xff]
      %v310 = vld [vmem:[%s274 + $0xd8] sm:$0xff]
      %v311 = vld [vmem:[%s274 + $0xe0] sm:$0xff]
      %v312 = vld [vmem:[%s274 + $0xe8] sm:$0xff]
      %v313 = vld [vmem:[%s274 + $0xf0] sm:$0xff]
      %v314 = vld [vmem:[%s274 + $0xf8] sm:$0xff]
      %vm315 = vcmask 261120
      %v316 = vsel %vm315, %v283, 0.0
      %317 = vadd.xlane.f32.xlu0 %v316
      %v318 = vpop.xlane.xlu0 %317
      %v319 = vsel %vm315, %v284, 0.0
      %320 = vadd.xlane.f32.xlu0 %v319
      %v321 = vpop.xlane.xlu0 %320
      %v322 = vsel %vm315, %v285, 0.0
      %323 = vadd.xlane.f32.xlu0 %v322
      %v324 = vpop.xlane.xlu0 %323
      %v325 = vsel %vm315, %v286, 0.0
      %326 = vadd.xlane.f32.xlu0 %v325
      %v327 = vpop.xlane.xlu0 %326
      %v328 = vsel %vm315, %v287, 0.0
      %329 = vadd.xlane.f32.xlu0 %v328
      %v330 = vpop.xlane.xlu0 %329
      %v331 = vsel %vm315, %v288, 0.0
      %332 = vadd.xlane.f32.xlu0 %v331
      %v333 = vpop.xlane.xlu0 %332
      %v334 = vsel %vm315, %v289, 0.0
      %335 = vadd.xlane.f32.xlu0 %v334
      %v336 = vpop.xlane.xlu0 %335
      %v337 = vsel %vm315, %v290, 0.0
      %338 = vadd.xlane.f32.xlu0 %v337
      %v339 = vpop.xlane.xlu0 %338
      %v340 = vsel %vm315, %v291, 0.0
      %341 = vadd.xlane.f32.xlu0 %v340
      %v342 = vpop.xlane.xlu0 %341
      %v343 = vsel %vm315, %v292, 0.0
      %344 = vadd.xlane.f32.xlu0 %v343
      %v345 = vpop.xlane.xlu0 %344
      %v346 = vsel %vm315, %v293, 0.0
      %347 = vadd.xlane.f32.xlu0 %v346
      %v348 = vpop.xlane.xlu0 %347
      %v349 = vsel %vm315, %v294, 0.0
      %350 = vadd.xlane.f32.xlu0 %v349
      %v351 = vpop.xlane.xlu0 %350
      %v352 = vsel %vm315, %v295, 0.0
      %353 = vadd.xlane.f32.xlu0 %v352
      %v354 = vpop.xlane.xlu0 %353
      %v355 = vsel %vm315, %v296, 0.0
      %356 = vadd.xlane.f32.xlu0 %v355
      %v357 = vpop.xlane.xlu0 %356
      %v358 = vsel %vm315, %v297, 0.0
      %359 = vadd.xlane.f32.xlu0 %v358
      %v360 = vpop.xlane.xlu0 %359
      %v361 = vsel %vm315, %v298, 0.0
      %362 = vadd.xlane.f32.xlu0 %v361
      %v363 = vpop.xlane.xlu0 %362
      %v364 = vsel %vm315, %v299, 0.0
      %365 = vadd.xlane.f32.xlu0 %v364
      %v366 = vpop.xlane.xlu0 %365
      %v367 = vsel %vm315, %v300, 0.0
      %368 = vadd.xlane.f32.xlu0 %v367
      %v369 = vpop.xlane.xlu0 %368
      %v370 = vsel %vm315, %v301, 0.0
      %371 = vadd.xlane.f32.xlu0 %v370
      %v372 = vpop.xlane.xlu0 %371
      %v373 = vsel %vm315, %v302, 0.0
      %374 = vadd.xlane.f32.xlu0 %v373
      %v375 = vpop.xlane.xlu0 %374
      %v376 = vsel %vm315, %v303, 0.0
      %377 = vadd.xlane.f32.xlu0 %v376
      %v378 = vpop.xlane.xlu0 %377
      %v379 = vsel %vm315, %v304, 0.0
      %380 = vadd.xlane.f32.xlu0 %v379
      %v381 = vpop.xlane.xlu0 %380
      %v382 = vsel %vm315, %v305, 0.0
      %383 = vadd.xlane.f32.xlu0 %v382
      %v384 = vpop.xlane.xlu0 %383
      %v385 = vsel %vm315, %v306, 0.0
      %386 = vadd.xlane.f32.xlu0 %v385
      %v387 = vpop.xlane.xlu0 %386
      %v388 = vsel %vm315, %v307, 0.0
      %389 = vadd.xlane.f32.xlu0 %v388
      %v390 = vpop.xlane.xlu0 %389
      %v391 = vsel %vm315, %v308, 0.0
      %392 = vadd.xlane.f32.xlu0 %v391
      %v393 = vpop.xlane.xlu0 %392
      %v394 = vsel %vm315, %v309, 0.0
      %395 = vadd.xlane.f32.xlu0 %v394
      %v396 = vpop.xlane.xlu0 %395
      %v397 = vsel %vm315, %v310, 0.0
      %398 = vadd.xlane.f32.xlu0 %v397
      %v399 = vpop.xlane.xlu0 %398
      %v400 = vsel %vm315, %v311, 0.0
      %401 = vadd.xlane.f32.xlu0 %v400
      %v402 = vpop.xlane.xlu0 %401
      %v403 = vsel %vm315, %v312, 0.0
      %404 = vadd.xlane.f32.xlu0 %v403
      %v405 = vpop.xlane.xlu0 %404
      %v406 = vsel %vm315, %v313, 0.0
      %407 = vadd.xlane.f32.xlu0 %v406
      %v408 = vpop.xlane.xlu0 %407
      %v409 = vsel %vm315, %v314, 0.0
      %410 = vadd.xlane.f32.xlu0 %v409
      %v411 = vpop.xlane.xlu0 %410
      %v412 = vrcp.pop 32.0
      %v413 = vmul.f32 %v318, %v412
      %v414 = vmul.f32 %v321, %v412
      %v415 = vmul.f32 %v324, %v412
      %v416 = vmul.f32 %v327, %v412
      %v417 = vmul.f32 %v330, %v412
      %v418 = vmul.f32 %v333, %v412
      %v419 = vmul.f32 %v336, %v412
      %v420 = vmul.f32 %v339, %v412
      %v421 = vmul.f32 %v342, %v412
      %v422 = vmul.f32 %v345, %v412
      %v423 = vmul.f32 %v348, %v412
      %v424 = vmul.f32 %v351, %v412
      %v425 = vmul.f32 %v354, %v412
      %v426 = vmul.f32 %v357, %v412
      %v427 = vmul.f32 %v360, %v412
      %v428 = vmul.f32 %v363, %v412
      %v429 = vmul.f32 %v366, %v412
      %v430 = vmul.f32 %v369, %v412
      %v431 = vmul.f32 %v372, %v412
      %v432 = vmul.f32 %v375, %v412
      %v433 = vmul.f32 %v378, %v412
      %v434 = vmul.f32 %v381, %v412
      %v435 = vmul.f32 %v384, %v412
      %v436 = vmul.f32 %v387, %v412
      %v437 = vmul.f32 %v390, %v412
      %v438 = vmul.f32 %v393, %v412
      %v439 = vmul.f32 %v396, %v412
      %v440 = vmul.f32 %v399, %v412
      %v441 = vmul.f32 %v402, %v412
      %v442 = vmul.f32 %v405, %v412
      %v443 = vmul.f32 %v408, %v412
      %v444 = vmul.f32 %v411, %v412
      %v445 = vsub.f32 %v283, %v413
      %v446 = vsub.f32 %v284, %v414
      %v447 = vsub.f32 %v285, %v415
      %v448 = vsub.f32 %v286, %v416
      %v449 = vsub.f32 %v287, %v417
      %v450 = vsub.f32 %v288, %v418
      %v451 = vsub.f32 %v289, %v419
      %v452 = vsub.f32 %v290, %v420
      %v453 = vsub.f32 %v291, %v421
      %v454 = vsub.f32 %v292, %v422
      %v455 = vsub.f32 %v293, %v423
      %v456 = vsub.f32 %v294, %v424
      %v457 = vsub.f32 %v295, %v425
      %v458 = vsub.f32 %v296, %v426
      %v459 = vsub.f32 %v297, %v427
      %v460 = vsub.f32 %v298, %v428
      %v461 = vsub.f32 %v299, %v429
      %v462 = vsub.f32 %v300, %v430
      %v463 = vsub.f32 %v301, %v431
      %v464 = vsub.f32 %v302, %v432
      %v465 = vsub.f32 %v303, %v433
      %v466 = vsub.f32 %v304, %v434
      %v467 = vsub.f32 %v305, %v435
      %v468 = vsub.f32 %v306, %v436
      %v469 = vsub.f32 %v307, %v437
      %v470 = vsub.f32 %v308, %v438
      %v471 = vsub.f32 %v309, %v439
      %v472 = vsub.f32 %v310, %v440
      %v473 = vsub.f32 %v311, %v441
      %v474 = vsub.f32 %v312, %v442
      %v475 = vsub.f32 %v313, %v443
      %v476 = vsub.f32 %v314, %v444
      %v477 = vmul.f32 %v445, %v445
      %v478 = vmul.f32 %v446, %v446
      %v479 = vmul.f32 %v447, %v447
      %v480 = vmul.f32 %v448, %v448
      %v481 = vmul.f32 %v449, %v449
      %v482 = vmul.f32 %v450, %v450
      %v483 = vmul.f32 %v451, %v451
      %v484 = vmul.f32 %v452, %v452
      %v485 = vmul.f32 %v453, %v453
      %v486 = vmul.f32 %v454, %v454
      %v487 = vmul.f32 %v455, %v455
      %v488 = vmul.f32 %v456, %v456
      %v489 = vmul.f32 %v457, %v457
      %v490 = vmul.f32 %v458, %v458
      %v491 = vmul.f32 %v459, %v459
      %v492 = vmul.f32 %v460, %v460
      %v493 = vmul.f32 %v461, %v461
      %v494 = vmul.f32 %v462, %v462
      %v495 = vmul.f32 %v463, %v463
      %v496 = vmul.f32 %v464, %v464
      %v497 = vmul.f32 %v465, %v465
      %v498 = vmul.f32 %v466, %v466
      %v499 = vmul.f32 %v467, %v467
      %v500 = vmul.f32 %v468, %v468
      %v501 = vmul.f32 %v469, %v469
      %v502 = vmul.f32 %v470, %v470
      %v503 = vmul.f32 %v471, %v471
      %v504 = vmul.f32 %v472, %v472
      %v505 = vmul.f32 %v473, %v473
      %v506 = vmul.f32 %v474, %v474
      %v507 = vmul.f32 %v475, %v475
      %v508 = vmul.f32 %v476, %v476
      %v509 = vsel %vm315, %v477, 0.0
      %510 = vadd.xlane.f32.xlu0 %v509
      %v511 = vpop.xlane.xlu0 %510
      %v512 = vsel %vm315, %v478, 0.0
      %513 = vadd.xlane.f32.xlu0 %v512
      %v514 = vpop.xlane.xlu0 %513
      %v515 = vsel %vm315, %v479, 0.0
      %516 = vadd.xlane.f32.xlu0 %v515
      %v517 = vpop.xlane.xlu0 %516
      %v518 = vsel %vm315, %v480, 0.0
      %519 = vadd.xlane.f32.xlu0 %v518
      %v520 = vpop.xlane.xlu0 %519
      %v521 = vsel %vm315, %v481, 0.0
      %522 = vadd.xlane.f32.xlu0 %v521
      %v523 = vpop.xlane.xlu0 %522
      %v524 = vsel %vm315, %v482, 0.0
      %525 = vadd.xlane.f32.xlu0 %v524
      %v526 = vpop.xlane.xlu0 %525
      %v527 = vsel %vm315, %v483, 0.0
      %528 = vadd.xlane.f32.xlu0 %v527
      %v529 = vpop.xlane.xlu0 %528
      %v530 = vsel %vm315, %v484, 0.0
      %531 = vadd.xlane.f32.xlu0 %v530
      %v532 = vpop.xlane.xlu0 %531
      %v533 = vsel %vm315, %v485, 0.0
      %534 = vadd.xlane.f32.xlu0 %v533
      %v535 = vpop.xlane.xlu0 %534
      %v536 = vsel %vm315, %v486, 0.0
      %537 = vadd.xlane.f32.xlu0 %v536
      %v538 = vpop.xlane.xlu0 %537
      %v539 = vsel %vm315, %v487, 0.0
      %540 = vadd.xlane.f32.xlu0 %v539
      %v541 = vpop.xlane.xlu0 %540
      %v542 = vsel %vm315, %v488, 0.0
      %543 = vadd.xlane.f32.xlu0 %v542
      %v544 = vpop.xlane.xlu0 %543
      %v545 = vsel %vm315, %v489, 0.0
      %546 = vadd.xlane.f32.xlu0 %v545
      %v547 = vpop.xlane.xlu0 %546
      %v548 = vsel %vm315, %v490, 0.0
      %549 = vadd.xlane.f32.xlu0 %v548
      %v550 = vpop.xlane.xlu0 %549
      %v551 = vsel %vm315, %v491, 0.0
      %552 = vadd.xlane.f32.xlu0 %v551
      %v553 = vpop.xlane.xlu0 %552
      %v554 = vsel %vm315, %v492, 0.0
      %555 = vadd.xlane.f32.xlu0 %v554
      %v556 = vpop.xlane.xlu0 %555
      %v557 = vsel %vm315, %v493, 0.0
      %558 = vadd.xlane.f32.xlu0 %v557
      %v559 = vpop.xlane.xlu0 %558
      %v560 = vsel %vm315, %v494, 0.0
      %561 = vadd.xlane.f32.xlu0 %v560
      %v562 = vpop.xlane.xlu0 %561
      %v563 = vsel %vm315, %v495, 0.0
      %564 = vadd.xlane.f32.xlu0 %v563
      %v565 = vpop.xlane.xlu0 %564
      %v566 = vsel %vm315, %v496, 0.0
      %567 = vadd.xlane.f32.xlu0 %v566
      %v568 = vpop.xlane.xlu0 %567
      %v569 = vsel %vm315, %v497, 0.0
      %570 = vadd.xlane.f32.xlu0 %v569
      %v571 = vpop.xlane.xlu0 %570
      %v572 = vsel %vm315, %v498, 0.0
      %573 = vadd.xlane.f32.xlu0 %v572
      %v574 = vpop.xlane.xlu0 %573
      %v575 = vsel %vm315, %v499, 0.0
      %576 = vadd.xlane.f32.xlu0 %v575
      %v577 = vpop.xlane.xlu0 %576
      %v578 = vsel %vm315, %v500, 0.0
      %579 = vadd.xlane.f32.xlu0 %v578
      %v580 = vpop.xlane.xlu0 %579
      %v581 = vsel %vm315, %v501, 0.0
      %582 = vadd.xlane.f32.xlu0 %v581
      %v583 = vpop.xlane.xlu0 %582
      %v584 = vsel %vm315, %v502, 0.0
      %585 = vadd.xlane.f32.xlu0 %v584
      %v586 = vpop.xlane.xlu0 %585
      %v587 = vsel %vm315, %v503, 0.0
      %588 = vadd.xlane.f32.xlu0 %v587
      %v589 = vpop.xlane.xlu0 %588
      %v590 = vsel %vm315, %v504, 0.0
      %591 = vadd.xlane.f32.xlu0 %v590
      %v592 = vpop.xlane.xlu0 %591
      %v593 = vsel %vm315, %v505, 0.0
      %594 = vadd.xlane.f32.xlu0 %v593
      %v595 = vpop.xlane.xlu0 %594
      %v596 = vsel %vm315, %v506, 0.0
      %597 = vadd.xlane.f32.xlu0 %v596
      %v598 = vpop.xlane.xlu0 %597
      %v599 = vsel %vm315, %v507, 0.0
      %600 = vadd.xlane.f32.xlu0 %v599
      %v601 = vpop.xlane.xlu0 %600
      %v602 = vsel %vm315, %v508, 0.0
      %603 = vadd.xlane.f32.xlu0 %v602
      %v604 = vpop.xlane.xlu0 %603
      %v605 = vmul.f32 %v511, %v412
      %v606 = vmul.f32 %v514, %v412
      %v607 = vmul.f32 %v517, %v412
      %v608 = vmul.f32 %v520, %v412
      %v609 = vmul.f32 %v523, %v412
      %v610 = vmul.f32 %v526, %v412
      %v611 = vmul.f32 %v529, %v412
      %v612 = vmul.f32 %v532, %v412
      %v613 = vmul.f32 %v535, %v412
      %v614 = vmul.f32 %v538, %v412
      %v615 = vmul.f32 %v541, %v412
      %v616 = vmul.f32 %v544, %v412
      %v617 = vmul.f32 %v547, %v412
      %v618 = vmul.f32 %v550, %v412
      %v619 = vmul.f32 %v553, %v412
      %v620 = vmul.f32 %v556, %v412
      %v621 = vmul.f32 %v559, %v412
      %v622 = vmul.f32 %v562, %v412
      %v623 = vmul.f32 %v565, %v412
      %v624 = vmul.f32 %v568, %v412
      %v625 = vmul.f32 %v571, %v412
      %v626 = vmul.f32 %v574, %v412
      %v627 = vmul.f32 %v577, %v412
      %v628 = vmul.f32 %v580, %v412
      %v629 = vmul.f32 %v583, %v412
      %v630 = vmul.f32 %v586, %v412
      %v631 = vmul.f32 %v589, %v412
      %v632 = vmul.f32 %v592, %v412
      %v633 = vmul.f32 %v595, %v412
      %v634 = vmul.f32 %v598, %v412
      %v635 = vmul.f32 %v601, %v412
      %v636 = vmul.f32 %v604, %v412
      %v637 = vadd.f32 %v605, 1e-05
      %v638 = vadd.f32 %v606, 1e-05
      %v639 = vadd.f32 %v607, 1e-05
      %v640 = vadd.f32 %v608, 1e-05
      %v641 = vadd.f32 %v609, 1e-05
      %v642 = vadd.f32 %v610, 1e-05
      %v643 = vadd.f32 %v611, 1e-05
      %v644 = vadd.f32 %v612, 1e-05
      %v645 = vadd.f32 %v613, 1e-05
      %v646 = vadd.f32 %v614, 1e-05
      %v647 = vadd.f32 %v615, 1e-05
      %v648 = vadd.f32 %v616, 1e-05
      %v649 = vadd.f32 %v617, 1e-05
      %v650 = vadd.f32 %v618, 1e-05
      %v651 = vadd.f32 %v619, 1e-05
      %v652 = vadd.f32 %v620, 1e-05
      %v653 = vadd.f32 %v621, 1e-05
      %v654 = vadd.f32 %v622, 1e-05
      %v655 = vadd.f32 %v623, 1e-05
      %v656 = vadd.f32 %v624, 1e-05
      %v657 = vadd.f32 %v625, 1e-05
      %v658 = vadd.f32 %v626, 1e-05
      %v659 = vadd.f32 %v627, 1e-05
      %v660 = vadd.f32 %v628, 1e-05
      %v661 = vadd.f32 %v629, 1e-05
      %v662 = vadd.f32 %v630, 1e-05
      %v663 = vadd.f32 %v631, 1e-05
      %v664 = vadd.f32 %v632, 1e-05
      %v665 = vadd.f32 %v633, 1e-05
      %v666 = vadd.f32 %v634, 1e-05
      %v667 = vadd.f32 %v635, 1e-05
      %v668 = vadd.f32 %v636, 1e-05
      %v669 = vrsqrt.pop %v637
      %v670 = vrsqrt.pop %v638
      %v671 = vrsqrt.pop %v639
      %v672 = vrsqrt.pop %v640
      %v673 = vrsqrt.pop %v641
      %v674 = vrsqrt.pop %v642
      %v675 = vrsqrt.pop %v643
      %v676 = vrsqrt.pop %v644
      %v677 = vrsqrt.pop %v645
      %v678 = vrsqrt.pop %v646
      %v679 = vrsqrt.pop %v647
      %v680 = vrsqrt.pop %v648
      %v681 = vrsqrt.pop %v649
      %v682 = vrsqrt.pop %v650
      %v683 = vrsqrt.pop %v651
      %v684 = vrsqrt.pop %v652
      %v685 = vrsqrt.pop %v653
      %v686 = vrsqrt.pop %v654
      %v687 = vrsqrt.pop %v655
      %v688 = vrsqrt.pop %v656
      %v689 = vrsqrt.pop %v657
      %v690 = vrsqrt.pop %v658
      %v691 = vrsqrt.pop %v659
      %v692 = vrsqrt.pop %v660
      %v693 = vrsqrt.pop %v661
      %v694 = vrsqrt.pop %v662
      %v695 = vrsqrt.pop %v663
      %v696 = vrsqrt.pop %v664
      %v697 = vrsqrt.pop %v665
      %v698 = vrsqrt.pop %v666
      %v699 = vrsqrt.pop %v667
      %v700 = vrsqrt.pop %v668
      %v701 = vmul.f32 %v445, %v669
      %v702 = vmul.f32 %v446, %v670
      %v703 = vmul.f32 %v447, %v671
      %v704 = vmul.f32 %v448, %v672
      %v705 = vmul.f32 %v449, %v673
      %v706 = vmul.f32 %v450, %v674
      %v707 = vmul.f32 %v451, %v675
      %v708 = vmul.f32 %v452, %v676
      %v709 = vmul.f32 %v453, %v677
      %v710 = vmul.f32 %v454, %v678
      %v711 = vmul.f32 %v455, %v679
      %v712 = vmul.f32 %v456, %v680
      %v713 = vmul.f32 %v457, %v681
      %v714 = vmul.f32 %v458, %v682
      %v715 = vmul.f32 %v459, %v683
      %v716 = vmul.f32 %v460, %v684
      %v717 = vmul.f32 %v461, %v685
      %v718 = vmul.f32 %v462, %v686
      %v719 = vmul.f32 %v463, %v687
      %v720 = vmul.f32 %v464, %v688
      %v721 = vmul.f32 %v465, %v689
      %v722 = vmul.f32 %v466, %v690
      %v723 = vmul.f32 %v467, %v691
      %v724 = vmul.f32 %v468, %v692
      %v725 = vmul.f32 %v469, %v693
      %v726 = vmul.f32 %v470, %v694
      %v727 = vmul.f32 %v471, %v695
      %v728 = vmul.f32 %v472, %v696
      %v729 = vmul.f32 %v473, %v697
      %v730 = vmul.f32 %v474, %v698
      %v731 = vmul.f32 %v475, %v699
      %v732 = vmul.f32 %v476, %v700
      %v733 = vld [vmem:[%s5] sm:$0x1]
      %v735 = vlaneseq
      %v736 = vshrl.u32 %v735, 7
      %v737 = vsub.s32 0, %v736
      %v738 = vrot.slane %v733, %v737
      %v740 = vmul.f32 %v701, %v738
      %v741 = vmul.f32 %v702, %v738
      %v742 = vmul.f32 %v703, %v738
      %v743 = vmul.f32 %v704, %v738
      %v744 = vmul.f32 %v705, %v738
      %v745 = vmul.f32 %v706, %v738
      %v746 = vmul.f32 %v707, %v738
      %v747 = vmul.f32 %v708, %v738
      %v748 = vmul.f32 %v709, %v738
      %v749 = vmul.f32 %v710, %v738
      %v750 = vmul.f32 %v711, %v738
      %v751 = vmul.f32 %v712, %v738
      %v752 = vmul.f32 %v713, %v738
      %v753 = vmul.f32 %v714, %v738
      %v754 = vmul.f32 %v715, %v738
      %v755 = vmul.f32 %v716, %v738
      %v756 = vmul.f32 %v717, %v738
      %v757 = vmul.f32 %v718, %v738
      %v758 = vmul.f32 %v719, %v738
      %v759 = vmul.f32 %v720, %v738
      %v760 = vmul.f32 %v721, %v738
      %v761 = vmul.f32 %v722, %v738
      %v762 = vmul.f32 %v723, %v738
      %v763 = vmul.f32 %v724, %v738
      %v764 = vmul.f32 %v725, %v738
      %v765 = vmul.f32 %v726, %v738
      %v766 = vmul.f32 %v727, %v738
      %v767 = vmul.f32 %v728, %v738
      %v768 = vmul.f32 %v729, %v738
      %v769 = vmul.f32 %v730, %v738
      %v770 = vmul.f32 %v731, %v738
      %v771 = vmul.f32 %v732, %v738
      %v772 = vld [vmem:[%s6] sm:$0x1]
      %v774 = vlaneseq
      %v775 = vshrl.u32 %v774, 7
      %v776 = vsub.s32 0, %v775
      %v777 = vrot.slane %v772, %v776
      %v779 = vadd.f32 %v740, %v777
      %v780 = vadd.f32 %v741, %v777
      %v781 = vadd.f32 %v742, %v777
      %v782 = vadd.f32 %v743, %v777
      %v783 = vadd.f32 %v744, %v777
      %v784 = vadd.f32 %v745, %v777
      %v785 = vadd.f32 %v746, %v777
      %v786 = vadd.f32 %v747, %v777
      %v787 = vadd.f32 %v748, %v777
      %v788 = vadd.f32 %v749, %v777
      %v789 = vadd.f32 %v750, %v777
      %v790 = vadd.f32 %v751, %v777
      %v791 = vadd.f32 %v752, %v777
      %v792 = vadd.f32 %v753, %v777
      %v793 = vadd.f32 %v754, %v777
      %v794 = vadd.f32 %v755, %v777
      %v795 = vadd.f32 %v756, %v777
      %v796 = vadd.f32 %v757, %v777
      %v797 = vadd.f32 %v758, %v777
      %v798 = vadd.f32 %v759, %v777
      %v799 = vadd.f32 %v760, %v777
      %v800 = vadd.f32 %v761, %v777
      %v801 = vadd.f32 %v762, %v777
      %v802 = vadd.f32 %v763, %v777
      %v803 = vadd.f32 %v764, %v777
      %v804 = vadd.f32 %v765, %v777
      %v805 = vadd.f32 %v766, %v777
      %v806 = vadd.f32 %v767, %v777
      %v807 = vadd.f32 %v768, %v777
      %v808 = vadd.f32 %v769, %v777
      %v809 = vadd.f32 %v770, %v777
      %v810 = vadd.f32 %v771, %v777
      %v811 = vpack.c.bf16 %v780, %v779
      %v812 = vpack.c.bf16 %v782, %v781
      %v813 = vpack.c.bf16 %v784, %v783
      %v814 = vpack.c.bf16 %v786, %v785
      %v815 = vpack.c.bf16 %v788, %v787
      %v816 = vpack.c.bf16 %v790, %v789
      %v817 = vpack.c.bf16 %v792, %v791
      %v818 = vpack.c.bf16 %v794, %v793
      %v819 = vpack.c.bf16 %v796, %v795
      %v820 = vpack.c.bf16 %v798, %v797
      %v821 = vpack.c.bf16 %v800, %v799
      %v822 = vpack.c.bf16 %v802, %v801
      %v823 = vpack.c.bf16 %v804, %v803
      %v824 = vpack.c.bf16 %v806, %v805
      %v825 = vpack.c.bf16 %v808, %v807
      %v826 = vpack.c.bf16 %v810, %v809
      %v827 = vld [vmem:[%s1] sm:$0xf]
      %v828 = vld [vmem:[%s1 + $0x4] sm:$0xf]
      %v829 = vld [vmem:[%s1 + $0x8] sm:$0xf]
      %v830 = vld [vmem:[%s1 + $0xc] sm:$0xf]
      %v831 = vld [vmem:[%s2] sm:$0x1]
      %v833 = vlaneseq
      %v834 = vshrl.u32 %v833, 7
      %v835 = vsub.s32 0, %v834
      %v836 = vrot.slane %v831, %v835
      %v842 = vunpack.c.l.b16 %v827
      %v843 = vunpack.c.l.b16 %v828
      %v844 = vunpack.c.l.b16 %v829
      %v845 = vunpack.c.l.b16 %v830
      %v846 = vpack.c.b16 %v843, %v842
      %v847 = vpack.c.b16 %v845, %v844
      %v851 = vsel %vm315, %v811, 0
      %v854 = vsel %vm315, %v812, 0
      %v857 = vsel %vm315, %v813, 0
      %v860 = vsel %vm315, %v814, 0
      %v863 = vsel %vm315, %v815, 0
      %v866 = vsel %vm315, %v816, 0
      %v869 = vsel %vm315, %v817, 0
      %v872 = vsel %vm315, %v818, 0
      %v875 = vsel %vm315, %v819, 0
      %v878 = vsel %vm315, %v820, 0
      %v881 = vsel %vm315, %v821, 0
      %v884 = vsel %vm315, %v822, 0
      %v887 = vsel %vm315, %v823, 0
      %v890 = vsel %vm315, %v824, 0
      %v893 = vsel %vm315, %v825, 0
      %v896 = vsel %vm315, %v826, 0
      %898 = vmatprep.subr.bf16.mxu0 0
      %899 = vmatpush1.bf16.msra.mxu0 %v846
      %900 = vmatprep.subr.bf16.mxu0 0
      %901 = vmatpush1.bf16.msra.mxu0 %v847
      %902 = vmatprep.subr.bf16.mxu0 0
      %903 = vmatpush1.bf16.msra.mxu0 0
      %904 = vmatprep.subr.bf16.mxu0 0
      %905 = vmatpush1.bf16.msra.mxu0 0
      %906 = vmatprep.subr.bf16.mxu0 0
      %907 = vmatpush1.bf16.msra.mxu0 0
      %908 = vmatprep.subr.bf16.mxu0 0
      %909 = vmatpush1.bf16.msra.mxu0 0
      %910 = vmatprep.subr.bf16.mxu0 0
      %911 = vmatpush1.bf16.msra.mxu0 0
      %912 = vmatprep.subr.bf16.mxu0 0
      %913 = vmatpush1.bf16.msra.mxu0 0
      %914 = vmatprep.subr.bf16.mxu0 0
      %915 = vmatpush1.bf16.msra.mxu0 0
      %916 = vmatprep.subr.bf16.mxu0 0
      %917 = vmatpush1.bf16.msra.mxu0 0
      %918 = vmatprep.subr.bf16.mxu0 0
      %919 = vmatpush1.bf16.msra.mxu0 0
      %920 = vmatprep.subr.bf16.mxu0 0
      %921 = vmatpush1.bf16.msra.mxu0 0
      %922 = vmatprep.subr.bf16.mxu0 0
      %923 = vmatpush1.bf16.msra.mxu0 0
      %924 = vmatprep.subr.bf16.mxu0 0
      %925 = vmatpush1.bf16.msra.mxu0 0
      %926 = vmatprep.subr.bf16.mxu0 0
      %927 = vmatpush1.bf16.msra.mxu0 0
      %928 = vmatprep.subr.bf16.mxu0 0
      %929 = vmatpush1.bf16.msra.mxu0 0
      %930 = vmatprep.mubr.bf16.mxu0 0
      %931 = vmatmul.mubr.bf16.gmra.mrb[0].mxu0 %v851
      %v932 = vpop.f32.mrb[0].mxu0
      %v933 = vadd.f32 %v836, %v932
      %v934 = vpop.f32.mrb[0].mxu0
      %v935 = vpop.f32.mrb[0].mxu0
      %v936 = vadd.f32 %v836, %v935
      %v937 = vpop.f32.mrb[0].mxu0
      %938 = vmatprep.mubr.bf16.mxu0 0
      %939 = vmatmul.mubr.bf16.gmra.mrb[0].mxu0 %v854
      %v940 = vpop.f32.mrb[0].mxu0
      %v941 = vadd.f32 %v836, %v940
      %v942 = vpop.f32.mrb[0].mxu0
      %v943 = vpop.f32.mrb[0].mxu0
      %v944 = vadd.f32 %v836, %v943
      %v945 = vpop.f32.mrb[0].mxu0
      %946 = vmatprep.mubr.bf16.mxu0 0
      %947 = vmatmul.mubr.bf16.gmra.mrb[0].mxu0 %v857
      %v948 = vpop.f32.mrb[0].mxu0
      %v949 = vadd.f32 %v836, %v948
      %v950 = vpop.f32.mrb[0].mxu0
      %v951 = vpop.f32.mrb[0].mxu0
      %v952 = vadd.f32 %v836, %v951
      %v953 = vpop.f32.mrb[0].mxu0
      %954 = vmatprep.mubr.bf16.mxu0 0
      %955 = vmatmul.mubr.bf16.gmra.mrb[0].mxu0 %v860
      %v956 = vpop.f32.mrb[0].mxu0
      %v957 = vadd.f32 %v836, %v956
      %v958 = vpop.f32.mrb[0].mxu0
      %v959 = vpop.f32.mrb[0].mxu0
      %v960 = vadd.f32 %v836, %v959
      %v961 = vpop.f32.mrb[0].mxu0
      %962 = vmatprep.mubr.bf16.mxu0 0
      %963 = vmatmul.mubr.bf16.gmra.mrb[0].mxu0 %v863
      %v964 = vpop.f32.mrb[0].mxu0
      %v965 = vadd.f32 %v836, %v964
      %v966 = vpop.f32.mrb[0].mxu0
      %v967 = vpop.f32.mrb[0].mxu0
      %v968 = vadd.f32 %v836, %v967
      %v969 = vpop.f32.mrb[0].mxu0
      %970 = vmatprep.mubr.bf16.mxu0 0
      %971 = vmatmul.mubr.bf16.gmra.mrb[0].mxu0 %v866
      %v972 = vpop.f32.mrb[0].mxu0
      %v973 = vadd.f32 %v836, %v972
      %v974 = vpop.f32.mrb[0].mxu0
      %v975 = vpop.f32.mrb[0].mxu0
      %v976 = vadd.f32 %v836, %v975
      %v977 = vpop.f32.mrb[0].mxu0
      %978 = vmatprep.mubr.bf16.mxu0 0
      %979 = vmatmul.mubr.bf16.gmra.mrb[0].mxu0 %v869
      %v980 = vpop.f32.mrb[0].mxu0
      %v981 = vadd.f32 %v836, %v980
      %v982 = vpop.f32.mrb[0].mxu0
      %v983 = vpop.f32.mrb[0].mxu0
      %v984 = vadd.f32 %v836, %v983
      %v985 = vpop.f32.mrb[0].mxu0
      %986 = vmatprep.mubr.bf16.mxu0 0
      %987 = vmatmul.mubr.bf16.gmra.mrb[0].mxu0 %v872
      %v988 = vpop.f32.mrb[0].mxu0
      %v989 = vadd.f32 %v836, %v988
      %v990 = vpop.f32.mrb[0].mxu0
      %v991 = vpop.f32.mrb[0].mxu0
      %v992 = vadd.f32 %v836, %v991
      %v993 = vpop.f32.mrb[0].mxu0
      %994 = vmatprep.mubr.bf16.mxu0 0
      %995 = vmatmul.mubr.bf16.gmra.mrb[0].mxu0 %v875
      %v996 = vpop.f32.mrb[0].mxu0
      %v997 = vadd.f32 %v836, %v996
      %v998 = vpop.f32.mrb[0].mxu0
      %v999 = vpop.f32.mrb[0].mxu0
      %v1000 = vadd.f32 %v836, %v999
      %v1001 = vpop.f32.mrb[0].mxu0
      %1002 = vmatprep.mubr.bf16.mxu0 0
      %1003 = vmatmul.mubr.bf16.gmra.mrb[0].mxu0 %v878
      %v1004 = vpop.f32.mrb[0].mxu0
      %v1005 = vadd.f32 %v836, %v1004
      %v1006 = vpop.f32.mrb[0].mxu0
      %v1007 = vpop.f32.mrb[0].mxu0
      %v1008 = vadd.f32 %v836, %v1007
      %v1009 = vpop.f32.mrb[0].mxu0
      %1010 = vmatprep.mubr.bf16.mxu0 0
      %1011 = vmatmul.mubr.bf16.gmra.mrb[0].mxu0 %v881
      %v1012 = vpop.f32.mrb[0].mxu0
      %v1013 = vadd.f32 %v836, %v1012
      %v1014 = vpop.f32.mrb[0].mxu0
      %v1015 = vpop.f32.mrb[0].mxu0
      %v1016 = vadd.f32 %v836, %v1015
      %v1017 = vpop.f32.mrb[0].mxu0
      %1018 = vmatprep.mubr.bf16.mxu0 0
      %1019 = vmatmul.mubr.bf16.gmra.mrb[0].mxu0 %v884
      %v1020 = vpop.f32.mrb[0].mxu0
      %v1021 = vadd.f32 %v836, %v1020
      %v1022 = vpop.f32.mrb[0].mxu0
      %v1023 = vpop.f32.mrb[0].mxu0
      %v1024 = vadd.f32 %v836, %v1023
      %v1025 = vpop.f32.mrb[0].mxu0
      %1026 = vmatprep.mubr.bf16.mxu0 0
      %1027 = vmatmul.mubr.bf16.gmra.mrb[0].mxu0 %v887
      %v1028 = vpop.f32.mrb[0].mxu0
      %v1029 = vadd.f32 %v836, %v1028
      %v1030 = vpop.f32.mrb[0].mxu0
      %v1031 = vpop.f32.mrb[0].mxu0
      %v1032 = vadd.f32 %v836, %v1031
      %v1033 = vpop.f32.mrb[0].mxu0
      %1034 = vmatprep.mubr.bf16.mxu0 0
      %1035 = vmatmul.mubr.bf16.gmra.mrb[0].mxu0 %v890
      %v1036 = vpop.f32.mrb[0].mxu0
      %v1037 = vadd.f32 %v836, %v1036
      %v1038 = vpop.f32.mrb[0].mxu0
      %v1039 = vpop.f32.mrb[0].mxu0
      %v1040 = vadd.f32 %v836, %v1039
      %v1041 = vpop.f32.mrb[0].mxu0
      %1042 = vmatprep.mubr.bf16.mxu0 0
      %1043 = vmatmul.mubr.bf16.gmra.mrb[0].mxu0 %v893
      %v1044 = vpop.f32.mrb[0].mxu0
      %v1045 = vadd.f32 %v836, %v1044
      %v1046 = vpop.f32.mrb[0].mxu0
      %v1047 = vpop.f32.mrb[0].mxu0
      %v1048 = vadd.f32 %v836, %v1047
      %v1049 = vpop.f32.mrb[0].mxu0
      %1050 = vmatprep.mubr.bf16.mxu0 0
      %1051 = vmatmul.mubr.bf16.gmra.mrb[0].mxu0 %v896
      %v1052 = vpop.f32.mrb[0].mxu0
      %v1053 = vadd.f32 %v836, %v1052
      %v1054 = vpop.f32.mrb[0].mxu0
      %v1055 = vpop.f32.mrb[0].mxu0
      %v1056 = vadd.f32 %v836, %v1055
      %v1057 = vpop.f32.mrb[0].mxu0
      %1058 = vdwg.mxu0
      %v1059 = vsub.f32 0.0, %v933
      %v1060 = vsub.f32 0.0, %v936
      %v1061 = vsub.f32 0.0, %v941
      %v1062 = vsub.f32 0.0, %v944
      %v1063 = vsub.f32 0.0, %v949
      %v1064 = vsub.f32 0.0, %v952
      %v1065 = vsub.f32 0.0, %v957
      %v1066 = vsub.f32 0.0, %v960
      %v1067 = vsub.f32 0.0, %v965
      %v1068 = vsub.f32 0.0, %v968
      %v1069 = vsub.f32 0.0, %v973
      %v1070 = vsub.f32 0.0, %v976
      %v1071 = vsub.f32 0.0, %v981
      %v1072 = vsub.f32 0.0, %v984
      %v1073 = vsub.f32 0.0, %v989
      %v1074 = vsub.f32 0.0, %v992
      %v1075 = vsub.f32 0.0, %v997
      %v1076 = vsub.f32 0.0, %v1000
      %v1077 = vsub.f32 0.0, %v1005
      %v1078 = vsub.f32 0.0, %v1008
      %v1079 = vsub.f32 0.0, %v1013
      %v1080 = vsub.f32 0.0, %v1016
      %v1081 = vsub.f32 0.0, %v1021
      %v1082 = vsub.f32 0.0, %v1024
      %v1083 = vsub.f32 0.0, %v1029
      %v1084 = vsub.f32 0.0, %v1032
      %v1085 = vsub.f32 0.0, %v1037
      %v1086 = vsub.f32 0.0, %v1040
      %v1087 = vsub.f32 0.0, %v1045
      %v1088 = vsub.f32 0.0, %v1048
      %v1089 = vsub.f32 0.0, %v1053
      %v1090 = vsub.f32 0.0, %v1056
      %v1091 = vmul.f32 %v1059, 1.442695
      %v1092 = vpow.pop %v1091
      %v1093 = vmul.f32 %v1060, 1.442695
      %v1094 = vpow.pop %v1093
      %v1095 = vmul.f32 %v1061, 1.442695
      %v1096 = vpow.pop %v1095
      %v1097 = vmul.f32 %v1062, 1.442695
      %v1098 = vpow.pop %v1097
      %v1099 = vmul.f32 %v1063, 1.442695
      %v1100 = vpow.pop %v1099
      %v1101 = vmul.f32 %v1064, 1.442695
      %v1102 = vpow.pop %v1101
      %v1103 = vmul.f32 %v1065, 1.442695
      %v1104 = vpow.pop %v1103
      %v1105 = vmul.f32 %v1066, 1.442695
      %v1106 = vpow.pop %v1105
      %v1107 = vmul.f32 %v1067, 1.442695
      %v1108 = vpow.pop %v1107
      %v1109 = vmul.f32 %v1068, 1.442695
      %v1110 = vpow.pop %v1109
      %v1111 = vmul.f32 %v1069, 1.442695
      %v1112 = vpow.pop %v1111
      %v1113 = vmul.f32 %v1070, 1.442695
      %v1114 = vpow.pop %v1113
      %v1115 = vmul.f32 %v1071, 1.442695
      %v1116 = vpow.pop %v1115
      %v1117 = vmul.f32 %v1072, 1.442695
      %v1118 = vpow.pop %v1117
      %v1119 = vmul.f32 %v1073, 1.442695
      %v1120 = vpow.pop %v1119
      %v1121 = vmul.f32 %v1074, 1.442695
      %v1122 = vpow.pop %v1121
      %v1123 = vmul.f32 %v1075, 1.442695
      %v1124 = vpow.pop %v1123
      %v1125 = vmul.f32 %v1076, 1.442695
      %v1126 = vpow.pop %v1125
      %v1127 = vmul.f32 %v1077, 1.442695
      %v1128 = vpow.pop %v1127
      %v1129 = vmul.f32 %v1078, 1.442695
      %v1130 = vpow.pop %v1129
      %v1131 = vmul.f32 %v1079, 1.442695
      %v1132 = vpow.pop %v1131
      %v1133 = vmul.f32 %v1080, 1.442695
      %v1134 = vpow.pop %v1133
      %v1135 = vmul.f32 %v1081, 1.442695
      %v1136 = vpow.pop %v1135
      %v1137 = vmul.f32 %v1082, 1.442695
      %v1138 = vpow.pop %v1137
      %v1139 = vmul.f32 %v1083, 1.442695
      %v1140 = vpow.pop %v1139
      %v1141 = vmul.f32 %v1084, 1.442695
      %v1142 = vpow.pop %v1141
      %v1143 = vmul.f32 %v1085, 1.442695
      %v1144 = vpow.pop %v1143
      %v1145 = vmul.f32 %v1086, 1.442695
      %v1146 = vpow.pop %v1145
      %v1147 = vmul.f32 %v1087, 1.442695
      %v1148 = vpow.pop %v1147
      %v1149 = vmul.f32 %v1088, 1.442695
      %v1150 = vpow.pop %v1149
      %v1151 = vmul.f32 %v1089, 1.442695
      %v1152 = vpow.pop %v1151
      %v1153 = vmul.f32 %v1090, 1.442695
      %v1154 = vpow.pop %v1153
      %v1155 = vadd.f32 %v1092, 1.0
      %v1156 = vadd.f32 %v1094, 1.0
      %v1157 = vadd.f32 %v1096, 1.0
      %v1158 = vadd.f32 %v1098, 1.0
      %v1159 = vadd.f32 %v1100, 1.0
      %v1160 = vadd.f32 %v1102, 1.0
      %v1161 = vadd.f32 %v1104, 1.0
      %v1162 = vadd.f32 %v1106, 1.0
      %v1163 = vadd.f32 %v1108, 1.0
      %v1164 = vadd.f32 %v1110, 1.0
      %v1165 = vadd.f32 %v1112, 1.0
      %v1166 = vadd.f32 %v1114, 1.0
      %v1167 = vadd.f32 %v1116, 1.0
      %v1168 = vadd.f32 %v1118, 1.0
      %v1169 = vadd.f32 %v1120, 1.0
      %v1170 = vadd.f32 %v1122, 1.0
      %v1171 = vadd.f32 %v1124, 1.0
      %v1172 = vadd.f32 %v1126, 1.0
      %v1173 = vadd.f32 %v1128, 1.0
      %v1174 = vadd.f32 %v1130, 1.0
      %v1175 = vadd.f32 %v1132, 1.0
      %v1176 = vadd.f32 %v1134, 1.0
      %v1177 = vadd.f32 %v1136, 1.0
      %v1178 = vadd.f32 %v1138, 1.0
      %v1179 = vadd.f32 %v1140, 1.0
      %v1180 = vadd.f32 %v1142, 1.0
      %v1181 = vadd.f32 %v1144, 1.0
      %v1182 = vadd.f32 %v1146, 1.0
      %v1183 = vadd.f32 %v1148, 1.0
      %v1184 = vadd.f32 %v1150, 1.0
      %v1185 = vadd.f32 %v1152, 1.0
      %v1186 = vadd.f32 %v1154, 1.0
      %v1187 = vrcp.pop %v1155
      %v1188 = vrcp.pop %v1156
      %v1189 = vrcp.pop %v1157
      %v1190 = vrcp.pop %v1158
      %v1191 = vrcp.pop %v1159
      %v1192 = vrcp.pop %v1160
      %v1193 = vrcp.pop %v1161
      %v1194 = vrcp.pop %v1162
      %v1195 = vrcp.pop %v1163
      %v1196 = vrcp.pop %v1164
      %v1197 = vrcp.pop %v1165
      %v1198 = vrcp.pop %v1166
      %v1199 = vrcp.pop %v1167
      %v1200 = vrcp.pop %v1168
      %v1201 = vrcp.pop %v1169
      %v1202 = vrcp.pop %v1170
      %v1203 = vrcp.pop %v1171
      %v1204 = vrcp.pop %v1172
      %v1205 = vrcp.pop %v1173
      %v1206 = vrcp.pop %v1174
      %v1207 = vrcp.pop %v1175
      %v1208 = vrcp.pop %v1176
      %v1209 = vrcp.pop %v1177
      %v1210 = vrcp.pop %v1178
      %v1211 = vrcp.pop %v1179
      %v1212 = vrcp.pop %v1180
      %v1213 = vrcp.pop %v1181
      %v1214 = vrcp.pop %v1182
      %v1215 = vrcp.pop %v1183
      %v1216 = vrcp.pop %v1184
      %v1217 = vrcp.pop %v1185
      %v1218 = vrcp.pop %v1186
      %v1219 = vmul.f32 %v933, %v1187
      %v1220 = vmul.f32 %v936, %v1188
      %v1221 = vmul.f32 %v941, %v1189
      %v1222 = vmul.f32 %v944, %v1190
      %v1223 = vmul.f32 %v949, %v1191
      %v1224 = vmul.f32 %v952, %v1192
      %v1225 = vmul.f32 %v957, %v1193
      %v1226 = vmul.f32 %v960, %v1194
      %v1227 = vmul.f32 %v965, %v1195
      %v1228 = vmul.f32 %v968, %v1196
      %v1229 = vmul.f32 %v973, %v1197
      %v1230 = vmul.f32 %v976, %v1198
      %v1231 = vmul.f32 %v981, %v1199
      %v1232 = vmul.f32 %v984, %v1200
      %v1233 = vmul.f32 %v989, %v1201
      %v1234 = vmul.f32 %v992, %v1202
      %v1235 = vmul.f32 %v997, %v1203
      %v1236 = vmul.f32 %v1000, %v1204
      %v1237 = vmul.f32 %v1005, %v1205
      %v1238 = vmul.f32 %v1008, %v1206
      %v1239 = vmul.f32 %v1013, %v1207
      %v1240 = vmul.f32 %v1016, %v1208
      %v1241 = vmul.f32 %v1021, %v1209
      %v1242 = vmul.f32 %v1024, %v1210
      %v1243 = vmul.f32 %v1029, %v1211
      %v1244 = vmul.f32 %v1032, %v1212
      %v1245 = vmul.f32 %v1037, %v1213
      %v1246 = vmul.f32 %v1040, %v1214
      %v1247 = vmul.f32 %v1045, %v1215
      %v1248 = vmul.f32 %v1048, %v1216
      %v1249 = vmul.f32 %v1053, %v1217
      %v1250 = vmul.f32 %v1056, %v1218
      %v1251 = vpack.c.bf16 %v1220, %v1219
      %v1252 = vpack.c.bf16 %v1222, %v1221
      %v1253 = vpack.c.bf16 %v1224, %v1223
      %v1254 = vpack.c.bf16 %v1226, %v1225
      %v1255 = vpack.c.bf16 %v1228, %v1227
      %v1256 = vpack.c.bf16 %v1230, %v1229
      %v1257 = vpack.c.bf16 %v1232, %v1231
      %v1258 = vpack.c.bf16 %v1234, %v1233
      %v1259 = vpack.c.bf16 %v1236, %v1235
      %v1260 = vpack.c.bf16 %v1238, %v1237
      %v1261 = vpack.c.bf16 %v1240, %v1239
      %v1262 = vpack.c.bf16 %v1242, %v1241
      %v1263 = vpack.c.bf16 %v1244, %v1243
      %v1264 = vpack.c.bf16 %v1246, %v1245
      %v1265 = vpack.c.bf16 %v1248, %v1247
      %v1266 = vpack.c.bf16 %v1250, %v1249
      %v1267 = vld [vmem:[%s3] sm:$0xf]
      %v1268 = vld [vmem:[%s3 + $0x4] sm:$0xf]
      %v1269 = vld [vmem:[%s3 + $0x8] sm:$0xf]
      %v1270 = vld [vmem:[%s3 + $0xc] sm:$0xf]
      %v1271 = vld [vmem:[%s3 + $0x10] sm:$0xf]
      %v1272 = vld [vmem:[%s3 + $0x14] sm:$0xf]
      %v1273 = vld [vmem:[%s3 + $0x18] sm:$0xf]
      %v1274 = vld [vmem:[%s3 + $0x1c] sm:$0xf]
      %v1275 = vld [vmem:[%s3 + $0x20] sm:$0xf]
      %v1276 = vld [vmem:[%s3 + $0x24] sm:$0xf]
      %v1277 = vld [vmem:[%s3 + $0x28] sm:$0xf]
      %v1278 = vld [vmem:[%s3 + $0x2c] sm:$0xf]
      %v1279 = vld [vmem:[%s3 + $0x30] sm:$0xf]
      %v1280 = vld [vmem:[%s3 + $0x34] sm:$0xf]
      %v1281 = vld [vmem:[%s3 + $0x38] sm:$0xf]
      %v1282 = vld [vmem:[%s3 + $0x3c] sm:$0xf]
      %v1283 = vld [vmem:[%s4] sm:$0x1]
      %v1285 = vlaneseq
      %v1286 = vshrl.u32 %v1285, 7
      %v1287 = vsub.s32 0, %v1286
      %v1288 = vrot.slane %v1283, %v1287
      %v1306 = vunpack.c.l.b16 %v1267
      %v1307 = vunpack.c.l.b16 %v1268
      %v1308 = vunpack.c.l.b16 %v1269
      %v1309 = vunpack.c.l.b16 %v1270
      %v1310 = vunpack.c.l.b16 %v1271
      %v1311 = vunpack.c.l.b16 %v1272
      %v1312 = vunpack.c.l.b16 %v1273
      %v1313 = vunpack.c.l.b16 %v1274
      %v1314 = vunpack.c.l.b16 %v1275
      %v1315 = vunpack.c.l.b16 %v1276
      %v1316 = vunpack.c.l.b16 %v1277
      %v1317 = vunpack.c.l.b16 %v1278
      %v1318 = vunpack.c.l.b16 %v1279
      %v1319 = vunpack.c.l.b16 %v1280
      %v1320 = vunpack.c.l.b16 %v1281
      %v1321 = vunpack.c.l.b16 %v1282
      %v1322 = vpack.c.b16 %v1307, %v1306
      %v1323 = vpack.c.b16 %v1309, %v1308
      %v1324 = vpack.c.b16 %v1311, %v1310
      %v1325 = vpack.c.b16 %v1313, %v1312
      %v1326 = vpack.c.b16 %v1315, %v1314
      %v1327 = vpack.c.b16 %v1317, %v1316
      %v1328 = vpack.c.b16 %v1319, %v1318
      %v1329 = vpack.c.b16 %v1321, %v1320
      %1338 = vmatprep.subr.bf16.mxu0 0
      %1339 = vmatpush1.bf16.msra.mxu0 %v1322
      %1340 = vmatprep.subr.bf16.mxu0 0
      %1341 = vmatpush1.bf16.msra.mxu0 %v1323
      %1342 = vmatprep.subr.bf16.mxu0 0
      %1343 = vmatpush1.bf16.msra.mxu0 %v1324
      %1344 = vmatprep.subr.bf16.mxu0 0
      %1345 = vmatpush1.bf16.msra.mxu0 %v1325
      %1346 = vmatprep.subr.bf16.mxu0 0
      %1347 = vmatpush1.bf16.msra.mxu0 %v1326
      %1348 = vmatprep.subr.bf16.mxu0 0
      %1349 = vmatpush1.bf16.msra.mxu0 %v1327
      %1350 = vmatprep.subr.bf16.mxu0 0
      %1351 = vmatpush1.bf16.msra.mxu0 %v1328
      %1352 = vmatprep.subr.bf16.mxu0 0
      %1353 = vmatpush1.bf16.msra.mxu0 %v1329
      %1354 = vmatprep.subr.bf16.mxu0 0
      %1355 = vmatpush1.bf16.msra.mxu0 0
      %1356 = vmatprep.subr.bf16.mxu0 0
      %1357 = vmatpush1.bf16.msra.mxu0 0
      %1358 = vmatprep.subr.bf16.mxu0 0
      %1359 = vmatpush1.bf16.msra.mxu0 0
      %1360 = vmatprep.subr.bf16.mxu0 0
      %1361 = vmatpush1.bf16.msra.mxu0 0
      %1362 = vmatprep.subr.bf16.mxu0 0
      %1363 = vmatpush1.bf16.msra.mxu0 0
      %1364 = vmatprep.subr.bf16.mxu0 0
      %1365 = vmatpush1.bf16.msra.mxu0 0
      %1366 = vmatprep.subr.bf16.mxu0 0
      %1367 = vmatpush1.bf16.msra.mxu0 0
      %1368 = vmatprep.subr.bf16.mxu0 0
      %1369 = vmatpush1.bf16.msra.mxu0 0
      %1370 = vmatprep.mubr.bf16.mxu0 0
      %1371 = vmatmul.mubr.bf16.gmra.mrb[0].mxu0 %v1251
      %v1372 = vpop.f32.mrb[0].mxu0
      %v1373 = vadd.f32 %v1288, %v1372
      %v1374 = vpop.f32.mrb[0].mxu0
      %v1375 = vpop.f32.mrb[0].mxu0
      %v1376 = vadd.f32 %v1288, %v1375
      %v1377 = vpop.f32.mrb[0].mxu0
      %1378 = vmatprep.mubr.bf16.mxu0 0
      %1379 = vmatmul.mubr.bf16.gmra.mrb[0].mxu0 %v1252
      %v1380 = vpop.f32.mrb[0].mxu0
      %v1381 = vadd.f32 %v1288, %v1380
      %v1382 = vpop.f32.mrb[0].mxu0
      %v1383 = vpop.f32.mrb[0].mxu0
      %v1384 = vadd.f32 %v1288, %v1383
      %v1385 = vpop.f32.mrb[0].mxu0
      %1386 = vmatprep.mubr.bf16.mxu0 0
      %1387 = vmatmul.mubr.bf16.gmra.mrb[0].mxu0 %v1253
      %v1388 = vpop.f32.mrb[0].mxu0
      %v1389 = vadd.f32 %v1288, %v1388
      %v1390 = vpop.f32.mrb[0].mxu0
      %v1391 = vpop.f32.mrb[0].mxu0
      %v1392 = vadd.f32 %v1288, %v1391
      %v1393 = vpop.f32.mrb[0].mxu0
      %1394 = vmatprep.mubr.bf16.mxu0 0
      %1395 = vmatmul.mubr.bf16.gmra.mrb[0].mxu0 %v1254
      %v1396 = vpop.f32.mrb[0].mxu0
      %v1397 = vadd.f32 %v1288, %v1396
      %v1398 = vpop.f32.mrb[0].mxu0
      %v1399 = vpop.f32.mrb[0].mxu0
      %v1400 = vadd.f32 %v1288, %v1399
      %v1401 = vpop.f32.mrb[0].mxu0
      %1402 = vmatprep.mubr.bf16.mxu0 0
      %1403 = vmatmul.mubr.bf16.gmra.mrb[0].mxu0 %v1255
      %v1404 = vpop.f32.mrb[0].mxu0
      %v1405 = vadd.f32 %v1288, %v1404
      %v1406 = vpop.f32.mrb[0].mxu0
      %v1407 = vpop.f32.mrb[0].mxu0
      %v1408 = vadd.f32 %v1288, %v1407
      %v1409 = vpop.f32.mrb[0].mxu0
      %1410 = vmatprep.mubr.bf16.mxu0 0
      %1411 = vmatmul.mubr.bf16.gmra.mrb[0].mxu0 %v1256
      %v1412 = vpop.f32.mrb[0].mxu0
      %v1413 = vadd.f32 %v1288, %v1412
      %v1414 = vpop.f32.mrb[0].mxu0
      %v1415 = vpop.f32.mrb[0].mxu0
      %v1416 = vadd.f32 %v1288, %v1415
      %v1417 = vpop.f32.mrb[0].mxu0
      %1418 = vmatprep.mubr.bf16.mxu0 0
      %1419 = vmatmul.mubr.bf16.gmra.mrb[0].mxu0 %v1257
      %v1420 = vpop.f32.mrb[0].mxu0
      %v1421 = vadd.f32 %v1288, %v1420
      %v1422 = vpop.f32.mrb[0].mxu0
      %v1423 = vpop.f32.mrb[0].mxu0
      %v1424 = vadd.f32 %v1288, %v1423
      %v1425 = vpop.f32.mrb[0].mxu0
      %1426 = vmatprep.mubr.bf16.mxu0 0
      %1427 = vmatmul.mubr.bf16.gmra.mrb[0].mxu0 %v1258
      %v1428 = vpop.f32.mrb[0].mxu0
      %v1429 = vadd.f32 %v1288, %v1428
      %v1430 = vpop.f32.mrb[0].mxu0
      %v1431 = vpop.f32.mrb[0].mxu0
      %v1432 = vadd.f32 %v1288, %v1431
      %v1433 = vpop.f32.mrb[0].mxu0
      %1434 = vmatprep.mubr.bf16.mxu0 0
      %1435 = vmatmul.mubr.bf16.gmra.mrb[0].mxu0 %v1259
      %v1436 = vpop.f32.mrb[0].mxu0
      %v1437 = vadd.f32 %v1288, %v1436
      %v1438 = vpop.f32.mrb[0].mxu0
      %v1439 = vpop.f32.mrb[0].mxu0
      %v1440 = vadd.f32 %v1288, %v1439
      %v1441 = vpop.f32.mrb[0].mxu0
      %1442 = vmatprep.mubr.bf16.mxu0 0
      %1443 = vmatmul.mubr.bf16.gmra.mrb[0].mxu0 %v1260
      %v1444 = vpop.f32.mrb[0].mxu0
      %v1445 = vadd.f32 %v1288, %v1444
      %v1446 = vpop.f32.mrb[0].mxu0
      %v1447 = vpop.f32.mrb[0].mxu0
      %v1448 = vadd.f32 %v1288, %v1447
      %v1449 = vpop.f32.mrb[0].mxu0
      %1450 = vmatprep.mubr.bf16.mxu0 0
      %1451 = vmatmul.mubr.bf16.gmra.mrb[0].mxu0 %v1261
      %v1452 = vpop.f32.mrb[0].mxu0
      %v1453 = vadd.f32 %v1288, %v1452
      %v1454 = vpop.f32.mrb[0].mxu0
      %v1455 = vpop.f32.mrb[0].mxu0
      %v1456 = vadd.f32 %v1288, %v1455
      %v1457 = vpop.f32.mrb[0].mxu0
      %1458 = vmatprep.mubr.bf16.mxu0 0
      %1459 = vmatmul.mubr.bf16.gmra.mrb[0].mxu0 %v1262
      %v1460 = vpop.f32.mrb[0].mxu0
      %v1461 = vadd.f32 %v1288, %v1460
      %v1462 = vpop.f32.mrb[0].mxu0
      %v1463 = vpop.f32.mrb[0].mxu0
      %v1464 = vadd.f32 %v1288, %v1463
      %v1465 = vpop.f32.mrb[0].mxu0
      %1466 = vmatprep.mubr.bf16.mxu0 0
      %1467 = vmatmul.mubr.bf16.gmra.mrb[0].mxu0 %v1263
      %v1468 = vpop.f32.mrb[0].mxu0
      %v1469 = vadd.f32 %v1288, %v1468
      %v1470 = vpop.f32.mrb[0].mxu0
      %v1471 = vpop.f32.mrb[0].mxu0
      %v1472 = vadd.f32 %v1288, %v1471
      %v1473 = vpop.f32.mrb[0].mxu0
      %1474 = vmatprep.mubr.bf16.mxu0 0
      %1475 = vmatmul.mubr.bf16.gmra.mrb[0].mxu0 %v1264
      %v1476 = vpop.f32.mrb[0].mxu0
      %v1477 = vadd.f32 %v1288, %v1476
      %v1478 = vpop.f32.mrb[0].mxu0
      %v1479 = vpop.f32.mrb[0].mxu0
      %v1480 = vadd.f32 %v1288, %v1479
      %v1481 = vpop.f32.mrb[0].mxu0
      %1482 = vmatprep.mubr.bf16.mxu0 0
      %1483 = vmatmul.mubr.bf16.gmra.mrb[0].mxu0 %v1265
      %v1484 = vpop.f32.mrb[0].mxu0
      %v1485 = vadd.f32 %v1288, %v1484
      %v1486 = vpop.f32.mrb[0].mxu0
      %v1487 = vpop.f32.mrb[0].mxu0
      %v1488 = vadd.f32 %v1288, %v1487
      %v1489 = vpop.f32.mrb[0].mxu0
      %1490 = vmatprep.mubr.bf16.mxu0 0
      %1491 = vmatmul.mubr.bf16.gmra.mrb[0].mxu0 %v1266
      %v1492 = vpop.f32.mrb[0].mxu0
      %v1493 = vadd.f32 %v1288, %v1492
      %v1494 = vpop.f32.mrb[0].mxu0
      %v1495 = vpop.f32.mrb[0].mxu0
      %v1496 = vadd.f32 %v1288, %v1495
      %v1497 = vpop.f32.mrb[0].mxu0
      %1498 = vdwg.mxu0
      %v1499 = vadd.f32 %v283, %v1373
      %v1500 = vadd.f32 %v284, %v1376
      %v1501 = vadd.f32 %v285, %v1381
      %v1502 = vadd.f32 %v286, %v1384
      %v1503 = vadd.f32 %v287, %v1389
      %v1504 = vadd.f32 %v288, %v1392
      %v1505 = vadd.f32 %v289, %v1397
      %v1506 = vadd.f32 %v290, %v1400
      %v1507 = vadd.f32 %v291, %v1405
      %v1508 = vadd.f32 %v292, %v1408
      %v1509 = vadd.f32 %v293, %v1413
      %v1510 = vadd.f32 %v294, %v1416
      %v1511 = vadd.f32 %v295, %v1421
      %v1512 = vadd.f32 %v296, %v1424
      %v1513 = vadd.f32 %v297, %v1429
      %v1514 = vadd.f32 %v298, %v1432
      %v1515 = vadd.f32 %v299, %v1437
      %v1516 = vadd.f32 %v300, %v1440
      %v1517 = vadd.f32 %v301, %v1445
      %v1518 = vadd.f32 %v302, %v1448
      %v1519 = vadd.f32 %v303, %v1453
      %v1520 = vadd.f32 %v304, %v1456
      %v1521 = vadd.f32 %v305, %v1461
      %v1522 = vadd.f32 %v306, %v1464
      %v1523 = vadd.f32 %v307, %v1469
      %v1524 = vadd.f32 %v308, %v1472
      %v1525 = vadd.f32 %v309, %v1477
      %v1526 = vadd.f32 %v310, %v1480
      %v1527 = vadd.f32 %v311, %v1485
      %v1528 = vadd.f32 %v312, %v1488
      %v1529 = vadd.f32 %v313, %v1493
      %v1530 = vadd.f32 %v314, %v1496
      %1531 = vst.msk [vmem:[%s280] sm:$0xff] %vm315, %v1499
      %1532 = vst.msk [vmem:[%s280 + $0x8] sm:$0xff] %vm315, %v1500
      %1533 = vst.msk [vmem:[%s280 + $0x10] sm:$0xff] %vm315, %v1501
      %1534 = vst.msk [vmem:[%s280 + $0x18] sm:$0xff] %vm315, %v1502
      %1535 = vst.msk [vmem:[%s280 + $0x20] sm:$0xff] %vm315, %v1503
      %1536 = vst.msk [vmem:[%s280 + $0x28] sm:$0xff] %vm315, %v1504
      %1537 = vst.msk [vmem:[%s280 + $0x30] sm:$0xff] %vm315, %v1505
      %1538 = vst.msk [vmem:[%s280 + $0x38] sm:$0xff] %vm315, %v1506
      %1539 = vst.msk [vmem:[%s280 + $0x40] sm:$0xff] %vm315, %v1507
      %1540 = vst.msk [vmem:[%s280 + $0x48] sm:$0xff] %vm315, %v1508
      %1541 = vst.msk [vmem:[%s280 + $0x50] sm:$0xff] %vm315, %v1509
      %1542 = vst.msk [vmem:[%s280 + $0x58] sm:$0xff] %vm315, %v1510
      %1543 = vst.msk [vmem:[%s280 + $0x60] sm:$0xff] %vm315, %v1511
      %1544 = vst.msk [vmem:[%s280 + $0x68] sm:$0xff] %vm315, %v1512
      %1545 = vst.msk [vmem:[%s280 + $0x70] sm:$0xff] %vm315, %v1513
      %1546 = vst.msk [vmem:[%s280 + $0x78] sm:$0xff] %vm315, %v1514
      %1547 = vst.msk [vmem:[%s280 + $0x80] sm:$0xff] %vm315, %v1515
      %1548 = vst.msk [vmem:[%s280 + $0x88] sm:$0xff] %vm315, %v1516
      %1549 = vst.msk [vmem:[%s280 + $0x90] sm:$0xff] %vm315, %v1517
      %1550 = vst.msk [vmem:[%s280 + $0x98] sm:$0xff] %vm315, %v1518
      %1551 = vst.msk [vmem:[%s280 + $0xa0] sm:$0xff] %vm315, %v1519
      %1552 = vst.msk [vmem:[%s280 + $0xa8] sm:$0xff] %vm315, %v1520
      %1553 = vst.msk [vmem:[%s280 + $0xb0] sm:$0xff] %vm315, %v1521
      %1554 = vst.msk [vmem:[%s280 + $0xb8] sm:$0xff] %vm315, %v1522
      %1555 = vst.msk [vmem:[%s280 + $0xc0] sm:$0xff] %vm315, %v1523
      %1556 = vst.msk [vmem:[%s280 + $0xc8] sm:$0xff] %vm315, %v1524
      %1557 = vst.msk [vmem:[%s280 + $0xd0] sm:$0xff] %vm315, %v1525
      %1558 = vst.msk [vmem:[%s280 + $0xd8] sm:$0xff] %vm315, %v1526
      %1559 = vst.msk [vmem:[%s280 + $0xe0] sm:$0xff] %vm315, %v1527
      %1560 = vst.msk [vmem:[%s280 + $0xe8] sm:$0xff] %vm315, %v1528
      %1561 = vst.msk [vmem:[%s280 + $0xf0] sm:$0xff] %vm315, %v1529
      %1562 = vst.msk [vmem:[%s280 + $0xf8] sm:$0xff] %vm315, %v1530
      %s1563 = smul.u32 32, %s18
      %p1564 = scmp.lt.s32.totalorder %s1563, 63
      %s1565 = scalar_select %p1564, %s1563, 63
      %s1566 = smul.addr %s1565, 8
      %s1567 = scalar_lea.vmem %s7, %s1566
      // Predicated region
      $region49: #{stcspa_forward.8} parent=47 // pred_check
        %p1568 = pneg %p188
      $region50: #{stcspa_forward.8} parent=47 // pred_check_branch
        %1570 = sbr.rel (%p1568) target = $region52
      $region51: #{stcspa_forward.8} parent=47 // pred_region
        %s1571 = smul.u32 32, %s18
      $region52: #{stcspa_forward.8} parent=47 // pred_fallthru
        _
    $region48: #{stcspa_forward.8} parent=5 // pred_fallthru
      _
    %p1572 = scmp.le.s32.totalorder 2, %s13
    // Predicated region
    $region53: #{stcspa_forward.8} parent=5 // pred_check
      %p1573 = pneg %p1572
    $region54: #{stcspa_forward.8} parent=5 // pred_check_branch
      %1575 = sbr.rel (%p1573) target = $region56
    $region55: #{stcspa_forward.8} parent=5 // pred_region
      %s1576 = ssub.s32 %s13, 2
      // Predicated region
      $region57: #{stcspa_forward.8} parent=55 // pred_check
        %p1577 = pneg %p194
      $region58: #{stcspa_forward.8} parent=55 // pred_check_branch
        %1579 = sbr.rel (%p1577) target = $region60
      $region59: #{stcspa_forward.8} parent=55 // pred_region
        %s1580 = smul.u32 32, %s19
        %p1581 = scmp.lt.s32.totalorder %s1580, 63
        %s1582 = scalar_select %p1581, %s1580, 63
        %s1583 = smul.addr %s1582, 8
        %s1584 = scalar_lea.vmem %s7, %s1583
      $region60: #{stcspa_forward.8} parent=55 // pred_fallthru
        _
    $region56: #{stcspa_forward.8} parent=5 // pred_fallthru
      _
  $region6: #{stcspa_forward.8} parent=0 // loop_footer
    %s17 = sadd.s32 1, %s13
  $region7: #{stcspa_forward.8} parent=0 // loop_footer_branch
    %12 = sbr.rel target = $region3
  $region8: #{stcspa_forward.8} parent=0 // loop_exit
    _

// kernel: stcspa_forward.11
$region0: #{stcspa_forward.11}
  #allocation0 [shape = 'u32[]', space=smem, size = 0x4, offset = 0x4, fixed_abs, tag = 'smem constant byte address 0x4 - core index']
  #allocation1 [shape = 'u32[144,128]{1,0:T(1,128)}', space=vmem, size = 0x12000, scoped, tag = 'internal scratch']
  %s0 = inlined_call_operand.vmem [shape: f32[512,32], index: 0, kind: input, shape index: {}]
  %s1 = inlined_call_operand.vmem [shape: f32[512,32], index: 1, kind: input, shape index: {}]
  %s2 = inlined_call_operand.vmem [shape: bf16[32,64], index: 2, kind: input, shape index: {}]
  %s3 = inlined_call_operand.vmem [shape: bf16[32,64], index: 3, kind: input, shape index: {}]
  %s4 = inlined_call_operand.vmem [shape: f32[1,64], index: 4, kind: input, shape index: {}]
  %s5 = inlined_call_operand.hbm [shape: f32[512,64], index: 5, kind: output, shape index: {}]
  %s6 = sld [smem:[#allocation0]]
  $region53: #{stcspa_forward.11} parent=0
    _
  %s8 = ssub.s32 1, %s6
  %s9 = scalar_select 0, %s8, %s6
  $region1: #{stcspa_forward.11} parent=0
    #allocation2 [shape = 'u8[262144]{0}', space=vmem, size = 0x40000, scoped, tag = 'output window, operand 0']
    #allocation3 [shape = 's32[2]{0}', space=sflag, size = 0x8, scoped, tag = 'scoped memory for stcspa_forward.11']
    %10 = vsyncpa [#allocation3], 0
    %s11 = scalar_lea.sflag [#allocation3], 1
    %12 = vsyncpa %s11, 0
    loop: start=0, step=1, limit=4
    $region2: #{stcspa_forward.11} parent=1 // loop_pre_header
      _
    $region3: #{stcspa_forward.11} parent=1 // loop_header
      %s14 = sphi 0, %s18
      %p15 = scmp.ge.s32.totalorder %s14, 4
      %s24 = sphi 0, %s26
      %s27 = sphi 0, %s24
      %s28 = sphi 0, %s27
      %s44 = sphi 0, %s28
      %s50 = sphi 0, %s52
      %s53 = sphi 0, %s50
      %s54 = sphi 0, %s53
      %s70 = sphi 0, %s54
      %s74 = sphi 0, %s74
      %s76 = sphi 0, %s74
      %s77 = sphi 0, %s76
      %s91 = sphi 0, %s77
      %s95 = sphi 0, %s95
      %s97 = sphi 0, %s95
      %s98 = sphi 0, %s97
      %s112 = sphi 0, %s98
      %s116 = sphi 0, %s116
      %s118 = sphi 0, %s116
      %s119 = sphi 0, %s118
      %s133 = sphi 0, %s119
      %s139 = sphi 0, %s141
      %s142 = sphi 0, %s139
      %s143 = sphi 0, %s142
      %s159 = sphi 0, %s143
    $region4: #{stcspa_forward.11} parent=1 // loop_header_branch
      %17 = sbr.rel (%p15) target = $region8
    $region5: #{stcspa_forward.11} parent=1 // loop_body
      %s19 = ssub.s32 %s14, 1
      %s20 = ssub.s32 %s14, 2
      %s21 = sadd.s32 %s14, 1
      %s22 = ssub.s32 %s14, %s21
      %p23 = scmp.eq.s32.totalorder %s22, 0
      %s25 = sadd.s32 %s24, 1
      %s26 = scalar_select %p23, %s24, %s25
      %p29 = pneg %p23
      %p30 = scmp.eq.s32.totalorder %s14, 1
      %p31 = por %p29, %p30
      %p32 = scmp.ne.s32.totalorder %s24, %s27
      %p33 = scmp.eq.s32.totalorder %s14, 0
      %p34 = por %p32, %p33
      %p35 = scmp.ne.s32.totalorder %s24, %s27
      %p36 = scmp.eq.s32.totalorder %s19, 1
      %p37 = por %p35, %p36
      %p38 = scmp.ne.s32.totalorder %s27, %s28
      %p39 = scmp.eq.s32.totalorder %s19, 0
      %p40 = por %p38, %p39
      %p41 = scmp.ne.s32.totalorder %s27, %s28
      %p42 = scmp.eq.s32.totalorder %s20, 1
      %p43 = por %p41, %p42
      %p45 = scmp.ne.s32.totalorder %s28, %s44
      %p46 = scmp.eq.s32.totalorder %s20, 0
      %p47 = por %p45, %p46
      %s48 = ssub.s32 %s14, %s21
      %p49 = scmp.eq.s32.totalorder %s48, 0
      %s51 = sadd.s32 %s50, 1
      %s52 = scalar_select %p49, %s50, %s51
      %p55 = pneg %p49
      %p56 = scmp.eq.s32.totalorder %s14, 1
      %p57 = por %p55, %p56
      %p58 = scmp.ne.s32.totalorder %s50, %s53
      %p59 = scmp.eq.s32.totalorder %s14, 0
      %p60 = por %p58, %p59
      %p61 = scmp.ne.s32.totalorder %s50, %s53
      %p62 = scmp.eq.s32.totalorder %s19, 1
      %p63 = por %p61, %p62
      %p64 = scmp.ne.s32.totalorder %s53, %s54
      %p65 = scmp.eq.s32.totalorder %s19, 0
      %p66 = por %p64, %p65
      %p67 = scmp.ne.s32.totalorder %s53, %s54
      %p68 = scmp.eq.s32.totalorder %s20, 1
      %p69 = por %p67, %p68
      %p71 = scmp.ne.s32.totalorder %s54, %s70
      %p72 = scmp.eq.s32.totalorder %s20, 0
      %p73 = por %p71, %p72
      %s75 = sadd.s32 %s74, 1
      %p78 = scmp.eq.s32.totalorder %s14, 1
      %p79 = scmp.ne.s32.totalorder %s74, %s76
      %p80 = scmp.eq.s32.totalorder %s14, 0
      %p81 = por %p79, %p80
      %p82 = scmp.ne.s32.totalorder %s74, %s76
      %p83 = scmp.eq.s32.totalorder %s19, 1
      %p84 = por %p82, %p83
      %p85 = scmp.ne.s32.totalorder %s76, %s77
      %p86 = scmp.eq.s32.totalorder %s19, 0
      %p87 = por %p85, %p86
      %p88 = scmp.ne.s32.totalorder %s76, %s77
      %p89 = scmp.eq.s32.totalorder %s20, 1
      %p90 = por %p88, %p89
      %p92 = scmp.ne.s32.totalorder %s77, %s91
      %p93 = scmp.eq.s32.totalorder %s20, 0
      %p94 = por %p92, %p93
      %s96 = sadd.s32 %s95, 1
      %p99 = scmp.eq.s32.totalorder %s14, 1
      %p100 = scmp.ne.s32.totalorder %s95, %s97
      %p101 = scmp.eq.s32.totalorder %s14, 0
      %p102 = por %p100, %p101
      %p103 = scmp.ne.s32.totalorder %s95, %s97
      %p104 = scmp.eq.s32.totalorder %s19, 1
      %p105 = por %p103, %p104
      %p106 = scmp.ne.s32.totalorder %s97, %s98
      %p107 = scmp.eq.s32.totalorder %s19, 0
      %p108 = por %p106, %p107
      %p109 = scmp.ne.s32.totalorder %s97, %s98
      %p110 = scmp.eq.s32.totalorder %s20, 1
      %p111 = por %p109, %p110
      %p113 = scmp.ne.s32.totalorder %s98, %s112
      %p114 = scmp.eq.s32.totalorder %s20, 0
      %p115 = por %p113, %p114
      %s117 = sadd.s32 %s116, 1
      %p120 = scmp.eq.s32.totalorder %s14, 1
      %p121 = scmp.ne.s32.totalorder %s116, %s118
      %p122 = scmp.eq.s32.totalorder %s14, 0
      %p123 = por %p121, %p122
      %p124 = scmp.ne.s32.totalorder %s116, %s118
      %p125 = scmp.eq.s32.totalorder %s19, 1
      %p126 = por %p124, %p125
      %p127 = scmp.ne.s32.totalorder %s118, %s119
      %p128 = scmp.eq.s32.totalorder %s19, 0
      %p129 = por %p127, %p128
      %p130 = scmp.ne.s32.totalorder %s118, %s119
      %p131 = scmp.eq.s32.totalorder %s20, 1
      %p132 = por %p130, %p131
      %p134 = scmp.ne.s32.totalorder %s119, %s133
      %p135 = scmp.eq.s32.totalorder %s20, 0
      %p136 = por %p134, %p135
      %s137 = ssub.s32 %s14, %s21
      %p138 = scmp.eq.s32.totalorder %s137, 0
      %s140 = sadd.s32 %s139, 1
      %s141 = scalar_select %p138, %s139, %s140
      %p144 = pneg %p138
      %p145 = scmp.eq.s32.totalorder %s14, 1
      %p146 = por %p144, %p145
      %p147 = scmp.ne.s32.totalorder %s139, %s142
      %p148 = scmp.eq.s32.totalorder %s14, 0
      %p149 = por %p147, %p148
      %p150 = scmp.ne.s32.totalorder %s139, %s142
      %p151 = scmp.eq.s32.totalorder %s19, 1
      %p152 = por %p150, %p151
      %p153 = scmp.ne.s32.totalorder %s142, %s143
      %p154 = scmp.eq.s32.totalorder %s19, 0
      %p155 = por %p153, %p154
      %p156 = scmp.ne.s32.totalorder %s142, %s143
      %p157 = scmp.eq.s32.totalorder %s20, 1
      %p158 = por %p156, %p157
      %p160 = scmp.ne.s32.totalorder %s143, %s159
      %p161 = scmp.eq.s32.totalorder %s20, 0
      %p162 = por %p160, %p161
      %p163 = scmp.le.s32.totalorder 1, %s14
      %p164 = scmp.lt.s32.totalorder %s14, 3
      %p165 = pnand %p163, %p164
      %p166 = pneg %p165
      // Predicated region
      $region9: #{stcspa_forward.11} parent=5 // pred_check
        _
      $region10: #{stcspa_forward.11} parent=5 // pred_check_branch
        %168 = sbr.rel (%p165) target = $region12
      $region11: #{stcspa_forward.11} parent=5 // pred_region
        %s169 = ssub.s32 %s14, 1
        // Predicated region
        $region13: #{stcspa_forward.11} parent=11 // pred_check
          %p170 = pneg %p87
        $region14: #{stcspa_forward.11} parent=11 // pred_check_branch
          %172 = sbr.rel (%p170) target = $region16
        $region15: #{stcspa_forward.11} parent=11 // pred_region
          _
        $region16: #{stcspa_forward.11} parent=11 // pred_fallthru
          _
        // Predicated region
        $region17: #{stcspa_forward.11} parent=11 // pred_check
          %p173 = pneg %p108
        $region18: #{stcspa_forward.11} parent=11 // pred_check_branch
          %175 = sbr.rel (%p173) target = $region20
        $region19: #{stcspa_forward.11} parent=11 // pred_region
          _
        $region20: #{stcspa_forward.11} parent=11 // pred_fallthru
          _
        // Predicated region
        $region21: #{stcspa_forward.11} parent=11 // pred_check
          %p176 = pneg %p129
        $region22: #{stcspa_forward.11} parent=11 // pred_check_branch
          %178 = sbr.rel (%p176) target = $region24
        $region23: #{stcspa_forward.11} parent=11 // pred_region
          _
        $region24: #{stcspa_forward.11} parent=11 // pred_fallthru
          _
      $region12: #{stcspa_forward.11} parent=5 // pred_fallthru
        _
      %p179 = scmp.lt.s32.totalorder %s14, 2
      // Predicated region
      $region25: #{stcspa_forward.11} parent=5 // pred_check
        %p180 = pneg %p179
      $region26: #{stcspa_forward.11} parent=5 // pred_check_branch
        %182 = sbr.rel (%p180) target = $region28
      $region27: #{stcspa_forward.11} parent=5 // pred_region
        // Predicated region
        $region29: #{stcspa_forward.11} parent=27 // pred_check
          %p183 = pneg %p34
        $region30: #{stcspa_forward.11} parent=27 // pred_check_branch
          %185 = sbr.rel (%p183) target = $region32
        $region31: #{stcspa_forward.11} parent=27 // pred_region
          %s186 = smul.u32 32, %s14
          %p187 = scmp.lt.s32.totalorder %s186, 63
          %s188 = scalar_select %p187, %s186, 63
          %s189 = smul.addr %s188, 8
          %s190 = scalar_lea.vmem %s0, %s189
          %s191 = smul.u32 32, %s14
        $region32: #{stcspa_forward.11} parent=27 // pred_fallthru
          _
        // Predicated region
        $region33: #{stcspa_forward.11} parent=27 // pred_check
          %p192 = pneg %p60
        $region34: #{stcspa_forward.11} parent=27 // pred_check_branch
          %194 = sbr.rel (%p192) target = $region36
        $region35: #{stcspa_forward.11} parent=27 // pred_region
          %s195 = smul.u32 32, %s14
          %p196 = scmp.lt.s32.totalorder %s195, 63
          %s197 = scalar_select %p196, %s195, 63
          %s198 = smul.addr %s197, 8
          %s199 = scalar_lea.vmem %s1, %s198
          %s200 = smul.u32 32, %s14
        $region36: #{stcspa_forward.11} parent=27 // pred_fallthru
          _
      $region28: #{stcspa_forward.11} parent=5 // pred_fallthru
        _
      %p201 = scmp.le.s32.totalorder 1, %s14
      %p202 = scmp.lt.s32.totalorder %s14, 3
      %p203 = pnand %p201, %p202
      %p204 = pneg %p203
      // Predicated region
      $region37: #{stcspa_forward.11} parent=5 // pred_check
        _
      $region38: #{stcspa_forward.11} parent=5 // pred_check_branch
        %206 = sbr.rel (%p203) target = $region40
      $region39: #{stcspa_forward.11} parent=5 // pred_region
        %s207 = ssub.s32 %s14, 1
        %s208 = smul.u32 32, %s19
        %p209 = scmp.lt.s32.totalorder %s208, 63
        %s210 = scalar_select %p209, %s208, 63
        %s211 = smul.addr %s210, 8
        %s212 = scalar_lea.vmem %s0, %s211
        %p213 = pneg %p40
        %p214 = pneg %p37
        %s215 = smul.u32 32, %s19
        %p216 = scmp.lt.s32.totalorder %s215, 63
        %s217 = scalar_select %p216, %s215, 63
        %s218 = smul.addr %s217, 8
        %s219 = scalar_lea.vmem %s1, %s218
        %p220 = pneg %p66
        %p221 = pneg %p63
        %p222 = pneg %p87
        %p223 = pneg %p84
        %p224 = pneg %p108
        %p225 = pneg %p105
        %p226 = pneg %p129
        %p227 = pneg %p126
        %p228 = pneg %p155
        %p229 = pneg %p152
        %s230 = sand.u32 %s142, 1
        %s231 = scalar_lea.sflag [#allocation3], %s230
        %s232 = sand.u32 %s142, 1
        %s233 = smul.addr %s232, 256
        %s234 = scalar_lea.vmem [#allocation2], %s233
        %s235 = smul.u32 32, %s19
        %p236 = scmp.lt.s32.totalorder %s235, 63
        %s237 = scalar_select %p236, %s235, 63
        %s238 = smul.addr %s237, 8
        %s239 = scalar_lea.vmem %s0, %s238
        %s240 = smul.u32 32, %s19
        %s241 = smul.u32 32, %s19
        %p242 = scmp.lt.s32.totalorder %s241, 63
        %s243 = scalar_select %p242, %s241, 63
        %s244 = smul.addr %s243, 8
        %s245 = scalar_lea.vmem %s1, %s244
        %s246 = smul.u32 32, %s19
        %s247 = smul.u32 32, %s19
        %v249 = vld [vmem:[%s239] sm:$0xff]
        %v250 = vld [vmem:[%s239 + $0x8] sm:$0xff]
        %v251 = vld [vmem:[%s239 + $0x10] sm:$0xff]
        %v252 = vld [vmem:[%s239 + $0x18] sm:$0xff]
        %v253 = vld [vmem:[%s239 + $0x20] sm:$0xff]
        %v254 = vld [vmem:[%s239 + $0x28] sm:$0xff]
        %v255 = vld [vmem:[%s239 + $0x30] sm:$0xff]
        %v256 = vld [vmem:[%s239 + $0x38] sm:$0xff]
        %v257 = vld [vmem:[%s239 + $0x40] sm:$0xff]
        %v258 = vld [vmem:[%s239 + $0x48] sm:$0xff]
        %v259 = vld [vmem:[%s239 + $0x50] sm:$0xff]
        %v260 = vld [vmem:[%s239 + $0x58] sm:$0xff]
        %v261 = vld [vmem:[%s239 + $0x60] sm:$0xff]
        %v262 = vld [vmem:[%s239 + $0x68] sm:$0xff]
        %v263 = vld [vmem:[%s239 + $0x70] sm:$0xff]
        %v264 = vld [vmem:[%s239 + $0x78] sm:$0xff]
        %v265 = vld [vmem:[%s239 + $0x80] sm:$0xff]
        %v266 = vld [vmem:[%s239 + $0x88] sm:$0xff]
        %v267 = vld [vmem:[%s239 + $0x90] sm:$0xff]
        %v268 = vld [vmem:[%s239 + $0x98] sm:$0xff]
        %v269 = vld [vmem:[%s239 + $0xa0] sm:$0xff]
        %v270 = vld [vmem:[%s239 + $0xa8] sm:$0xff]
        %v271 = vld [vmem:[%s239 + $0xb0] sm:$0xff]
        %v272 = vld [vmem:[%s239 + $0xb8] sm:$0xff]
        %v273 = vld [vmem:[%s239 + $0xc0] sm:$0xff]
        %v274 = vld [vmem:[%s239 + $0xc8] sm:$0xff]
        %v275 = vld [vmem:[%s239 + $0xd0] sm:$0xff]
        %v276 = vld [vmem:[%s239 + $0xd8] sm:$0xff]
        %v277 = vld [vmem:[%s239 + $0xe0] sm:$0xff]
        %v278 = vld [vmem:[%s239 + $0xe8] sm:$0xff]
        %v279 = vld [vmem:[%s239 + $0xf0] sm:$0xff]
        %v280 = vld [vmem:[%s239 + $0xf8] sm:$0xff]
        %v281 = vpack.c.bf16 %v250, %v249
        %v282 = vpack.c.bf16 %v252, %v251
        %v283 = vpack.c.bf16 %v254, %v253
        %v284 = vpack.c.bf16 %v256, %v255
        %v285 = vpack.c.bf16 %v258, %v257
        %v286 = vpack.c.bf16 %v260, %v259
        %v287 = vpack.c.bf16 %v262, %v261
        %v288 = vpack.c.bf16 %v264, %v263
        %v289 = vpack.c.bf16 %v266, %v265
        %v290 = vpack.c.bf16 %v268, %v267
        %v291 = vpack.c.bf16 %v270, %v269
        %v292 = vpack.c.bf16 %v272, %v271
        %v293 = vpack.c.bf16 %v274, %v273
        %v294 = vpack.c.bf16 %v276, %v275
        %v295 = vpack.c.bf16 %v278, %v277
        %v296 = vpack.c.bf16 %v280, %v279
        %v297 = vld [vmem:[%s2] sm:$0xf]
        %v298 = vld [vmem:[%s2 + $0x4] sm:$0xf]
        %v299 = vld [vmem:[%s2 + $0x8] sm:$0xf]
        %v300 = vld [vmem:[%s2 + $0xc] sm:$0xf]
        %v301 = vld [vmem:[%s245] sm:$0xff]
        %v302 = vld [vmem:[%s245 + $0x8] sm:$0xff]
        %v303 = vld [vmem:[%s245 + $0x10] sm:$0xff]
        %v304 = vld [vmem:[%s245 + $0x18] sm:$0xff]
        %v305 = vld [vmem:[%s245 + $0x20] sm:$0xff]
        %v306 = vld [vmem:[%s245 + $0x28] sm:$0xff]
        %v307 = vld [vmem:[%s245 + $0x30] sm:$0xff]
        %v308 = vld [vmem:[%s245 + $0x38] sm:$0xff]
        %v309 = vld [vmem:[%s245 + $0x40] sm:$0xff]
        %v310 = vld [vmem:[%s245 + $0x48] sm:$0xff]
        %v311 = vld [vmem:[%s245 + $0x50] sm:$0xff]
        %v312 = vld [vmem:[%s245 + $0x58] sm:$0xff]
        %v313 = vld [vmem:[%s245 + $0x60] sm:$0xff]
        %v314 = vld [vmem:[%s245 + $0x68] sm:$0xff]
        %v315 = vld [vmem:[%s245 + $0x70] sm:$0xff]
        %v316 = vld [vmem:[%s245 + $0x78] sm:$0xff]
        %v317 = vld [vmem:[%s245 + $0x80] sm:$0xff]
        %v318 = vld [vmem:[%s245 + $0x88] sm:$0xff]
        %v319 = vld [vmem:[%s245 + $0x90] sm:$0xff]
        %v320 = vld [vmem:[%s245 + $0x98] sm:$0xff]
        %v321 = vld [vmem:[%s245 + $0xa0] sm:$0xff]
        %v322 = vld [vmem:[%s245 + $0xa8] sm:$0xff]
        %v323 = vld [vmem:[%s245 + $0xb0] sm:$0xff]
        %v324 = vld [vmem:[%s245 + $0xb8] sm:$0xff]
        %v325 = vld [vmem:[%s245 + $0xc0] sm:$0xff]
        %v326 = vld [vmem:[%s245 + $0xc8] sm:$0xff]
        %v327 = vld [vmem:[%s245 + $0xd0] sm:$0xff]
        %v328 = vld [vmem:[%s245 + $0xd8] sm:$0xff]
        %v329 = vld [vmem:[%s245 + $0xe0] sm:$0xff]
        %v330 = vld [vmem:[%s245 + $0xe8] sm:$0xff]
        %v331 = vld [vmem:[%s245 + $0xf0] sm:$0xff]
        %v332 = vld [vmem:[%s245 + $0xf8] sm:$0xff]
        %v333 = vpack.c.bf16 %v302, %v301
        %v334 = vpack.c.bf16 %v304, %v303
        %v335 = vpack.c.bf16 %v306, %v305
        %v336 = vpack.c.bf16 %v308, %v307
        %v337 = vpack.c.bf16 %v310, %v309
        %v338 = vpack.c.bf16 %v312, %v311
        %v339 = vpack.c.bf16 %v314, %v313
        %v340 = vpack.c.bf16 %v316, %v315
        %v341 = vpack.c.bf16 %v318, %v317
        %v342 = vpack.c.bf16 %v320, %v319
        %v343 = vpack.c.bf16 %v322, %v321
        %v344 = vpack.c.bf16 %v324, %v323
        %v345 = vpack.c.bf16 %v326, %v325
        %v346 = vpack.c.bf16 %v328, %v327
        %v347 = vpack.c.bf16 %v330, %v329
        %v348 = vpack.c.bf16 %v332, %v331
        %v349 = vld [vmem:[%s3] sm:$0xf]
        %v350 = vld [vmem:[%s3 + $0x4] sm:$0xf]
        %v351 = vld [vmem:[%s3 + $0x8] sm:$0xf]
        %v352 = vld [vmem:[%s3 + $0xc] sm:$0xf]
        %v357 = vunpack.c.l.b16 %v349
        %v358 = vunpack.c.l.b16 %v350
        %v359 = vunpack.c.l.b16 %v351
        %v360 = vunpack.c.l.b16 %v352
        %v361 = vpack.c.b16 %v358, %v357
        %v362 = vpack.c.b16 %v360, %v359
        %vm365 = vcmask 261120
        %v367 = vsel %vm365, %v333, 0
        %v370 = vsel %vm365, %v334, 0
        %v373 = vsel %vm365, %v335, 0
        %v376 = vsel %vm365, %v336, 0
        %v379 = vsel %vm365, %v337, 0
        %v382 = vsel %vm365, %v338, 0
        %v385 = vsel %vm365, %v339, 0
        %v388 = vsel %vm365, %v340, 0
        %v391 = vsel %vm365, %v341, 0
        %v394 = vsel %vm365, %v342, 0
        %v397 = vsel %vm365, %v343, 0
        %v400 = vsel %vm365, %v344, 0
        %v403 = vsel %vm365, %v345, 0
        %v406 = vsel %vm365, %v346, 0
        %v409 = vsel %vm365, %v347, 0
        %v412 = vsel %vm365, %v348, 0
        %414 = vmatprep.subr.bf16.mxu0 0
        %415 = vmatpush1.bf16.msra.mxu0 %v361
        %416 = vmatprep.subr.bf16.mxu0 0
        %417 = vmatpush1.bf16.msra.mxu0 %v362
        %418 = vmatprep.subr.bf16.mxu0 0
        %419 = vmatpush1.bf16.msra.mxu0 0
        %420 = vmatprep.subr.bf16.mxu0 0
        %421 = vmatpush1.bf16.msra.mxu0 0
        %422 = vmatprep.subr.bf16.mxu0 0
        %423 = vmatpush1.bf16.msra.mxu0 0
        %424 = vmatprep.subr.bf16.mxu0 0
        %425 = vmatpush1.bf16.msra.mxu0 0
        %426 = vmatprep.subr.bf16.mxu0 0
        %427 = vmatpush1.bf16.msra.mxu0 0
        %428 = vmatprep.subr.bf16.mxu0 0
        %429 = vmatpush1.bf16.msra.mxu0 0
        %430 = vmatprep.subr.bf16.mxu0 0
        %431 = vmatpush1.bf16.msra.mxu0 0
        %432 = vmatprep.subr.bf16.mxu0 0
        %433 = vmatpush1.bf16.msra.mxu0 0
        %434 = vmatprep.subr.bf16.mxu0 0
        %435 = vmatpush1.bf16.msra.mxu0 0
        %436 = vmatprep.subr.bf16.mxu0 0
        %437 = vmatpush1.bf16.msra.mxu0 0
        %438 = vmatprep.subr.bf16.mxu0 0
        %439 = vmatpush1.bf16.msra.mxu0 0
        %440 = vmatprep.subr.bf16.mxu0 0
        %441 = vmatpush1.bf16.msra.mxu0 0
        %442 = vmatprep.subr.bf16.mxu0 0
        %443 = vmatpush1.bf16.msra.mxu0 0
        %444 = vmatprep.subr.bf16.mxu0 0
        %445 = vmatpush1.bf16.msra.mxu0 0
        %446 = vmatprep.mubr.bf16.mxu0 0
        %447 = vmatmul.mubr.bf16.gmra.mrb[0].mxu0 %v367
        %v448 = vpop.f32.mrb[0].mxu0
        %v449 = vadd.f32 0.0, %v448
        %v450 = vpop.f32.mrb[0].mxu0
        %v451 = vpop.f32.mrb[0].mxu0
        %v452 = vadd.f32 0.0, %v451
        %v453 = vpop.f32.mrb[0].mxu0
        %454 = vmatprep.mubr.bf16.mxu0 0
        %455 = vmatmul.mubr.bf16.gmra.mrb[0].mxu0 %v370
        %v456 = vpop.f32.mrb[0].mxu0
        %v457 = vadd.f32 0.0, %v456
        %v458 = vpop.f32.mrb[0].mxu0
        %v459 = vpop.f32.mrb[0].mxu0
        %v460 = vadd.f32 0.0, %v459
        %v461 = vpop.f32.mrb[0].mxu0
        %462 = vmatprep.mubr.bf16.mxu0 0
        %463 = vmatmul.mubr.bf16.gmra.mrb[0].mxu0 %v373
        %v464 = vpop.f32.mrb[0].mxu0
        %v465 = vadd.f32 0.0, %v464
        %v466 = vpop.f32.mrb[0].mxu0
        %v467 = vpop.f32.mrb[0].mxu0
        %v468 = vadd.f32 0.0, %v467
        %v469 = vpop.f32.mrb[0].mxu0
        %470 = vmatprep.mubr.bf16.mxu0 0
        %471 = vmatmul.mubr.bf16.gmra.mrb[0].mxu0 %v376
        %v472 = vpop.f32.mrb[0].mxu0
        %v473 = vadd.f32 0.0, %v472
        %v474 = vpop.f32.mrb[0].mxu0
        %v475 = vpop.f32.mrb[0].mxu0
        %v476 = vadd.f32 0.0, %v475
        %v477 = vpop.f32.mrb[0].mxu0
        %478 = vmatprep.mubr.bf16.mxu0 0
        %479 = vmatmul.mubr.bf16.gmra.mrb[0].mxu0 %v379
        %v480 = vpop.f32.mrb[0].mxu0
        %v481 = vadd.f32 0.0, %v480
        %v482 = vpop.f32.mrb[0].mxu0
        %v483 = vpop.f32.mrb[0].mxu0
        %v484 = vadd.f32 0.0, %v483
        %v485 = vpop.f32.mrb[0].mxu0
        %486 = vmatprep.mubr.bf16.mxu0 0
        %487 = vmatmul.mubr.bf16.gmra.mrb[0].mxu0 %v382
        %v488 = vpop.f32.mrb[0].mxu0
        %v489 = vadd.f32 0.0, %v488
        %v490 = vpop.f32.mrb[0].mxu0
        %v491 = vpop.f32.mrb[0].mxu0
        %v492 = vadd.f32 0.0, %v491
        %v493 = vpop.f32.mrb[0].mxu0
        %494 = vmatprep.mubr.bf16.mxu0 0
        %495 = vmatmul.mubr.bf16.gmra.mrb[0].mxu0 %v385
        %v496 = vpop.f32.mrb[0].mxu0
        %v497 = vadd.f32 0.0, %v496
        %v498 = vpop.f32.mrb[0].mxu0
        %v499 = vpop.f32.mrb[0].mxu0
        %v500 = vadd.f32 0.0, %v499
        %v501 = vpop.f32.mrb[0].mxu0
        %502 = vmatprep.mubr.bf16.mxu0 0
        %503 = vmatmul.mubr.bf16.gmra.mrb[0].mxu0 %v388
        %v504 = vpop.f32.mrb[0].mxu0
        %v505 = vadd.f32 0.0, %v504
        %v506 = vpop.f32.mrb[0].mxu0
        %v507 = vpop.f32.mrb[0].mxu0
        %v508 = vadd.f32 0.0, %v507
        %v509 = vpop.f32.mrb[0].mxu0
        %510 = vmatprep.mubr.bf16.mxu0 0
        %511 = vmatmul.mubr.bf16.gmra.mrb[0].mxu0 %v391
        %v512 = vpop.f32.mrb[0].mxu0
        %v513 = vadd.f32 0.0, %v512
        %v514 = vpop.f32.mrb[0].mxu0
        %v515 = vpop.f32.mrb[0].mxu0
        %v516 = vadd.f32 0.0, %v515
        %v517 = vpop.f32.mrb[0].mxu0
        %518 = vmatprep.mubr.bf16.mxu0 0
        %519 = vmatmul.mubr.bf16.gmra.mrb[0].mxu0 %v394
        %v520 = vpop.f32.mrb[0].mxu0
        %v521 = vadd.f32 0.0, %v520
        %v522 = vpop.f32.mrb[0].mxu0
        %v523 = vpop.f32.mrb[0].mxu0
        %v524 = vadd.f32 0.0, %v523
        %v525 = vpop.f32.mrb[0].mxu0
        %526 = vmatprep.mubr.bf16.mxu0 0
        %527 = vmatmul.mubr.bf16.gmra.mrb[0].mxu0 %v397
        %v528 = vpop.f32.mrb[0].mxu0
        %v529 = vadd.f32 0.0, %v528
        %v530 = vpop.f32.mrb[0].mxu0
        %v531 = vpop.f32.mrb[0].mxu0
        %v532 = vadd.f32 0.0, %v531
        %v533 = vpop.f32.mrb[0].mxu0
        %534 = vmatprep.mubr.bf16.mxu0 0
        %535 = vmatmul.mubr.bf16.gmra.mrb[0].mxu0 %v400
        %v536 = vpop.f32.mrb[0].mxu0
        %v537 = vadd.f32 0.0, %v536
        %v538 = vpop.f32.mrb[0].mxu0
        %v539 = vpop.f32.mrb[0].mxu0
        %v540 = vadd.f32 0.0, %v539
        %v541 = vpop.f32.mrb[0].mxu0
        %542 = vmatprep.mubr.bf16.mxu0 0
        %543 = vmatmul.mubr.bf16.gmra.mrb[0].mxu0 %v403
        %v544 = vpop.f32.mrb[0].mxu0
        %v545 = vadd.f32 0.0, %v544
        %v546 = vpop.f32.mrb[0].mxu0
        %v547 = vpop.f32.mrb[0].mxu0
        %v548 = vadd.f32 0.0, %v547
        %v549 = vpop.f32.mrb[0].mxu0
        %550 = vmatprep.mubr.bf16.mxu0 0
        %551 = vmatmul.mubr.bf16.gmra.mrb[0].mxu0 %v406
        %v552 = vpop.f32.mrb[0].mxu0
        %v553 = vadd.f32 0.0, %v552
        %v554 = vpop.f32.mrb[0].mxu0
        %v555 = vpop.f32.mrb[0].mxu0
        %v556 = vadd.f32 0.0, %v555
        %v557 = vpop.f32.mrb[0].mxu0
        %558 = vmatprep.mubr.bf16.mxu0 0
        %559 = vmatmul.mubr.bf16.gmra.mrb[0].mxu0 %v409
        %v560 = vpop.f32.mrb[0].mxu0
        %v561 = vadd.f32 0.0, %v560
        %v562 = vpop.f32.mrb[0].mxu0
        %v563 = vpop.f32.mrb[0].mxu0
        %v564 = vadd.f32 0.0, %v563
        %v565 = vpop.f32.mrb[0].mxu0
        %566 = vmatprep.mubr.bf16.mxu0 0
        %567 = vmatmul.mubr.bf16.gmra.mrb[0].mxu0 %v412
        %v568 = vpop.f32.mrb[0].mxu0
        %v569 = vadd.f32 0.0, %v568
        %v570 = vpop.f32.mrb[0].mxu0
        %v571 = vpop.f32.mrb[0].mxu0
        %v572 = vadd.f32 0.0, %v571
        %v573 = vpop.f32.mrb[0].mxu0
        %574 = vdwg.mxu0
        %v579 = vunpack.c.l.b16 %v297
        %v580 = vunpack.c.l.b16 %v298
        %v581 = vunpack.c.l.b16 %v299
        %v582 = vunpack.c.l.b16 %v300
        %v583 = vpack.c.b16 %v580, %v579
        %v584 = vpack.c.b16 %v582, %v581
        %v588 = vsel %vm365, %v281, 0
        %v591 = vsel %vm365, %v282, 0
        %v594 = vsel %vm365, %v283, 0
        %v597 = vsel %vm365, %v284, 0
        %v600 = vsel %vm365, %v285, 0
        %v603 = vsel %vm365, %v286, 0
        %v606 = vsel %vm365, %v287, 0
        %v609 = vsel %vm365, %v288, 0
        %v612 = vsel %vm365, %v289, 0
        %v615 = vsel %vm365, %v290, 0
        %v618 = vsel %vm365, %v291, 0
        %v621 = vsel %vm365, %v292, 0
        %v624 = vsel %vm365, %v293, 0
        %v627 = vsel %vm365, %v294, 0
        %v630 = vsel %vm365, %v295, 0
        %v633 = vsel %vm365, %v296, 0
        %635 = vmatprep.subr.bf16.mxu0 0
        %636 = vmatpush1.bf16.msra.mxu0 %v583
        %637 = vmatprep.subr.bf16.mxu0 0
        %638 = vmatpush1.bf16.msra.mxu0 %v584
        %639 = vmatprep.subr.bf16.mxu0 0
        %640 = vmatpush1.bf16.msra.mxu0 0
        %641 = vmatprep.subr.bf16.mxu0 0
        %642 = vmatpush1.bf16.msra.mxu0 0
        %643 = vmatprep.subr.bf16.mxu0 0
        %644 = vmatpush1.bf16.msra.mxu0 0
        %645 = vmatprep.subr.bf16.mxu0 0
        %646 = vmatpush1.bf16.msra.mxu0 0
        %647 = vmatprep.subr.bf16.mxu0 0
        %648 = vmatpush1.bf16.msra.mxu0 0
        %649 = vmatprep.subr.bf16.mxu0 0
        %650 = vmatpush1.bf16.msra.mxu0 0
        %651 = vmatprep.subr.bf16.mxu0 0
        %652 = vmatpush1.bf16.msra.mxu0 0
        %653 = vmatprep.subr.bf16.mxu0 0
        %654 = vmatpush1.bf16.msra.mxu0 0
        %655 = vmatprep.subr.bf16.mxu0 0
        %656 = vmatpush1.bf16.msra.mxu0 0
        %657 = vmatprep.subr.bf16.mxu0 0
        %658 = vmatpush1.bf16.msra.mxu0 0
        %659 = vmatprep.subr.bf16.mxu0 0
        %660 = vmatpush1.bf16.msra.mxu0 0
        %661 = vmatprep.subr.bf16.mxu0 0
        %662 = vmatpush1.bf16.msra.mxu0 0
        %663 = vmatprep.subr.bf16.mxu0 0
        %664 = vmatpush1.bf16.msra.mxu0 0
        %665 = vmatprep.subr.bf16.mxu0 0
        %666 = vmatpush1.bf16.msra.mxu0 0
        %667 = vmatprep.mubr.bf16.mxu0 0
        %668 = vmatmul.mubr.bf16.gmra.mrb[0].mxu0 %v588
        %v669 = vpop.f32.mrb[0].mxu0
        %v670 = vadd.f32 %v449, %v669
        %v671 = vpop.f32.mrb[0].mxu0
        %v672 = vpop.f32.mrb[0].mxu0
        %v673 = vadd.f32 %v452, %v672
        %v674 = vpop.f32.mrb[0].mxu0
        %675 = vmatprep.mubr.bf16.mxu0 0
        %676 = vmatmul.mubr.bf16.gmra.mrb[0].mxu0 %v591
        %v677 = vpop.f32.mrb[0].mxu0
        %v678 = vadd.f32 %v457, %v677
        %v679 = vpop.f32.mrb[0].mxu0
        %v680 = vpop.f32.mrb[0].mxu0
        %v681 = vadd.f32 %v460, %v680
        %v682 = vpop.f32.mrb[0].mxu0
        %683 = vmatprep.mubr.bf16.mxu0 0
        %684 = vmatmul.mubr.bf16.gmra.mrb[0].mxu0 %v594
        %v685 = vpop.f32.mrb[0].mxu0
        %v686 = vadd.f32 %v465, %v685
        %v687 = vpop.f32.mrb[0].mxu0
        %v688 = vpop.f32.mrb[0].mxu0
        %v689 = vadd.f32 %v468, %v688
        %v690 = vpop.f32.mrb[0].mxu0
        %691 = vmatprep.mubr.bf16.mxu0 0
        %692 = vmatmul.mubr.bf16.gmra.mrb[0].mxu0 %v597
        %v693 = vpop.f32.mrb[0].mxu0
        %v694 = vadd.f32 %v473, %v693
        %v695 = vpop.f32.mrb[0].mxu0
        %v696 = vpop.f32.mrb[0].mxu0
        %v697 = vadd.f32 %v476, %v696
        %v698 = vpop.f32.mrb[0].mxu0
        %699 = vmatprep.mubr.bf16.mxu0 0
        %700 = vmatmul.mubr.bf16.gmra.mrb[0].mxu0 %v600
        %v701 = vpop.f32.mrb[0].mxu0
        %v702 = vadd.f32 %v481, %v701
        %v703 = vpop.f32.mrb[0].mxu0
        %v704 = vpop.f32.mrb[0].mxu0
        %v705 = vadd.f32 %v484, %v704
        %v706 = vpop.f32.mrb[0].mxu0
        %707 = vmatprep.mubr.bf16.mxu0 0
        %708 = vmatmul.mubr.bf16.gmra.mrb[0].mxu0 %v603
        %v709 = vpop.f32.mrb[0].mxu0
        %v710 = vadd.f32 %v489, %v709
        %v711 = vpop.f32.mrb[0].mxu0
        %v712 = vpop.f32.mrb[0].mxu0
        %v713 = vadd.f32 %v492, %v712
        %v714 = vpop.f32.mrb[0].mxu0
        %715 = vmatprep.mubr.bf16.mxu0 0
        %716 = vmatmul.mubr.bf16.gmra.mrb[0].mxu0 %v606
        %v717 = vpop.f32.mrb[0].mxu0
        %v718 = vadd.f32 %v497, %v717
        %v719 = vpop.f32.mrb[0].mxu0
        %v720 = vpop.f32.mrb[0].mxu0
        %v721 = vadd.f32 %v500, %v720
        %v722 = vpop.f32.mrb[0].mxu0
        %723 = vmatprep.mubr.bf16.mxu0 0
        %724 = vmatmul.mubr.bf16.gmra.mrb[0].mxu0 %v609
        %v725 = vpop.f32.mrb[0].mxu0
        %v726 = vadd.f32 %v505, %v725
        %v727 = vpop.f32.mrb[0].mxu0
        %v728 = vpop.f32.mrb[0].mxu0
        %v729 = vadd.f32 %v508, %v728
        %v730 = vpop.f32.mrb[0].mxu0
        %731 = vmatprep.mubr.bf16.mxu0 0
        %732 = vmatmul.mubr.bf16.gmra.mrb[0].mxu0 %v612
        %v733 = vpop.f32.mrb[0].mxu0
        %v734 = vadd.f32 %v513, %v733
        %v735 = vpop.f32.mrb[0].mxu0
        %v736 = vpop.f32.mrb[0].mxu0
        %v737 = vadd.f32 %v516, %v736
        %v738 = vpop.f32.mrb[0].mxu0
        %739 = vmatprep.mubr.bf16.mxu0 0
        %740 = vmatmul.mubr.bf16.gmra.mrb[0].mxu0 %v615
        %v741 = vpop.f32.mrb[0].mxu0
        %v742 = vadd.f32 %v521, %v741
        %v743 = vpop.f32.mrb[0].mxu0
        %v744 = vpop.f32.mrb[0].mxu0
        %v745 = vadd.f32 %v524, %v744
        %v746 = vpop.f32.mrb[0].mxu0
        %747 = vmatprep.mubr.bf16.mxu0 0
        %748 = vmatmul.mubr.bf16.gmra.mrb[0].mxu0 %v618
        %v749 = vpop.f32.mrb[0].mxu0
        %v750 = vadd.f32 %v529, %v749
        %v751 = vpop.f32.mrb[0].mxu0
        %v752 = vpop.f32.mrb[0].mxu0
        %v753 = vadd.f32 %v532, %v752
        %v754 = vpop.f32.mrb[0].mxu0
        %755 = vmatprep.mubr.bf16.mxu0 0
        %756 = vmatmul.mubr.bf16.gmra.mrb[0].mxu0 %v621
        %v757 = vpop.f32.mrb[0].mxu0
        %v758 = vadd.f32 %v537, %v757
        %v759 = vpop.f32.mrb[0].mxu0
        %v760 = vpop.f32.mrb[0].mxu0
        %v761 = vadd.f32 %v540, %v760
        %v762 = vpop.f32.mrb[0].mxu0
        %763 = vmatprep.mubr.bf16.mxu0 0
        %764 = vmatmul.mubr.bf16.gmra.mrb[0].mxu0 %v624
        %v765 = vpop.f32.mrb[0].mxu0
        %v766 = vadd.f32 %v545, %v765
        %v767 = vpop.f32.mrb[0].mxu0
        %v768 = vpop.f32.mrb[0].mxu0
        %v769 = vadd.f32 %v548, %v768
        %v770 = vpop.f32.mrb[0].mxu0
        %771 = vmatprep.mubr.bf16.mxu0 0
        %772 = vmatmul.mubr.bf16.gmra.mrb[0].mxu0 %v627
        %v773 = vpop.f32.mrb[0].mxu0
        %v774 = vadd.f32 %v553, %v773
        %v775 = vpop.f32.mrb[0].mxu0
        %v776 = vpop.f32.mrb[0].mxu0
        %v777 = vadd.f32 %v556, %v776
        %v778 = vpop.f32.mrb[0].mxu0
        %779 = vmatprep.mubr.bf16.mxu0 0
        %780 = vmatmul.mubr.bf16.gmra.mrb[0].mxu0 %v630
        %v781 = vpop.f32.mrb[0].mxu0
        %v782 = vadd.f32 %v561, %v781
        %v783 = vpop.f32.mrb[0].mxu0
        %v784 = vpop.f32.mrb[0].mxu0
        %v785 = vadd.f32 %v564, %v784
        %v786 = vpop.f32.mrb[0].mxu0
        %787 = vmatprep.mubr.bf16.mxu0 0
        %788 = vmatmul.mubr.bf16.gmra.mrb[0].mxu0 %v633
        %v789 = vpop.f32.mrb[0].mxu0
        %v790 = vadd.f32 %v569, %v789
        %v791 = vpop.f32.mrb[0].mxu0
        %v792 = vpop.f32.mrb[0].mxu0
        %v793 = vadd.f32 %v572, %v792
        %v794 = vpop.f32.mrb[0].mxu0
        %795 = vdwg.mxu0
        %v796 = vld [vmem:[%s4] sm:$0x1]
        %v798 = vlaneseq
        %v799 = vshrl.u32 %v798, 7
        %v800 = vsub.s32 0, %v799
        %v801 = vrot.slane %v796, %v800
        %v803 = vadd.f32 %v670, %v801
        %v804 = vadd.f32 %v673, %v801
        %v805 = vadd.f32 %v678, %v801
        %v806 = vadd.f32 %v681, %v801
        %v807 = vadd.f32 %v686, %v801
        %v808 = vadd.f32 %v689, %v801
        %v809 = vadd.f32 %v694, %v801
        %v810 = vadd.f32 %v697, %v801
        %v811 = vadd.f32 %v702, %v801
        %v812 = vadd.f32 %v705, %v801
        %v813 = vadd.f32 %v710, %v801
        %v814 = vadd.f32 %v713, %v801
        %v815 = vadd.f32 %v718, %v801
        %v816 = vadd.f32 %v721, %v801
        %v817 = vadd.f32 %v726, %v801
        %v818 = vadd.f32 %v729, %v801
        %v819 = vadd.f32 %v734, %v801
        %v820 = vadd.f32 %v737, %v801
        %v821 = vadd.f32 %v742, %v801
        %v822 = vadd.f32 %v745, %v801
        %v823 = vadd.f32 %v750, %v801
        %v824 = vadd.f32 %v753, %v801
        %v825 = vadd.f32 %v758, %v801
        %v826 = vadd.f32 %v761, %v801
        %v827 = vadd.f32 %v766, %v801
        %v828 = vadd.f32 %v769, %v801
        %v829 = vadd.f32 %v774, %v801
        %v830 = vadd.f32 %v777, %v801
        %v831 = vadd.f32 %v782, %v801
        %v832 = vadd.f32 %v785, %v801
        %v833 = vadd.f32 %v790, %v801
        %v834 = vadd.f32 %v793, %v801
        %v835 = vsub.f32 0.0, %v803
        %v836 = vsub.f32 0.0, %v804
        %v837 = vsub.f32 0.0, %v805
        %v838 = vsub.f32 0.0, %v806
        %v839 = vsub.f32 0.0, %v807
        %v840 = vsub.f32 0.0, %v808
        %v841 = vsub.f32 0.0, %v809
        %v842 = vsub.f32 0.0, %v810
        %v843 = vsub.f32 0.0, %v811
        %v844 = vsub.f32 0.0, %v812
        %v845 = vsub.f32 0.0, %v813
        %v846 = vsub.f32 0.0, %v814
        %v847 = vsub.f32 0.0, %v815
        %v848 = vsub.f32 0.0, %v816
        %v849 = vsub.f32 0.0, %v817
        %v850 = vsub.f32 0.0, %v818
        %v851 = vsub.f32 0.0, %v819
        %v852 = vsub.f32 0.0, %v820
        %v853 = vsub.f32 0.0, %v821
        %v854 = vsub.f32 0.0, %v822
        %v855 = vsub.f32 0.0, %v823
        %v856 = vsub.f32 0.0, %v824
        %v857 = vsub.f32 0.0, %v825
        %v858 = vsub.f32 0.0, %v826
        %v859 = vsub.f32 0.0, %v827
        %v860 = vsub.f32 0.0, %v828
        %v861 = vsub.f32 0.0, %v829
        %v862 = vsub.f32 0.0, %v830
        %v863 = vsub.f32 0.0, %v831
        %v864 = vsub.f32 0.0, %v832
        %v865 = vsub.f32 0.0, %v833
        %v866 = vsub.f32 0.0, %v834
        %v867 = vmul.f32 %v835, 1.442695
        %v868 = vpow.pop %v867
        %v869 = vmul.f32 %v836, 1.442695
        %v870 = vpow.pop %v869
        %v871 = vmul.f32 %v837, 1.442695
        %v872 = vpow.pop %v871
        %v873 = vmul.f32 %v838, 1.442695
        %v874 = vpow.pop %v873
        %v875 = vmul.f32 %v839, 1.442695
        %v876 = vpow.pop %v875
        %v877 = vmul.f32 %v840, 1.442695
        %v878 = vpow.pop %v877
        %v879 = vmul.f32 %v841, 1.442695
        %v880 = vpow.pop %v879
        %v881 = vmul.f32 %v842, 1.442695
        %v882 = vpow.pop %v881
        %v883 = vmul.f32 %v843, 1.442695
        %v884 = vpow.pop %v883
        %v885 = vmul.f32 %v844, 1.442695
        %v886 = vpow.pop %v885
        %v887 = vmul.f32 %v845, 1.442695
        %v888 = vpow.pop %v887
        %v889 = vmul.f32 %v846, 1.442695
        %v890 = vpow.pop %v889
        %v891 = vmul.f32 %v847, 1.442695
        %v892 = vpow.pop %v891
        %v893 = vmul.f32 %v848, 1.442695
        %v894 = vpow.pop %v893
        %v895 = vmul.f32 %v849, 1.442695
        %v896 = vpow.pop %v895
        %v897 = vmul.f32 %v850, 1.442695
        %v898 = vpow.pop %v897
        %v899 = vmul.f32 %v851, 1.442695
        %v900 = vpow.pop %v899
        %v901 = vmul.f32 %v852, 1.442695
        %v902 = vpow.pop %v901
        %v903 = vmul.f32 %v853, 1.442695
        %v904 = vpow.pop %v903
        %v905 = vmul.f32 %v854, 1.442695
        %v906 = vpow.pop %v905
        %v907 = vmul.f32 %v855, 1.442695
        %v908 = vpow.pop %v907
        %v909 = vmul.f32 %v856, 1.442695
        %v910 = vpow.pop %v909
        %v911 = vmul.f32 %v857, 1.442695
        %v912 = vpow.pop %v911
        %v913 = vmul.f32 %v858, 1.442695
        %v914 = vpow.pop %v913
        %v915 = vmul.f32 %v859, 1.442695
        %v916 = vpow.pop %v915
        %v917 = vmul.f32 %v860, 1.442695
        %v918 = vpow.pop %v917
        %v919 = vmul.f32 %v861, 1.442695
        %v920 = vpow.pop %v919
        %v921 = vmul.f32 %v862, 1.442695
        %v922 = vpow.pop %v921
        %v923 = vmul.f32 %v863, 1.442695
        %v924 = vpow.pop %v923
        %v925 = vmul.f32 %v864, 1.442695
        %v926 = vpow.pop %v925
        %v927 = vmul.f32 %v865, 1.442695
        %v928 = vpow.pop %v927
        %v929 = vmul.f32 %v866, 1.442695
        %v930 = vpow.pop %v929
        %v931 = vadd.f32 %v868, 1.0
        %v932 = vadd.f32 %v870, 1.0
        %v933 = vadd.f32 %v872, 1.0
        %v934 = vadd.f32 %v874, 1.0
        %v935 = vadd.f32 %v876, 1.0
        %v936 = vadd.f32 %v878, 1.0
        %v937 = vadd.f32 %v880, 1.0
        %v938 = vadd.f32 %v882, 1.0
        %v939 = vadd.f32 %v884, 1.0
        %v940 = vadd.f32 %v886, 1.0
        %v941 = vadd.f32 %v888, 1.0
        %v942 = vadd.f32 %v890, 1.0
        %v943 = vadd.f32 %v892, 1.0
        %v944 = vadd.f32 %v894, 1.0
        %v945 = vadd.f32 %v896, 1.0
        %v946 = vadd.f32 %v898, 1.0
        %v947 = vadd.f32 %v900, 1.0
        %v948 = vadd.f32 %v902, 1.0
        %v949 = vadd.f32 %v904, 1.0
        %v950 = vadd.f32 %v906, 1.0
        %v951 = vadd.f32 %v908, 1.0
        %v952 = vadd.f32 %v910, 1.0
        %v953 = vadd.f32 %v912, 1.0
        %v954 = vadd.f32 %v914, 1.0
        %v955 = vadd.f32 %v916, 1.0
        %v956 = vadd.f32 %v918, 1.0
        %v957 = vadd.f32 %v920, 1.0
        %v958 = vadd.f32 %v922, 1.0
        %v959 = vadd.f32 %v924, 1.0
        %v960 = vadd.f32 %v926, 1.0
        %v961 = vadd.f32 %v928, 1.0
        %v962 = vadd.f32 %v930, 1.0
        %v963 = vrcp.pop %v931
        %v964 = vrcp.pop %v932
        %v965 = vrcp.pop %v933
        %v966 = vrcp.pop %v934
        %v967 = vrcp.pop %v935
        %v968 = vrcp.pop %v936
        %v969 = vrcp.pop %v937
        %v970 = vrcp.pop %v938
        %v971 = vrcp.pop %v939
        %v972 = vrcp.pop %v940
        %v973 = vrcp.pop %v941
        %v974 = vrcp.pop %v942
        %v975 = vrcp.pop %v943
        %v976 = vrcp.pop %v944
        %v977 = vrcp.pop %v945
        %v978 = vrcp.pop %v946
        %v979 = vrcp.pop %v947
        %v980 = vrcp.pop %v948
        %v981 = vrcp.pop %v949
        %v982 = vrcp.pop %v950
        %v983 = vrcp.pop %v951
        %v984 = vrcp.pop %v952
        %v985 = vrcp.pop %v953
        %v986 = vrcp.pop %v954
        %v987 = vrcp.pop %v955
        %v988 = vrcp.pop %v956
        %v989 = vrcp.pop %v957
        %v990 = vrcp.pop %v958
        %v991 = vrcp.pop %v959
        %v992 = vrcp.pop %v960
        %v993 = vrcp.pop %v961
        %v994 = vrcp.pop %v962
        %v995 = vmul.f32 %v803, %v963
        %v996 = vmul.f32 %v804, %v964
        %v997 = vmul.f32 %v805, %v965
        %v998 = vmul.f32 %v806, %v966
        %v999 = vmul.f32 %v807, %v967
        %v1000 = vmul.f32 %v808, %v968
        %v1001 = vmul.f32 %v809, %v969
        %v1002 = vmul.f32 %v810, %v970
        %v1003 = vmul.f32 %v811, %v971
        %v1004 = vmul.f32 %v812, %v972
        %v1005 = vmul.f32 %v813, %v973
        %v1006 = vmul.f32 %v814, %v974
        %v1007 = vmul.f32 %v815, %v975
        %v1008 = vmul.f32 %v816, %v976
        %v1009 = vmul.f32 %v817, %v977
        %v1010 = vmul.f32 %v818, %v978
        %v1011 = vmul.f32 %v819, %v979
        %v1012 = vmul.f32 %v820, %v980
        %v1013 = vmul.f32 %v821, %v981
        %v1014 = vmul.f32 %v822, %v982
        %v1015 = vmul.f32 %v823, %v983
        %v1016 = vmul.f32 %v824, %v984
        %v1017 = vmul.f32 %v825, %v985
        %v1018 = vmul.f32 %v826, %v986
        %v1019 = vmul.f32 %v827, %v987
        %v1020 = vmul.f32 %v828, %v988
        %v1021 = vmul.f32 %v829, %v989
        %v1022 = vmul.f32 %v830, %v990
        %v1023 = vmul.f32 %v831, %v991
        %v1024 = vmul.f32 %v832, %v992
        %v1025 = vmul.f32 %v833, %v993
        %v1026 = vmul.f32 %v834, %v994
        %vm1027 = vcmask 523264
        %1028 = vst.msk [vmem:[%s234] sm:$0xff] %vm1027, %v995
        %1029 = vst.msk [vmem:[%s234 + $0x8] sm:$0xff] %vm1027, %v996
        %1030 = vst.msk [vmem:[%s234 + $0x10] sm:$0xff] %vm1027, %v997
        %1031 = vst.msk [vmem:[%s234 + $0x18] sm:$0xff] %vm1027, %v998
        %1032 = vst.msk [vmem:[%s234 + $0x20] sm:$0xff] %vm1027, %v999
        %1033 = vst.msk [vmem:[%s234 + $0x28] sm:$0xff] %vm1027, %v1000
        %1034 = vst.msk [vmem:[%s234 + $0x30] sm:$0xff] %vm1027, %v1001
        %1035 = vst.msk [vmem:[%s234 + $0x38] sm:$0xff] %vm1027, %v1002
        %1036 = vst.msk [vmem:[%s234 + $0x40] sm:$0xff] %vm1027, %v1003
        %1037 = vst.msk [vmem:[%s234 + $0x48] sm:$0xff] %vm1027, %v1004
        %1038 = vst.msk [vmem:[%s234 + $0x50] sm:$0xff] %vm1027, %v1005
        %1039 = vst.msk [vmem:[%s234 + $0x58] sm:$0xff] %vm1027, %v1006
        %1040 = vst.msk [vmem:[%s234 + $0x60] sm:$0xff] %vm1027, %v1007
        %1041 = vst.msk [vmem:[%s234 + $0x68] sm:$0xff] %vm1027, %v1008
        %1042 = vst.msk [vmem:[%s234 + $0x70] sm:$0xff] %vm1027, %v1009
        %1043 = vst.msk [vmem:[%s234 + $0x78] sm:$0xff] %vm1027, %v1010
        %1044 = vst.msk [vmem:[%s234 + $0x80] sm:$0xff] %vm1027, %v1011
        %1045 = vst.msk [vmem:[%s234 + $0x88] sm:$0xff] %vm1027, %v1012
        %1046 = vst.msk [vmem:[%s234 + $0x90] sm:$0xff] %vm1027, %v1013
        %1047 = vst.msk [vmem:[%s234 + $0x98] sm:$0xff] %vm1027, %v1014
        %1048 = vst.msk [vmem:[%s234 + $0xa0] sm:$0xff] %vm1027, %v1015
        %1049 = vst.msk [vmem:[%s234 + $0xa8] sm:$0xff] %vm1027, %v1016
        %1050 = vst.msk [vmem:[%s234 + $0xb0] sm:$0xff] %vm1027, %v1017
        %1051 = vst.msk [vmem:[%s234 + $0xb8] sm:$0xff] %vm1027, %v1018
        %1052 = vst.msk [vmem:[%s234 + $0xc0] sm:$0xff] %vm1027, %v1019
        %1053 = vst.msk [vmem:[%s234 + $0xc8] sm:$0xff] %vm1027, %v1020
        %1054 = vst.msk [vmem:[%s234 + $0xd0] sm:$0xff] %vm1027, %v1021
        %1055 = vst.msk [vmem:[%s234 + $0xd8] sm:$0xff] %vm1027, %v1022
        %1056 = vst.msk [vmem:[%s234 + $0xe0] sm:$0xff] %vm1027, %v1023
        %1057 = vst.msk [vmem:[%s234 + $0xe8] sm:$0xff] %vm1027, %v1024
        %1058 = vst.msk [vmem:[%s234 + $0xf0] sm:$0xff] %vm1027, %v1025
        %1059 = vst.msk [vmem:[%s234 + $0xf8] sm:$0xff] %vm1027, %v1026
        %s1060 = sand.u32 %s142, 1
        %s1061 = scalar_lea.sflag [#allocation3], %s1060
        %s1062 = sand.u32 %s142, 1
        %s1063 = smul.addr %s1062, 256
        %s1064 = scalar_lea.vmem [#allocation2], %s1063
        // Predicated region
        $region41: #{stcspa_forward.11} parent=39 // pred_check
          %p1065 = pneg %p152
        $region42: #{stcspa_forward.11} parent=39 // pred_check_branch
          %1067 = sbr.rel (%p1065) target = $region44
        $region43: #{stcspa_forward.11} parent=39 // pred_region
          %s1068 = smul.u32 32, %s19
          %s1070 = ssub.s32 4096, 4096
          %1071 = vsyncadd %s1061, %s1070
          %s1072 = smul.addr %s1068, 128
          %s1073 = scalar_lea.hbm %s5, %s1072
          %s1074 = sshll.u32 %s1064, 4
          %s1075 = int_to_ptr.vmem [resolvable:$true] %s1074
          %1080 = dma.vmem_to_hbm [thread:$0]  %s1075, 4096, %s1073, %s1061, 128, 128, 8
        $region44: #{stcspa_forward.11} parent=39 // pred_fallthru
          _
      $region40: #{stcspa_forward.11} parent=5 // pred_fallthru
        _
      %p1081 = scmp.le.s32.totalorder 2, %s14
      // Predicated region
      $region45: #{stcspa_forward.11} parent=5 // pred_check
        %p1082 = pneg %p1081
      $region46: #{stcspa_forward.11} parent=5 // pred_check_branch
        %1084 = sbr.rel (%p1082) target = $region48
      $region47: #{stcspa_forward.11} parent=5 // pred_region
        %s1085 = ssub.s32 %s14, 2
        // Predicated region
        $region49: #{stcspa_forward.11} parent=47 // pred_check
          %p1086 = pneg %p158
        $region50: #{stcspa_forward.11} parent=47 // pred_check_branch
          %1088 = sbr.rel (%p1086) target = $region52
        $region51: #{stcspa_forward.11} parent=47 // pred_region
          %s1089 = sand.u32 %s143, 1
          %s1090 = scalar_lea.sflag [#allocation3], %s1089
          %s1091 = sand.u32 %s143, 1
          %s1092 = smul.addr %s1091, 256
          %s1093 = scalar_lea.vmem [#allocation2], %s1092
          %1094 = dma.done %s1090, 4096
        $region52: #{stcspa_forward.11} parent=47 // pred_fallthru
          _
      $region48: #{stcspa_forward.11} parent=5 // pred_fallthru
        _
    $region6: #{stcspa_forward.11} parent=1 // loop_footer
      %s18 = sadd.s32 1, %s14
    $region7: #{stcspa_forward.11} parent=1 // loop_footer_branch
      %13 = sbr.rel target = $region3
    $region8: #{stcspa_forward.11} parent=1 // loop_exit
      _
    %1095 = vsyncpa [#allocation3], 1
    %s1096 = scalar_lea.sflag [#allocation3], 1
    %1097 = vsyncpa %s1096, 1

// kernel: stcspa_forward.9
$region0: #{stcspa_forward.9}
  #allocation0 [shape = 'u32[]', space=smem, size = 0x4, offset = 0x4, fixed_abs, tag = 'smem constant byte address 0x4 - core index']
  #allocation1 [shape = 'u32[144,128]{1,0:T(1,128)}', space=vmem, size = 0x12000, scoped, tag = 'internal scratch']
  %s0 = inlined_call_operand.vmem [shape: f32[2,16,16,32], index: 0, kind: input, shape index: {}]
  %s1 = inlined_call_operand.vmem [shape: bf16[32,32], index: 1, kind: input, shape index: {}]
  %s2 = inlined_call_operand.vmem [shape: bf16[32,32], index: 2, kind: input, shape index: {}]
  %s3 = inlined_call_operand.vmem [shape: bf16[32,32], index: 3, kind: input, shape index: {}]
  %s4 = inlined_call_operand.vmem [shape: f32[1,32], index: 4, kind: input, shape index: {}]
  %s5 = inlined_call_operand.vmem [shape: f32[1,32], index: 5, kind: input, shape index: {}]
  %s6 = inlined_call_operand.vmem [shape: f32[1,32], index: 6, kind: input, shape index: {}]
  %s7 = inlined_call_operand.vmem [shape: bf16[32,32], index: 7, kind: input, shape index: {}]
  %s8 = inlined_call_operand.vmem [shape: f32[1,32], index: 8, kind: input, shape index: {}]
  %s9 = inlined_call_operand.vmem [shape: f32[1,32], index: 9, kind: input, shape index: {}]
  %s10 = inlined_call_operand.vmem [shape: f32[1,32], index: 10, kind: input, shape index: {}]
  %s11 = inlined_call_operand.vmem [shape: f32[4,1,64,64], index: 11, kind: input, shape index: {}]
  %s12 = inlined_call_operand.vmem [shape: f32[2,16,16,32], index: 12, kind: output, shape index: {}]
  %s13 = sld [smem:[#allocation0]]
  $region81: #{stcspa_forward.9} parent=0
    _
  %s15 = ssub.s32 1, %s13
  %s16 = scalar_select 0, %s15, %s13
  loop: start=0, step=1, limit=6
  $region2: #{stcspa_forward.9} parent=0 // loop_pre_header
    _
  $region3: #{stcspa_forward.9} parent=0 // loop_header
    %s18 = sphi 0, %s22
    %p19 = scmp.ge.s32.totalorder %s18, 6
    %s25 = sphi 0, %s37
    %s26 = sphi 0, %s33
    %s27 = sphi 0, %s25
    %s28 = sphi 0, %s26
    %s29 = sphi 0, %s27
    %s30 = sphi 0, %s28
    %s42 = sphi 0, %s44
    %s45 = sphi 0, %s42
    %s46 = sphi 0, %s45
    %s62 = sphi 0, %s46
    %s66 = sphi 0, %s66
    %s68 = sphi 0, %s66
    %s69 = sphi 0, %s68
    %s83 = sphi 0, %s69
    %s87 = sphi 0, %s87
    %s89 = sphi 0, %s87
    %s90 = sphi 0, %s89
    %s104 = sphi 0, %s90
    %s108 = sphi 0, %s108
    %s110 = sphi 0, %s108
    %s111 = sphi 0, %s110
    %s125 = sphi 0, %s111
    %s129 = sphi 0, %s129
    %s131 = sphi 0, %s129
    %s132 = sphi 0, %s131
    %s146 = sphi 0, %s132
    %s150 = sphi 0, %s150
    %s152 = sphi 0, %s150
    %s153 = sphi 0, %s152
    %s167 = sphi 0, %s153
    %s171 = sphi 0, %s171
    %s173 = sphi 0, %s171
    %s174 = sphi 0, %s173
    %s188 = sphi 0, %s174
    %s192 = sphi 0, %s192
    %s194 = sphi 0, %s192
    %s195 = sphi 0, %s194
    %s209 = sphi 0, %s195
    %s213 = sphi 0, %s213
    %s215 = sphi 0, %s213
    %s216 = sphi 0, %s215
    %s230 = sphi 0, %s216
    %s234 = sphi 0, %s234
    %s236 = sphi 0, %s234
    %s237 = sphi 0, %s236
    %s251 = sphi 0, %s237
    %s255 = sphi 0, %s255
    %s257 = sphi 0, %s255
    %s258 = sphi 0, %s257
    %s272 = sphi 0, %s258
    %s278 = sphi 0, %s280
    %s281 = sphi 0, %s278
    %s282 = sphi 0, %s281
    %s298 = sphi 0, %s282
    %s306 = sphi 0, %s308
    %s309 = sphi 0, %s306
    %s310 = sphi 0, %s309
    %s326 = sphi 0, %s310
  $region4: #{stcspa_forward.9} parent=0 // loop_header_branch
    %21 = sbr.rel (%p19) target = $region8
  $region5: #{stcspa_forward.9} parent=0 // loop_body
    %s23 = ssub.s32 %s18, 1
    %s24 = ssub.s32 %s18, 2
    %s31 = sadd.s32 1, %s26
    %p32 = scmp.ge.s32.totalorder %s31, 2
    %s33 = scalar_select %p32, 0, %s31
    %s34 = sadd.s32 1, %s25
    %s35 = scalar_select %p32, %s34, %s25
    %p36 = scmp.ge.s32.totalorder %s35, 2
    %s37 = scalar_select %p36, 0, %s35
    %s38 = ssub.s32 %s25, %s37
    %s39 = ssub.s32 %s26, %s33
    %s40 = sor.u32 %s38, %s39
    %p41 = scmp.eq.s32.totalorder %s40, 0
    %s43 = sadd.s32 %s42, 1
    %s44 = scalar_select %p41, %s42, %s43
    %p47 = pneg %p41
    %p48 = scmp.eq.s32.totalorder %s18, 3
    %p49 = por %p47, %p48
    %p50 = scmp.ne.s32.totalorder %s42, %s45
    %p51 = scmp.eq.s32.totalorder %s18, 0
    %p52 = por %p50, %p51
    %p53 = scmp.ne.s32.totalorder %s42, %s45
    %p54 = scmp.eq.s32.totalorder %s23, 3
    %p55 = por %p53, %p54
    %p56 = scmp.ne.s32.totalorder %s45, %s46
    %p57 = scmp.eq.s32.totalorder %s23, 0
    %p58 = por %p56, %p57
    %p59 = scmp.ne.s32.totalorder %s45, %s46
    %p60 = scmp.eq.s32.totalorder %s24, 3
    %p61 = por %p59, %p60
    %p63 = scmp.ne.s32.totalorder %s46, %s62
    %p64 = scmp.eq.s32.totalorder %s24, 0
    %p65 = por %p63, %p64
    %s67 = sadd.s32 %s66, 1
    %p70 = scmp.eq.s32.totalorder %s18, 3
    %p71 = scmp.ne.s32.totalorder %s66, %s68
    %p72 = scmp.eq.s32.totalorder %s18, 0
    %p73 = por %p71, %p72
    %p74 = scmp.ne.s32.totalorder %s66, %s68
    %p75 = scmp.eq.s32.totalorder %s23, 3
    %p76 = por %p74, %p75
    %p77 = scmp.ne.s32.totalorder %s68, %s69
    %p78 = scmp.eq.s32.totalorder %s23, 0
    %p79 = por %p77, %p78
    %p80 = scmp.ne.s32.totalorder %s68, %s69
    %p81 = scmp.eq.s32.totalorder %s24, 3
    %p82 = por %p80, %p81
    %p84 = scmp.ne.s32.totalorder %s69, %s83
    %p85 = scmp.eq.s32.totalorder %s24, 0
    %p86 = por %p84, %p85
    %s88 = sadd.s32 %s87, 1
    %p91 = scmp.eq.s32.totalorder %s18, 3
    %p92 = scmp.ne.s32.totalorder %s87, %s89
    %p93 = scmp.eq.s32.totalorder %s18, 0
    %p94 = por %p92, %p93
    %p95 = scmp.ne.s32.totalorder %s87, %s89
    %p96 = scmp.eq.s32.totalorder %s23, 3
    %p97 = por %p95, %p96
    %p98 = scmp.ne.s32.totalorder %s89, %s90
    %p99 = scmp.eq.s32.totalorder %s23, 0
    %p100 = por %p98, %p99
    %p101 = scmp.ne.s32.totalorder %s89, %s90
    %p102 = scmp.eq.s32.totalorder %s24, 3
    %p103 = por %p101, %p102
    %p105 = scmp.ne.s32.totalorder %s90, %s104
    %p106 = scmp.eq.s32.totalorder %s24, 0
    %p107 = por %p105, %p106
    %s109 = sadd.s32 %s108, 1
    %p112 = scmp.eq.s32.totalorder %s18, 3
    %p113 = scmp.ne.s32.totalorder %s108, %s110
    %p114 = scmp.eq.s32.totalorder %s18, 0
    %p115 = por %p113, %p114
    %p116 = scmp.ne.s32.totalorder %s108, %s110
    %p117 = scmp.eq.s32.totalorder %s23, 3
    %p118 = por %p116, %p117
    %p119 = scmp.ne.s32.totalorder %s110, %s111
    %p120 = scmp.eq.s32.totalorder %s23, 0
    %p121 = por %p119, %p120
    %p122 = scmp.ne.s32.totalorder %s110, %s111
    %p123 = scmp.eq.s32.totalorder %s24, 3
    %p124 = por %p122, %p123
    %p126 = scmp.ne.s32.totalorder %s111, %s125
    %p127 = scmp.eq.s32.totalorder %s24, 0
    %p128 = por %p126, %p127
    %s130 = sadd.s32 %s129, 1
    %p133 = scmp.eq.s32.totalorder %s18, 3
    %p134 = scmp.ne.s32.totalorder %s129, %s131
    %p135 = scmp.eq.s32.totalorder %s18, 0
    %p136 = por %p134, %p135
    %p137 = scmp.ne.s32.totalorder %s129, %s131
    %p138 = scmp.eq.s32.totalorder %s23, 3
    %p139 = por %p137, %p138
    %p140 = scmp.ne.s32.totalorder %s131, %s132
    %p141 = scmp.eq.s32.totalorder %s23, 0
    %p142 = por %p140, %p141
    %p143 = scmp.ne.s32.totalorder %s131, %s132
    %p144 = scmp.eq.s32.totalorder %s24, 3
    %p145 = por %p143, %p144
    %p147 = scmp.ne.s32.totalorder %s132, %s146
    %p148 = scmp.eq.s32.totalorder %s24, 0
    %p149 = por %p147, %p148
    %s151 = sadd.s32 %s150, 1
    %p154 = scmp.eq.s32.totalorder %s18, 3
    %p155 = scmp.ne.s32.totalorder %s150, %s152
    %p156 = scmp.eq.s32.totalorder %s18, 0
    %p157 = por %p155, %p156
    %p158 = scmp.ne.s32.totalorder %s150, %s152
    %p159 = scmp.eq.s32.totalorder %s23, 3
    %p160 = por %p158, %p159
    %p161 = scmp.ne.s32.totalorder %s152, %s153
    %p162 = scmp.eq.s32.totalorder %s23, 0
    %p163 = por %p161, %p162
    %p164 = scmp.ne.s32.totalorder %s152, %s153
    %p165 = scmp.eq.s32.totalorder %s24, 3
    %p166 = por %p164, %p165
    %p168 = scmp.ne.s32.totalorder %s153, %s167
    %p169 = scmp.eq.s32.totalorder %s24, 0
    %p170 = por %p168, %p169
    %s172 = sadd.s32 %s171, 1
    %p175 = scmp.eq.s32.totalorder %s18, 3
    %p176 = scmp.ne.s32.totalorder %s171, %s173
    %p177 = scmp.eq.s32.totalorder %s18, 0
    %p178 = por %p176, %p177
    %p179 = scmp.ne.s32.totalorder %s171, %s173
    %p180 = scmp.eq.s32.totalorder %s23, 3
    %p181 = por %p179, %p180
    %p182 = scmp.ne.s32.totalorder %s173, %s174
    %p183 = scmp.eq.s32.totalorder %s23, 0
    %p184 = por %p182, %p183
    %p185 = scmp.ne.s32.totalorder %s173, %s174
    %p186 = scmp.eq.s32.totalorder %s24, 3
    %p187 = por %p185, %p186
    %p189 = scmp.ne.s32.totalorder %s174, %s188
    %p190 = scmp.eq.s32.totalorder %s24, 0
    %p191 = por %p189, %p190
    %s193 = sadd.s32 %s192, 1
    %p196 = scmp.eq.s32.totalorder %s18, 3
    %p197 = scmp.ne.s32.totalorder %s192, %s194
    %p198 = scmp.eq.s32.totalorder %s18, 0
    %p199 = por %p197, %p198
    %p200 = scmp.ne.s32.totalorder %s192, %s194
    %p201 = scmp.eq.s32.totalorder %s23, 3
    %p202 = por %p200, %p201
    %p203 = scmp.ne.s32.totalorder %s194, %s195
    %p204 = scmp.eq.s32.totalorder %s23, 0
    %p205 = por %p203, %p204
    %p206 = scmp.ne.s32.totalorder %s194, %s195
    %p207 = scmp.eq.s32.totalorder %s24, 3
    %p208 = por %p206, %p207
    %p210 = scmp.ne.s32.totalorder %s195, %s209
    %p211 = scmp.eq.s32.totalorder %s24, 0
    %p212 = por %p210, %p211
    %s214 = sadd.s32 %s213, 1
    %p217 = scmp.eq.s32.totalorder %s18, 3
    %p218 = scmp.ne.s32.totalorder %s213, %s215
    %p219 = scmp.eq.s32.totalorder %s18, 0
    %p220 = por %p218, %p219
    %p221 = scmp.ne.s32.totalorder %s213, %s215
    %p222 = scmp.eq.s32.totalorder %s23, 3
    %p223 = por %p221, %p222
    %p224 = scmp.ne.s32.totalorder %s215, %s216
    %p225 = scmp.eq.s32.totalorder %s23, 0
    %p226 = por %p224, %p225
    %p227 = scmp.ne.s32.totalorder %s215, %s216
    %p228 = scmp.eq.s32.totalorder %s24, 3
    %p229 = por %p227, %p228
    %p231 = scmp.ne.s32.totalorder %s216, %s230
    %p232 = scmp.eq.s32.totalorder %s24, 0
    %p233 = por %p231, %p232
    %s235 = sadd.s32 %s234, 1
    %p238 = scmp.eq.s32.totalorder %s18, 3
    %p239 = scmp.ne.s32.totalorder %s234, %s236
    %p240 = scmp.eq.s32.totalorder %s18, 0
    %p241 = por %p239, %p240
    %p242 = scmp.ne.s32.totalorder %s234, %s236
    %p243 = scmp.eq.s32.totalorder %s23, 3
    %p244 = por %p242, %p243
    %p245 = scmp.ne.s32.totalorder %s236, %s237
    %p246 = scmp.eq.s32.totalorder %s23, 0
    %p247 = por %p245, %p246
    %p248 = scmp.ne.s32.totalorder %s236, %s237
    %p249 = scmp.eq.s32.totalorder %s24, 3
    %p250 = por %p248, %p249
    %p252 = scmp.ne.s32.totalorder %s237, %s251
    %p253 = scmp.eq.s32.totalorder %s24, 0
    %p254 = por %p252, %p253
    %s256 = sadd.s32 %s255, 1
    %p259 = scmp.eq.s32.totalorder %s18, 3
    %p260 = scmp.ne.s32.totalorder %s255, %s257
    %p261 = scmp.eq.s32.totalorder %s18, 0
    %p262 = por %p260, %p261
    %p263 = scmp.ne.s32.totalorder %s255, %s257
    %p264 = scmp.eq.s32.totalorder %s23, 3
    %p265 = por %p263, %p264
    %p266 = scmp.ne.s32.totalorder %s257, %s258
    %p267 = scmp.eq.s32.totalorder %s23, 0
    %p268 = por %p266, %p267
    %p269 = scmp.ne.s32.totalorder %s257, %s258
    %p270 = scmp.eq.s32.totalorder %s24, 3
    %p271 = por %p269, %p270
    %p273 = scmp.ne.s32.totalorder %s258, %s272
    %p274 = scmp.eq.s32.totalorder %s24, 0
    %p275 = por %p273, %p274
    %s276 = ssub.s32 %s26, %s33
    %p277 = scmp.eq.s32.totalorder %s276, 0
    %s279 = sadd.s32 %s278, 1
    %s280 = scalar_select %p277, %s278, %s279
    %p283 = pneg %p277
    %p284 = scmp.eq.s32.totalorder %s18, 3
    %p285 = por %p283, %p284
    %p286 = scmp.ne.s32.totalorder %s278, %s281
    %p287 = scmp.eq.s32.totalorder %s18, 0
    %p288 = por %p286, %p287
    %p289 = scmp.ne.s32.totalorder %s278, %s281
    %p290 = scmp.eq.s32.totalorder %s23, 3
    %p291 = por %p289, %p290
    %p292 = scmp.ne.s32.totalorder %s281, %s282
    %p293 = scmp.eq.s32.totalorder %s23, 0
    %p294 = por %p292, %p293
    %p295 = scmp.ne.s32.totalorder %s281, %s282
    %p296 = scmp.eq.s32.totalorder %s24, 3
    %p297 = por %p295, %p296
    %p299 = scmp.ne.s32.totalorder %s282, %s298
    %p300 = scmp.eq.s32.totalorder %s24, 0
    %p301 = por %p299, %p300
    %s302 = ssub.s32 %s25, %s37
    %s303 = ssub.s32 %s26, %s33
    %s304 = sor.u32 %s302, %s303
    %p305 = scmp.eq.s32.totalorder %s304, 0
    %s307 = sadd.s32 %s306, 1
    %s308 = scalar_select %p305, %s306, %s307
    %p311 = pneg %p305
    %p312 = scmp.eq.s32.totalorder %s18, 3
    %p313 = por %p311, %p312
    %p314 = scmp.ne.s32.totalorder %s306, %s309
    %p315 = scmp.eq.s32.totalorder %s18, 0
    %p316 = por %p314, %p315
    %p317 = scmp.ne.s32.totalorder %s306, %s309
    %p318 = scmp.eq.s32.totalorder %s23, 3
    %p319 = por %p317, %p318
    %p320 = scmp.ne.s32.totalorder %s309, %s310
    %p321 = scmp.eq.s32.totalorder %s23, 0
    %p322 = por %p320, %p321
    %p323 = scmp.ne.s32.totalorder %s309, %s310
    %p324 = scmp.eq.s32.totalorder %s24, 3
    %p325 = por %p323, %p324
    %p327 = scmp.ne.s32.totalorder %s310, %s326
    %p328 = scmp.eq.s32.totalorder %s24, 0
    %p329 = por %p327, %p328
    %p330 = scmp.le.s32.totalorder 1, %s18
    %p331 = scmp.lt.s32.totalorder %s18, 5
    %p332 = pnand %p330, %p331
    %p333 = pneg %p332
    // Predicated region
    $region9: #{stcspa_forward.9} parent=5 // pred_check
      _
    $region10: #{stcspa_forward.9} parent=5 // pred_check_branch
      %335 = sbr.rel (%p332) target = $region12
    $region11: #{stcspa_forward.9} parent=5 // pred_region
      %s336 = ssub.s32 %s18, 1
      // Predicated region
      $region13: #{stcspa_forward.9} parent=11 // pred_check
        %p337 = pneg %p79
      $region14: #{stcspa_forward.9} parent=11 // pred_check_branch
        %339 = sbr.rel (%p337) target = $region16
      $region15: #{stcspa_forward.9} parent=11 // pred_region
        _
      $region16: #{stcspa_forward.9} parent=11 // pred_fallthru
        _
      // Predicated region
      $region17: #{stcspa_forward.9} parent=11 // pred_check
        %p340 = pneg %p100
      $region18: #{stcspa_forward.9} parent=11 // pred_check_branch
        %342 = sbr.rel (%p340) target = $region20
      $region19: #{stcspa_forward.9} parent=11 // pred_region
        _
      $region20: #{stcspa_forward.9} parent=11 // pred_fallthru
        _
      // Predicated region
      $region21: #{stcspa_forward.9} parent=11 // pred_check
        %p343 = pneg %p121
      $region22: #{stcspa_forward.9} parent=11 // pred_check_branch
        %345 = sbr.rel (%p343) target = $region24
      $region23: #{stcspa_forward.9} parent=11 // pred_region
        _
      $region24: #{stcspa_forward.9} parent=11 // pred_fallthru
        _
      // Predicated region
      $region25: #{stcspa_forward.9} parent=11 // pred_check
        %p346 = pneg %p142
      $region26: #{stcspa_forward.9} parent=11 // pred_check_branch
        %348 = sbr.rel (%p346) target = $region28
      $region27: #{stcspa_forward.9} parent=11 // pred_region
        _
      $region28: #{stcspa_forward.9} parent=11 // pred_fallthru
        _
      // Predicated region
      $region29: #{stcspa_forward.9} parent=11 // pred_check
        %p349 = pneg %p163
      $region30: #{stcspa_forward.9} parent=11 // pred_check_branch
        %351 = sbr.rel (%p349) target = $region32
      $region31: #{stcspa_forward.9} parent=11 // pred_region
        _
      $region32: #{stcspa_forward.9} parent=11 // pred_fallthru
        _
      // Predicated region
      $region33: #{stcspa_forward.9} parent=11 // pred_check
        %p352 = pneg %p184
      $region34: #{stcspa_forward.9} parent=11 // pred_check_branch
        %354 = sbr.rel (%p352) target = $region36
      $region35: #{stcspa_forward.9} parent=11 // pred_region
        _
      $region36: #{stcspa_forward.9} parent=11 // pred_fallthru
        _
      // Predicated region
      $region37: #{stcspa_forward.9} parent=11 // pred_check
        %p355 = pneg %p205
      $region38: #{stcspa_forward.9} parent=11 // pred_check_branch
        %357 = sbr.rel (%p355) target = $region40
      $region39: #{stcspa_forward.9} parent=11 // pred_region
        _
      $region40: #{stcspa_forward.9} parent=11 // pred_fallthru
        _
      // Predicated region
      $region41: #{stcspa_forward.9} parent=11 // pred_check
        %p358 = pneg %p226
      $region42: #{stcspa_forward.9} parent=11 // pred_check_branch
        %360 = sbr.rel (%p358) target = $region44
      $region43: #{stcspa_forward.9} parent=11 // pred_region
        _
      $region44: #{stcspa_forward.9} parent=11 // pred_fallthru
        _
      // Predicated region
      $region45: #{stcspa_forward.9} parent=11 // pred_check
        %p361 = pneg %p247
      $region46: #{stcspa_forward.9} parent=11 // pred_check_branch
        %363 = sbr.rel (%p361) target = $region48
      $region47: #{stcspa_forward.9} parent=11 // pred_region
        _
      $region48: #{stcspa_forward.9} parent=11 // pred_fallthru
        _
      // Predicated region
      $region49: #{stcspa_forward.9} parent=11 // pred_check
        %p364 = pneg %p268
      $region50: #{stcspa_forward.9} parent=11 // pred_check_branch
        %366 = sbr.rel (%p364) target = $region52
      $region51: #{stcspa_forward.9} parent=11 // pred_region
        _
      $region52: #{stcspa_forward.9} parent=11 // pred_fallthru
        _
    $region12: #{stcspa_forward.9} parent=5 // pred_fallthru
      _
    %p367 = scmp.lt.s32.totalorder %s18, 4
    // Predicated region
    $region53: #{stcspa_forward.9} parent=5 // pred_check
      %p368 = pneg %p367
    $region54: #{stcspa_forward.9} parent=5 // pred_check_branch
      %370 = sbr.rel (%p368) target = $region56
    $region55: #{stcspa_forward.9} parent=5 // pred_region
      // Predicated region
      $region57: #{stcspa_forward.9} parent=55 // pred_check
        %p371 = pneg %p52
      $region58: #{stcspa_forward.9} parent=55 // pred_check_branch
        %373 = sbr.rel (%p371) target = $region60
      $region59: #{stcspa_forward.9} parent=55 // pred_region
        %s374 = smul.u32 8, %s26
        %p375 = scmp.lt.s32.totalorder %s25, 1
        %s376 = scalar_select %p375, %s25, 1
        %p377 = scmp.lt.s32.totalorder %s374, 15
        %s378 = scalar_select %p377, %s374, 15
        %s379 = smul.addr %s378, 2
        %s380 = smul.addr %s376, 32
        %s381 = sadd.s32 %s379, %s380
        %s382 = smul.addr %s381, 8
        %s383 = scalar_lea.vmem %s0, %s382
        %s384 = smul.u32 8, %s26
      $region60: #{stcspa_forward.9} parent=55 // pred_fallthru
        _
      // Predicated region
      $region61: #{stcspa_forward.9} parent=55 // pred_check
        %p385 = pneg %p288
      $region62: #{stcspa_forward.9} parent=55 // pred_check_branch
        %387 = sbr.rel (%p385) target = $region64
      $region63: #{stcspa_forward.9} parent=55 // pred_region
        %s388 = smul.u32 2, %s26
        %p389 = scmp.lt.s32.totalorder %s388, 3
        %s390 = scalar_select %p389, %s388, 3
        %s391 = smul.addr %s390, 8
        %s392 = smul.addr %s391, 8
        %s393 = scalar_lea.vmem %s11, %s392
        %s394 = smul.u32 2, %s26
      $region64: #{stcspa_forward.9} parent=55 // pred_fallthru
        _
    $region56: #{stcspa_forward.9} parent=5 // pred_fallthru
      _
    %p395 = scmp.le.s32.totalorder 1, %s18
    %p396 = scmp.lt.s32.totalorder %s18, 5
    %p397 = pnand %p395, %p396
    %p398 = pneg %p397
    // Predicated region
    $region65: #{stcspa_forward.9} parent=5 // pred_check
      _
    $region66: #{stcspa_forward.9} parent=5 // pred_check_branch
      %400 = sbr.rel (%p397) target = $region68
    $region67: #{stcspa_forward.9} parent=5 // pred_region
      %s401 = ssub.s32 %s18, 1
      %s402 = smul.u32 8, %s28
      %p403 = scmp.lt.s32.totalorder %s27, 1
      %s404 = scalar_select %p403, %s27, 1
      %p405 = scmp.lt.s32.totalorder %s402, 15
      %s406 = scalar_select %p405, %s402, 15
      %s407 = smul.addr %s406, 2
      %s408 = smul.addr %s404, 32
      %s409 = sadd.s32 %s407, %s408
      %s410 = smul.addr %s409, 8
      %s411 = scalar_lea.vmem %s0, %s410
      %p412 = pneg %p58
      %p413 = pneg %p55
      %p414 = pneg %p79
      %p415 = pneg %p76
      %p416 = pneg %p100
      %p417 = pneg %p97
      %p418 = pneg %p121
      %p419 = pneg %p118
      %p420 = pneg %p142
      %p421 = pneg %p139
      %p422 = pneg %p163
      %p423 = pneg %p160
      %p424 = pneg %p184
      %p425 = pneg %p181
      %p426 = pneg %p205
      %p427 = pneg %p202
      %p428 = pneg %p226
      %p429 = pneg %p223
      %p430 = pneg %p247
      %p431 = pneg %p244
      %p432 = pneg %p268
      %p433 = pneg %p265
      %s434 = smul.u32 2, %s28
      %p435 = scmp.lt.s32.totalorder %s434, 3
      %s436 = scalar_select %p435, %s434, 3
      %s437 = smul.addr %s436, 8
      %s438 = smul.addr %s437, 8
      %s439 = scalar_lea.vmem %s11, %s438
      %p440 = pneg %p294
      %p441 = pneg %p291
      %p442 = pneg %p322
      %p443 = pneg %p319
      %s444 = smul.u32 8, %s28
      %p445 = scmp.lt.s32.totalorder %s27, 1
      %s446 = scalar_select %p445, %s27, 1
      %p447 = scmp.lt.s32.totalorder %s444, 15
      %s448 = scalar_select %p447, %s444, 15
      %s449 = smul.addr %s448, 2
      %s450 = smul.addr %s446, 32
      %s451 = sadd.s32 %s449, %s450
      %s452 = smul.addr %s451, 8
      %s453 = scalar_lea.vmem %s12, %s452
      %s454 = smul.u32 8, %s28
      %p455 = scmp.lt.s32.totalorder %s27, 1
      %s456 = scalar_select %p455, %s27, 1
      %p457 = scmp.lt.s32.totalorder %s454, 15
      %s458 = scalar_select %p457, %s454, 15
      %s459 = smul.addr %s458, 2
      %s460 = smul.addr %s456, 32
      %s461 = sadd.s32 %s459, %s460
      %s462 = smul.addr %s461, 8
      %s463 = scalar_lea.vmem %s0, %s462
      %s464 = smul.u32 8, %s28
      %s465 = smul.u32 2, %s28
      %p466 = scmp.lt.s32.totalorder %s465, 3
      %s467 = scalar_select %p466, %s465, 3
      %s468 = smul.addr %s467, 8
      %s469 = smul.addr %s468, 8
      %s470 = scalar_lea.vmem %s11, %s469
      %s471 = smul.u32 2, %s28
      %s472 = smul.u32 8, %s28
      %p473 = scmp.lt.s32.totalorder %s27, 1
      %s474 = scalar_select %p473, %s27, 1
      %p475 = scmp.lt.s32.totalorder %s472, 15
      %s476 = scalar_select %p475, %s472, 15
      %s477 = smul.addr %s476, 2
      %s478 = smul.addr %s474, 32
      %s479 = sadd.s32 %s477, %s478
      %s480 = smul.addr %s479, 8
      %s481 = scalar_lea.vmem %s12, %s480
      %s482 = smul.u32 8, %s28
      %v484 = vld [vmem:[%s463] sm:$0xff]
      %v485 = vld [vmem:[%s463 + $0x8] sm:$0xff]
      %v486 = vld [vmem:[%s463 + $0x10] sm:$0xff]
      %v487 = vld [vmem:[%s463 + $0x18] sm:$0xff]
      %v488 = vld [vmem:[%s463 + $0x20] sm:$0xff]
      %v489 = vld [vmem:[%s463 + $0x28] sm:$0xff]
      %v490 = vld [vmem:[%s463 + $0x30] sm:$0xff]
      %v491 = vld [vmem:[%s463 + $0x38] sm:$0xff]
      %v492 = vld [vmem:[%s463 + $0x40] sm:$0xff]
      %v493 = vld [vmem:[%s463 + $0x48] sm:$0xff]
      %v494 = vld [vmem:[%s463 + $0x50] sm:$0xff]
      %v495 = vld [vmem:[%s463 + $0x58] sm:$0xff]
      %v496 = vld [vmem:[%s463 + $0x60] sm:$0xff]
      %v497 = vld [vmem:[%s463 + $0x68] sm:$0xff]
      %v498 = vld [vmem:[%s463 + $0x70] sm:$0xff]
      %v499 = vld [vmem:[%s463 + $0x78] sm:$0xff]
      %vm500 = vcmask 261120
      %v501 = vsel %vm500, %v484, 0.0
      %502 = vadd.xlane.f32.xlu0 %v501
      %v503 = vpop.xlane.xlu0 %502
      %v504 = vsel %vm500, %v486, 0.0
      %505 = vadd.xlane.f32.xlu0 %v504
      %v506 = vpop.xlane.xlu0 %505
      %v507 = vsel %vm500, %v488, 0.0
      %508 = vadd.xlane.f32.xlu0 %v507
      %v509 = vpop.xlane.xlu0 %508
      %v510 = vsel %vm500, %v490, 0.0
      %511 = vadd.xlane.f32.xlu0 %v510
      %v512 = vpop.xlane.xlu0 %511
      %v513 = vsel %vm500, %v492, 0.0
      %514 = vadd.xlane.f32.xlu0 %v513
      %v515 = vpop.xlane.xlu0 %514
      %v516 = vsel %vm500, %v494, 0.0
      %517 = vadd.xlane.f32.xlu0 %v516
      %v518 = vpop.xlane.xlu0 %517
      %v519 = vsel %vm500, %v496, 0.0
      %520 = vadd.xlane.f32.xlu0 %v519
      %v521 = vpop.xlane.xlu0 %520
      %v522 = vsel %vm500, %v498, 0.0
      %523 = vadd.xlane.f32.xlu0 %v522
      %v524 = vpop.xlane.xlu0 %523
      %v525 = vsel %vm500, %v485, 0.0
      %526 = vadd.xlane.f32.xlu0 %v525
      %v527 = vpop.xlane.xlu0 %526
      %v528 = vsel %vm500, %v487, 0.0
      %529 = vadd.xlane.f32.xlu0 %v528
      %v530 = vpop.xlane.xlu0 %529
      %v531 = vsel %vm500, %v489, 0.0
      %532 = vadd.xlane.f32.xlu0 %v531
      %v533 = vpop.xlane.xlu0 %532
      %v534 = vsel %vm500, %v491, 0.0
      %535 = vadd.xlane.f32.xlu0 %v534
      %v536 = vpop.xlane.xlu0 %535
      %v537 = vsel %vm500, %v493, 0.0
      %538 = vadd.xlane.f32.xlu0 %v537
      %v539 = vpop.xlane.xlu0 %538
      %v540 = vsel %vm500, %v495, 0.0
      %541 = vadd.xlane.f32.xlu0 %v540
      %v542 = vpop.xlane.xlu0 %541
      %v543 = vsel %vm500, %v497, 0.0
      %544 = vadd.xlane.f32.xlu0 %v543
      %v545 = vpop.xlane.xlu0 %544
      %v546 = vsel %vm500, %v499, 0.0
      %547 = vadd.xlane.f32.xlu0 %v546
      %v548 = vpop.xlane.xlu0 %547
      %v549 = vrcp.pop 32.0
      %v550 = vmul.f32 %v503, %v549
      %v551 = vmul.f32 %v506, %v549
      %v552 = vmul.f32 %v509, %v549
      %v553 = vmul.f32 %v512, %v549
      %v554 = vmul.f32 %v515, %v549
      %v555 = vmul.f32 %v518, %v549
      %v556 = vmul.f32 %v521, %v549
      %v557 = vmul.f32 %v524, %v549
      %v558 = vmul.f32 %v527, %v549
      %v559 = vmul.f32 %v530, %v549
      %v560 = vmul.f32 %v533, %v549
      %v561 = vmul.f32 %v536, %v549
      %v562 = vmul.f32 %v539, %v549
      %v563 = vmul.f32 %v542, %v549
      %v564 = vmul.f32 %v545, %v549
      %v565 = vmul.f32 %v548, %v549
      %v566 = vsub.f32 %v484, %v550
      %v567 = vsub.f32 %v486, %v551
      %v568 = vsub.f32 %v488, %v552
      %v569 = vsub.f32 %v490, %v553
      %v570 = vsub.f32 %v492, %v554
      %v571 = vsub.f32 %v494, %v555
      %v572 = vsub.f32 %v496, %v556
      %v573 = vsub.f32 %v498, %v557
      %v574 = vsub.f32 %v485, %v558
      %v575 = vsub.f32 %v487, %v559
      %v576 = vsub.f32 %v489, %v560
      %v577 = vsub.f32 %v491, %v561
      %v578 = vsub.f32 %v493, %v562
      %v579 = vsub.f32 %v495, %v563
      %v580 = vsub.f32 %v497, %v564
      %v581 = vsub.f32 %v499, %v565
      %v582 = vmul.f32 %v566, %v566
      %v583 = vmul.f32 %v567, %v567
      %v584 = vmul.f32 %v568, %v568
      %v585 = vmul.f32 %v569, %v569
      %v586 = vmul.f32 %v570, %v570
      %v587 = vmul.f32 %v571, %v571
      %v588 = vmul.f32 %v572, %v572
      %v589 = vmul.f32 %v573, %v573
      %v590 = vmul.f32 %v574, %v574
      %v591 = vmul.f32 %v575, %v575
      %v592 = vmul.f32 %v576, %v576
      %v593 = vmul.f32 %v577, %v577
      %v594 = vmul.f32 %v578, %v578
      %v595 = vmul.f32 %v579, %v579
      %v596 = vmul.f32 %v580, %v580
      %v597 = vmul.f32 %v581, %v581
      %v598 = vsel %vm500, %v582, 0.0
      %599 = vadd.xlane.f32.xlu0 %v598
      %v600 = vpop.xlane.xlu0 %599
      %v601 = vsel %vm500, %v583, 0.0
      %602 = vadd.xlane.f32.xlu0 %v601
      %v603 = vpop.xlane.xlu0 %602
      %v604 = vsel %vm500, %v584, 0.0
      %605 = vadd.xlane.f32.xlu0 %v604
      %v606 = vpop.xlane.xlu0 %605
      %v607 = vsel %vm500, %v585, 0.0
      %608 = vadd.xlane.f32.xlu0 %v607
      %v609 = vpop.xlane.xlu0 %608
      %v610 = vsel %vm500, %v586, 0.0
      %611 = vadd.xlane.f32.xlu0 %v610
      %v612 = vpop.xlane.xlu0 %611
      %v613 = vsel %vm500, %v587, 0.0
      %614 = vadd.xlane.f32.xlu0 %v613
      %v615 = vpop.xlane.xlu0 %614
      %v616 = vsel %vm500, %v588, 0.0
      %617 = vadd.xlane.f32.xlu0 %v616
      %v618 = vpop.xlane.xlu0 %617
      %v619 = vsel %vm500, %v589, 0.0
      %620 = vadd.xlane.f32.xlu0 %v619
      %v621 = vpop.xlane.xlu0 %620
      %v622 = vsel %vm500, %v590, 0.0
      %623 = vadd.xlane.f32.xlu0 %v622
      %v624 = vpop.xlane.xlu0 %623
      %v625 = vsel %vm500, %v591, 0.0
      %626 = vadd.xlane.f32.xlu0 %v625
      %v627 = vpop.xlane.xlu0 %626
      %v628 = vsel %vm500, %v592, 0.0
      %629 = vadd.xlane.f32.xlu0 %v628
      %v630 = vpop.xlane.xlu0 %629
      %v631 = vsel %vm500, %v593, 0.0
      %632 = vadd.xlane.f32.xlu0 %v631
      %v633 = vpop.xlane.xlu0 %632
      %v634 = vsel %vm500, %v594, 0.0
      %635 = vadd.xlane.f32.xlu0 %v634
      %v636 = vpop.xlane.xlu0 %635
      %v637 = vsel %vm500, %v595, 0.0
      %638 = vadd.xlane.f32.xlu0 %v637
      %v639 = vpop.xlane.xlu0 %638
      %v640 = vsel %vm500, %v596, 0.0
      %641 = vadd.xlane.f32.xlu0 %v640
      %v642 = vpop.xlane.xlu0 %641
      %v643 = vsel %vm500, %v597, 0.0
      %644 = vadd.xlane.f32.xlu0 %v643
      %v645 = vpop.xlane.xlu0 %644
      %v646 = vmul.f32 %v600, %v549
      %v647 = vmul.f32 %v603, %v549
      %v648 = vmul.f32 %v606, %v549
      %v649 = vmul.f32 %v609, %v549
      %v650 = vmul.f32 %v612, %v549
      %v651 = vmul.f32 %v615, %v549
      %v652 = vmul.f32 %v618, %v549
      %v653 = vmul.f32 %v621, %v549
      %v654 = vmul.f32 %v624, %v549
      %v655 = vmul.f32 %v627, %v549
      %v656 = vmul.f32 %v630, %v549
      %v657 = vmul.f32 %v633, %v549
      %v658 = vmul.f32 %v636, %v549
      %v659 = vmul.f32 %v639, %v549
      %v660 = vmul.f32 %v642, %v549
      %v661 = vmul.f32 %v645, %v549
      %v662 = vadd.f32 %v646, 1e-05
      %v663 = vadd.f32 %v647, 1e-05
      %v664 = vadd.f32 %v648, 1e-05
      %v665 = vadd.f32 %v649, 1e-05
      %v666 = vadd.f32 %v650, 1e-05
      %v667 = vadd.f32 %v651, 1e-05
      %v668 = vadd.f32 %v652, 1e-05
      %v669 = vadd.f32 %v653, 1e-05
      %v670 = vadd.f32 %v654, 1e-05
      %v671 = vadd.f32 %v655, 1e-05
      %v672 = vadd.f32 %v656, 1e-05
      %v673 = vadd.f32 %v657, 1e-05
      %v674 = vadd.f32 %v658, 1e-05
      %v675 = vadd.f32 %v659, 1e-05
      %v676 = vadd.f32 %v660, 1e-05
      %v677 = vadd.f32 %v661, 1e-05
      %v678 = vrsqrt.pop %v662
      %v679 = vrsqrt.pop %v663
      %v680 = vrsqrt.pop %v664
      %v681 = vrsqrt.pop %v665
      %v682 = vrsqrt.pop %v666
      %v683 = vrsqrt.pop %v667
      %v684 = vrsqrt.pop %v668
      %v685 = vrsqrt.pop %v669
      %v686 = vrsqrt.pop %v670
      %v687 = vrsqrt.pop %v671
      %v688 = vrsqrt.pop %v672
      %v689 = vrsqrt.pop %v673
      %v690 = vrsqrt.pop %v674
      %v691 = vrsqrt.pop %v675
      %v692 = vrsqrt.pop %v676
      %v693 = vrsqrt.pop %v677
      %v694 = vmul.f32 %v566, %v678
      %v695 = vmul.f32 %v567, %v679
      %v696 = vmul.f32 %v568, %v680
      %v697 = vmul.f32 %v569, %v681
      %v698 = vmul.f32 %v570, %v682
      %v699 = vmul.f32 %v571, %v683
      %v700 = vmul.f32 %v572, %v684
      %v701 = vmul.f32 %v573, %v685
      %v702 = vmul.f32 %v574, %v686
      %v703 = vmul.f32 %v575, %v687
      %v704 = vmul.f32 %v576, %v688
      %v705 = vmul.f32 %v577, %v689
      %v706 = vmul.f32 %v578, %v690
      %v707 = vmul.f32 %v579, %v691
      %v708 = vmul.f32 %v580, %v692
      %v709 = vmul.f32 %v581, %v693
      %v710 = vld [vmem:[%s9] sm:$0x1]
      %v712 = vlaneseq
      %v713 = vshrl.u32 %v712, 7
      %v714 = vsub.s32 0, %v713
      %v715 = vrot.slane %v710, %v714
      %v717 = vmul.f32 %v694, %v715
      %v718 = vmul.f32 %v695, %v715
      %v719 = vmul.f32 %v696, %v715
      %v720 = vmul.f32 %v697, %v715
      %v721 = vmul.f32 %v698, %v715
      %v722 = vmul.f32 %v699, %v715
      %v723 = vmul.f32 %v700, %v715
      %v724 = vmul.f32 %v701, %v715
      %v725 = vmul.f32 %v702, %v715
      %v726 = vmul.f32 %v703, %v715
      %v727 = vmul.f32 %v704, %v715
      %v728 = vmul.f32 %v705, %v715
      %v729 = vmul.f32 %v706, %v715
      %v730 = vmul.f32 %v707, %v715
      %v731 = vmul.f32 %v708, %v715
      %v732 = vmul.f32 %v709, %v715
      %v733 = vld [vmem:[%s10] sm:$0x1]
      %v735 = vlaneseq
      %v736 = vshrl.u32 %v735, 7
      %v737 = vsub.s32 0, %v736
      %v738 = vrot.slane %v733, %v737
      %v740 = vadd.f32 %v717, %v738
      %v741 = vadd.f32 %v718, %v738
      %v742 = vadd.f32 %v719, %v738
      %v743 = vadd.f32 %v720, %v738
      %v744 = vadd.f32 %v721, %v738
      %v745 = vadd.f32 %v722, %v738
      %v746 = vadd.f32 %v723, %v738
      %v747 = vadd.f32 %v724, %v738
      %v748 = vadd.f32 %v725, %v738
      %v749 = vadd.f32 %v726, %v738
      %v750 = vadd.f32 %v727, %v738
      %v751 = vadd.f32 %v728, %v738
      %v752 = vadd.f32 %v729, %v738
      %v753 = vadd.f32 %v730, %v738
      %v754 = vadd.f32 %v731, %v738
      %v755 = vadd.f32 %v732, %v738
      %v756 = vpack.c.bf16 %v741, %v740
      %v757 = vpack.c.bf16 %v743, %v742
      %v758 = vpack.c.bf16 %v745, %v744
      %v759 = vpack.c.bf16 %v747, %v746
      %v760 = vpack.c.bf16 %v749, %v748
      %v761 = vpack.c.bf16 %v751, %v750
      %v762 = vpack.c.bf16 %v753, %v752
      %v763 = vpack.c.bf16 %v755, %v754
      %v764 = vld [vmem:[%s1] sm:$0xf]
      %v765 = vld [vmem:[%s1 + $0x4] sm:$0xf]
      %v766 = vld [vmem:[%s1 + $0x8] sm:$0xf]
      %v767 = vld [vmem:[%s1 + $0xc] sm:$0xf]
      %v768 = vld [vmem:[%s4] sm:$0x1]
      %v770 = vlaneseq
      %v771 = vshrl.u32 %v770, 7
      %v772 = vsub.s32 0, %v771
      %v773 = vrot.slane %v768, %v772
      %v779 = vunpack.c.l.b16 %v764
      %v780 = vunpack.c.l.b16 %v765
      %v781 = vunpack.c.l.b16 %v766
      %v782 = vunpack.c.l.b16 %v767
      %v783 = vpack.c.b16 %v780, %v779
      %v784 = vpack.c.b16 %v782, %v781
      %v788 = vsel %vm500, %v756, 0
      %v791 = vsel %vm500, %v757, 0
      %v794 = vsel %vm500, %v758, 0
      %v797 = vsel %vm500, %v759, 0
      %v800 = vsel %vm500, %v760, 0
      %v803 = vsel %vm500, %v761, 0
      %v806 = vsel %vm500, %v762, 0
      %v809 = vsel %vm500, %v763, 0
      %811 = vmatprep.subr.bf16.mxu0 0
      %812 = vmatpush1.bf16.msra.mxu0 %v783
      %813 = vmatprep.subr.bf16.mxu0 0
      %814 = vmatpush1.bf16.msra.mxu0 %v784
      %815 = vmatprep.subr.bf16.mxu0 0
      %816 = vmatpush1.bf16.msra.mxu0 0
      %817 = vmatprep.subr.bf16.mxu0 0
      %818 = vmatpush1.bf16.msra.mxu0 0
      %819 = vmatprep.subr.bf16.mxu0 0
      %820 = vmatpush1.bf16.msra.mxu0 0
      %821 = vmatprep.subr.bf16.mxu0 0
      %822 = vmatpush1.bf16.msra.mxu0 0
      %823 = vmatprep.subr.bf16.mxu0 0
      %824 = vmatpush1.bf16.msra.mxu0 0
      %825 = vmatprep.subr.bf16.mxu0 0
      %826 = vmatpush1.bf16.msra.mxu0 0
      %827 = vmatprep.subr.bf16.mxu0 0
      %828 = vmatpush1.bf16.msra.mxu0 0
      %829 = vmatprep.subr.bf16.mxu0 0
      %830 = vmatpush1.bf16.msra.mxu0 0
      %831 = vmatprep.subr.bf16.mxu0 0
      %832 = vmatpush1.bf16.msra.mxu0 0
      %833 = vmatprep.subr.bf16.mxu0 0
      %834 = vmatpush1.bf16.msra.mxu0 0
      %835 = vmatprep.subr.bf16.mxu0 0
      %836 = vmatpush1.bf16.msra.mxu0 0
      %837 = vmatprep.subr.bf16.mxu0 0
      %838 = vmatpush1.bf16.msra.mxu0 0
      %839 = vmatprep.subr.bf16.mxu0 0
      %840 = vmatpush1.bf16.msra.mxu0 0
      %841 = vmatprep.subr.bf16.mxu0 0
      %842 = vmatpush1.bf16.msra.mxu0 0
      %843 = vmatprep.mubr.bf16.mxu0 0
      %844 = vmatmul.mubr.bf16.gmra.mrb[0].mxu0 %v788
      %v845 = vpop.f32.mrb[0].mxu0
      %v846 = vadd.f32 %v773, %v845
      %v847 = vpop.f32.mrb[0].mxu0
      %v848 = vpop.f32.mrb[0].mxu0
      %v849 = vadd.f32 %v773, %v848
      %v850 = vpop.f32.mrb[0].mxu0
      %851 = vmatprep.mubr.bf16.mxu0 0
      %852 = vmatmul.mubr.bf16.gmra.mrb[0].mxu0 %v791
      %v853 = vpop.f32.mrb[0].mxu0
      %v854 = vadd.f32 %v773, %v853
      %v855 = vpop.f32.mrb[0].mxu0
      %v856 = vpop.f32.mrb[0].mxu0
      %v857 = vadd.f32 %v773, %v856
      %v858 = vpop.f32.mrb[0].mxu0
      %859 = vmatprep.mubr.bf16.mxu0 0
      %860 = vmatmul.mubr.bf16.gmra.mrb[0].mxu0 %v794
      %v861 = vpop.f32.mrb[0].mxu0
      %v862 = vadd.f32 %v773, %v861
      %v863 = vpop.f32.mrb[0].mxu0
      %v864 = vpop.f32.mrb[0].mxu0
      %v865 = vadd.f32 %v773, %v864
      %v866 = vpop.f32.mrb[0].mxu0
      %867 = vmatprep.mubr.bf16.mxu0 0
      %868 = vmatmul.mubr.bf16.gmra.mrb[0].mxu0 %v797
      %v869 = vpop.f32.mrb[0].mxu0
      %v870 = vadd.f32 %v773, %v869
      %v871 = vpop.f32.mrb[0].mxu0
      %v872 = vpop.f32.mrb[0].mxu0
      %v873 = vadd.f32 %v773, %v872
      %v874 = vpop.f32.mrb[0].mxu0
      %875 = vmatprep.mubr.bf16.mxu0 0
      %876 = vmatmul.mubr.bf16.gmra.mrb[0].mxu0 %v800
      %v877 = vpop.f32.mrb[0].mxu0
      %v878 = vadd.f32 %v773, %v877
      %v879 = vpop.f32.mrb[0].mxu0
      %v880 = vpop.f32.mrb[0].mxu0
      %v881 = vadd.f32 %v773, %v880
      %v882 = vpop.f32.mrb[0].mxu0
      %883 = vmatprep.mubr.bf16.mxu0 0
      %884 = vmatmul.mubr.bf16.gmra.mrb[0].mxu0 %v803
      %v885 = vpop.f32.mrb[0].mxu0
      %v886 = vadd.f32 %v773, %v885
      %v887 = vpop.f32.mrb[0].mxu0
      %v888 = vpop.f32.mrb[0].mxu0
      %v889 = vadd.f32 %v773, %v888
      %v890 = vpop.f32.mrb[0].mxu0
      %891 = vmatprep.mubr.bf16.mxu0 0
      %892 = vmatmul.mubr.bf16.gmra.mrb[0].mxu0 %v806
      %v893 = vpop.f32.mrb[0].mxu0
      %v894 = vadd.f32 %v773, %v893
      %v895 = vpop.f32.mrb[0].mxu0
      %v896 = vpop.f32.mrb[0].mxu0
      %v897 = vadd.f32 %v773, %v896
      %v898 = vpop.f32.mrb[0].mxu0
      %899 = vmatprep.mubr.bf16.mxu0 0
      %900 = vmatmul.mubr.bf16.gmra.mrb[0].mxu0 %v809
      %v901 = vpop.f32.mrb[0].mxu0
      %v902 = vadd.f32 %v773, %v901
      %v903 = vpop.f32.mrb[0].mxu0
      %v904 = vpop.f32.mrb[0].mxu0
      %v905 = vadd.f32 %v773, %v904
      %v906 = vpop.f32.mrb[0].mxu0
      %907 = vdwg.mxu0
      %v908 = vld [vmem:[%s2] sm:$0xf]
      %v909 = vld [vmem:[%s2 + $0x4] sm:$0xf]
      %v910 = vld [vmem:[%s2 + $0x8] sm:$0xf]
      %v911 = vld [vmem:[%s2 + $0xc] sm:$0xf]
      %v912 = vld [vmem:[%s5] sm:$0x1]
      %v914 = vlaneseq
      %v915 = vshrl.u32 %v914, 7
      %v916 = vsub.s32 0, %v915
      %v917 = vrot.slane %v912, %v916
      %v923 = vunpack.c.l.b16 %v908
      %v924 = vunpack.c.l.b16 %v909
      %v925 = vunpack.c.l.b16 %v910
      %v926 = vunpack.c.l.b16 %v911
      %v927 = vpack.c.b16 %v924, %v923
      %v928 = vpack.c.b16 %v926, %v925
      %931 = vmatprep.subr.bf16.mxu0 0
      %932 = vmatpush1.bf16.msra.mxu0 %v927
      %933 = vmatprep.subr.bf16.mxu0 0
      %934 = vmatpush1.bf16.msra.mxu0 %v928
      %935 = vmatprep.subr.bf16.mxu0 0
      %936 = vmatpush1.bf16.msra.mxu0 0
      %937 = vmatprep.subr.bf16.mxu0 0
      %938 = vmatpush1.bf16.msra.mxu0 0
      %939 = vmatprep.subr.bf16.mxu0 0
      %940 = vmatpush1.bf16.msra.mxu0 0
      %941 = vmatprep.subr.bf16.mxu0 0
      %942 = vmatpush1.bf16.msra.mxu0 0
      %943 = vmatprep.subr.bf16.mxu0 0
      %944 = vmatpush1.bf16.msra.mxu0 0
      %945 = vmatprep.subr.bf16.mxu0 0
      %946 = vmatpush1.bf16.msra.mxu0 0
      %947 = vmatprep.subr.bf16.mxu0 0
      %948 = vmatpush1.bf16.msra.mxu0 0
      %949 = vmatprep.subr.bf16.mxu0 0
      %950 = vmatpush1.bf16.msra.mxu0 0
      %951 = vmatprep.subr.bf16.mxu0 0
      %952 = vmatpush1.bf16.msra.mxu0 0
      %953 = vmatprep.subr.bf16.mxu0 0
      %954 = vmatpush1.bf16.msra.mxu0 0
      %955 = vmatprep.subr.bf16.mxu0 0
      %956 = vmatpush1.bf16.msra.mxu0 0
      %957 = vmatprep.subr.bf16.mxu0 0
      %958 = vmatpush1.bf16.msra.mxu0 0
      %959 = vmatprep.subr.bf16.mxu0 0
      %960 = vmatpush1.bf16.msra.mxu0 0
      %961 = vmatprep.subr.bf16.mxu0 0
      %962 = vmatpush1.bf16.msra.mxu0 0
      %963 = vmatprep.mubr.bf16.mxu0 0
      %964 = vmatmul.mubr.bf16.gmra.mrb[0].mxu0 %v788
      %v965 = vpop.f32.mrb[0].mxu0
      %v966 = vadd.f32 %v917, %v965
      %v967 = vpop.f32.mrb[0].mxu0
      %v968 = vpop.f32.mrb[0].mxu0
      %v969 = vadd.f32 %v917, %v968
      %v970 = vpop.f32.mrb[0].mxu0
      %971 = vmatprep.mubr.bf16.mxu0 0
      %972 = vmatmul.mubr.bf16.gmra.mrb[0].mxu0 %v791
      %v973 = vpop.f32.mrb[0].mxu0
      %v974 = vadd.f32 %v917, %v973
      %v975 = vpop.f32.mrb[0].mxu0
      %v976 = vpop.f32.mrb[0].mxu0
      %v977 = vadd.f32 %v917, %v976
      %v978 = vpop.f32.mrb[0].mxu0
      %979 = vmatprep.mubr.bf16.mxu0 0
      %980 = vmatmul.mubr.bf16.gmra.mrb[0].mxu0 %v794
      %v981 = vpop.f32.mrb[0].mxu0
      %v982 = vadd.f32 %v917, %v981
      %v983 = vpop.f32.mrb[0].mxu0
      %v984 = vpop.f32.mrb[0].mxu0
      %v985 = vadd.f32 %v917, %v984
      %v986 = vpop.f32.mrb[0].mxu0
      %987 = vmatprep.mubr.bf16.mxu0 0
      %988 = vmatmul.mubr.bf16.gmra.mrb[0].mxu0 %v797
      %v989 = vpop.f32.mrb[0].mxu0
      %v990 = vadd.f32 %v917, %v989
      %v991 = vpop.f32.mrb[0].mxu0
      %v992 = vpop.f32.mrb[0].mxu0
      %v993 = vadd.f32 %v917, %v992
      %v994 = vpop.f32.mrb[0].mxu0
      %995 = vmatprep.mubr.bf16.mxu0 0
      %996 = vmatmul.mubr.bf16.gmra.mrb[0].mxu0 %v800
      %v997 = vpop.f32.mrb[0].mxu0
      %v998 = vadd.f32 %v917, %v997
      %v999 = vpop.f32.mrb[0].mxu0
      %v1000 = vpop.f32.mrb[0].mxu0
      %v1001 = vadd.f32 %v917, %v1000
      %v1002 = vpop.f32.mrb[0].mxu0
      %1003 = vmatprep.mubr.bf16.mxu0 0
      %1004 = vmatmul.mubr.bf16.gmra.mrb[0].mxu0 %v803
      %v1005 = vpop.f32.mrb[0].mxu0
      %v1006 = vadd.f32 %v917, %v1005
      %v1007 = vpop.f32.mrb[0].mxu0
      %v1008 = vpop.f32.mrb[0].mxu0
      %v1009 = vadd.f32 %v917, %v1008
      %v1010 = vpop.f32.mrb[0].mxu0
      %1011 = vmatprep.mubr.bf16.mxu0 0
      %1012 = vmatmul.mubr.bf16.gmra.mrb[0].mxu0 %v806
      %v1013 = vpop.f32.mrb[0].mxu0
      %v1014 = vadd.f32 %v917, %v1013
      %v1015 = vpop.f32.mrb[0].mxu0
      %v1016 = vpop.f32.mrb[0].mxu0
      %v1017 = vadd.f32 %v917, %v1016
      %v1018 = vpop.f32.mrb[0].mxu0
      %1019 = vmatprep.mubr.bf16.mxu0 0
      %1020 = vmatmul.mubr.bf16.gmra.mrb[0].mxu0 %v809
      %v1021 = vpop.f32.mrb[0].mxu0
      %v1022 = vadd.f32 %v917, %v1021
      %v1023 = vpop.f32.mrb[0].mxu0
      %v1024 = vpop.f32.mrb[0].mxu0
      %v1025 = vadd.f32 %v917, %v1024
      %v1026 = vpop.f32.mrb[0].mxu0
      %1027 = vdwg.mxu0
      %v1028 = vld [vmem:[%s3] sm:$0xf]
      %v1029 = vld [vmem:[%s3 + $0x4] sm:$0xf]
      %v1030 = vld [vmem:[%s3 + $0x8] sm:$0xf]
      %v1031 = vld [vmem:[%s3 + $0xc] sm:$0xf]
      %v1032 = vld [vmem:[%s6] sm:$0x1]
      %v1034 = vlaneseq
      %v1035 = vshrl.u32 %v1034, 7
      %v1036 = vsub.s32 0, %v1035
      %v1037 = vrot.slane %v1032, %v1036
      %v1043 = vunpack.c.l.b16 %v1028
      %v1044 = vunpack.c.l.b16 %v1029
      %v1045 = vunpack.c.l.b16 %v1030
      %v1046 = vunpack.c.l.b16 %v1031
      %v1047 = vpack.c.b16 %v1044, %v1043
      %v1048 = vpack.c.b16 %v1046, %v1045
      %1051 = vmatprep.subr.bf16.mxu0 0
      %1052 = vmatpush1.bf16.msra.mxu0 %v1047
      %1053 = vmatprep.subr.bf16.mxu0 0
      %1054 = vmatpush1.bf16.msra.mxu0 %v1048
      %1055 = vmatprep.subr.bf16.mxu0 0
      %1056 = vmatpush1.bf16.msra.mxu0 0
      %1057 = vmatprep.subr.bf16.mxu0 0
      %1058 = vmatpush1.bf16.msra.mxu0 0
      %1059 = vmatprep.subr.bf16.mxu0 0
      %1060 = vmatpush1.bf16.msra.mxu0 0
      %1061 = vmatprep.subr.bf16.mxu0 0
      %1062 = vmatpush1.bf16.msra.mxu0 0
      %1063 = vmatprep.subr.bf16.mxu0 0
      %1064 = vmatpush1.bf16.msra.mxu0 0
      %1065 = vmatprep.subr.bf16.mxu0 0
      %1066 = vmatpush1.bf16.msra.mxu0 0
      %1067 = vmatprep.subr.bf16.mxu0 0
      %1068 = vmatpush1.bf16.msra.mxu0 0
      %1069 = vmatprep.subr.bf16.mxu0 0
      %1070 = vmatpush1.bf16.msra.mxu0 0
      %1071 = vmatprep.subr.bf16.mxu0 0
      %1072 = vmatpush1.bf16.msra.mxu0 0
      %1073 = vmatprep.subr.bf16.mxu0 0
      %1074 = vmatpush1.bf16.msra.mxu0 0
      %1075 = vmatprep.subr.bf16.mxu0 0
      %1076 = vmatpush1.bf16.msra.mxu0 0
      %1077 = vmatprep.subr.bf16.mxu0 0
      %1078 = vmatpush1.bf16.msra.mxu0 0
      %1079 = vmatprep.subr.bf16.mxu0 0
      %1080 = vmatpush1.bf16.msra.mxu0 0
      %1081 = vmatprep.subr.bf16.mxu0 0
      %1082 = vmatpush1.bf16.msra.mxu0 0
      %1083 = vmatprep.mubr.bf16.mxu0 0
      %1084 = vmatmul.mubr.bf16.gmra.mrb[0].mxu0 %v788
      %v1085 = vpop.f32.mrb[0].mxu0
      %v1086 = vadd.f32 %v1037, %v1085
      %v1087 = vpop.f32.mrb[0].mxu0
      %v1088 = vpop.f32.mrb[0].mxu0
      %v1089 = vadd.f32 %v1037, %v1088
      %v1090 = vpop.f32.mrb[0].mxu0
      %1091 = vmatprep.mubr.bf16.mxu0 0
      %1092 = vmatmul.mubr.bf16.gmra.mrb[0].mxu0 %v791
      %v1093 = vpop.f32.mrb[0].mxu0
      %v1094 = vadd.f32 %v1037, %v1093
      %v1095 = vpop.f32.mrb[0].mxu0
      %v1096 = vpop.f32.mrb[0].mxu0
      %v1097 = vadd.f32 %v1037, %v1096
      %v1098 = vpop.f32.mrb[0].mxu0
      %1099 = vmatprep.mubr.bf16.mxu0 0
      %1100 = vmatmul.mubr.bf16.gmra.mrb[0].mxu0 %v794
      %v1101 = vpop.f32.mrb[0].mxu0
      %v1102 = vadd.f32 %v1037, %v1101
      %v1103 = vpop.f32.mrb[0].mxu0
      %v1104 = vpop.f32.mrb[0].mxu0
      %v1105 = vadd.f32 %v1037, %v1104
      %v1106 = vpop.f32.mrb[0].mxu0
      %1107 = vmatprep.mubr.bf16.mxu0 0
      %1108 = vmatmul.mubr.bf16.gmra.mrb[0].mxu0 %v797
      %v1109 = vpop.f32.mrb[0].mxu0
      %v1110 = vadd.f32 %v1037, %v1109
      %v1111 = vpop.f32.mrb[0].mxu0
      %v1112 = vpop.f32.mrb[0].mxu0
      %v1113 = vadd.f32 %v1037, %v1112
      %v1114 = vpop.f32.mrb[0].mxu0
      %1115 = vmatprep.mubr.bf16.mxu0 0
      %1116 = vmatmul.mubr.bf16.gmra.mrb[0].mxu0 %v800
      %v1117 = vpop.f32.mrb[0].mxu0
      %v1118 = vadd.f32 %v1037, %v1117
      %v1119 = vpop.f32.mrb[0].mxu0
      %v1120 = vpop.f32.mrb[0].mxu0
      %v1121 = vadd.f32 %v1037, %v1120
      %v1122 = vpop.f32.mrb[0].mxu0
      %1123 = vmatprep.mubr.bf16.mxu0 0
      %1124 = vmatmul.mubr.bf16.gmra.mrb[0].mxu0 %v803
      %v1125 = vpop.f32.mrb[0].mxu0
      %v1126 = vadd.f32 %v1037, %v1125
      %v1127 = vpop.f32.mrb[0].mxu0
      %v1128 = vpop.f32.mrb[0].mxu0
      %v1129 = vadd.f32 %v1037, %v1128
      %v1130 = vpop.f32.mrb[0].mxu0
      %1131 = vmatprep.mubr.bf16.mxu0 0
      %1132 = vmatmul.mubr.bf16.gmra.mrb[0].mxu0 %v806
      %v1133 = vpop.f32.mrb[0].mxu0
      %v1134 = vadd.f32 %v1037, %v1133
      %v1135 = vpop.f32.mrb[0].mxu0
      %v1136 = vpop.f32.mrb[0].mxu0
      %v1137 = vadd.f32 %v1037, %v1136
      %v1138 = vpop.f32.mrb[0].mxu0
      %1139 = vmatprep.mubr.bf16.mxu0 0
      %1140 = vmatmul.mubr.bf16.gmra.mrb[0].mxu0 %v809
      %v1141 = vpop.f32.mrb[0].mxu0
      %v1142 = vadd.f32 %v1037, %v1141
      %v1143 = vpop.f32.mrb[0].mxu0
      %v1144 = vpop.f32.mrb[0].mxu0
      %v1145 = vadd.f32 %v1037, %v1144
      %v1146 = vpop.f32.mrb[0].mxu0
      %1147 = vdwg.mxu0
      %v1148 = vld [vmem:[%s470] sm:$0xff]
      %v1149 = vld [vmem:[%s470 + $0x8] sm:$0xff]
      %v1150 = vld [vmem:[%s470 + $0x10] sm:$0xff]
      %v1151 = vld [vmem:[%s470 + $0x18] sm:$0xff]
      %v1152 = vld [vmem:[%s470 + $0x20] sm:$0xff]
      %v1153 = vld [vmem:[%s470 + $0x28] sm:$0xff]
      %v1154 = vld [vmem:[%s470 + $0x30] sm:$0xff]
      %v1155 = vld [vmem:[%s470 + $0x38] sm:$0xff]
      %v1156 = vld [vmem:[%s470 + $0x40] sm:$0xff]
      %v1157 = vld [vmem:[%s470 + $0x48] sm:$0xff]
      %v1158 = vld [vmem:[%s470 + $0x50] sm:$0xff]
      %v1159 = vld [vmem:[%s470 + $0x58] sm:$0xff]
      %v1160 = vld [vmem:[%s470 + $0x60] sm:$0xff]
      %v1161 = vld [vmem:[%s470 + $0x68] sm:$0xff]
      %v1162 = vld [vmem:[%s470 + $0x70] sm:$0xff]
      %v1163 = vld [vmem:[%s470 + $0x78] sm:$0xff]
      %v1164 = vpack.c.bf16 %v849, %v846
      %v1165 = vpack.c.bf16 %v857, %v854
      %v1166 = vpack.c.bf16 %v865, %v862
      %v1167 = vpack.c.bf16 %v873, %v870
      %v1168 = vpack.c.bf16 %v881, %v878
      %v1169 = vpack.c.bf16 %v889, %v886
      %v1170 = vpack.c.bf16 %v897, %v894
      %v1171 = vpack.c.bf16 %v905, %v902
      %v1172 = vpack.c.bf16 %v969, %v966
      %v1173 = vpack.c.bf16 %v977, %v974
      %v1174 = vpack.c.bf16 %v985, %v982
      %v1175 = vpack.c.bf16 %v993, %v990
      %v1176 = vpack.c.bf16 %v1001, %v998
      %v1177 = vpack.c.bf16 %v1009, %v1006
      %v1178 = vpack.c.bf16 %v1017, %v1014
      %v1179 = vpack.c.bf16 %v1025, %v1022
      %v1180 = vpack.c.bf16 %v1089, %v1086
      %v1181 = vpack.c.bf16 %v1097, %v1094
      %v1182 = vpack.c.bf16 %v1105, %v1102
      %v1183 = vpack.c.bf16 %v1113, %v1110
      %v1184 = vpack.c.bf16 %v1121, %v1118
      %v1185 = vpack.c.bf16 %v1129, %v1126
      %v1186 = vpack.c.bf16 %v1137, %v1134
      %v1187 = vpack.c.bf16 %v1145, %v1142
      %v1189 = vsel %vm500, %v1164, 0
      %v1192 = vsel %vm500, %v1165, 0
      %v1195 = vsel %vm500, %v1166, 0
      %v1198 = vsel %vm500, %v1167, 0
      %v1201 = vsel %vm500, %v1172, 0
      %v1204 = vsel %vm500, %v1173, 0
      %v1207 = vsel %vm500, %v1174, 0
      %v1210 = vsel %vm500, %v1175, 0
      %1212 = vmatprep.subr.bf16.mxu0 0
      %1213 = vmatpush1.bf16.xpose.msra.mxu0 %v1201
      %1214 = vmatprep.subr.bf16.mxu0 0
      %1215 = vmatpush1.bf16.xpose.msra.mxu0 %v1204
      %1216 = vmatprep.subr.bf16.mxu0 0
      %1217 = vmatpush1.bf16.xpose.msra.mxu0 %v1207
      %1218 = vmatprep.subr.bf16.mxu0 0
      %1219 = vmatpush1.bf16.xpose.msra.mxu0 %v1210
      %1220 = vmatprep.subr.bf16.mxu0 0
      %1221 = vmatpush1.bf16.xpose.msra.mxu0 0
      %1222 = vmatprep.subr.bf16.mxu0 0
      %1223 = vmatpush1.bf16.xpose.msra.mxu0 0
      %1224 = vmatprep.subr.bf16.mxu0 0
      %1225 = vmatpush1.bf16.xpose.msra.mxu0 0
      %1226 = vmatprep.subr.bf16.mxu0 0
      %1227 = vmatpush1.bf16.xpose.msra.mxu0 0
      %1228 = vmatprep.subr.bf16.mxu0 0
      %1229 = vmatpush1.bf16.xpose.msra.mxu0 0
      %1230 = vmatprep.subr.bf16.mxu0 0
      %1231 = vmatpush1.bf16.xpose.msra.mxu0 0
      %1232 = vmatprep.subr.bf16.mxu0 0
      %1233 = vmatpush1.bf16.xpose.msra.mxu0 0
      %1234 = vmatprep.subr.bf16.mxu0 0
      %1235 = vmatpush1.bf16.xpose.msra.mxu0 0
      %1236 = vmatprep.subr.bf16.mxu0 0
      %1237 = vmatpush1.bf16.xpose.msra.mxu0 0
      %1238 = vmatprep.subr.bf16.mxu0 0
      %1239 = vmatpush1.bf16.xpose.msra.mxu0 0
      %1240 = vmatprep.subr.bf16.mxu0 0
      %1241 = vmatpush1.bf16.xpose.msra.mxu0 0
      %1242 = vmatprep.subr.bf16.mxu0 0
      %1243 = vmatpush1.bf16.xpose.msra.mxu0 0
      %1244 = vmatprep.mubr.bf16.mxu0 0
      %1245 = vmatmul.mubr.bf16.gmra.mrb[0].mxu0 %v1189
      %v1246 = vpop.f32.mrb[0].mxu0
      %v1247 = vadd.f32 %v1148, %v1246
      %v1248 = vpop.f32.mrb[0].mxu0
      %v1249 = vpop.f32.mrb[0].mxu0
      %v1250 = vadd.f32 %v1149, %v1249
      %v1251 = vpop.f32.mrb[0].mxu0
      %1252 = vmatprep.mubr.bf16.mxu0 0
      %1253 = vmatmul.mubr.bf16.gmra.mrb[0].mxu0 %v1192
      %v1254 = vpop.f32.mrb[0].mxu0
      %v1255 = vadd.f32 %v1150, %v1254
      %v1256 = vpop.f32.mrb[0].mxu0
      %v1257 = vpop.f32.mrb[0].mxu0
      %v1258 = vadd.f32 %v1151, %v1257
      %v1259 = vpop.f32.mrb[0].mxu0
      %1260 = vmatprep.mubr.bf16.mxu0 0
      %1261 = vmatmul.mubr.bf16.gmra.mrb[0].mxu0 %v1195
      %v1262 = vpop.f32.mrb[0].mxu0
      %v1263 = vadd.f32 %v1152, %v1262
      %v1264 = vpop.f32.mrb[0].mxu0
      %v1265 = vpop.f32.mrb[0].mxu0
      %v1266 = vadd.f32 %v1153, %v1265
      %v1267 = vpop.f32.mrb[0].mxu0
      %1268 = vmatprep.mubr.bf16.mxu0 0
      %1269 = vmatmul.mubr.bf16.gmra.mrb[0].mxu0 %v1198
      %v1270 = vpop.f32.mrb[0].mxu0
      %v1271 = vadd.f32 %v1154, %v1270
      %v1272 = vpop.f32.mrb[0].mxu0
      %v1273 = vpop.f32.mrb[0].mxu0
      %v1274 = vadd.f32 %v1155, %v1273
      %v1275 = vpop.f32.mrb[0].mxu0
      %1276 = vdwg.mxu0
      %v1278 = vsel %vm500, %v1168, 0
      %v1281 = vsel %vm500, %v1169, 0
      %v1284 = vsel %vm500, %v1170, 0
      %v1287 = vsel %vm500, %v1171, 0
      %v1290 = vsel %vm500, %v1176, 0
      %v1293 = vsel %vm500, %v1177, 0
      %v1296 = vsel %vm500, %v1178, 0
      %v1299 = vsel %vm500, %v1179, 0
      %1301 = vmatprep.subr.bf16.mxu0 0
      %1302 = vmatpush1.bf16.xpose.msra.mxu0 %v1290
      %1303 = vmatprep.subr.bf16.mxu0 0
      %1304 = vmatpush1.bf16.xpose.msra.mxu0 %v1293
      %1305 = vmatprep.subr.bf16.mxu0 0
      %1306 = vmatpush1.bf16.xpose.msra.mxu0 %v1296
      %1307 = vmatprep.subr.bf16.mxu0 0
      %1308 = vmatpush1.bf16.xpose.msra.mxu0 %v1299
      %1309 = vmatprep.subr.bf16.mxu0 0
      %1310 = vmatpush1.bf16.xpose.msra.mxu0 0
      %1311 = vmatprep.subr.bf16.mxu0 0
      %1312 = vmatpush1.bf16.xpose.msra.mxu0 0
      %1313 = vmatprep.subr.bf16.mxu0 0
      %1314 = vmatpush1.bf16.xpose.msra.mxu0 0
      %1315 = vmatprep.subr.bf16.mxu0 0
      %1316 = vmatpush1.bf16.xpose.msra.mxu0 0
      %1317 = vmatprep.subr.bf16.mxu0 0
      %1318 = vmatpush1.bf16.xpose.msra.mxu0 0
      %1319 = vmatprep.subr.bf16.mxu0 0
      %1320 = vmatpush1.bf16.xpose.msra.mxu0 0
      %1321 = vmatprep.subr.bf16.mxu0 0
      %1322 = vmatpush1.bf16.xpose.msra.mxu0 0
      %1323 = vmatprep.subr.bf16.mxu0 0
      %1324 = vmatpush1.bf16.xpose.msra.mxu0 0
      %1325 = vmatprep.subr.bf16.mxu0 0
      %1326 = vmatpush1.bf16.xpose.msra.mxu0 0
      %1327 = vmatprep.subr.bf16.mxu0 0
      %1328 = vmatpush1.bf16.xpose.msra.mxu0 0
      %1329 = vmatprep.subr.bf16.mxu0 0
      %1330 = vmatpush1.bf16.xpose.msra.mxu0 0
      %1331 = vmatprep.subr.bf16.mxu0 0
      %1332 = vmatpush1.bf16.xpose.msra.mxu0 0
      %1333 = vmatprep.mubr.bf16.mxu0 0
      %1334 = vmatmul.mubr.bf16.gmra.mrb[0].mxu0 %v1278
      %v1335 = vpop.f32.mrb[0].mxu0
      %v1336 = vadd.f32 %v1156, %v1335
      %v1337 = vpop.f32.mrb[0].mxu0
      %v1338 = vpop.f32.mrb[0].mxu0
      %v1339 = vadd.f32 %v1157, %v1338
      %v1340 = vpop.f32.mrb[0].mxu0
      %1341 = vmatprep.mubr.bf16.mxu0 0
      %1342 = vmatmul.mubr.bf16.gmra.mrb[0].mxu0 %v1281
      %v1343 = vpop.f32.mrb[0].mxu0
      %v1344 = vadd.f32 %v1158, %v1343
      %v1345 = vpop.f32.mrb[0].mxu0
      %v1346 = vpop.f32.mrb[0].mxu0
      %v1347 = vadd.f32 %v1159, %v1346
      %v1348 = vpop.f32.mrb[0].mxu0
      %1349 = vmatprep.mubr.bf16.mxu0 0
      %1350 = vmatmul.mubr.bf16.gmra.mrb[0].mxu0 %v1284
      %v1351 = vpop.f32.mrb[0].mxu0
      %v1352 = vadd.f32 %v1160, %v1351
      %v1353 = vpop.f32.mrb[0].mxu0
      %v1354 = vpop.f32.mrb[0].mxu0
      %v1355 = vadd.f32 %v1161, %v1354
      %v1356 = vpop.f32.mrb[0].mxu0
      %1357 = vmatprep.mubr.bf16.mxu0 0
      %1358 = vmatmul.mubr.bf16.gmra.mrb[0].mxu0 %v1287
      %v1359 = vpop.f32.mrb[0].mxu0
      %v1360 = vadd.f32 %v1162, %v1359
      %v1361 = vpop.f32.mrb[0].mxu0
      %v1362 = vpop.f32.mrb[0].mxu0
      %v1363 = vadd.f32 %v1163, %v1362
      %v1364 = vpop.f32.mrb[0].mxu0
      %1365 = vdwg.mxu0
      %vm1366 = vcmask 523264
      %v1367 = vsel %vm1366, %v1247, -inf
      %1368 = vmax.xlane.f32.xlu0 %v1367
      %v1369 = vpop.xlane.xlu0 %1368
      %v1370 = vsel %vm1366, %v1250, -inf
      %1371 = vmax.xlane.f32.xlu0 %v1370
      %v1372 = vpop.xlane.xlu0 %1371
      %v1373 = vsel %vm1366, %v1255, -inf
      %1374 = vmax.xlane.f32.xlu0 %v1373
      %v1375 = vpop.xlane.xlu0 %1374
      %v1376 = vsel %vm1366, %v1258, -inf
      %1377 = vmax.xlane.f32.xlu0 %v1376
      %v1378 = vpop.xlane.xlu0 %1377
      %v1379 = vsel %vm1366, %v1263, -inf
      %1380 = vmax.xlane.f32.xlu0 %v1379
      %v1381 = vpop.xlane.xlu0 %1380
      %v1382 = vsel %vm1366, %v1266, -inf
      %1383 = vmax.xlane.f32.xlu0 %v1382
      %v1384 = vpop.xlane.xlu0 %1383
      %v1385 = vsel %vm1366, %v1271, -inf
      %1386 = vmax.xlane.f32.xlu0 %v1385
      %v1387 = vpop.xlane.xlu0 %1386
      %v1388 = vsel %vm1366, %v1274, -inf
      %1389 = vmax.xlane.f32.xlu0 %v1388
      %v1390 = vpop.xlane.xlu0 %1389
      %v1391 = vsel %vm1366, %v1336, -inf
      %1392 = vmax.xlane.f32.xlu0 %v1391
      %v1393 = vpop.xlane.xlu0 %1392
      %v1394 = vsel %vm1366, %v1339, -inf
      %1395 = vmax.xlane.f32.xlu0 %v1394
      %v1396 = vpop.xlane.xlu0 %1395
      %v1397 = vsel %vm1366, %v1344, -inf
      %1398 = vmax.xlane.f32.xlu0 %v1397
      %v1399 = vpop.xlane.xlu0 %1398
      %v1400 = vsel %vm1366, %v1347, -inf
      %1401 = vmax.xlane.f32.xlu0 %v1400
      %v1402 = vpop.xlane.xlu0 %1401
      %v1403 = vsel %vm1366, %v1352, -inf
      %1404 = vmax.xlane.f32.xlu0 %v1403
      %v1405 = vpop.xlane.xlu0 %1404
      %v1406 = vsel %vm1366, %v1355, -inf
      %1407 = vmax.xlane.f32.xlu0 %v1406
      %v1408 = vpop.xlane.xlu0 %1407
      %v1409 = vsel %vm1366, %v1360, -inf
      %1410 = vmax.xlane.f32.xlu0 %v1409
      %v1411 = vpop.xlane.xlu0 %1410
      %v1412 = vsel %vm1366, %v1363, -inf
      %1413 = vmax.xlane.f32.xlu0 %v1412
      %v1414 = vpop.xlane.xlu0 %1413
      %v1415 = vsub.f32 %v1247, %v1369
      %v1416 = vsub.f32 %v1250, %v1372
      %v1417 = vsub.f32 %v1255, %v1375
      %v1418 = vsub.f32 %v1258, %v1378
      %v1419 = vsub.f32 %v1263, %v1381
      %v1420 = vsub.f32 %v1266, %v1384
      %v1421 = vsub.f32 %v1271, %v1387
      %v1422 = vsub.f32 %v1274, %v1390
      %v1423 = vsub.f32 %v1336, %v1393
      %v1424 = vsub.f32 %v1339, %v1396
      %v1425 = vsub.f32 %v1344, %v1399
      %v1426 = vsub.f32 %v1347, %v1402
      %v1427 = vsub.f32 %v1352, %v1405
      %v1428 = vsub.f32 %v1355, %v1408
      %v1429 = vsub.f32 %v1360, %v1411
      %v1430 = vsub.f32 %v1363, %v1414
      %v1431 = vmul.f32 %v1415, 1.442695
      %v1432 = vpow.pop %v1431
      %v1433 = vmul.f32 %v1416, 1.442695
      %v1434 = vpow.pop %v1433
      %v1435 = vmul.f32 %v1417, 1.442695
      %v1436 = vpow.pop %v1435
      %v1437 = vmul.f32 %v1418, 1.442695
      %v1438 = vpow.pop %v1437
      %v1439 = vmul.f32 %v1419, 1.442695
      %v1440 = vpow.pop %v1439
      %v1441 = vmul.f32 %v1420, 1.442695
      %v1442 = vpow.pop %v1441
      %v1443 = vmul.f32 %v1421, 1.442695
      %v1444 = vpow.pop %v1443
      %v1445 = vmul.f32 %v1422, 1.442695
      %v1446 = vpow.pop %v1445
      %v1447 = vmul.f32 %v1423, 1.442695
      %v1448 = vpow.pop %v1447
      %v1449 = vmul.f32 %v1424, 1.442695
      %v1450 = vpow.pop %v1449
      %v1451 = vmul.f32 %v1425, 1.442695
      %v1452 = vpow.pop %v1451
      %v1453 = vmul.f32 %v1426, 1.442695
      %v1454 = vpow.pop %v1453
      %v1455 = vmul.f32 %v1427, 1.442695
      %v1456 = vpow.pop %v1455
      %v1457 = vmul.f32 %v1428, 1.442695
      %v1458 = vpow.pop %v1457
      %v1459 = vmul.f32 %v1429, 1.442695
      %v1460 = vpow.pop %v1459
      %v1461 = vmul.f32 %v1430, 1.442695
      %v1462 = vpow.pop %v1461
      %v1463 = vsel %vm1366, %v1432, 0.0
      %1464 = vadd.xlane.f32.xlu0 %v1463
      %v1465 = vpop.xlane.xlu0 %1464
      %v1466 = vsel %vm1366, %v1434, 0.0
      %1467 = vadd.xlane.f32.xlu0 %v1466
      %v1468 = vpop.xlane.xlu0 %1467
      %v1469 = vsel %vm1366, %v1436, 0.0
      %1470 = vadd.xlane.f32.xlu0 %v1469
      %v1471 = vpop.xlane.xlu0 %1470
      %v1472 = vsel %vm1366, %v1438, 0.0
      %1473 = vadd.xlane.f32.xlu0 %v1472
      %v1474 = vpop.xlane.xlu0 %1473
      %v1475 = vsel %vm1366, %v1440, 0.0
      %1476 = vadd.xlane.f32.xlu0 %v1475
      %v1477 = vpop.xlane.xlu0 %1476
      %v1478 = vsel %vm1366, %v1442, 0.0
      %1479 = vadd.xlane.f32.xlu0 %v1478
      %v1480 = vpop.xlane.xlu0 %1479
      %v1481 = vsel %vm1366, %v1444, 0.0
      %1482 = vadd.xlane.f32.xlu0 %v1481
      %v1483 = vpop.xlane.xlu0 %1482
      %v1484 = vsel %vm1366, %v1446, 0.0
      %1485 = vadd.xlane.f32.xlu0 %v1484
      %v1486 = vpop.xlane.xlu0 %1485
      %v1487 = vsel %vm1366, %v1448, 0.0
      %1488 = vadd.xlane.f32.xlu0 %v1487
      %v1489 = vpop.xlane.xlu0 %1488
      %v1490 = vsel %vm1366, %v1450, 0.0
      %1491 = vadd.xlane.f32.xlu0 %v1490
      %v1492 = vpop.xlane.xlu0 %1491
      %v1493 = vsel %vm1366, %v1452, 0.0
      %1494 = vadd.xlane.f32.xlu0 %v1493
      %v1495 = vpop.xlane.xlu0 %1494
      %v1496 = vsel %vm1366, %v1454, 0.0
      %1497 = vadd.xlane.f32.xlu0 %v1496
      %v1498 = vpop.xlane.xlu0 %1497
      %v1499 = vsel %vm1366, %v1456, 0.0
      %1500 = vadd.xlane.f32.xlu0 %v1499
      %v1501 = vpop.xlane.xlu0 %1500
      %v1502 = vsel %vm1366, %v1458, 0.0
      %1503 = vadd.xlane.f32.xlu0 %v1502
      %v1504 = vpop.xlane.xlu0 %1503
      %v1505 = vsel %vm1366, %v1460, 0.0
      %1506 = vadd.xlane.f32.xlu0 %v1505
      %v1507 = vpop.xlane.xlu0 %1506
      %v1508 = vsel %vm1366, %v1462, 0.0
      %1509 = vadd.xlane.f32.xlu0 %v1508
      %v1510 = vpop.xlane.xlu0 %1509
      %v1511 = vrcp.pop %v1465
      %v1512 = vrcp.pop %v1468
      %v1513 = vrcp.pop %v1471
      %v1514 = vrcp.pop %v1474
      %v1515 = vrcp.pop %v1477
      %v1516 = vrcp.pop %v1480
      %v1517 = vrcp.pop %v1483
      %v1518 = vrcp.pop %v1486
      %v1519 = vrcp.pop %v1489
      %v1520 = vrcp.pop %v1492
      %v1521 = vrcp.pop %v1495
      %v1522 = vrcp.pop %v1498
      %v1523 = vrcp.pop %v1501
      %v1524 = vrcp.pop %v1504
      %v1525 = vrcp.pop %v1507
      %v1526 = vrcp.pop %v1510
      %v1527 = vmul.f32 %v1432, %v1511
      %v1528 = vmul.f32 %v1434, %v1512
      %v1529 = vmul.f32 %v1436, %v1513
      %v1530 = vmul.f32 %v1438, %v1514
      %v1531 = vmul.f32 %v1440, %v1515
      %v1532 = vmul.f32 %v1442, %v1516
      %v1533 = vmul.f32 %v1444, %v1517
      %v1534 = vmul.f32 %v1446, %v1518
      %v1535 = vmul.f32 %v1448, %v1519
      %v1536 = vmul.f32 %v1450, %v1520
      %v1537 = vmul.f32 %v1452, %v1521
      %v1538 = vmul.f32 %v1454, %v1522
      %v1539 = vmul.f32 %v1456, %v1523
      %v1540 = vmul.f32 %v1458, %v1524
      %v1541 = vmul.f32 %v1460, %v1525
      %v1542 = vmul.f32 %v1462, %v1526
      %v1543 = vpack.c.bf16 %v1528, %v1527
      %v1544 = vpack.c.bf16 %v1530, %v1529
      %v1545 = vpack.c.bf16 %v1532, %v1531
      %v1546 = vpack.c.bf16 %v1534, %v1533
      %v1547 = vpack.c.bf16 %v1536, %v1535
      %v1548 = vpack.c.bf16 %v1538, %v1537
      %v1549 = vpack.c.bf16 %v1540, %v1539
      %v1550 = vpack.c.bf16 %v1542, %v1541
      %v1552 = vsel %vm1366, %v1543, 0
      %v1555 = vsel %vm1366, %v1544, 0
      %v1558 = vsel %vm1366, %v1545, 0
      %v1561 = vsel %vm1366, %v1546, 0
      %1563 = vmatprep.subr.bf16.mxu0 0
      %1564 = vmatpush1.bf16.msra.mxu0 %v1180
      %1565 = vmatprep.subr.bf16.mxu0 0
      %1566 = vmatpush1.bf16.msra.mxu0 %v1181
      %1567 = vmatprep.subr.bf16.mxu0 0
      %1568 = vmatpush1.bf16.msra.mxu0 %v1182
      %1569 = vmatprep.subr.bf16.mxu0 0
      %1570 = vmatpush1.bf16.msra.mxu0 %v1183
      %1571 = vmatprep.subr.bf16.mxu0 0
      %1572 = vmatpush1.bf16.msra.mxu0 0
      %1573 = vmatprep.subr.bf16.mxu0 0
      %1574 = vmatpush1.bf16.msra.mxu0 0
      %1575 = vmatprep.subr.bf16.mxu0 0
      %1576 = vmatpush1.bf16.msra.mxu0 0
      %1577 = vmatprep.subr.bf16.mxu0 0
      %1578 = vmatpush1.bf16.msra.mxu0 0
      %1579 = vmatprep.subr.bf16.mxu0 0
      %1580 = vmatpush1.bf16.msra.mxu0 0
      %1581 = vmatprep.subr.bf16.mxu0 0
      %1582 = vmatpush1.bf16.msra.mxu0 0
      %1583 = vmatprep.subr.bf16.mxu0 0
      %1584 = vmatpush1.bf16.msra.mxu0 0
      %1585 = vmatprep.subr.bf16.mxu0 0
      %1586 = vmatpush1.bf16.msra.mxu0 0
      %1587 = vmatprep.subr.bf16.mxu0 0
      %1588 = vmatpush1.bf16.msra.mxu0 0
      %1589 = vmatprep.subr.bf16.mxu0 0
      %1590 = vmatpush1.bf16.msra.mxu0 0
      %1591 = vmatprep.subr.bf16.mxu0 0
      %1592 = vmatpush1.bf16.msra.mxu0 0
      %1593 = vmatprep.subr.bf16.mxu0 0
      %1594 = vmatpush1.bf16.msra.mxu0 0
      %1595 = vmatprep.mubr.bf16.mxu0 0
      %1596 = vmatmul.mubr.bf16.gmra.mrb[0].mxu0 %v1552
      %v1597 = vpop.f32.mrb[0].mxu0
      %v1598 = vadd.f32 0.0, %v1597
      %v1599 = vpop.f32.mrb[0].mxu0
      %v1600 = vpop.f32.mrb[0].mxu0
      %v1601 = vadd.f32 0.0, %v1600
      %v1602 = vpop.f32.mrb[0].mxu0
      %1603 = vmatprep.mubr.bf16.mxu0 0
      %1604 = vmatmul.mubr.bf16.gmra.mrb[0].mxu0 %v1555
      %v1605 = vpop.f32.mrb[0].mxu0
      %v1606 = vadd.f32 0.0, %v1605
      %v1607 = vpop.f32.mrb[0].mxu0
      %v1608 = vpop.f32.mrb[0].mxu0
      %v1609 = vadd.f32 0.0, %v1608
      %v1610 = vpop.f32.mrb[0].mxu0
      %1611 = vmatprep.mubr.bf16.mxu0 0
      %1612 = vmatmul.mubr.bf16.gmra.mrb[0].mxu0 %v1558
      %v1613 = vpop.f32.mrb[0].mxu0
      %v1614 = vadd.f32 0.0, %v1613
      %v1615 = vpop.f32.mrb[0].mxu0
      %v1616 = vpop.f32.mrb[0].mxu0
      %v1617 = vadd.f32 0.0, %v1616
      %v1618 = vpop.f32.mrb[0].mxu0
      %1619 = vmatprep.mubr.bf16.mxu0 0
      %1620 = vmatmul.mubr.bf16.gmra.mrb[0].mxu0 %v1561
      %v1621 = vpop.f32.mrb[0].mxu0
      %v1622 = vadd.f32 0.0, %v1621
      %v1623 = vpop.f32.mrb[0].mxu0
      %v1624 = vpop.f32.mrb[0].mxu0
      %v1625 = vadd.f32 0.0, %v1624
      %v1626 = vpop.f32.mrb[0].mxu0
      %1627 = vdwg.mxu0
      %v1629 = vsel %vm1366, %v1547, 0
      %v1632 = vsel %vm1366, %v1548, 0
      %v1635 = vsel %vm1366, %v1549, 0
      %v1638 = vsel %vm1366, %v1550, 0
      %1640 = vmatprep.subr.bf16.mxu0 0
      %1641 = vmatpush1.bf16.msra.mxu0 %v1184
      %1642 = vmatprep.subr.bf16.mxu0 0
      %1643 = vmatpush1.bf16.msra.mxu0 %v1185
      %1644 = vmatprep.subr.bf16.mxu0 0
      %1645 = vmatpush1.bf16.msra.mxu0 %v1186
      %1646 = vmatprep.subr.bf16.mxu0 0
      %1647 = vmatpush1.bf16.msra.mxu0 %v1187
      %1648 = vmatprep.subr.bf16.mxu0 0
      %1649 = vmatpush1.bf16.msra.mxu0 0
      %1650 = vmatprep.subr.bf16.mxu0 0
      %1651 = vmatpush1.bf16.msra.mxu0 0
      %1652 = vmatprep.subr.bf16.mxu0 0
      %1653 = vmatpush1.bf16.msra.mxu0 0
      %1654 = vmatprep.subr.bf16.mxu0 0
      %1655 = vmatpush1.bf16.msra.mxu0 0
      %1656 = vmatprep.subr.bf16.mxu0 0
      %1657 = vmatpush1.bf16.msra.mxu0 0
      %1658 = vmatprep.subr.bf16.mxu0 0
      %1659 = vmatpush1.bf16.msra.mxu0 0
      %1660 = vmatprep.subr.bf16.mxu0 0
      %1661 = vmatpush1.bf16.msra.mxu0 0
      %1662 = vmatprep.subr.bf16.mxu0 0
      %1663 = vmatpush1.bf16.msra.mxu0 0
      %1664 = vmatprep.subr.bf16.mxu0 0
      %1665 = vmatpush1.bf16.msra.mxu0 0
      %1666 = vmatprep.subr.bf16.mxu0 0
      %1667 = vmatpush1.bf16.msra.mxu0 0
      %1668 = vmatprep.subr.bf16.mxu0 0
      %1669 = vmatpush1.bf16.msra.mxu0 0
      %1670 = vmatprep.subr.bf16.mxu0 0
      %1671 = vmatpush1.bf16.msra.mxu0 0
      %1672 = vmatprep.mubr.bf16.mxu0 0
      %1673 = vmatmul.mubr.bf16.gmra.mrb[0].mxu0 %v1629
      %v1674 = vpop.f32.mrb[0].mxu0
      %v1675 = vadd.f32 0.0, %v1674
      %v1676 = vpop.f32.mrb[0].mxu0
      %v1677 = vpop.f32.mrb[0].mxu0
      %v1678 = vadd.f32 0.0, %v1677
      %v1679 = vpop.f32.mrb[0].mxu0
      %1680 = vmatprep.mubr.bf16.mxu0 0
      %1681 = vmatmul.mubr.bf16.gmra.mrb[0].mxu0 %v1632
      %v1682 = vpop.f32.mrb[0].mxu0
      %v1683 = vadd.f32 0.0, %v1682
      %v1684 = vpop.f32.mrb[0].mxu0
      %v1685 = vpop.f32.mrb[0].mxu0
      %v1686 = vadd.f32 0.0, %v1685
      %v1687 = vpop.f32.mrb[0].mxu0
      %1688 = vmatprep.mubr.bf16.mxu0 0
      %1689 = vmatmul.mubr.bf16.gmra.mrb[0].mxu0 %v1635
      %v1690 = vpop.f32.mrb[0].mxu0
      %v1691 = vadd.f32 0.0, %v1690
      %v1692 = vpop.f32.mrb[0].mxu0
      %v1693 = vpop.f32.mrb[0].mxu0
      %v1694 = vadd.f32 0.0, %v1693
      %v1695 = vpop.f32.mrb[0].mxu0
      %1696 = vmatprep.mubr.bf16.mxu0 0
      %1697 = vmatmul.mubr.bf16.gmra.mrb[0].mxu0 %v1638
      %v1698 = vpop.f32.mrb[0].mxu0
      %v1699 = vadd.f32 0.0, %v1698
      %v1700 = vpop.f32.mrb[0].mxu0
      %v1701 = vpop.f32.mrb[0].mxu0
      %v1702 = vadd.f32 0.0, %v1701
      %v1703 = vpop.f32.mrb[0].mxu0
      %1704 = vdwg.mxu0
      %v1705 = vpack.c.bf16 %v1601, %v1598
      %v1706 = vpack.c.bf16 %v1609, %v1606
      %v1707 = vpack.c.bf16 %v1617, %v1614
      %v1708 = vpack.c.bf16 %v1625, %v1622
      %v1709 = vpack.c.bf16 %v1678, %v1675
      %v1710 = vpack.c.bf16 %v1686, %v1683
      %v1711 = vpack.c.bf16 %v1694, %v1691
      %v1712 = vpack.c.bf16 %v1702, %v1699
      %v1713 = vld [vmem:[%s7] sm:$0xf]
      %v1714 = vld [vmem:[%s7 + $0x4] sm:$0xf]
      %v1715 = vld [vmem:[%s7 + $0x8] sm:$0xf]
      %v1716 = vld [vmem:[%s7 + $0xc] sm:$0xf]
      %v1717 = vld [vmem:[%s8] sm:$0x1]
      %v1719 = vlaneseq
      %v1720 = vshrl.u32 %v1719, 7
      %v1721 = vsub.s32 0, %v1720
      %v1722 = vrot.slane %v1717, %v1721
      %v1728 = vunpack.c.l.b16 %v1713
      %v1729 = vunpack.c.l.b16 %v1714
      %v1730 = vunpack.c.l.b16 %v1715
      %v1731 = vunpack.c.l.b16 %v1716
      %v1732 = vpack.c.b16 %v1729, %v1728
      %v1733 = vpack.c.b16 %v1731, %v1730
      %v1737 = vsel %vm500, %v1705, 0
      %v1740 = vsel %vm500, %v1706, 0
      %v1743 = vsel %vm500, %v1707, 0
      %v1746 = vsel %vm500, %v1708, 0
      %v1749 = vsel %vm500, %v1709, 0
      %v1752 = vsel %vm500, %v1710, 0
      %v1755 = vsel %vm500, %v1711, 0
      %v1758 = vsel %vm500, %v1712, 0
      %1760 = vmatprep.subr.bf16.mxu0 0
      %1761 = vmatpush1.bf16.msra.mxu0 %v1732
      %1762 = vmatprep.subr.bf16.mxu0 0
      %1763 = vmatpush1.bf16.msra.mxu0 %v1733
      %1764 = vmatprep.subr.bf16.mxu0 0
      %1765 = vmatpush1.bf16.msra.mxu0 0
      %1766 = vmatprep.subr.bf16.mxu0 0
      %1767 = vmatpush1.bf16.msra.mxu0 0
      %1768 = vmatprep.subr.bf16.mxu0 0
      %1769 = vmatpush1.bf16.msra.mxu0 0
      %1770 = vmatprep.subr.bf16.mxu0 0
      %1771 = vmatpush1.bf16.msra.mxu0 0
      %1772 = vmatprep.subr.bf16.mxu0 0
      %1773 = vmatpush1.bf16.msra.mxu0 0
      %1774 = vmatprep.subr.bf16.mxu0 0
      %1775 = vmatpush1.bf16.msra.mxu0 0
      %1776 = vmatprep.subr.bf16.mxu0 0
      %1777 = vmatpush1.bf16.msra.mxu0 0
      %1778 = vmatprep.subr.bf16.mxu0 0
      %1779 = vmatpush1.bf16.msra.mxu0 0
      %1780 = vmatprep.subr.bf16.mxu0 0
      %1781 = vmatpush1.bf16.msra.mxu0 0
      %1782 = vmatprep.subr.bf16.mxu0 0
      %1783 = vmatpush1.bf16.msra.mxu0 0
      %1784 = vmatprep.subr.bf16.mxu0 0
      %1785 = vmatpush1.bf16.msra.mxu0 0
      %1786 = vmatprep.subr.bf16.mxu0 0
      %1787 = vmatpush1.bf16.msra.mxu0 0
      %1788 = vmatprep.subr.bf16.mxu0 0
      %1789 = vmatpush1.bf16.msra.mxu0 0
      %1790 = vmatprep.subr.bf16.mxu0 0
      %1791 = vmatpush1.bf16.msra.mxu0 0
      %1792 = vmatprep.mubr.bf16.mxu0 0
      %1793 = vmatmul.mubr.bf16.gmra.mrb[0].mxu0 %v1737
      %v1794 = vpop.f32.mrb[0].mxu0
      %v1795 = vadd.f32 %v1722, %v1794
      %v1796 = vpop.f32.mrb[0].mxu0
      %v1797 = vpop.f32.mrb[0].mxu0
      %v1798 = vadd.f32 %v1722, %v1797
      %v1799 = vpop.f32.mrb[0].mxu0
      %1800 = vmatprep.mubr.bf16.mxu0 0
      %1801 = vmatmul.mubr.bf16.gmra.mrb[0].mxu0 %v1740
      %v1802 = vpop.f32.mrb[0].mxu0
      %v1803 = vadd.f32 %v1722, %v1802
      %v1804 = vpop.f32.mrb[0].mxu0
      %v1805 = vpop.f32.mrb[0].mxu0
      %v1806 = vadd.f32 %v1722, %v1805
      %v1807 = vpop.f32.mrb[0].mxu0
      %1808 = vmatprep.mubr.bf16.mxu0 0
      %1809 = vmatmul.mubr.bf16.gmra.mrb[0].mxu0 %v1743
      %v1810 = vpop.f32.mrb[0].mxu0
      %v1811 = vadd.f32 %v1722, %v1810
      %v1812 = vpop.f32.mrb[0].mxu0
      %v1813 = vpop.f32.mrb[0].mxu0
      %v1814 = vadd.f32 %v1722, %v1813
      %v1815 = vpop.f32.mrb[0].mxu0
      %1816 = vmatprep.mubr.bf16.mxu0 0
      %1817 = vmatmul.mubr.bf16.gmra.mrb[0].mxu0 %v1746
      %v1818 = vpop.f32.mrb[0].mxu0
      %v1819 = vadd.f32 %v1722, %v1818
      %v1820 = vpop.f32.mrb[0].mxu0
      %v1821 = vpop.f32.mrb[0].mxu0
      %v1822 = vadd.f32 %v1722, %v1821
      %v1823 = vpop.f32.mrb[0].mxu0
      %1824 = vmatprep.mubr.bf16.mxu0 0
      %1825 = vmatmul.mubr.bf16.gmra.mrb[0].mxu0 %v1749
      %v1826 = vpop.f32.mrb[0].mxu0
      %v1827 = vadd.f32 %v1722, %v1826
      %v1828 = vpop.f32.mrb[0].mxu0
      %v1829 = vpop.f32.mrb[0].mxu0
      %v1830 = vadd.f32 %v1722, %v1829
      %v1831 = vpop.f32.mrb[0].mxu0
      %1832 = vmatprep.mubr.bf16.mxu0 0
      %1833 = vmatmul.mubr.bf16.gmra.mrb[0].mxu0 %v1752
      %v1834 = vpop.f32.mrb[0].mxu0
      %v1835 = vadd.f32 %v1722, %v1834
      %v1836 = vpop.f32.mrb[0].mxu0
      %v1837 = vpop.f32.mrb[0].mxu0
      %v1838 = vadd.f32 %v1722, %v1837
      %v1839 = vpop.f32.mrb[0].mxu0
      %1840 = vmatprep.mubr.bf16.mxu0 0
      %1841 = vmatmul.mubr.bf16.gmra.mrb[0].mxu0 %v1755
      %v1842 = vpop.f32.mrb[0].mxu0
      %v1843 = vadd.f32 %v1722, %v1842
      %v1844 = vpop.f32.mrb[0].mxu0
      %v1845 = vpop.f32.mrb[0].mxu0
      %v1846 = vadd.f32 %v1722, %v1845
      %v1847 = vpop.f32.mrb[0].mxu0
      %1848 = vmatprep.mubr.bf16.mxu0 0
      %1849 = vmatmul.mubr.bf16.gmra.mrb[0].mxu0 %v1758
      %v1850 = vpop.f32.mrb[0].mxu0
      %v1851 = vadd.f32 %v1722, %v1850
      %v1852 = vpop.f32.mrb[0].mxu0
      %v1853 = vpop.f32.mrb[0].mxu0
      %v1854 = vadd.f32 %v1722, %v1853
      %v1855 = vpop.f32.mrb[0].mxu0
      %1856 = vdwg.mxu0
      %v1857 = vadd.f32 %v1795, %v484
      %v1858 = vadd.f32 %v1798, %v486
      %v1859 = vadd.f32 %v1803, %v488
      %v1860 = vadd.f32 %v1806, %v490
      %v1861 = vadd.f32 %v1811, %v492
      %v1862 = vadd.f32 %v1814, %v494
      %v1863 = vadd.f32 %v1819, %v496
      %v1864 = vadd.f32 %v1822, %v498
      %v1865 = vadd.f32 %v1827, %v485
      %v1866 = vadd.f32 %v1830, %v487
      %v1867 = vadd.f32 %v1835, %v489
      %v1868 = vadd.f32 %v1838, %v491
      %v1869 = vadd.f32 %v1843, %v493
      %v1870 = vadd.f32 %v1846, %v495
      %v1871 = vadd.f32 %v1851, %v497
      %v1872 = vadd.f32 %v1854, %v499
      %1873 = vst.msk [vmem:[%s481] sm:$0xff] %vm500, %v1857
      %1874 = vst.msk [vmem:[%s481 + $0x8] sm:$0xff] %vm500, %v1865
      %1875 = vst.msk [vmem:[%s481 + $0x10] sm:$0xff] %vm500, %v1858
      %1876 = vst.msk [vmem:[%s481 + $0x18] sm:$0xff] %vm500, %v1866
      %1877 = vst.msk [vmem:[%s481 + $0x20] sm:$0xff] %vm500, %v1859
      %1878 = vst.msk [vmem:[%s481 + $0x28] sm:$0xff] %vm500, %v1867
      %1879 = vst.msk [vmem:[%s481 + $0x30] sm:$0xff] %vm500, %v1860
      %1880 = vst.msk [vmem:[%s481 + $0x38] sm:$0xff] %vm500, %v1868
      %1881 = vst.msk [vmem:[%s481 + $0x40] sm:$0xff] %vm500, %v1861
      %1882 = vst.msk [vmem:[%s481 + $0x48] sm:$0xff] %vm500, %v1869
      %1883 = vst.msk [vmem:[%s481 + $0x50] sm:$0xff] %vm500, %v1862
      %1884 = vst.msk [vmem:[%s481 + $0x58] sm:$0xff] %vm500, %v1870
      %1885 = vst.msk [vmem:[%s481 + $0x60] sm:$0xff] %vm500, %v1863
      %1886 = vst.msk [vmem:[%s481 + $0x68] sm:$0xff] %vm500, %v1871
      %1887 = vst.msk [vmem:[%s481 + $0x70] sm:$0xff] %vm500, %v1864
      %1888 = vst.msk [vmem:[%s481 + $0x78] sm:$0xff] %vm500, %v1872
      %s1889 = smul.u32 8, %s28
      %p1890 = scmp.lt.s32.totalorder %s27, 1
      %s1891 = scalar_select %p1890, %s27, 1
      %p1892 = scmp.lt.s32.totalorder %s1889, 15
      %s1893 = scalar_select %p1892, %s1889, 15
      %s1894 = smul.addr %s1893, 2
      %s1895 = smul.addr %s1891, 32
      %s1896 = sadd.s32 %s1894, %s1895
      %s1897 = smul.addr %s1896, 8
      %s1898 = scalar_lea.vmem %s12, %s1897
      // Predicated region
      $region69: #{stcspa_forward.9} parent=67 // pred_check
        %p1899 = pneg %p319
      $region70: #{stcspa_forward.9} parent=67 // pred_check_branch
        %1901 = sbr.rel (%p1899) target = $region72
      $region71: #{stcspa_forward.9} parent=67 // pred_region
        %s1902 = smul.u32 8, %s28
      $region72: #{stcspa_forward.9} parent=67 // pred_fallthru
        _
    $region68: #{stcspa_forward.9} parent=5 // pred_fallthru
      _
    %p1903 = scmp.le.s32.totalorder 2, %s18
    // Predicated region
    $region73: #{stcspa_forward.9} parent=5 // pred_check
      %p1904 = pneg %p1903
    $region74: #{stcspa_forward.9} parent=5 // pred_check_branch
      %1906 = sbr.rel (%p1904) target = $region76
    $region75: #{stcspa_forward.9} parent=5 // pred_region
      %s1907 = ssub.s32 %s18, 2
      // Predicated region
      $region77: #{stcspa_forward.9} parent=75 // pred_check
        %p1908 = pneg %p325
      $region78: #{stcspa_forward.9} parent=75 // pred_check_branch
        %1910 = sbr.rel (%p1908) target = $region80
      $region79: #{stcspa_forward.9} parent=75 // pred_region
        %s1911 = smul.u32 8, %s30
        %p1912 = scmp.lt.s32.totalorder %s29, 1
        %s1913 = scalar_select %p1912, %s29, 1
        %p1914 = scmp.lt.s32.totalorder %s1911, 15
        %s1915 = scalar_select %p1914, %s1911, 15
        %s1916 = smul.addr %s1915, 2
        %s1917 = smul.addr %s1913, 32
        %s1918 = sadd.s32 %s1916, %s1917
        %s1919 = smul.addr %s1918, 8
        %s1920 = scalar_lea.vmem %s12, %s1919
      $region80: #{stcspa_forward.9} parent=75 // pred_fallthru
        _
    $region76: #{stcspa_forward.9} parent=5 // pred_fallthru
      _
  $region6: #{stcspa_forward.9} parent=0 // loop_footer
    %s22 = sadd.s32 1, %s18
  $region7: #{stcspa_forward.9} parent=0 // loop_footer_branch
    %17 = sbr.rel target = $region3
  $region8: #{stcspa_forward.9} parent=0 // loop_exit
    _

</llo_original>
